<compile_context>
chip_gen: v5e
topology: v5e:2x2
jax: 0.10.0
libtpu: 0.0.40
codegen_flags: <defaults>
</compile_context>

<pallas_src>
import functools

import jax
import jax.numpy as jnp
from jax.experimental import pallas as pl
from jax.experimental.pallas import tpu as pltpu

BN_EPS = 1e-5
LANE = 128


def resnet_block_kernel(xp_ref, w1_ref, g1_ref, be1_ref, w2_ref, g2_ref, be2_ref,
                        out_ref, hpad_ref, *, N, H, W, Cp):
    M = N * H * W
    inv_m = jnp.float32(1.0 / M)

    def batchnorm(h2d, gamma, beta):
        # One reduction pass: var = E[x^2] - mean^2, then y = x*scale + shift.
        s = jnp.sum(h2d, axis=0, keepdims=True)
        ss = jnp.sum(h2d * h2d, axis=0, keepdims=True)
        mean = s * inv_m
        var = ss * inv_m - mean * mean
        scale = gamma * jax.lax.rsqrt(var + BN_EPS)
        shift = beta - mean * scale
        return h2d * scale + shift

    # ---- conv1: single im2col matmul on the MXU (bf16 operands, f32 acc) ----
    xp = xp_ref[...]  # (N, H+2, W+2, Cp) f32, zero-padded spatially + on channels
    p1 = [xp[:, dy:dy + H, dx:dx + W, :].reshape(M, Cp)
          for dy in range(3) for dx in range(3)]
    identity = p1[4]  # center tap (dy=1, dx=1) == unpadded x, kept exact f32
    lhs1 = jnp.concatenate([p.astype(jnp.bfloat16) for p in p1], axis=-1)
    h = jnp.dot(lhs1, w1_ref[...], preferred_element_type=jnp.float32)

    # ---- bn1 + relu ----------------------------------------------------------
    h = jnp.maximum(batchnorm(h, g1_ref[...], be1_ref[...]), 0.0)

    # ---- re-pad conv1 output for conv2 (zero only the 1-wide halo strips) ----
    hpad_ref[:, 0:1, :, :] = jnp.zeros((N, 1, W + 2, Cp), jnp.float32)
    hpad_ref[:, H + 1:H + 2, :, :] = jnp.zeros((N, 1, W + 2, Cp), jnp.float32)
    hpad_ref[:, :, 0:1, :] = jnp.zeros((N, H + 2, 1, Cp), jnp.float32)
    hpad_ref[:, :, W + 1:W + 2, :] = jnp.zeros((N, H + 2, 1, Cp), jnp.float32)
    hpad_ref[:, 1:H + 1, 1:W + 1, :] = h.reshape(N, H, W, Cp)
    hp = hpad_ref[...]

    # ---- conv2: single im2col matmul -----------------------------------------
    p2 = [hp[:, dy:dy + H, dx:dx + W, :].reshape(M, Cp)
          for dy in range(3) for dx in range(3)]
    lhs2 = jnp.concatenate([p.astype(jnp.bfloat16) for p in p2], axis=-1)
    h = jnp.dot(lhs2, w2_ref[...], preferred_element_type=jnp.float32)

    # ---- bn2 + residual add + relu --------------------------------------------
    h = batchnorm(h, g2_ref[...], be2_ref[...])
    y = jnp.maximum(h + identity, 0.0)
    out_ref[...] = y.reshape(N, H, W, Cp)  # lane-dense (Cp=128) aligned store


def cifar_resnet_block(x_nchw, params):
    """Wrapper: PyTorch-style NCHW in -> NCHW out; kernel runs lane-dense NHWC."""
    N, Cin, H, W = x_nchw.shape
    Cout = params["w1"].shape[0]
    assert Cin == Cout, "identity add requires Cin == Cout when no downsample"

    Cp = ((max(Cin, Cout) + LANE - 1) // LANE) * LANE  # channel pad -> lane-dense

    # Layout glue outside the kernel: NCHW -> NHWC, channel pad to Cp,
    # spatial zero-pad by 1 for conv1's halo.
    x = jnp.transpose(x_nchw, (0, 2, 3, 1)).astype(jnp.float32)
    xp = jnp.pad(x, ((0, 0), (1, 1), (1, 1), (0, Cp - Cin)))

    def prep_w(w_torch):
        # (Cout, Cin, 3, 3) -> (ky, kx, Cin, Cout) -> channel pad -> (9*Cp, Cp) bf16
        co, ci = w_torch.shape[0], w_torch.shape[1]
        w = jnp.transpose(w_torch, (2, 3, 1, 0))
        w = jnp.pad(w, ((0, 0), (0, 0), (0, Cp - ci), (0, Cp - co)))
        return w.reshape(9 * Cp, Cp).astype(jnp.bfloat16)

    def prep_bn(gamma, beta):
        g = jnp.pad(gamma.astype(jnp.float32), (0, Cp - gamma.shape[0]),
                    constant_values=1.0).reshape(1, Cp)
        b = jnp.pad(beta.astype(jnp.float32), (0, Cp - beta.shape[0])).reshape(1, Cp)
        return g, b

    w1 = prep_w(params["w1"])
    w2 = prep_w(params["w2"])
    g1, be1 = prep_bn(params["g1"], params["be1"])
    g2, be2 = prep_bn(params["g2"], params["be2"])
    # NOTE: conv biases (params["b1"], params["b2"]) are intentionally unused:
    # a per-channel constant added before training-mode BatchNorm cancels
    # exactly in (x - mean), so the forward output is unchanged.

    args = (xp, w1, g1, be1, w2, g2, be2)

    def full_spec(shape):
        rank = len(shape)
        return pl.BlockSpec(shape, lambda i, _r=rank: (0,) * _r)

    kernel = functools.partial(resnet_block_kernel, N=N, H=H, W=W, Cp=Cp)

    out = pl.pallas_call(
        kernel,
        out_shape=jax.ShapeDtypeStruct((N, H, W, Cp), jnp.float32),
        grid=(1,),
        in_specs=[full_spec(a.shape) for a in args],
        out_specs=full_spec((N, H, W, Cp)),
        scratch_shapes=[pltpu.VMEM((N, H + 2, W + 2, Cp), jnp.float32)],
        compiler_params=pltpu.CompilerParams(
            dimension_semantics=("arbitrary",),
            vmem_limit_bytes=32 * 1024 * 1024),
    )(*args)

    # Drop padded channels, back to NCHW.
    return jnp.transpose(out[..., :Cout], (0, 3, 1, 2))


def init_params(key, in_channels, out_channels):
    """Deterministic synthetic parameters in PyTorch layouts
    (nn.Conv2d weight (Cout,Cin,3,3) + bias, nn.BatchNorm2d gamma/beta)."""
    k0, k1, k2, k3, k4, k5 = jax.random.split(key, 6)

    w1 = jax.random.normal(k0, (out_channels, in_channels, 3, 3),
                           jnp.float32) / jnp.sqrt(9.0 * in_channels)
    b1 = 0.01 * jax.random.normal(k1, (out_channels,), jnp.float32)
    w2 = jax.random.normal(k2, (out_channels, out_channels, 3, 3),
                           jnp.float32) / jnp.sqrt(9.0 * out_channels)
    b2 = 0.01 * jax.random.normal(k3, (out_channels,), jnp.float32)

    g1 = 1.0 + 0.1 * jax.random.normal(k4, (out_channels,), jnp.float32)
    be1 = jnp.zeros((out_channels,), jnp.float32)
    g2 = 1.0 + 0.1 * jax.random.normal(k5, (out_channels,), jnp.float32)
    be2 = jnp.zeros((out_channels,), jnp.float32)

    return dict(w1=w1, b1=b1, g1=g1, be1=be1, w2=w2, b2=b2, g2=g2, be2=be2)


if __name__ == "__main__":
    key = jax.random.PRNGKey(0)
    kx, kp = jax.random.split(key)

    N, C, H, W = 2, 4, 16, 16
    x = jax.random.normal(kx, (N, C, H, W), jnp.float32)  # NCHW, like PyTorch
    params = init_params(kp, C, C)

    y = cifar_resnet_block(x, params)
    y = jax.block_until_ready(y)

    assert y.shape == (N, C, H, W)
    assert bool(jnp.all(jnp.isfinite(y)))
    assert bool(jnp.all(y >= 0.0))  # final ReLU
    print("KERNEL_OK")
</pallas_src>

<mosaic_0001>
module attributes {stable_mosaic.version = 11 : i64} {
  func.func @resnet_block_kernel(%arg0: i32, %arg1: memref<2x18x18x128xf32, #tpu.memory_space<vmem>>, %arg2: memref<1152x128xbf16, #tpu.memory_space<vmem>>, %arg3: memref<1x128xf32, #tpu.memory_space<vmem>>, %arg4: memref<1x128xf32, #tpu.memory_space<vmem>>, %arg5: memref<1152x128xbf16, #tpu.memory_space<vmem>>, %arg6: memref<1x128xf32, #tpu.memory_space<vmem>>, %arg7: memref<1x128xf32, #tpu.memory_space<vmem>>, %arg8: memref<2x16x16x128xf32, #tpu.memory_space<vmem>>, %arg9: memref<2x18x18x128xf32, #tpu.memory_space<vmem>>) attributes {dimension_semantics = [#tpu.dimension_semantics<arbitrary>], iteration_bounds = array<i64: 1>, scalar_prefetch = 0 : i64, scratch_operands = 1 : i64, tpu.core_type = #tpu.core_type<tc>, window_params = [{pipeline_mode = #tpu.pipeline_mode<synchronous>, transform_indices = @transform_0, window_bounds = array<i64: 2, 18, 18, 128>}, {pipeline_mode = #tpu.pipeline_mode<synchronous>, transform_indices = @transform_1, window_bounds = array<i64: 1152, 128>}, {pipeline_mode = #tpu.pipeline_mode<synchronous>, transform_indices = @transform_2, window_bounds = array<i64: 1, 128>}, {pipeline_mode = #tpu.pipeline_mode<synchronous>, transform_indices = @transform_3, window_bounds = array<i64: 1, 128>}, {pipeline_mode = #tpu.pipeline_mode<synchronous>, transform_indices = @transform_4, window_bounds = array<i64: 1152, 128>}, {pipeline_mode = #tpu.pipeline_mode<synchronous>, transform_indices = @transform_5, window_bounds = array<i64: 1, 128>}, {pipeline_mode = #tpu.pipeline_mode<synchronous>, transform_indices = @transform_6, window_bounds = array<i64: 1, 128>}, {pipeline_mode = #tpu.pipeline_mode<synchronous>, transform_indices = @transform_7, window_bounds = array<i64: 2, 16, 16, 128>}]} {
    %c0 = arith.constant 0 : index
    %c0_0 = arith.constant 0 : index
    %c0_1 = arith.constant 0 : index
    %c0_2 = arith.constant 0 : index
    %0 = vector.load %arg1[%c0, %c0_0, %c0_1, %c0_2] : memref<2x18x18x128xf32, #tpu.memory_space<vmem>>, vector<2x18x18x128xf32>
    %1 = vector.extract_strided_slice %0 {offsets = [0, 0, 0, 0], sizes = [2, 16, 16, 128], strides = [1, 1, 1, 1]} : vector<2x18x18x128xf32> to vector<2x16x16x128xf32>
    %2 = vector.shape_cast %1 : vector<2x16x16x128xf32> to vector<512x128xf32>
    %3 = vector.extract_strided_slice %0 {offsets = [0, 0, 1, 0], sizes = [2, 16, 16, 128], strides = [1, 1, 1, 1]} : vector<2x18x18x128xf32> to vector<2x16x16x128xf32>
    %4 = vector.shape_cast %3 : vector<2x16x16x128xf32> to vector<512x128xf32>
    %5 = vector.extract_strided_slice %0 {offsets = [0, 0, 2, 0], sizes = [2, 16, 16, 128], strides = [1, 1, 1, 1]} : vector<2x18x18x128xf32> to vector<2x16x16x128xf32>
    %6 = vector.shape_cast %5 : vector<2x16x16x128xf32> to vector<512x128xf32>
    %7 = vector.extract_strided_slice %0 {offsets = [0, 1, 0, 0], sizes = [2, 16, 16, 128], strides = [1, 1, 1, 1]} : vector<2x18x18x128xf32> to vector<2x16x16x128xf32>
    %8 = vector.shape_cast %7 : vector<2x16x16x128xf32> to vector<512x128xf32>
    %9 = vector.extract_strided_slice %0 {offsets = [0, 1, 1, 0], sizes = [2, 16, 16, 128], strides = [1, 1, 1, 1]} : vector<2x18x18x128xf32> to vector<2x16x16x128xf32>
    %10 = vector.shape_cast %9 : vector<2x16x16x128xf32> to vector<512x128xf32>
    %11 = vector.extract_strided_slice %0 {offsets = [0, 1, 2, 0], sizes = [2, 16, 16, 128], strides = [1, 1, 1, 1]} : vector<2x18x18x128xf32> to vector<2x16x16x128xf32>
    %12 = vector.shape_cast %11 : vector<2x16x16x128xf32> to vector<512x128xf32>
    %13 = vector.extract_strided_slice %0 {offsets = [0, 2, 0, 0], sizes = [2, 16, 16, 128], strides = [1, 1, 1, 1]} : vector<2x18x18x128xf32> to vector<2x16x16x128xf32>
    %14 = vector.shape_cast %13 : vector<2x16x16x128xf32> to vector<512x128xf32>
    %15 = vector.extract_strided_slice %0 {offsets = [0, 2, 1, 0], sizes = [2, 16, 16, 128], strides = [1, 1, 1, 1]} : vector<2x18x18x128xf32> to vector<2x16x16x128xf32>
    %16 = vector.shape_cast %15 : vector<2x16x16x128xf32> to vector<512x128xf32>
    %17 = vector.extract_strided_slice %0 {offsets = [0, 2, 2, 0], sizes = [2, 16, 16, 128], strides = [1, 1, 1, 1]} : vector<2x18x18x128xf32> to vector<2x16x16x128xf32>
    %18 = vector.shape_cast %17 : vector<2x16x16x128xf32> to vector<512x128xf32>
    %19 = arith.truncf %2 : vector<512x128xf32> to vector<512x128xbf16>
    %20 = arith.truncf %4 : vector<512x128xf32> to vector<512x128xbf16>
    %21 = arith.truncf %6 : vector<512x128xf32> to vector<512x128xbf16>
    %22 = arith.truncf %8 : vector<512x128xf32> to vector<512x128xbf16>
    %23 = arith.truncf %10 : vector<512x128xf32> to vector<512x128xbf16>
    %24 = arith.truncf %12 : vector<512x128xf32> to vector<512x128xbf16>
    %25 = arith.truncf %14 : vector<512x128xf32> to vector<512x128xbf16>
    %26 = arith.truncf %16 : vector<512x128xf32> to vector<512x128xbf16>
    %27 = arith.truncf %18 : vector<512x128xf32> to vector<512x128xbf16>
    %28 = tpu.concatenate %19, %20, %21, %22, %23, %24, %25, %26, %27 in 1 : vector<512x128xbf16>, vector<512x128xbf16>, vector<512x128xbf16>, vector<512x128xbf16>, vector<512x128xbf16>, vector<512x128xbf16>, vector<512x128xbf16>, vector<512x128xbf16>, vector<512x128xbf16> -> vector<512x1152xbf16>
    %c0_3 = arith.constant 0 : index
    %c0_4 = arith.constant 0 : index
    %29 = vector.load %arg2[%c0_3, %c0_4] : memref<1152x128xbf16, #tpu.memory_space<vmem>>, vector<1152x128xbf16>
    %cst = arith.constant dense<0.000000e+00> : vector<512x128xf32>
    %30 = tpu.matmul %28, %29, %cst {dimension_numbers = #tpu.dot_dimension_numbers<[1], [0], [0], [1], [0, 0, 1, 1], [], []>} : vector<512x1152xbf16>, vector<1152x128xbf16>, vector<512x128xf32> -> vector<512x128xf32>
    %c0_5 = arith.constant 0 : index
    %c0_6 = arith.constant 0 : index
    %31 = vector.load %arg3[%c0_5, %c0_6] : memref<1x128xf32, #tpu.memory_space<vmem>>, vector<1x128xf32>
    %c0_7 = arith.constant 0 : index
    %c0_8 = arith.constant 0 : index
    %32 = vector.load %arg4[%c0_7, %c0_8] : memref<1x128xf32, #tpu.memory_space<vmem>>, vector<1x128xf32>
    %cst_9 = arith.constant dense<0.000000e+00> : vector<128xf32>
    %33 = vector.multi_reduction <add>, %30, %cst_9 [0] : vector<512x128xf32> to vector<128xf32>
    %34 = vector.shape_cast %33 : vector<128xf32> to vector<1x128xf32>
    %35 = arith.mulf %30, %30 : vector<512x128xf32>
    %cst_10 = arith.constant dense<0.000000e+00> : vector<128xf32>
    %36 = vector.multi_reduction <add>, %35, %cst_10 [0] : vector<512x128xf32> to vector<128xf32>
    %37 = vector.shape_cast %36 : vector<128xf32> to vector<1x128xf32>
    %cst_11 = arith.constant 0.001953125 : f32
    %38 = vector.broadcast %cst_11 : f32 to vector<1x128xf32>
    %39 = arith.mulf %34, %38 : vector<1x128xf32>
    %cst_12 = arith.constant 0.001953125 : f32
    %40 = vector.broadcast %cst_12 : f32 to vector<1x128xf32>
    %41 = arith.mulf %37, %40 : vector<1x128xf32>
    %42 = arith.mulf %39, %39 : vector<1x128xf32>
    %43 = arith.subf %41, %42 : vector<1x128xf32>
    %cst_13 = arith.constant 9.99999974E-6 : f32
    %44 = vector.broadcast %cst_13 : f32 to vector<1x128xf32>
    %45 = arith.addf %43, %44 : vector<1x128xf32>
    %46 = math.rsqrt %45 : vector<1x128xf32>
    %47 = arith.mulf %31, %46 : vector<1x128xf32>
    %48 = arith.mulf %39, %47 : vector<1x128xf32>
    %49 = arith.subf %32, %48 : vector<1x128xf32>
    %50 = vector.broadcast %47 : vector<1x128xf32> to vector<512x128xf32>
    %51 = arith.mulf %30, %50 : vector<512x128xf32>
    %52 = vector.broadcast %49 : vector<1x128xf32> to vector<512x128xf32>
    %53 = arith.addf %51, %52 : vector<512x128xf32>
    %cst_14 = arith.constant 0.000000e+00 : f32
    %54 = vector.broadcast %cst_14 : f32 to vector<512x128xf32>
    %55 = arith.maximumf %53, %54 : vector<512x128xf32>
    %cst_15 = arith.constant 0.000000e+00 : f32
    %56 = vector.broadcast %cst_15 : f32 to vector<2x1x18x128xf32>
    %c0_16 = arith.constant 0 : index
    %c0_17 = arith.constant 0 : index
    %c0_18 = arith.constant 0 : index
    %c0_19 = arith.constant 0 : index
    %57 = vector.load %arg9[%c0_16, %c0_17, %c0_18, %c0_19] : memref<2x18x18x128xf32, #tpu.memory_space<vmem>>, vector<2x1x18x128xf32>
    tpu.vector_store %arg9[%c0_16, %c0_17, %c0_18, %c0_19], %56 {strides = array<i32>} : memref<2x18x18x128xf32, #tpu.memory_space<vmem>>, vector<2x1x18x128xf32>,
    %cst_20 = arith.constant 0.000000e+00 : f32
    %58 = vector.broadcast %cst_20 : f32 to vector<2x1x18x128xf32>
    %c0_21 = arith.constant 0 : index
    %c17 = arith.constant 17 : index
    %c0_22 = arith.constant 0 : index
    %c0_23 = arith.constant 0 : index
    %59 = vector.load %arg9[%c0_21, %c17, %c0_22, %c0_23] : memref<2x18x18x128xf32, #tpu.memory_space<vmem>>, vector<2x1x18x128xf32>
    tpu.vector_store %arg9[%c0_21, %c17, %c0_22, %c0_23], %58 {strides = array<i32>} : memref<2x18x18x128xf32, #tpu.memory_space<vmem>>, vector<2x1x18x128xf32>,
    %cst_24 = arith.constant 0.000000e+00 : f32
    %60 = vector.broadcast %cst_24 : f32 to vector<2x18x1x128xf32>
    %c0_25 = arith.constant 0 : index
    %c0_26 = arith.constant 0 : index
    %c0_27 = arith.constant 0 : index
    %c0_28 = arith.constant 0 : index
    %61 = vector.load %arg9[%c0_25, %c0_26, %c0_27, %c0_28] : memref<2x18x18x128xf32, #tpu.memory_space<vmem>>, vector<2x18x1x128xf32>
    tpu.vector_store %arg9[%c0_25, %c0_26, %c0_27, %c0_28], %60 {strides = array<i32>} : memref<2x18x18x128xf32, #tpu.memory_space<vmem>>, vector<2x18x1x128xf32>,
    %cst_29 = arith.constant 0.000000e+00 : f32
    %62 = vector.broadcast %cst_29 : f32 to vector<2x18x1x128xf32>
    %c0_30 = arith.constant 0 : index
    %c0_31 = arith.constant 0 : index
    %c17_32 = arith.constant 17 : index
    %c0_33 = arith.constant 0 : index
    %63 = vector.load %arg9[%c0_30, %c0_31, %c17_32, %c0_33] : memref<2x18x18x128xf32, #tpu.memory_space<vmem>>, vector<2x18x1x128xf32>
    tpu.vector_store %arg9[%c0_30, %c0_31, %c17_32, %c0_33], %62 {strides = array<i32>} : memref<2x18x18x128xf32, #tpu.memory_space<vmem>>, vector<2x18x1x128xf32>,
    %64 = vector.shape_cast %55 : vector<512x128xf32> to vector<2x16x16x128xf32>
    %c0_34 = arith.constant 0 : index
    %c1 = arith.constant 1 : index
    %c1_35 = arith.constant 1 : index
    %c0_36 = arith.constant 0 : index
    %65 = vector.load %arg9[%c0_34, %c1, %c1_35, %c0_36] : memref<2x18x18x128xf32, #tpu.memory_space<vmem>>, vector<2x16x16x128xf32>
    tpu.vector_store %arg9[%c0_34, %c1, %c1_35, %c0_36], %64 {strides = array<i32>} : memref<2x18x18x128xf32, #tpu.memory_space<vmem>>, vector<2x16x16x128xf32>,
    %c0_37 = arith.constant 0 : index
    %c0_38 = arith.constant 0 : index
    %c0_39 = arith.constant 0 : index
    %c0_40 = arith.constant 0 : index
    %66 = vector.load %arg9[%c0_37, %c0_38, %c0_39, %c0_40] : memref<2x18x18x128xf32, #tpu.memory_space<vmem>>, vector<2x18x18x128xf32>
    %67 = vector.extract_strided_slice %66 {offsets = [0, 0, 0, 0], sizes = [2, 16, 16, 128], strides = [1, 1, 1, 1]} : vector<2x18x18x128xf32> to vector<2x16x16x128xf32>
    %68 = vector.shape_cast %67 : vector<2x16x16x128xf32> to vector<512x128xf32>
    %69 = vector.extract_strided_slice %66 {offsets = [0, 0, 1, 0], sizes = [2, 16, 16, 128], strides = [1, 1, 1, 1]} : vector<2x18x18x128xf32> to vector<2x16x16x128xf32>
    %70 = vector.shape_cast %69 : vector<2x16x16x128xf32> to vector<512x128xf32>
    %71 = vector.extract_strided_slice %66 {offsets = [0, 0, 2, 0], sizes = [2, 16, 16, 128], strides = [1, 1, 1, 1]} : vector<2x18x18x128xf32> to vector<2x16x16x128xf32>
    %72 = vector.shape_cast %71 : vector<2x16x16x128xf32> to vector<512x128xf32>
    %73 = vector.extract_strided_slice %66 {offsets = [0, 1, 0, 0], sizes = [2, 16, 16, 128], strides = [1, 1, 1, 1]} : vector<2x18x18x128xf32> to vector<2x16x16x128xf32>
    %74 = vector.shape_cast %73 : vector<2x16x16x128xf32> to vector<512x128xf32>
    %75 = vector.extract_strided_slice %66 {offsets = [0, 1, 1, 0], sizes = [2, 16, 16, 128], strides = [1, 1, 1, 1]} : vector<2x18x18x128xf32> to vector<2x16x16x128xf32>
    %76 = vector.shape_cast %75 : vector<2x16x16x128xf32> to vector<512x128xf32>
    %77 = vector.extract_strided_slice %66 {offsets = [0, 1, 2, 0], sizes = [2, 16, 16, 128], strides = [1, 1, 1, 1]} : vector<2x18x18x128xf32> to vector<2x16x16x128xf32>
    %78 = vector.shape_cast %77 : vector<2x16x16x128xf32> to vector<512x128xf32>
    %79 = vector.extract_strided_slice %66 {offsets = [0, 2, 0, 0], sizes = [2, 16, 16, 128], strides = [1, 1, 1, 1]} : vector<2x18x18x128xf32> to vector<2x16x16x128xf32>
    %80 = vector.shape_cast %79 : vector<2x16x16x128xf32> to vector<512x128xf32>
    %81 = vector.extract_strided_slice %66 {offsets = [0, 2, 1, 0], sizes = [2, 16, 16, 128], strides = [1, 1, 1, 1]} : vector<2x18x18x128xf32> to vector<2x16x16x128xf32>
    %82 = vector.shape_cast %81 : vector<2x16x16x128xf32> to vector<512x128xf32>
    %83 = vector.extract_strided_slice %66 {offsets = [0, 2, 2, 0], sizes = [2, 16, 16, 128], strides = [1, 1, 1, 1]} : vector<2x18x18x128xf32> to vector<2x16x16x128xf32>
    %84 = vector.shape_cast %83 : vector<2x16x16x128xf32> to vector<512x128xf32>
    %85 = arith.truncf %68 : vector<512x128xf32> to vector<512x128xbf16>
    %86 = arith.truncf %70 : vector<512x128xf32> to vector<512x128xbf16>
    %87 = arith.truncf %72 : vector<512x128xf32> to vector<512x128xbf16>
    %88 = arith.truncf %74 : vector<512x128xf32> to vector<512x128xbf16>
    %89 = arith.truncf %76 : vector<512x128xf32> to vector<512x128xbf16>
    %90 = arith.truncf %78 : vector<512x128xf32> to vector<512x128xbf16>
    %91 = arith.truncf %80 : vector<512x128xf32> to vector<512x128xbf16>
    %92 = arith.truncf %82 : vector<512x128xf32> to vector<512x128xbf16>
    %93 = arith.truncf %84 : vector<512x128xf32> to vector<512x128xbf16>
    %94 = tpu.concatenate %85, %86, %87, %88, %89, %90, %91, %92, %93 in 1 : vector<512x128xbf16>, vector<512x128xbf16>, vector<512x128xbf16>, vector<512x128xbf16>, vector<512x128xbf16>, vector<512x128xbf16>, vector<512x128xbf16>, vector<512x128xbf16>, vector<512x128xbf16> -> vector<512x1152xbf16>
    %c0_41 = arith.constant 0 : index
    %c0_42 = arith.constant 0 : index
    %95 = vector.load %arg5[%c0_41, %c0_42] : memref<1152x128xbf16, #tpu.memory_space<vmem>>, vector<1152x128xbf16>
    %cst_43 = arith.constant dense<0.000000e+00> : vector<512x128xf32>
    %96 = tpu.matmul %94, %95, %cst_43 {dimension_numbers = #tpu.dot_dimension_numbers<[1], [0], [0], [1], [0, 0, 1, 1], [], []>} : vector<512x1152xbf16>, vector<1152x128xbf16>, vector<512x128xf32> -> vector<512x128xf32>
    %c0_44 = arith.constant 0 : index
    %c0_45 = arith.constant 0 : index
    %97 = vector.load %arg6[%c0_44, %c0_45] : memref<1x128xf32, #tpu.memory_space<vmem>>, vector<1x128xf32>
    %c0_46 = arith.constant 0 : index
    %c0_47 = arith.constant 0 : index
    %98 = vector.load %arg7[%c0_46, %c0_47] : memref<1x128xf32, #tpu.memory_space<vmem>>, vector<1x128xf32>
    %cst_48 = arith.constant dense<0.000000e+00> : vector<128xf32>
    %99 = vector.multi_reduction <add>, %96, %cst_48 [0] : vector<512x128xf32> to vector<128xf32>
    %100 = vector.shape_cast %99 : vector<128xf32> to vector<1x128xf32>
    %101 = arith.mulf %96, %96 : vector<512x128xf32>
    %cst_49 = arith.constant dense<0.000000e+00> : vector<128xf32>
    %102 = vector.multi_reduction <add>, %101, %cst_49 [0] : vector<512x128xf32> to vector<128xf32>
    %103 = vector.shape_cast %102 : vector<128xf32> to vector<1x128xf32>
    %cst_50 = arith.constant 0.001953125 : f32
    %104 = vector.broadcast %cst_50 : f32 to vector<1x128xf32>
    %105 = arith.mulf %100, %104 : vector<1x128xf32>
    %cst_51 = arith.constant 0.001953125 : f32
    %106 = vector.broadcast %cst_51 : f32 to vector<1x128xf32>
    %107 = arith.mulf %103, %106 : vector<1x128xf32>
    %108 = arith.mulf %105, %105 : vector<1x128xf32>
    %109 = arith.subf %107, %108 : vector<1x128xf32>
    %cst_52 = arith.constant 9.99999974E-6 : f32
    %110 = vector.broadcast %cst_52 : f32 to vector<1x128xf32>
    %111 = arith.addf %109, %110 : vector<1x128xf32>
    %112 = math.rsqrt %111 : vector<1x128xf32>
    %113 = arith.mulf %97, %112 : vector<1x128xf32>
    %114 = arith.mulf %105, %113 : vector<1x128xf32>
    %115 = arith.subf %98, %114 : vector<1x128xf32>
    %116 = vector.broadcast %113 : vector<1x128xf32> to vector<512x128xf32>
    %117 = arith.mulf %96, %116 : vector<512x128xf32>
    %118 = vector.broadcast %115 : vector<1x128xf32> to vector<512x128xf32>
    %119 = arith.addf %117, %118 : vector<512x128xf32>
    %120 = arith.addf %119, %10 : vector<512x128xf32>
    %cst_53 = arith.constant 0.000000e+00 : f32
    %121 = vector.broadcast %cst_53 : f32 to vector<512x128xf32>
    %122 = arith.maximumf %120, %121 : vector<512x128xf32>
    %123 = vector.shape_cast %122 : vector<512x128xf32> to vector<2x16x16x128xf32>
    %c0_54 = arith.constant 0 : index
    %c0_55 = arith.constant 0 : index
    %c0_56 = arith.constant 0 : index
    %c0_57 = arith.constant 0 : index
    %124 = vector.load %arg8[%c0_54, %c0_55, %c0_56, %c0_57] : memref<2x16x16x128xf32, #tpu.memory_space<vmem>>, vector<2x16x16x128xf32>
    tpu.vector_store %arg8[%c0_54, %c0_55, %c0_56, %c0_57], %123 {strides = array<i32>} : memref<2x16x16x128xf32, #tpu.memory_space<vmem>>, vector<2x16x16x128xf32>,
    return
  }
  func.func @transform_0(%arg0: i32) -> (i32, i32, i32, i32) {
    %c0_i32 = arith.constant 0 : i32
    %c0_i32_0 = arith.constant 0 : i32
    %c0_i32_1 = arith.constant 0 : i32
    %c0_i32_2 = arith.constant 0 : i32
    %c0_i32_3 = arith.constant 0 : i32
    return %c0_i32, %c0_i32_0, %c0_i32_1, %c0_i32_2 : i32, i32, i32, i32
  }
  func.func @transform_1(%arg0: i32) -> (i32, i32) {
    %c0_i32 = arith.constant 0 : i32
    %c0_i32_0 = arith.constant 0 : i32
    %c0_i32_1 = arith.constant 0 : i32
    return %c0_i32, %c0_i32_0 : i32, i32
  }
  func.func @transform_2(%arg0: i32) -> (i32, i32) {
    %c0_i32 = arith.constant 0 : i32
    %c0_i32_0 = arith.constant 0 : i32
    %c0_i32_1 = arith.constant 0 : i32
    return %c0_i32, %c0_i32_0 : i32, i32
  }
  func.func @transform_3(%arg0: i32) -> (i32, i32) {
    %c0_i32 = arith.constant 0 : i32
    %c0_i32_0 = arith.constant 0 : i32
    %c0_i32_1 = arith.constant 0 : i32
    return %c0_i32, %c0_i32_0 : i32, i32
  }
  func.func @transform_4(%arg0: i32) -> (i32, i32) {
    %c0_i32 = arith.constant 0 : i32
    %c0_i32_0 = arith.constant 0 : i32
    %c0_i32_1 = arith.constant 0 : i32
    return %c0_i32, %c0_i32_0 : i32, i32
  }
  func.func @transform_5(%arg0: i32) -> (i32, i32) {
    %c0_i32 = arith.constant 0 : i32
    %c0_i32_0 = arith.constant 0 : i32
    %c0_i32_1 = arith.constant 0 : i32
    return %c0_i32, %c0_i32_0 : i32, i32
  }
  func.func @transform_6(%arg0: i32) -> (i32, i32) {
    %c0_i32 = arith.constant 0 : i32
    %c0_i32_0 = arith.constant 0 : i32
    %c0_i32_1 = arith.constant 0 : i32
    return %c0_i32, %c0_i32_0 : i32, i32
  }
  func.func @transform_7(%arg0: i32) -> (i32, i32, i32, i32) {
    %c0_i32 = arith.constant 0 : i32
    %c0_i32_0 = arith.constant 0 : i32
    %c0_i32_1 = arith.constant 0 : i32
    %c0_i32_2 = arith.constant 0 : i32
    %c0_i32_3 = arith.constant 0 : i32
    return %c0_i32, %c0_i32_0, %c0_i32_1, %c0_i32_2 : i32, i32, i32, i32
  }
}

</mosaic_0001>

<llo_original>
// kernel: tpu_custom_call.1
$region0: #{tpu_custom_call.1}
  #allocation0 [shape = 'u32[]', space=smem, size = 0x4, offset = 0x4, fixed_abs, tag = 'smem constant byte address 0x4 - core index']
  #allocation1 [shape = 'u32[72,128]{1,0:T(1,128)}', space=vmem, size = 0x9000, scoped, tag = 'internal scratch']
  #allocation2 [shape = 'f32[2,18,18,128]{3,2,1,0:T(8,128)}', space=vmem, size = 0x6c000, scoped, tag = 'scratch operand']
  %s0 = inlined_call_operand.vmem [shape: f32[2,18,18,128], index: 0, kind: input, shape index: {}]
  %s1 = inlined_call_operand.vmem [shape: bf16[1152,128], index: 1, kind: input, shape index: {}]
  %s2 = inlined_call_operand.vmem [shape: f32[1,128], index: 2, kind: input, shape index: {}]
  %s3 = inlined_call_operand.vmem [shape: f32[1,128], index: 3, kind: input, shape index: {}]
  %s4 = inlined_call_operand.vmem [shape: bf16[1152,128], index: 4, kind: input, shape index: {}]
  %s5 = inlined_call_operand.vmem [shape: f32[1,128], index: 5, kind: input, shape index: {}]
  %s6 = inlined_call_operand.vmem [shape: f32[1,128], index: 6, kind: input, shape index: {}]
  %s7 = inlined_call_operand.hbm [shape: f32[2,16,16,128], index: 7, kind: output, shape index: {}]
  %s8 = sld [smem:[#allocation0]]
  $region38: #{tpu_custom_call.1} parent=0
    _
  %s10 = ssub.s32 1, %s8
  %s11 = scalar_select 0, %s10, %s8
  $region1: #{tpu_custom_call.1} parent=0
    #allocation3 [shape = 'u8[262144]{0}', space=vmem, size = 0x40000, scoped, tag = 'output window, operand 0, single buffered']
    #allocation4 [shape = 's32[1]{0}', space=sflag, size = 0x4, scoped, tag = 'scoped memory for tpu_custom_call.1']
    %12 = vsyncpa [#allocation4], 0
    // Predicated region
    $region2: #{tpu_custom_call.1} parent=1 // pred_check
      _
    $region3: #{tpu_custom_call.1} parent=1 // pred_check_branch
      %14 = sbr.rel (0) target = $region5
    $region4: #{tpu_custom_call.1} parent=1 // pred_region
      _
    $region5: #{tpu_custom_call.1} parent=1 // pred_fallthru
      _
    // Predicated region
    $region6: #{tpu_custom_call.1} parent=1 // pred_check
      _
    $region7: #{tpu_custom_call.1} parent=1 // pred_check_branch
      %16 = sbr.rel (0) target = $region9
    $region8: #{tpu_custom_call.1} parent=1 // pred_region
      _
    $region9: #{tpu_custom_call.1} parent=1 // pred_fallthru
      _
    // Predicated region
    $region10: #{tpu_custom_call.1} parent=1 // pred_check
      _
    $region11: #{tpu_custom_call.1} parent=1 // pred_check_branch
      %18 = sbr.rel (0) target = $region13
    $region12: #{tpu_custom_call.1} parent=1 // pred_region
      _
    $region13: #{tpu_custom_call.1} parent=1 // pred_fallthru
      _
    // Predicated region
    $region14: #{tpu_custom_call.1} parent=1 // pred_check
      _
    $region15: #{tpu_custom_call.1} parent=1 // pred_check_branch
      %20 = sbr.rel (0) target = $region17
    $region16: #{tpu_custom_call.1} parent=1 // pred_region
      _
    $region17: #{tpu_custom_call.1} parent=1 // pred_fallthru
      _
    // Predicated region
    $region18: #{tpu_custom_call.1} parent=1 // pred_check
      _
    $region19: #{tpu_custom_call.1} parent=1 // pred_check_branch
      %22 = sbr.rel (0) target = $region21
    $region20: #{tpu_custom_call.1} parent=1 // pred_region
      _
    $region21: #{tpu_custom_call.1} parent=1 // pred_fallthru
      _
    // Predicated region
    $region22: #{tpu_custom_call.1} parent=1 // pred_check
      _
    $region23: #{tpu_custom_call.1} parent=1 // pred_check_branch
      %24 = sbr.rel (0) target = $region25
    $region24: #{tpu_custom_call.1} parent=1 // pred_region
      _
    $region25: #{tpu_custom_call.1} parent=1 // pred_fallthru
      _
    // Predicated region
    $region26: #{tpu_custom_call.1} parent=1 // pred_check
      _
    $region27: #{tpu_custom_call.1} parent=1 // pred_check_branch
      %26 = sbr.rel (0) target = $region29
    $region28: #{tpu_custom_call.1} parent=1 // pred_region
      _
    $region29: #{tpu_custom_call.1} parent=1 // pred_fallthru
      _
    %v27 = vld [vmem:[%s0] sm:$0xff]
    %v28 = vld [vmem:[%s0 + $0x8] sm:$0xff]
    %v29 = vld [vmem:[%s0 + $0x10] sm:$0x3]
    %v30 = vld [vmem:[%s0 + $0x18] sm:$0xff]
    %v31 = vld [vmem:[%s0 + $0x20] sm:$0xff]
    %v32 = vld [vmem:[%s0 + $0x28] sm:$0x3]
    %v33 = vld [vmem:[%s0 + $0x30] sm:$0xff]
    %v34 = vld [vmem:[%s0 + $0x38] sm:$0xff]
    %v35 = vld [vmem:[%s0 + $0x40] sm:$0x3]
    %v36 = vld [vmem:[%s0 + $0x48] sm:$0xff]
    %v37 = vld [vmem:[%s0 + $0x50] sm:$0xff]
    %v38 = vld [vmem:[%s0 + $0x58] sm:$0x3]
    %v39 = vld [vmem:[%s0 + $0x60] sm:$0xff]
    %v40 = vld [vmem:[%s0 + $0x68] sm:$0xff]
    %v41 = vld [vmem:[%s0 + $0x70] sm:$0x3]
    %v42 = vld [vmem:[%s0 + $0x78] sm:$0xff]
    %v43 = vld [vmem:[%s0 + $0x80] sm:$0xff]
    %v44 = vld [vmem:[%s0 + $0x88] sm:$0x3]
    %v45 = vld [vmem:[%s0 + $0x90] sm:$0xff]
    %v46 = vld [vmem:[%s0 + $0x98] sm:$0xff]
    %v47 = vld [vmem:[%s0 + $0xa0] sm:$0x3]
    %v48 = vld [vmem:[%s0 + $0xa8] sm:$0xff]
    %v49 = vld [vmem:[%s0 + $0xb0] sm:$0xff]
    %v50 = vld [vmem:[%s0 + $0xb8] sm:$0x3]
    %v51 = vld [vmem:[%s0 + $0xc0] sm:$0xff]
    %v52 = vld [vmem:[%s0 + $0xc8] sm:$0xff]
    %v53 = vld [vmem:[%s0 + $0xd0] sm:$0x3]
    %v54 = vld [vmem:[%s0 + $0xd8] sm:$0xff]
    %v55 = vld [vmem:[%s0 + $0xe0] sm:$0xff]
    %v56 = vld [vmem:[%s0 + $0xe8] sm:$0x3]
    %v57 = vld [vmem:[%s0 + $0xf0] sm:$0xff]
    %v58 = vld [vmem:[%s0 + $0xf8] sm:$0xff]
    %v59 = vld [vmem:[%s0 + $0x100] sm:$0x3]
    %v60 = vld [vmem:[%s0 + $0x108] sm:$0xff]
    %v61 = vld [vmem:[%s0 + $0x110] sm:$0xff]
    %v62 = vld [vmem:[%s0 + $0x118] sm:$0x3]
    %v63 = vld [vmem:[%s0 + $0x120] sm:$0xff]
    %v64 = vld [vmem:[%s0 + $0x128] sm:$0xff]
    %v65 = vld [vmem:[%s0 + $0x130] sm:$0x3]
    %v66 = vld [vmem:[%s0 + $0x138] sm:$0xff]
    %v67 = vld [vmem:[%s0 + $0x140] sm:$0xff]
    %v68 = vld [vmem:[%s0 + $0x148] sm:$0x3]
    %v69 = vld [vmem:[%s0 + $0x150] sm:$0xff]
    %v70 = vld [vmem:[%s0 + $0x158] sm:$0xff]
    %v71 = vld [vmem:[%s0 + $0x160] sm:$0x3]
    %v72 = vld [vmem:[%s0 + $0x168] sm:$0xff]
    %v73 = vld [vmem:[%s0 + $0x170] sm:$0xff]
    %v74 = vld [vmem:[%s0 + $0x178] sm:$0x3]
    %v75 = vld [vmem:[%s0 + $0x180] sm:$0xff]
    %v76 = vld [vmem:[%s0 + $0x188] sm:$0xff]
    %v77 = vld [vmem:[%s0 + $0x190] sm:$0x3]
    %v78 = vld [vmem:[%s0 + $0x198] sm:$0xff]
    %v79 = vld [vmem:[%s0 + $0x1a0] sm:$0xff]
    %v80 = vld [vmem:[%s0 + $0x1a8] sm:$0x3]
    %v81 = vld [vmem:[%s0 + $0x1b0] sm:$0xff]
    %v82 = vld [vmem:[%s0 + $0x1b8] sm:$0xff]
    %v83 = vld [vmem:[%s0 + $0x1c0] sm:$0x3]
    %v84 = vld [vmem:[%s0 + $0x1c8] sm:$0xff]
    %v85 = vld [vmem:[%s0 + $0x1d0] sm:$0xff]
    %v86 = vld [vmem:[%s0 + $0x1d8] sm:$0x3]
    %v87 = vld [vmem:[%s0 + $0x1e0] sm:$0xff]
    %v88 = vld [vmem:[%s0 + $0x1e8] sm:$0xff]
    %v89 = vld [vmem:[%s0 + $0x1f0] sm:$0x3]
    %v90 = vld [vmem:[%s0 + $0x1f8] sm:$0xff]
    %v91 = vld [vmem:[%s0 + $0x200] sm:$0xff]
    %v92 = vld [vmem:[%s0 + $0x208] sm:$0x3]
    %v93 = vld [vmem:[%s0 + $0x210] sm:$0xff]
    %v94 = vld [vmem:[%s0 + $0x218] sm:$0xff]
    %v95 = vld [vmem:[%s0 + $0x220] sm:$0x3]
    %v96 = vld [vmem:[%s0 + $0x228] sm:$0xff]
    %v97 = vld [vmem:[%s0 + $0x230] sm:$0xff]
    %v98 = vld [vmem:[%s0 + $0x238] sm:$0x3]
    %v99 = vld [vmem:[%s0 + $0x240] sm:$0xff]
    %v100 = vld [vmem:[%s0 + $0x248] sm:$0xff]
    %v101 = vld [vmem:[%s0 + $0x250] sm:$0x3]
    %v102 = vld [vmem:[%s0 + $0x258] sm:$0xff]
    %v103 = vld [vmem:[%s0 + $0x260] sm:$0xff]
    %v104 = vld [vmem:[%s0 + $0x268] sm:$0x3]
    %v105 = vld [vmem:[%s0 + $0x270] sm:$0xff]
    %v106 = vld [vmem:[%s0 + $0x278] sm:$0xff]
    %v107 = vld [vmem:[%s0 + $0x280] sm:$0x3]
    %v108 = vld [vmem:[%s0 + $0x288] sm:$0xff]
    %v109 = vld [vmem:[%s0 + $0x290] sm:$0xff]
    %v110 = vld [vmem:[%s0 + $0x298] sm:$0x3]
    %v111 = vld [vmem:[%s0 + $0x2a0] sm:$0xff]
    %v112 = vld [vmem:[%s0 + $0x2a8] sm:$0xff]
    %v113 = vld [vmem:[%s0 + $0x2b0] sm:$0x3]
    %v114 = vld [vmem:[%s0 + $0x2b8] sm:$0xff]
    %v115 = vld [vmem:[%s0 + $0x2c0] sm:$0xff]
    %v116 = vld [vmem:[%s0 + $0x2c8] sm:$0x3]
    %v117 = vld [vmem:[%s0 + $0x2d0] sm:$0xff]
    %v118 = vld [vmem:[%s0 + $0x2d8] sm:$0xff]
    %v119 = vld [vmem:[%s0 + $0x2e0] sm:$0x3]
    %v120 = vld [vmem:[%s0 + $0x2e8] sm:$0xff]
    %v121 = vld [vmem:[%s0 + $0x2f0] sm:$0xff]
    %v122 = vld [vmem:[%s0 + $0x2f8] sm:$0x3]
    %v123 = vld [vmem:[%s0 + $0x300] sm:$0xff]
    %v124 = vld [vmem:[%s0 + $0x308] sm:$0xff]
    %v125 = vld [vmem:[%s0 + $0x310] sm:$0x3]
    %v126 = vld [vmem:[%s0 + $0x318] sm:$0xff]
    %v127 = vld [vmem:[%s0 + $0x320] sm:$0xff]
    %v128 = vld [vmem:[%s0 + $0x328] sm:$0x3]
    %v129 = vld [vmem:[%s0 + $0x330] sm:$0xff]
    %v130 = vld [vmem:[%s0 + $0x338] sm:$0xff]
    %v131 = vld [vmem:[%s0 + $0x340] sm:$0x3]
    %v132 = vld [vmem:[%s0 + $0x348] sm:$0xff]
    %v133 = vld [vmem:[%s0 + $0x350] sm:$0xff]
    %v134 = vld [vmem:[%s0 + $0x358] sm:$0x3]
    %vm231 = vcmask 1046528
    %v232 = vrot.slane %v27, 1
    %v233 = vrot.slane %v28, 1
    %v234 = vsel %vm231, %v232, %v233
    %v235 = vrot.slane %v29, 1
    %v236 = vsel %vm231, %v233, %v235
    %v237 = vrot.slane %v30, 1
    %v238 = vrot.slane %v31, 1
    %v239 = vsel %vm231, %v237, %v238
    %v240 = vrot.slane %v32, 1
    %v241 = vsel %vm231, %v238, %v240
    %v242 = vrot.slane %v33, 1
    %v243 = vrot.slane %v34, 1
    %v244 = vsel %vm231, %v242, %v243
    %v245 = vrot.slane %v35, 1
    %v246 = vsel %vm231, %v243, %v245
    %v247 = vrot.slane %v36, 1
    %v248 = vrot.slane %v37, 1
    %v249 = vsel %vm231, %v247, %v248
    %v250 = vrot.slane %v38, 1
    %v251 = vsel %vm231, %v248, %v250
    %v252 = vrot.slane %v39, 1
    %v253 = vrot.slane %v40, 1
    %v254 = vsel %vm231, %v252, %v253
    %v255 = vrot.slane %v41, 1
    %v256 = vsel %vm231, %v253, %v255
    %v257 = vrot.slane %v42, 1
    %v258 = vrot.slane %v43, 1
    %v259 = vsel %vm231, %v257, %v258
    %v260 = vrot.slane %v44, 1
    %v261 = vsel %vm231, %v258, %v260
    %v262 = vrot.slane %v45, 1
    %v263 = vrot.slane %v46, 1
    %v264 = vsel %vm231, %v262, %v263
    %v265 = vrot.slane %v47, 1
    %v266 = vsel %vm231, %v263, %v265
    %v267 = vrot.slane %v48, 1
    %v268 = vrot.slane %v49, 1
    %v269 = vsel %vm231, %v267, %v268
    %v270 = vrot.slane %v50, 1
    %v271 = vsel %vm231, %v268, %v270
    %v272 = vrot.slane %v51, 1
    %v273 = vrot.slane %v52, 1
    %v274 = vsel %vm231, %v272, %v273
    %v275 = vrot.slane %v53, 1
    %v276 = vsel %vm231, %v273, %v275
    %v277 = vrot.slane %v54, 1
    %v278 = vrot.slane %v55, 1
    %v279 = vsel %vm231, %v277, %v278
    %v280 = vrot.slane %v56, 1
    %v281 = vsel %vm231, %v278, %v280
    %v282 = vrot.slane %v57, 1
    %v283 = vrot.slane %v58, 1
    %v284 = vsel %vm231, %v282, %v283
    %v285 = vrot.slane %v59, 1
    %v286 = vsel %vm231, %v283, %v285
    %v287 = vrot.slane %v60, 1
    %v288 = vrot.slane %v61, 1
    %v289 = vsel %vm231, %v287, %v288
    %v290 = vrot.slane %v62, 1
    %v291 = vsel %vm231, %v288, %v290
    %v292 = vrot.slane %v63, 1
    %v293 = vrot.slane %v64, 1
    %v294 = vsel %vm231, %v292, %v293
    %v295 = vrot.slane %v65, 1
    %v296 = vsel %vm231, %v293, %v295
    %v297 = vrot.slane %v66, 1
    %v298 = vrot.slane %v67, 1
    %v299 = vsel %vm231, %v297, %v298
    %v300 = vrot.slane %v68, 1
    %v301 = vsel %vm231, %v298, %v300
    %v302 = vrot.slane %v69, 1
    %v303 = vrot.slane %v70, 1
    %v304 = vsel %vm231, %v302, %v303
    %v305 = vrot.slane %v71, 1
    %v306 = vsel %vm231, %v303, %v305
    %v307 = vrot.slane %v72, 1
    %v308 = vrot.slane %v73, 1
    %v309 = vsel %vm231, %v307, %v308
    %v310 = vrot.slane %v74, 1
    %v311 = vsel %vm231, %v308, %v310
    %v312 = vrot.slane %v81, 1
    %v313 = vrot.slane %v82, 1
    %v314 = vsel %vm231, %v312, %v313
    %v315 = vrot.slane %v83, 1
    %v316 = vsel %vm231, %v313, %v315
    %v317 = vrot.slane %v84, 1
    %v318 = vrot.slane %v85, 1
    %v319 = vsel %vm231, %v317, %v318
    %v320 = vrot.slane %v86, 1
    %v321 = vsel %vm231, %v318, %v320
    %v322 = vrot.slane %v87, 1
    %v323 = vrot.slane %v88, 1
    %v324 = vsel %vm231, %v322, %v323
    %v325 = vrot.slane %v89, 1
    %v326 = vsel %vm231, %v323, %v325
    %v327 = vrot.slane %v90, 1
    %v328 = vrot.slane %v91, 1
    %v329 = vsel %vm231, %v327, %v328
    %v330 = vrot.slane %v92, 1
    %v331 = vsel %vm231, %v328, %v330
    %v332 = vrot.slane %v93, 1
    %v333 = vrot.slane %v94, 1
    %v334 = vsel %vm231, %v332, %v333
    %v335 = vrot.slane %v95, 1
    %v336 = vsel %vm231, %v333, %v335
    %v337 = vrot.slane %v96, 1
    %v338 = vrot.slane %v97, 1
    %v339 = vsel %vm231, %v337, %v338
    %v340 = vrot.slane %v98, 1
    %v341 = vsel %vm231, %v338, %v340
    %v342 = vrot.slane %v99, 1
    %v343 = vrot.slane %v100, 1
    %v344 = vsel %vm231, %v342, %v343
    %v345 = vrot.slane %v101, 1
    %v346 = vsel %vm231, %v343, %v345
    %v347 = vrot.slane %v102, 1
    %v348 = vrot.slane %v103, 1
    %v349 = vsel %vm231, %v347, %v348
    %v350 = vrot.slane %v104, 1
    %v351 = vsel %vm231, %v348, %v350
    %v352 = vrot.slane %v105, 1
    %v353 = vrot.slane %v106, 1
    %v354 = vsel %vm231, %v352, %v353
    %v355 = vrot.slane %v107, 1
    %v356 = vsel %vm231, %v353, %v355
    %v357 = vrot.slane %v108, 1
    %v358 = vrot.slane %v109, 1
    %v359 = vsel %vm231, %v357, %v358
    %v360 = vrot.slane %v110, 1
    %v361 = vsel %vm231, %v358, %v360
    %v362 = vrot.slane %v111, 1
    %v363 = vrot.slane %v112, 1
    %v364 = vsel %vm231, %v362, %v363
    %v365 = vrot.slane %v113, 1
    %v366 = vsel %vm231, %v363, %v365
    %v367 = vrot.slane %v114, 1
    %v368 = vrot.slane %v115, 1
    %v369 = vsel %vm231, %v367, %v368
    %v370 = vrot.slane %v116, 1
    %v371 = vsel %vm231, %v368, %v370
    %v372 = vrot.slane %v117, 1
    %v373 = vrot.slane %v118, 1
    %v374 = vsel %vm231, %v372, %v373
    %v375 = vrot.slane %v119, 1
    %v376 = vsel %vm231, %v373, %v375
    %v377 = vrot.slane %v120, 1
    %v378 = vrot.slane %v121, 1
    %v379 = vsel %vm231, %v377, %v378
    %v380 = vrot.slane %v122, 1
    %v381 = vsel %vm231, %v378, %v380
    %v382 = vrot.slane %v123, 1
    %v383 = vrot.slane %v124, 1
    %v384 = vsel %vm231, %v382, %v383
    %v385 = vrot.slane %v125, 1
    %v386 = vsel %vm231, %v383, %v385
    %v387 = vrot.slane %v126, 1
    %v388 = vrot.slane %v127, 1
    %v389 = vsel %vm231, %v387, %v388
    %v390 = vrot.slane %v128, 1
    %v391 = vsel %vm231, %v388, %v390
    %vm456 = vcmask 1045504
    %v457 = vrot.slane %v27, 2
    %v458 = vrot.slane %v28, 2
    %v459 = vsel %vm456, %v457, %v458
    %v460 = vrot.slane %v29, 2
    %v461 = vsel %vm456, %v458, %v460
    %v462 = vrot.slane %v30, 2
    %v463 = vrot.slane %v31, 2
    %v464 = vsel %vm456, %v462, %v463
    %v465 = vrot.slane %v32, 2
    %v466 = vsel %vm456, %v463, %v465
    %v467 = vrot.slane %v33, 2
    %v468 = vrot.slane %v34, 2
    %v469 = vsel %vm456, %v467, %v468
    %v470 = vrot.slane %v35, 2
    %v471 = vsel %vm456, %v468, %v470
    %v472 = vrot.slane %v36, 2
    %v473 = vrot.slane %v37, 2
    %v474 = vsel %vm456, %v472, %v473
    %v475 = vrot.slane %v38, 2
    %v476 = vsel %vm456, %v473, %v475
    %v477 = vrot.slane %v39, 2
    %v478 = vrot.slane %v40, 2
    %v479 = vsel %vm456, %v477, %v478
    %v480 = vrot.slane %v41, 2
    %v481 = vsel %vm456, %v478, %v480
    %v482 = vrot.slane %v42, 2
    %v483 = vrot.slane %v43, 2
    %v484 = vsel %vm456, %v482, %v483
    %v485 = vrot.slane %v44, 2
    %v486 = vsel %vm456, %v483, %v485
    %v487 = vrot.slane %v45, 2
    %v488 = vrot.slane %v46, 2
    %v489 = vsel %vm456, %v487, %v488
    %v490 = vrot.slane %v47, 2
    %v491 = vsel %vm456, %v488, %v490
    %v492 = vrot.slane %v48, 2
    %v493 = vrot.slane %v49, 2
    %v494 = vsel %vm456, %v492, %v493
    %v495 = vrot.slane %v50, 2
    %v496 = vsel %vm456, %v493, %v495
    %v497 = vrot.slane %v51, 2
    %v498 = vrot.slane %v52, 2
    %v499 = vsel %vm456, %v497, %v498
    %v500 = vrot.slane %v53, 2
    %v501 = vsel %vm456, %v498, %v500
    %v502 = vrot.slane %v54, 2
    %v503 = vrot.slane %v55, 2
    %v504 = vsel %vm456, %v502, %v503
    %v505 = vrot.slane %v56, 2
    %v506 = vsel %vm456, %v503, %v505
    %v507 = vrot.slane %v57, 2
    %v508 = vrot.slane %v58, 2
    %v509 = vsel %vm456, %v507, %v508
    %v510 = vrot.slane %v59, 2
    %v511 = vsel %vm456, %v508, %v510
    %v512 = vrot.slane %v60, 2
    %v513 = vrot.slane %v61, 2
    %v514 = vsel %vm456, %v512, %v513
    %v515 = vrot.slane %v62, 2
    %v516 = vsel %vm456, %v513, %v515
    %v517 = vrot.slane %v63, 2
    %v518 = vrot.slane %v64, 2
    %v519 = vsel %vm456, %v517, %v518
    %v520 = vrot.slane %v65, 2
    %v521 = vsel %vm456, %v518, %v520
    %v522 = vrot.slane %v66, 2
    %v523 = vrot.slane %v67, 2
    %v524 = vsel %vm456, %v522, %v523
    %v525 = vrot.slane %v68, 2
    %v526 = vsel %vm456, %v523, %v525
    %v527 = vrot.slane %v69, 2
    %v528 = vrot.slane %v70, 2
    %v529 = vsel %vm456, %v527, %v528
    %v530 = vrot.slane %v71, 2
    %v531 = vsel %vm456, %v528, %v530
    %v532 = vrot.slane %v72, 2
    %v533 = vrot.slane %v73, 2
    %v534 = vsel %vm456, %v532, %v533
    %v535 = vrot.slane %v74, 2
    %v536 = vsel %vm456, %v533, %v535
    %v537 = vrot.slane %v81, 2
    %v538 = vrot.slane %v82, 2
    %v539 = vsel %vm456, %v537, %v538
    %v540 = vrot.slane %v83, 2
    %v541 = vsel %vm456, %v538, %v540
    %v542 = vrot.slane %v84, 2
    %v543 = vrot.slane %v85, 2
    %v544 = vsel %vm456, %v542, %v543
    %v545 = vrot.slane %v86, 2
    %v546 = vsel %vm456, %v543, %v545
    %v547 = vrot.slane %v87, 2
    %v548 = vrot.slane %v88, 2
    %v549 = vsel %vm456, %v547, %v548
    %v550 = vrot.slane %v89, 2
    %v551 = vsel %vm456, %v548, %v550
    %v552 = vrot.slane %v90, 2
    %v553 = vrot.slane %v91, 2
    %v554 = vsel %vm456, %v552, %v553
    %v555 = vrot.slane %v92, 2
    %v556 = vsel %vm456, %v553, %v555
    %v557 = vrot.slane %v93, 2
    %v558 = vrot.slane %v94, 2
    %v559 = vsel %vm456, %v557, %v558
    %v560 = vrot.slane %v95, 2
    %v561 = vsel %vm456, %v558, %v560
    %v562 = vrot.slane %v96, 2
    %v563 = vrot.slane %v97, 2
    %v564 = vsel %vm456, %v562, %v563
    %v565 = vrot.slane %v98, 2
    %v566 = vsel %vm456, %v563, %v565
    %v567 = vrot.slane %v99, 2
    %v568 = vrot.slane %v100, 2
    %v569 = vsel %vm456, %v567, %v568
    %v570 = vrot.slane %v101, 2
    %v571 = vsel %vm456, %v568, %v570
    %v572 = vrot.slane %v102, 2
    %v573 = vrot.slane %v103, 2
    %v574 = vsel %vm456, %v572, %v573
    %v575 = vrot.slane %v104, 2
    %v576 = vsel %vm456, %v573, %v575
    %v577 = vrot.slane %v105, 2
    %v578 = vrot.slane %v106, 2
    %v579 = vsel %vm456, %v577, %v578
    %v580 = vrot.slane %v107, 2
    %v581 = vsel %vm456, %v578, %v580
    %v582 = vrot.slane %v108, 2
    %v583 = vrot.slane %v109, 2
    %v584 = vsel %vm456, %v582, %v583
    %v585 = vrot.slane %v110, 2
    %v586 = vsel %vm456, %v583, %v585
    %v587 = vrot.slane %v111, 2
    %v588 = vrot.slane %v112, 2
    %v589 = vsel %vm456, %v587, %v588
    %v590 = vrot.slane %v113, 2
    %v591 = vsel %vm456, %v588, %v590
    %v592 = vrot.slane %v114, 2
    %v593 = vrot.slane %v115, 2
    %v594 = vsel %vm456, %v592, %v593
    %v595 = vrot.slane %v116, 2
    %v596 = vsel %vm456, %v593, %v595
    %v597 = vrot.slane %v117, 2
    %v598 = vrot.slane %v118, 2
    %v599 = vsel %vm456, %v597, %v598
    %v600 = vrot.slane %v119, 2
    %v601 = vsel %vm456, %v598, %v600
    %v602 = vrot.slane %v120, 2
    %v603 = vrot.slane %v121, 2
    %v604 = vsel %vm456, %v602, %v603
    %v605 = vrot.slane %v122, 2
    %v606 = vsel %vm456, %v603, %v605
    %v607 = vrot.slane %v123, 2
    %v608 = vrot.slane %v124, 2
    %v609 = vsel %vm456, %v607, %v608
    %v610 = vrot.slane %v125, 2
    %v611 = vsel %vm456, %v608, %v610
    %v612 = vrot.slane %v126, 2
    %v613 = vrot.slane %v127, 2
    %v614 = vsel %vm456, %v612, %v613
    %v615 = vrot.slane %v128, 2
    %v616 = vsel %vm456, %v613, %v615
    %v687 = vrot.slane %v75, 1
    %v688 = vrot.slane %v76, 1
    %v689 = vsel %vm231, %v687, %v688
    %v690 = vrot.slane %v77, 1
    %v691 = vsel %vm231, %v688, %v690
    %v692 = vrot.slane %v129, 1
    %v693 = vrot.slane %v130, 1
    %v694 = vsel %vm231, %v692, %v693
    %v695 = vrot.slane %v131, 1
    %v696 = vsel %vm231, %v693, %v695
    %v701 = vrot.slane %v75, 2
    %v702 = vrot.slane %v76, 2
    %v703 = vsel %vm456, %v701, %v702
    %v704 = vrot.slane %v77, 2
    %v705 = vsel %vm456, %v702, %v704
    %v706 = vrot.slane %v129, 2
    %v707 = vrot.slane %v130, 2
    %v708 = vsel %vm456, %v706, %v707
    %v709 = vrot.slane %v131, 2
    %v710 = vsel %vm456, %v707, %v709
    %v721 = vrot.slane %v78, 1
    %v722 = vrot.slane %v79, 1
    %v723 = vsel %vm231, %v721, %v722
    %v724 = vrot.slane %v80, 1
    %v725 = vsel %vm231, %v722, %v724
    %v726 = vrot.slane %v132, 1
    %v727 = vrot.slane %v133, 1
    %v728 = vsel %vm231, %v726, %v727
    %v729 = vrot.slane %v134, 1
    %v730 = vsel %vm231, %v727, %v729
    %v735 = vrot.slane %v78, 2
    %v736 = vrot.slane %v79, 2
    %v737 = vsel %vm456, %v735, %v736
    %v738 = vrot.slane %v80, 2
    %v739 = vsel %vm456, %v736, %v738
    %v740 = vrot.slane %v132, 2
    %v741 = vrot.slane %v133, 2
    %v742 = vsel %vm456, %v740, %v741
    %v743 = vrot.slane %v134, 2
    %v744 = vsel %vm456, %v741, %v743
    %v749 = vpack.c.bf16 %v27, %v27
    %v750 = vpack.c.bf16 %v28, %v28
    %v751 = vpack.c.bf16 %v30, %v30
    %v752 = vpack.c.bf16 %v31, %v31
    %v753 = vpack.c.bf16 %v33, %v33
    %v754 = vpack.c.bf16 %v34, %v34
    %v755 = vpack.c.bf16 %v36, %v36
    %v756 = vpack.c.bf16 %v37, %v37
    %v757 = vpack.c.bf16 %v39, %v39
    %v758 = vpack.c.bf16 %v40, %v40
    %v759 = vpack.c.bf16 %v42, %v42
    %v760 = vpack.c.bf16 %v43, %v43
    %v761 = vpack.c.bf16 %v45, %v45
    %v762 = vpack.c.bf16 %v46, %v46
    %v763 = vpack.c.bf16 %v48, %v48
    %v764 = vpack.c.bf16 %v49, %v49
    %v765 = vpack.c.bf16 %v51, %v51
    %v766 = vpack.c.bf16 %v52, %v52
    %v767 = vpack.c.bf16 %v54, %v54
    %v768 = vpack.c.bf16 %v55, %v55
    %v769 = vpack.c.bf16 %v57, %v57
    %v770 = vpack.c.bf16 %v58, %v58
    %v771 = vpack.c.bf16 %v60, %v60
    %v772 = vpack.c.bf16 %v61, %v61
    %v773 = vpack.c.bf16 %v63, %v63
    %v774 = vpack.c.bf16 %v64, %v64
    %v775 = vpack.c.bf16 %v66, %v66
    %v776 = vpack.c.bf16 %v67, %v67
    %v777 = vpack.c.bf16 %v69, %v69
    %v778 = vpack.c.bf16 %v70, %v70
    %v779 = vpack.c.bf16 %v72, %v72
    %v780 = vpack.c.bf16 %v73, %v73
    %v781 = vpack.c.bf16 %v81, %v81
    %v782 = vpack.c.bf16 %v82, %v82
    %v783 = vpack.c.bf16 %v84, %v84
    %v784 = vpack.c.bf16 %v85, %v85
    %v785 = vpack.c.bf16 %v87, %v87
    %v786 = vpack.c.bf16 %v88, %v88
    %v787 = vpack.c.bf16 %v90, %v90
    %v788 = vpack.c.bf16 %v91, %v91
    %v789 = vpack.c.bf16 %v93, %v93
    %v790 = vpack.c.bf16 %v94, %v94
    %v791 = vpack.c.bf16 %v96, %v96
    %v792 = vpack.c.bf16 %v97, %v97
    %v793 = vpack.c.bf16 %v99, %v99
    %v794 = vpack.c.bf16 %v100, %v100
    %v795 = vpack.c.bf16 %v102, %v102
    %v796 = vpack.c.bf16 %v103, %v103
    %v797 = vpack.c.bf16 %v105, %v105
    %v798 = vpack.c.bf16 %v106, %v106
    %v799 = vpack.c.bf16 %v108, %v108
    %v800 = vpack.c.bf16 %v109, %v109
    %v801 = vpack.c.bf16 %v111, %v111
    %v802 = vpack.c.bf16 %v112, %v112
    %v803 = vpack.c.bf16 %v114, %v114
    %v804 = vpack.c.bf16 %v115, %v115
    %v805 = vpack.c.bf16 %v117, %v117
    %v806 = vpack.c.bf16 %v118, %v118
    %v807 = vpack.c.bf16 %v120, %v120
    %v808 = vpack.c.bf16 %v121, %v121
    %v809 = vpack.c.bf16 %v123, %v123
    %v810 = vpack.c.bf16 %v124, %v124
    %v811 = vpack.c.bf16 %v126, %v126
    %v812 = vpack.c.bf16 %v127, %v127
    %v813 = vpack.c.bf16 %v234, %v234
    %v814 = vpack.c.bf16 %v236, %v236
    %v815 = vpack.c.bf16 %v239, %v239
    %v816 = vpack.c.bf16 %v241, %v241
    %v817 = vpack.c.bf16 %v244, %v244
    %v818 = vpack.c.bf16 %v246, %v246
    %v819 = vpack.c.bf16 %v249, %v249
    %v820 = vpack.c.bf16 %v251, %v251
    %v821 = vpack.c.bf16 %v254, %v254
    %v822 = vpack.c.bf16 %v256, %v256
    %v823 = vpack.c.bf16 %v259, %v259
    %v824 = vpack.c.bf16 %v261, %v261
    %v825 = vpack.c.bf16 %v264, %v264
    %v826 = vpack.c.bf16 %v266, %v266
    %v827 = vpack.c.bf16 %v269, %v269
    %v828 = vpack.c.bf16 %v271, %v271
    %v829 = vpack.c.bf16 %v274, %v274
    %v830 = vpack.c.bf16 %v276, %v276
    %v831 = vpack.c.bf16 %v279, %v279
    %v832 = vpack.c.bf16 %v281, %v281
    %v833 = vpack.c.bf16 %v284, %v284
    %v834 = vpack.c.bf16 %v286, %v286
    %v835 = vpack.c.bf16 %v289, %v289
    %v836 = vpack.c.bf16 %v291, %v291
    %v837 = vpack.c.bf16 %v294, %v294
    %v838 = vpack.c.bf16 %v296, %v296
    %v839 = vpack.c.bf16 %v299, %v299
    %v840 = vpack.c.bf16 %v301, %v301
    %v841 = vpack.c.bf16 %v304, %v304
    %v842 = vpack.c.bf16 %v306, %v306
    %v843 = vpack.c.bf16 %v309, %v309
    %v844 = vpack.c.bf16 %v311, %v311
    %v845 = vpack.c.bf16 %v314, %v314
    %v846 = vpack.c.bf16 %v316, %v316
    %v847 = vpack.c.bf16 %v319, %v319
    %v848 = vpack.c.bf16 %v321, %v321
    %v849 = vpack.c.bf16 %v324, %v324
    %v850 = vpack.c.bf16 %v326, %v326
    %v851 = vpack.c.bf16 %v329, %v329
    %v852 = vpack.c.bf16 %v331, %v331
    %v853 = vpack.c.bf16 %v334, %v334
    %v854 = vpack.c.bf16 %v336, %v336
    %v855 = vpack.c.bf16 %v339, %v339
    %v856 = vpack.c.bf16 %v341, %v341
    %v857 = vpack.c.bf16 %v344, %v344
    %v858 = vpack.c.bf16 %v346, %v346
    %v859 = vpack.c.bf16 %v349, %v349
    %v860 = vpack.c.bf16 %v351, %v351
    %v861 = vpack.c.bf16 %v354, %v354
    %v862 = vpack.c.bf16 %v356, %v356
    %v863 = vpack.c.bf16 %v359, %v359
    %v864 = vpack.c.bf16 %v361, %v361
    %v865 = vpack.c.bf16 %v364, %v364
    %v866 = vpack.c.bf16 %v366, %v366
    %v867 = vpack.c.bf16 %v369, %v369
    %v868 = vpack.c.bf16 %v371, %v371
    %v869 = vpack.c.bf16 %v374, %v374
    %v870 = vpack.c.bf16 %v376, %v376
    %v871 = vpack.c.bf16 %v379, %v379
    %v872 = vpack.c.bf16 %v381, %v381
    %v873 = vpack.c.bf16 %v384, %v384
    %v874 = vpack.c.bf16 %v386, %v386
    %v875 = vpack.c.bf16 %v389, %v389
    %v876 = vpack.c.bf16 %v391, %v391
    %v877 = vpack.c.bf16 %v459, %v459
    %v878 = vpack.c.bf16 %v461, %v461
    %v879 = vpack.c.bf16 %v464, %v464
    %v880 = vpack.c.bf16 %v466, %v466
    %v881 = vpack.c.bf16 %v469, %v469
    %v882 = vpack.c.bf16 %v471, %v471
    %v883 = vpack.c.bf16 %v474, %v474
    %v884 = vpack.c.bf16 %v476, %v476
    %v885 = vpack.c.bf16 %v479, %v479
    %v886 = vpack.c.bf16 %v481, %v481
    %v887 = vpack.c.bf16 %v484, %v484
    %v888 = vpack.c.bf16 %v486, %v486
    %v889 = vpack.c.bf16 %v489, %v489
    %v890 = vpack.c.bf16 %v491, %v491
    %v891 = vpack.c.bf16 %v494, %v494
    %v892 = vpack.c.bf16 %v496, %v496
    %v893 = vpack.c.bf16 %v499, %v499
    %v894 = vpack.c.bf16 %v501, %v501
    %v895 = vpack.c.bf16 %v504, %v504
    %v896 = vpack.c.bf16 %v506, %v506
    %v897 = vpack.c.bf16 %v509, %v509
    %v898 = vpack.c.bf16 %v511, %v511
    %v899 = vpack.c.bf16 %v514, %v514
    %v900 = vpack.c.bf16 %v516, %v516
    %v901 = vpack.c.bf16 %v519, %v519
    %v902 = vpack.c.bf16 %v521, %v521
    %v903 = vpack.c.bf16 %v524, %v524
    %v904 = vpack.c.bf16 %v526, %v526
    %v905 = vpack.c.bf16 %v529, %v529
    %v906 = vpack.c.bf16 %v531, %v531
    %v907 = vpack.c.bf16 %v534, %v534
    %v908 = vpack.c.bf16 %v536, %v536
    %v909 = vpack.c.bf16 %v539, %v539
    %v910 = vpack.c.bf16 %v541, %v541
    %v911 = vpack.c.bf16 %v544, %v544
    %v912 = vpack.c.bf16 %v546, %v546
    %v913 = vpack.c.bf16 %v549, %v549
    %v914 = vpack.c.bf16 %v551, %v551
    %v915 = vpack.c.bf16 %v554, %v554
    %v916 = vpack.c.bf16 %v556, %v556
    %v917 = vpack.c.bf16 %v559, %v559
    %v918 = vpack.c.bf16 %v561, %v561
    %v919 = vpack.c.bf16 %v564, %v564
    %v920 = vpack.c.bf16 %v566, %v566
    %v921 = vpack.c.bf16 %v569, %v569
    %v922 = vpack.c.bf16 %v571, %v571
    %v923 = vpack.c.bf16 %v574, %v574
    %v924 = vpack.c.bf16 %v576, %v576
    %v925 = vpack.c.bf16 %v579, %v579
    %v926 = vpack.c.bf16 %v581, %v581
    %v927 = vpack.c.bf16 %v584, %v584
    %v928 = vpack.c.bf16 %v586, %v586
    %v929 = vpack.c.bf16 %v589, %v589
    %v930 = vpack.c.bf16 %v591, %v591
    %v931 = vpack.c.bf16 %v594, %v594
    %v932 = vpack.c.bf16 %v596, %v596
    %v933 = vpack.c.bf16 %v599, %v599
    %v934 = vpack.c.bf16 %v601, %v601
    %v935 = vpack.c.bf16 %v604, %v604
    %v936 = vpack.c.bf16 %v606, %v606
    %v937 = vpack.c.bf16 %v609, %v609
    %v938 = vpack.c.bf16 %v611, %v611
    %v939 = vpack.c.bf16 %v614, %v614
    %v940 = vpack.c.bf16 %v616, %v616
    %v941 = vpack.c.bf16 %v75, %v75
    %v942 = vpack.c.bf16 %v76, %v76
    %v943 = vpack.c.bf16 %v129, %v129
    %v944 = vpack.c.bf16 %v130, %v130
    %v945 = vpack.c.bf16 %v689, %v689
    %v946 = vpack.c.bf16 %v691, %v691
    %v947 = vpack.c.bf16 %v694, %v694
    %v948 = vpack.c.bf16 %v696, %v696
    %v949 = vpack.c.bf16 %v703, %v703
    %v950 = vpack.c.bf16 %v705, %v705
    %v951 = vpack.c.bf16 %v708, %v708
    %v952 = vpack.c.bf16 %v710, %v710
    %v953 = vpack.c.bf16 %v78, %v78
    %v954 = vpack.c.bf16 %v79, %v79
    %v955 = vpack.c.bf16 %v132, %v132
    %v956 = vpack.c.bf16 %v133, %v133
    %v957 = vpack.c.bf16 %v723, %v723
    %v958 = vpack.c.bf16 %v725, %v725
    %v959 = vpack.c.bf16 %v728, %v728
    %v960 = vpack.c.bf16 %v730, %v730
    %v961 = vpack.c.bf16 %v737, %v737
    %v962 = vpack.c.bf16 %v739, %v739
    %v963 = vpack.c.bf16 %v742, %v742
    %v964 = vpack.c.bf16 %v744, %v744
    %v1029 = vunpack.c.l.b16 %v749
    %v1030 = vunpack.c.l.b16 %v750
    %v1031 = vunpack.c.l.b16 %v751
    %v1032 = vunpack.c.l.b16 %v752
    %v1033 = vunpack.c.l.b16 %v753
    %v1034 = vunpack.c.l.b16 %v754
    %v1035 = vunpack.c.l.b16 %v755
    %v1036 = vunpack.c.l.b16 %v756
    %v1037 = vunpack.c.l.b16 %v757
    %v1038 = vunpack.c.l.b16 %v758
    %v1039 = vunpack.c.l.b16 %v759
    %v1040 = vunpack.c.l.b16 %v760
    %v1041 = vunpack.c.l.b16 %v761
    %v1042 = vunpack.c.l.b16 %v762
    %v1043 = vunpack.c.l.b16 %v763
    %v1044 = vunpack.c.l.b16 %v764
    %v1045 = vunpack.c.l.b16 %v765
    %v1046 = vunpack.c.l.b16 %v766
    %v1047 = vunpack.c.l.b16 %v767
    %v1048 = vunpack.c.l.b16 %v768
    %v1049 = vunpack.c.l.b16 %v769
    %v1050 = vunpack.c.l.b16 %v770
    %v1051 = vunpack.c.l.b16 %v771
    %v1052 = vunpack.c.l.b16 %v772
    %v1053 = vunpack.c.l.b16 %v773
    %v1054 = vunpack.c.l.b16 %v774
    %v1055 = vunpack.c.l.b16 %v775
    %v1056 = vunpack.c.l.b16 %v776
    %v1057 = vunpack.c.l.b16 %v777
    %v1058 = vunpack.c.l.b16 %v778
    %v1059 = vunpack.c.l.b16 %v779
    %v1060 = vunpack.c.l.b16 %v780
    %v1061 = vunpack.c.l.b16 %v781
    %v1062 = vunpack.c.l.b16 %v782
    %v1063 = vunpack.c.l.b16 %v783
    %v1064 = vunpack.c.l.b16 %v784
    %v1065 = vunpack.c.l.b16 %v785
    %v1066 = vunpack.c.l.b16 %v786
    %v1067 = vunpack.c.l.b16 %v787
    %v1068 = vunpack.c.l.b16 %v788
    %v1069 = vunpack.c.l.b16 %v789
    %v1070 = vunpack.c.l.b16 %v790
    %v1071 = vunpack.c.l.b16 %v791
    %v1072 = vunpack.c.l.b16 %v792
    %v1073 = vunpack.c.l.b16 %v793
    %v1074 = vunpack.c.l.b16 %v794
    %v1075 = vunpack.c.l.b16 %v795
    %v1076 = vunpack.c.l.b16 %v796
    %v1077 = vunpack.c.l.b16 %v797
    %v1078 = vunpack.c.l.b16 %v798
    %v1079 = vunpack.c.l.b16 %v799
    %v1080 = vunpack.c.l.b16 %v800
    %v1081 = vunpack.c.l.b16 %v801
    %v1082 = vunpack.c.l.b16 %v802
    %v1083 = vunpack.c.l.b16 %v803
    %v1084 = vunpack.c.l.b16 %v804
    %v1085 = vunpack.c.l.b16 %v805
    %v1086 = vunpack.c.l.b16 %v806
    %v1087 = vunpack.c.l.b16 %v807
    %v1088 = vunpack.c.l.b16 %v808
    %v1089 = vunpack.c.l.b16 %v809
    %v1090 = vunpack.c.l.b16 %v810
    %v1091 = vunpack.c.l.b16 %v811
    %v1092 = vunpack.c.l.b16 %v812
    %v1093 = vpack.c.b16 %v1030, %v1029
    %v1094 = vpack.c.b16 %v1032, %v1031
    %v1095 = vpack.c.b16 %v1034, %v1033
    %v1096 = vpack.c.b16 %v1036, %v1035
    %v1097 = vpack.c.b16 %v1038, %v1037
    %v1098 = vpack.c.b16 %v1040, %v1039
    %v1099 = vpack.c.b16 %v1042, %v1041
    %v1100 = vpack.c.b16 %v1044, %v1043
    %v1101 = vpack.c.b16 %v1046, %v1045
    %v1102 = vpack.c.b16 %v1048, %v1047
    %v1103 = vpack.c.b16 %v1050, %v1049
    %v1104 = vpack.c.b16 %v1052, %v1051
    %v1105 = vpack.c.b16 %v1054, %v1053
    %v1106 = vpack.c.b16 %v1056, %v1055
    %v1107 = vpack.c.b16 %v1058, %v1057
    %v1108 = vpack.c.b16 %v1060, %v1059
    %v1109 = vpack.c.b16 %v1062, %v1061
    %v1110 = vpack.c.b16 %v1064, %v1063
    %v1111 = vpack.c.b16 %v1066, %v1065
    %v1112 = vpack.c.b16 %v1068, %v1067
    %v1113 = vpack.c.b16 %v1070, %v1069
    %v1114 = vpack.c.b16 %v1072, %v1071
    %v1115 = vpack.c.b16 %v1074, %v1073
    %v1116 = vpack.c.b16 %v1076, %v1075
    %v1117 = vpack.c.b16 %v1078, %v1077
    %v1118 = vpack.c.b16 %v1080, %v1079
    %v1119 = vpack.c.b16 %v1082, %v1081
    %v1120 = vpack.c.b16 %v1084, %v1083
    %v1121 = vpack.c.b16 %v1086, %v1085
    %v1122 = vpack.c.b16 %v1088, %v1087
    %v1123 = vpack.c.b16 %v1090, %v1089
    %v1124 = vpack.c.b16 %v1092, %v1091
    %v1221 = vunpack.c.l.b16 %v813
    %v1222 = vunpack.c.l.b16 %v814
    %v1223 = vunpack.c.l.b16 %v815
    %v1224 = vunpack.c.l.b16 %v816
    %v1225 = vunpack.c.l.b16 %v817
    %v1226 = vunpack.c.l.b16 %v818
    %v1227 = vunpack.c.l.b16 %v819
    %v1228 = vunpack.c.l.b16 %v820
    %v1229 = vunpack.c.l.b16 %v821
    %v1230 = vunpack.c.l.b16 %v822
    %v1231 = vunpack.c.l.b16 %v823
    %v1232 = vunpack.c.l.b16 %v824
    %v1233 = vunpack.c.l.b16 %v825
    %v1234 = vunpack.c.l.b16 %v826
    %v1235 = vunpack.c.l.b16 %v827
    %v1236 = vunpack.c.l.b16 %v828
    %v1237 = vunpack.c.l.b16 %v829
    %v1238 = vunpack.c.l.b16 %v830
    %v1239 = vunpack.c.l.b16 %v831
    %v1240 = vunpack.c.l.b16 %v832
    %v1241 = vunpack.c.l.b16 %v833
    %v1242 = vunpack.c.l.b16 %v834
    %v1243 = vunpack.c.l.b16 %v835
    %v1244 = vunpack.c.l.b16 %v836
    %v1245 = vunpack.c.l.b16 %v837
    %v1246 = vunpack.c.l.b16 %v838
    %v1247 = vunpack.c.l.b16 %v839
    %v1248 = vunpack.c.l.b16 %v840
    %v1249 = vunpack.c.l.b16 %v841
    %v1250 = vunpack.c.l.b16 %v842
    %v1251 = vunpack.c.l.b16 %v843
    %v1252 = vunpack.c.l.b16 %v844
    %v1253 = vunpack.c.l.b16 %v845
    %v1254 = vunpack.c.l.b16 %v846
    %v1255 = vunpack.c.l.b16 %v847
    %v1256 = vunpack.c.l.b16 %v848
    %v1257 = vunpack.c.l.b16 %v849
    %v1258 = vunpack.c.l.b16 %v850
    %v1259 = vunpack.c.l.b16 %v851
    %v1260 = vunpack.c.l.b16 %v852
    %v1261 = vunpack.c.l.b16 %v853
    %v1262 = vunpack.c.l.b16 %v854
    %v1263 = vunpack.c.l.b16 %v855
    %v1264 = vunpack.c.l.b16 %v856
    %v1265 = vunpack.c.l.b16 %v857
    %v1266 = vunpack.c.l.b16 %v858
    %v1267 = vunpack.c.l.b16 %v859
    %v1268 = vunpack.c.l.b16 %v860
    %v1269 = vunpack.c.l.b16 %v861
    %v1270 = vunpack.c.l.b16 %v862
    %v1271 = vunpack.c.l.b16 %v863
    %v1272 = vunpack.c.l.b16 %v864
    %v1273 = vunpack.c.l.b16 %v865
    %v1274 = vunpack.c.l.b16 %v866
    %v1275 = vunpack.c.l.b16 %v867
    %v1276 = vunpack.c.l.b16 %v868
    %v1277 = vunpack.c.l.b16 %v869
    %v1278 = vunpack.c.l.b16 %v870
    %v1279 = vunpack.c.l.b16 %v871
    %v1280 = vunpack.c.l.b16 %v872
    %v1281 = vunpack.c.l.b16 %v873
    %v1282 = vunpack.c.l.b16 %v874
    %v1283 = vunpack.c.l.b16 %v875
    %v1284 = vunpack.c.l.b16 %v876
    %v1285 = vpack.c.b16 %v1222, %v1221
    %v1286 = vpack.c.b16 %v1224, %v1223
    %v1287 = vpack.c.b16 %v1226, %v1225
    %v1288 = vpack.c.b16 %v1228, %v1227
    %v1289 = vpack.c.b16 %v1230, %v1229
    %v1290 = vpack.c.b16 %v1232, %v1231
    %v1291 = vpack.c.b16 %v1234, %v1233
    %v1292 = vpack.c.b16 %v1236, %v1235
    %v1293 = vpack.c.b16 %v1238, %v1237
    %v1294 = vpack.c.b16 %v1240, %v1239
    %v1295 = vpack.c.b16 %v1242, %v1241
    %v1296 = vpack.c.b16 %v1244, %v1243
    %v1297 = vpack.c.b16 %v1246, %v1245
    %v1298 = vpack.c.b16 %v1248, %v1247
    %v1299 = vpack.c.b16 %v1250, %v1249
    %v1300 = vpack.c.b16 %v1252, %v1251
    %v1301 = vpack.c.b16 %v1254, %v1253
    %v1302 = vpack.c.b16 %v1256, %v1255
    %v1303 = vpack.c.b16 %v1258, %v1257
    %v1304 = vpack.c.b16 %v1260, %v1259
    %v1305 = vpack.c.b16 %v1262, %v1261
    %v1306 = vpack.c.b16 %v1264, %v1263
    %v1307 = vpack.c.b16 %v1266, %v1265
    %v1308 = vpack.c.b16 %v1268, %v1267
    %v1309 = vpack.c.b16 %v1270, %v1269
    %v1310 = vpack.c.b16 %v1272, %v1271
    %v1311 = vpack.c.b16 %v1274, %v1273
    %v1312 = vpack.c.b16 %v1276, %v1275
    %v1313 = vpack.c.b16 %v1278, %v1277
    %v1314 = vpack.c.b16 %v1280, %v1279
    %v1315 = vpack.c.b16 %v1282, %v1281
    %v1316 = vpack.c.b16 %v1284, %v1283
    %v1413 = vunpack.c.l.b16 %v877
    %v1414 = vunpack.c.l.b16 %v878
    %v1415 = vunpack.c.l.b16 %v879
    %v1416 = vunpack.c.l.b16 %v880
    %v1417 = vunpack.c.l.b16 %v881
    %v1418 = vunpack.c.l.b16 %v882
    %v1419 = vunpack.c.l.b16 %v883
    %v1420 = vunpack.c.l.b16 %v884
    %v1421 = vunpack.c.l.b16 %v885
    %v1422 = vunpack.c.l.b16 %v886
    %v1423 = vunpack.c.l.b16 %v887
    %v1424 = vunpack.c.l.b16 %v888
    %v1425 = vunpack.c.l.b16 %v889
    %v1426 = vunpack.c.l.b16 %v890
    %v1427 = vunpack.c.l.b16 %v891
    %v1428 = vunpack.c.l.b16 %v892
    %v1429 = vunpack.c.l.b16 %v893
    %v1430 = vunpack.c.l.b16 %v894
    %v1431 = vunpack.c.l.b16 %v895
    %v1432 = vunpack.c.l.b16 %v896
    %v1433 = vunpack.c.l.b16 %v897
    %v1434 = vunpack.c.l.b16 %v898
    %v1435 = vunpack.c.l.b16 %v899
    %v1436 = vunpack.c.l.b16 %v900
    %v1437 = vunpack.c.l.b16 %v901
    %v1438 = vunpack.c.l.b16 %v902
    %v1439 = vunpack.c.l.b16 %v903
    %v1440 = vunpack.c.l.b16 %v904
    %v1441 = vunpack.c.l.b16 %v905
    %v1442 = vunpack.c.l.b16 %v906
    %v1443 = vunpack.c.l.b16 %v907
    %v1444 = vunpack.c.l.b16 %v908
    %v1445 = vunpack.c.l.b16 %v909
    %v1446 = vunpack.c.l.b16 %v910
    %v1447 = vunpack.c.l.b16 %v911
    %v1448 = vunpack.c.l.b16 %v912
    %v1449 = vunpack.c.l.b16 %v913
    %v1450 = vunpack.c.l.b16 %v914
    %v1451 = vunpack.c.l.b16 %v915
    %v1452 = vunpack.c.l.b16 %v916
    %v1453 = vunpack.c.l.b16 %v917
    %v1454 = vunpack.c.l.b16 %v918
    %v1455 = vunpack.c.l.b16 %v919
    %v1456 = vunpack.c.l.b16 %v920
    %v1457 = vunpack.c.l.b16 %v921
    %v1458 = vunpack.c.l.b16 %v922
    %v1459 = vunpack.c.l.b16 %v923
    %v1460 = vunpack.c.l.b16 %v924
    %v1461 = vunpack.c.l.b16 %v925
    %v1462 = vunpack.c.l.b16 %v926
    %v1463 = vunpack.c.l.b16 %v927
    %v1464 = vunpack.c.l.b16 %v928
    %v1465 = vunpack.c.l.b16 %v929
    %v1466 = vunpack.c.l.b16 %v930
    %v1467 = vunpack.c.l.b16 %v931
    %v1468 = vunpack.c.l.b16 %v932
    %v1469 = vunpack.c.l.b16 %v933
    %v1470 = vunpack.c.l.b16 %v934
    %v1471 = vunpack.c.l.b16 %v935
    %v1472 = vunpack.c.l.b16 %v936
    %v1473 = vunpack.c.l.b16 %v937
    %v1474 = vunpack.c.l.b16 %v938
    %v1475 = vunpack.c.l.b16 %v939
    %v1476 = vunpack.c.l.b16 %v940
    %v1477 = vpack.c.b16 %v1414, %v1413
    %v1478 = vpack.c.b16 %v1416, %v1415
    %v1479 = vpack.c.b16 %v1418, %v1417
    %v1480 = vpack.c.b16 %v1420, %v1419
    %v1481 = vpack.c.b16 %v1422, %v1421
    %v1482 = vpack.c.b16 %v1424, %v1423
    %v1483 = vpack.c.b16 %v1426, %v1425
    %v1484 = vpack.c.b16 %v1428, %v1427
    %v1485 = vpack.c.b16 %v1430, %v1429
    %v1486 = vpack.c.b16 %v1432, %v1431
    %v1487 = vpack.c.b16 %v1434, %v1433
    %v1488 = vpack.c.b16 %v1436, %v1435
    %v1489 = vpack.c.b16 %v1438, %v1437
    %v1490 = vpack.c.b16 %v1440, %v1439
    %v1491 = vpack.c.b16 %v1442, %v1441
    %v1492 = vpack.c.b16 %v1444, %v1443
    %v1493 = vpack.c.b16 %v1446, %v1445
    %v1494 = vpack.c.b16 %v1448, %v1447
    %v1495 = vpack.c.b16 %v1450, %v1449
    %v1496 = vpack.c.b16 %v1452, %v1451
    %v1497 = vpack.c.b16 %v1454, %v1453
    %v1498 = vpack.c.b16 %v1456, %v1455
    %v1499 = vpack.c.b16 %v1458, %v1457
    %v1500 = vpack.c.b16 %v1460, %v1459
    %v1501 = vpack.c.b16 %v1462, %v1461
    %v1502 = vpack.c.b16 %v1464, %v1463
    %v1503 = vpack.c.b16 %v1466, %v1465
    %v1504 = vpack.c.b16 %v1468, %v1467
    %v1505 = vpack.c.b16 %v1470, %v1469
    %v1506 = vpack.c.b16 %v1472, %v1471
    %v1507 = vpack.c.b16 %v1474, %v1473
    %v1508 = vpack.c.b16 %v1476, %v1475
    %v1545 = vunpack.c.l.b16 %v941
    %v1546 = vunpack.c.l.b16 %v942
    %v1547 = vunpack.c.l.b16 %v943
    %v1548 = vunpack.c.l.b16 %v944
    %v1549 = vpack.c.b16 %v1546, %v1545
    %v1550 = vpack.c.b16 %v1548, %v1547
    %v1557 = vunpack.c.l.b16 %v945
    %v1558 = vunpack.c.l.b16 %v946
    %v1559 = vunpack.c.l.b16 %v947
    %v1560 = vunpack.c.l.b16 %v948
    %v1561 = vpack.c.b16 %v1558, %v1557
    %v1562 = vpack.c.b16 %v1560, %v1559
    %v1569 = vunpack.c.l.b16 %v949
    %v1570 = vunpack.c.l.b16 %v950
    %v1571 = vunpack.c.l.b16 %v951
    %v1572 = vunpack.c.l.b16 %v952
    %v1573 = vpack.c.b16 %v1570, %v1569
    %v1574 = vpack.c.b16 %v1572, %v1571
    %v1581 = vunpack.c.l.b16 %v953
    %v1582 = vunpack.c.l.b16 %v954
    %v1583 = vunpack.c.l.b16 %v955
    %v1584 = vunpack.c.l.b16 %v956
    %v1585 = vpack.c.b16 %v1582, %v1581
    %v1586 = vpack.c.b16 %v1584, %v1583
    %v1593 = vunpack.c.l.b16 %v957
    %v1594 = vunpack.c.l.b16 %v958
    %v1595 = vunpack.c.l.b16 %v959
    %v1596 = vunpack.c.l.b16 %v960
    %v1597 = vpack.c.b16 %v1594, %v1593
    %v1598 = vpack.c.b16 %v1596, %v1595
    %v1605 = vunpack.c.l.b16 %v961
    %v1606 = vunpack.c.l.b16 %v962
    %v1607 = vunpack.c.l.b16 %v963
    %v1608 = vunpack.c.l.b16 %v964
    %v1609 = vpack.c.b16 %v1606, %v1605
    %v1610 = vpack.c.b16 %v1608, %v1607
    %v1613 = vld [vmem:[%s1] sm:$0xf]
    %v1614 = vld [vmem:[%s1 + $0x4] sm:$0xf]
    %v1615 = vld [vmem:[%s1 + $0x8] sm:$0xf]
    %v1616 = vld [vmem:[%s1 + $0xc] sm:$0xf]
    %v1617 = vld [vmem:[%s1 + $0x10] sm:$0xf]
    %v1618 = vld [vmem:[%s1 + $0x14] sm:$0xf]
    %v1619 = vld [vmem:[%s1 + $0x18] sm:$0xf]
    %v1620 = vld [vmem:[%s1 + $0x1c] sm:$0xf]
    %v1621 = vld [vmem:[%s1 + $0x20] sm:$0xf]
    %v1622 = vld [vmem:[%s1 + $0x24] sm:$0xf]
    %v1623 = vld [vmem:[%s1 + $0x28] sm:$0xf]
    %v1624 = vld [vmem:[%s1 + $0x2c] sm:$0xf]
    %v1625 = vld [vmem:[%s1 + $0x30] sm:$0xf]
    %v1626 = vld [vmem:[%s1 + $0x34] sm:$0xf]
    %v1627 = vld [vmem:[%s1 + $0x38] sm:$0xf]
    %v1628 = vld [vmem:[%s1 + $0x3c] sm:$0xf]
    %v1629 = vld [vmem:[%s1 + $0x40] sm:$0xf]
    %v1630 = vld [vmem:[%s1 + $0x44] sm:$0xf]
    %v1631 = vld [vmem:[%s1 + $0x48] sm:$0xf]
    %v1632 = vld [vmem:[%s1 + $0x4c] sm:$0xf]
    %v1633 = vld [vmem:[%s1 + $0x50] sm:$0xf]
    %v1634 = vld [vmem:[%s1 + $0x54] sm:$0xf]
    %v1635 = vld [vmem:[%s1 + $0x58] sm:$0xf]
    %v1636 = vld [vmem:[%s1 + $0x5c] sm:$0xf]
    %v1637 = vld [vmem:[%s1 + $0x60] sm:$0xf]
    %v1638 = vld [vmem:[%s1 + $0x64] sm:$0xf]
    %v1639 = vld [vmem:[%s1 + $0x68] sm:$0xf]
    %v1640 = vld [vmem:[%s1 + $0x6c] sm:$0xf]
    %v1641 = vld [vmem:[%s1 + $0x70] sm:$0xf]
    %v1642 = vld [vmem:[%s1 + $0x74] sm:$0xf]
    %v1643 = vld [vmem:[%s1 + $0x78] sm:$0xf]
    %v1644 = vld [vmem:[%s1 + $0x7c] sm:$0xf]
    %v1645 = vld [vmem:[%s1 + $0x80] sm:$0xf]
    %v1646 = vld [vmem:[%s1 + $0x84] sm:$0xf]
    %v1647 = vld [vmem:[%s1 + $0x88] sm:$0xf]
    %v1648 = vld [vmem:[%s1 + $0x8c] sm:$0xf]
    %v1649 = vld [vmem:[%s1 + $0x90] sm:$0xf]
    %v1650 = vld [vmem:[%s1 + $0x94] sm:$0xf]
    %v1651 = vld [vmem:[%s1 + $0x98] sm:$0xf]
    %v1652 = vld [vmem:[%s1 + $0x9c] sm:$0xf]
    %v1653 = vld [vmem:[%s1 + $0xa0] sm:$0xf]
    %v1654 = vld [vmem:[%s1 + $0xa4] sm:$0xf]
    %v1655 = vld [vmem:[%s1 + $0xa8] sm:$0xf]
    %v1656 = vld [vmem:[%s1 + $0xac] sm:$0xf]
    %v1657 = vld [vmem:[%s1 + $0xb0] sm:$0xf]
    %v1658 = vld [vmem:[%s1 + $0xb4] sm:$0xf]
    %v1659 = vld [vmem:[%s1 + $0xb8] sm:$0xf]
    %v1660 = vld [vmem:[%s1 + $0xbc] sm:$0xf]
    %v1661 = vld [vmem:[%s1 + $0xc0] sm:$0xf]
    %v1662 = vld [vmem:[%s1 + $0xc4] sm:$0xf]
    %v1663 = vld [vmem:[%s1 + $0xc8] sm:$0xf]
    %v1664 = vld [vmem:[%s1 + $0xcc] sm:$0xf]
    %v1665 = vld [vmem:[%s1 + $0xd0] sm:$0xf]
    %v1666 = vld [vmem:[%s1 + $0xd4] sm:$0xf]
    %v1667 = vld [vmem:[%s1 + $0xd8] sm:$0xf]
    %v1668 = vld [vmem:[%s1 + $0xdc] sm:$0xf]
    %v1669 = vld [vmem:[%s1 + $0xe0] sm:$0xf]
    %v1670 = vld [vmem:[%s1 + $0xe4] sm:$0xf]
    %v1671 = vld [vmem:[%s1 + $0xe8] sm:$0xf]
    %v1672 = vld [vmem:[%s1 + $0xec] sm:$0xf]
    %v1673 = vld [vmem:[%s1 + $0xf0] sm:$0xf]
    %v1674 = vld [vmem:[%s1 + $0xf4] sm:$0xf]
    %v1675 = vld [vmem:[%s1 + $0xf8] sm:$0xf]
    %v1676 = vld [vmem:[%s1 + $0xfc] sm:$0xf]
    %v1677 = vld [vmem:[%s1 + $0x100] sm:$0xf]
    %v1678 = vld [vmem:[%s1 + $0x104] sm:$0xf]
    %v1679 = vld [vmem:[%s1 + $0x108] sm:$0xf]
    %v1680 = vld [vmem:[%s1 + $0x10c] sm:$0xf]
    %v1681 = vld [vmem:[%s1 + $0x110] sm:$0xf]
    %v1682 = vld [vmem:[%s1 + $0x114] sm:$0xf]
    %v1683 = vld [vmem:[%s1 + $0x118] sm:$0xf]
    %v1684 = vld [vmem:[%s1 + $0x11c] sm:$0xf]
    %v1685 = vld [vmem:[%s1 + $0x120] sm:$0xf]
    %v1686 = vld [vmem:[%s1 + $0x124] sm:$0xf]
    %v1687 = vld [vmem:[%s1 + $0x128] sm:$0xf]
    %v1688 = vld [vmem:[%s1 + $0x12c] sm:$0xf]
    %v1689 = vld [vmem:[%s1 + $0x130] sm:$0xf]
    %v1690 = vld [vmem:[%s1 + $0x134] sm:$0xf]
    %v1691 = vld [vmem:[%s1 + $0x138] sm:$0xf]
    %v1692 = vld [vmem:[%s1 + $0x13c] sm:$0xf]
    %v1693 = vld [vmem:[%s1 + $0x140] sm:$0xf]
    %v1694 = vld [vmem:[%s1 + $0x144] sm:$0xf]
    %v1695 = vld [vmem:[%s1 + $0x148] sm:$0xf]
    %v1696 = vld [vmem:[%s1 + $0x14c] sm:$0xf]
    %v1697 = vld [vmem:[%s1 + $0x150] sm:$0xf]
    %v1698 = vld [vmem:[%s1 + $0x154] sm:$0xf]
    %v1699 = vld [vmem:[%s1 + $0x158] sm:$0xf]
    %v1700 = vld [vmem:[%s1 + $0x15c] sm:$0xf]
    %v1701 = vld [vmem:[%s1 + $0x160] sm:$0xf]
    %v1702 = vld [vmem:[%s1 + $0x164] sm:$0xf]
    %v1703 = vld [vmem:[%s1 + $0x168] sm:$0xf]
    %v1704 = vld [vmem:[%s1 + $0x16c] sm:$0xf]
    %v1705 = vld [vmem:[%s1 + $0x170] sm:$0xf]
    %v1706 = vld [vmem:[%s1 + $0x174] sm:$0xf]
    %v1707 = vld [vmem:[%s1 + $0x178] sm:$0xf]
    %v1708 = vld [vmem:[%s1 + $0x17c] sm:$0xf]
    %v1709 = vld [vmem:[%s1 + $0x180] sm:$0xf]
    %v1710 = vld [vmem:[%s1 + $0x184] sm:$0xf]
    %v1711 = vld [vmem:[%s1 + $0x188] sm:$0xf]
    %v1712 = vld [vmem:[%s1 + $0x18c] sm:$0xf]
    %v1713 = vld [vmem:[%s1 + $0x190] sm:$0xf]
    %v1714 = vld [vmem:[%s1 + $0x194] sm:$0xf]
    %v1715 = vld [vmem:[%s1 + $0x198] sm:$0xf]
    %v1716 = vld [vmem:[%s1 + $0x19c] sm:$0xf]
    %v1717 = vld [vmem:[%s1 + $0x1a0] sm:$0xf]
    %v1718 = vld [vmem:[%s1 + $0x1a4] sm:$0xf]
    %v1719 = vld [vmem:[%s1 + $0x1a8] sm:$0xf]
    %v1720 = vld [vmem:[%s1 + $0x1ac] sm:$0xf]
    %v1721 = vld [vmem:[%s1 + $0x1b0] sm:$0xf]
    %v1722 = vld [vmem:[%s1 + $0x1b4] sm:$0xf]
    %v1723 = vld [vmem:[%s1 + $0x1b8] sm:$0xf]
    %v1724 = vld [vmem:[%s1 + $0x1bc] sm:$0xf]
    %v1725 = vld [vmem:[%s1 + $0x1c0] sm:$0xf]
    %v1726 = vld [vmem:[%s1 + $0x1c4] sm:$0xf]
    %v1727 = vld [vmem:[%s1 + $0x1c8] sm:$0xf]
    %v1728 = vld [vmem:[%s1 + $0x1cc] sm:$0xf]
    %v1729 = vld [vmem:[%s1 + $0x1d0] sm:$0xf]
    %v1730 = vld [vmem:[%s1 + $0x1d4] sm:$0xf]
    %v1731 = vld [vmem:[%s1 + $0x1d8] sm:$0xf]
    %v1732 = vld [vmem:[%s1 + $0x1dc] sm:$0xf]
    %v1733 = vld [vmem:[%s1 + $0x1e0] sm:$0xf]
    %v1734 = vld [vmem:[%s1 + $0x1e4] sm:$0xf]
    %v1735 = vld [vmem:[%s1 + $0x1e8] sm:$0xf]
    %v1736 = vld [vmem:[%s1 + $0x1ec] sm:$0xf]
    %v1737 = vld [vmem:[%s1 + $0x1f0] sm:$0xf]
    %v1738 = vld [vmem:[%s1 + $0x1f4] sm:$0xf]
    %v1739 = vld [vmem:[%s1 + $0x1f8] sm:$0xf]
    %v1740 = vld [vmem:[%s1 + $0x1fc] sm:$0xf]
    %v1741 = vld [vmem:[%s1 + $0x200] sm:$0xf]
    %v1742 = vld [vmem:[%s1 + $0x204] sm:$0xf]
    %v1743 = vld [vmem:[%s1 + $0x208] sm:$0xf]
    %v1744 = vld [vmem:[%s1 + $0x20c] sm:$0xf]
    %v1745 = vld [vmem:[%s1 + $0x210] sm:$0xf]
    %v1746 = vld [vmem:[%s1 + $0x214] sm:$0xf]
    %v1747 = vld [vmem:[%s1 + $0x218] sm:$0xf]
    %v1748 = vld [vmem:[%s1 + $0x21c] sm:$0xf]
    %v1749 = vld [vmem:[%s1 + $0x220] sm:$0xf]
    %v1750 = vld [vmem:[%s1 + $0x224] sm:$0xf]
    %v1751 = vld [vmem:[%s1 + $0x228] sm:$0xf]
    %v1752 = vld [vmem:[%s1 + $0x22c] sm:$0xf]
    %v1753 = vld [vmem:[%s1 + $0x230] sm:$0xf]
    %v1754 = vld [vmem:[%s1 + $0x234] sm:$0xf]
    %v1755 = vld [vmem:[%s1 + $0x238] sm:$0xf]
    %v1756 = vld [vmem:[%s1 + $0x23c] sm:$0xf]
    %v1901 = vunpack.c.l.b16 %v1613
    %v1902 = vunpack.c.l.b16 %v1614
    %v1903 = vunpack.c.l.b16 %v1615
    %v1904 = vunpack.c.l.b16 %v1616
    %v1905 = vunpack.c.l.b16 %v1617
    %v1906 = vunpack.c.l.b16 %v1618
    %v1907 = vunpack.c.l.b16 %v1619
    %v1908 = vunpack.c.l.b16 %v1620
    %v1909 = vunpack.c.l.b16 %v1621
    %v1910 = vunpack.c.l.b16 %v1622
    %v1911 = vunpack.c.l.b16 %v1623
    %v1912 = vunpack.c.l.b16 %v1624
    %v1913 = vunpack.c.l.b16 %v1625
    %v1914 = vunpack.c.l.b16 %v1626
    %v1915 = vunpack.c.l.b16 %v1627
    %v1916 = vunpack.c.l.b16 %v1628
    %v1917 = vunpack.c.l.b16 %v1629
    %v1918 = vunpack.c.l.b16 %v1630
    %v1919 = vunpack.c.l.b16 %v1631
    %v1920 = vunpack.c.l.b16 %v1632
    %v1921 = vunpack.c.l.b16 %v1633
    %v1922 = vunpack.c.l.b16 %v1634
    %v1923 = vunpack.c.l.b16 %v1635
    %v1924 = vunpack.c.l.b16 %v1636
    %v1925 = vunpack.c.l.b16 %v1637
    %v1926 = vunpack.c.l.b16 %v1638
    %v1927 = vunpack.c.l.b16 %v1639
    %v1928 = vunpack.c.l.b16 %v1640
    %v1929 = vunpack.c.l.b16 %v1641
    %v1930 = vunpack.c.l.b16 %v1642
    %v1931 = vunpack.c.l.b16 %v1643
    %v1932 = vunpack.c.l.b16 %v1644
    %v1933 = vunpack.c.l.b16 %v1645
    %v1934 = vunpack.c.l.b16 %v1646
    %v1935 = vunpack.c.l.b16 %v1647
    %v1936 = vunpack.c.l.b16 %v1648
    %v1937 = vunpack.c.l.b16 %v1649
    %v1938 = vunpack.c.l.b16 %v1650
    %v1939 = vunpack.c.l.b16 %v1651
    %v1940 = vunpack.c.l.b16 %v1652
    %v1941 = vunpack.c.l.b16 %v1653
    %v1942 = vunpack.c.l.b16 %v1654
    %v1943 = vunpack.c.l.b16 %v1655
    %v1944 = vunpack.c.l.b16 %v1656
    %v1945 = vunpack.c.l.b16 %v1657
    %v1946 = vunpack.c.l.b16 %v1658
    %v1947 = vunpack.c.l.b16 %v1659
    %v1948 = vunpack.c.l.b16 %v1660
    %v1949 = vunpack.c.l.b16 %v1661
    %v1950 = vunpack.c.l.b16 %v1662
    %v1951 = vunpack.c.l.b16 %v1663
    %v1952 = vunpack.c.l.b16 %v1664
    %v1953 = vunpack.c.l.b16 %v1665
    %v1954 = vunpack.c.l.b16 %v1666
    %v1955 = vunpack.c.l.b16 %v1667
    %v1956 = vunpack.c.l.b16 %v1668
    %v1957 = vunpack.c.l.b16 %v1669
    %v1958 = vunpack.c.l.b16 %v1670
    %v1959 = vunpack.c.l.b16 %v1671
    %v1960 = vunpack.c.l.b16 %v1672
    %v1961 = vunpack.c.l.b16 %v1673
    %v1962 = vunpack.c.l.b16 %v1674
    %v1963 = vunpack.c.l.b16 %v1675
    %v1964 = vunpack.c.l.b16 %v1676
    %v1965 = vunpack.c.l.b16 %v1677
    %v1966 = vunpack.c.l.b16 %v1678
    %v1967 = vunpack.c.l.b16 %v1679
    %v1968 = vunpack.c.l.b16 %v1680
    %v1969 = vunpack.c.l.b16 %v1681
    %v1970 = vunpack.c.l.b16 %v1682
    %v1971 = vunpack.c.l.b16 %v1683
    %v1972 = vunpack.c.l.b16 %v1684
    %v1973 = vunpack.c.l.b16 %v1685
    %v1974 = vunpack.c.l.b16 %v1686
    %v1975 = vunpack.c.l.b16 %v1687
    %v1976 = vunpack.c.l.b16 %v1688
    %v1977 = vunpack.c.l.b16 %v1689
    %v1978 = vunpack.c.l.b16 %v1690
    %v1979 = vunpack.c.l.b16 %v1691
    %v1980 = vunpack.c.l.b16 %v1692
    %v1981 = vunpack.c.l.b16 %v1693
    %v1982 = vunpack.c.l.b16 %v1694
    %v1983 = vunpack.c.l.b16 %v1695
    %v1984 = vunpack.c.l.b16 %v1696
    %v1985 = vunpack.c.l.b16 %v1697
    %v1986 = vunpack.c.l.b16 %v1698
    %v1987 = vunpack.c.l.b16 %v1699
    %v1988 = vunpack.c.l.b16 %v1700
    %v1989 = vunpack.c.l.b16 %v1701
    %v1990 = vunpack.c.l.b16 %v1702
    %v1991 = vunpack.c.l.b16 %v1703
    %v1992 = vunpack.c.l.b16 %v1704
    %v1993 = vunpack.c.l.b16 %v1705
    %v1994 = vunpack.c.l.b16 %v1706
    %v1995 = vunpack.c.l.b16 %v1707
    %v1996 = vunpack.c.l.b16 %v1708
    %v1997 = vunpack.c.l.b16 %v1709
    %v1998 = vunpack.c.l.b16 %v1710
    %v1999 = vunpack.c.l.b16 %v1711
    %v2000 = vunpack.c.l.b16 %v1712
    %v2001 = vunpack.c.l.b16 %v1713
    %v2002 = vunpack.c.l.b16 %v1714
    %v2003 = vunpack.c.l.b16 %v1715
    %v2004 = vunpack.c.l.b16 %v1716
    %v2005 = vunpack.c.l.b16 %v1717
    %v2006 = vunpack.c.l.b16 %v1718
    %v2007 = vunpack.c.l.b16 %v1719
    %v2008 = vunpack.c.l.b16 %v1720
    %v2009 = vunpack.c.l.b16 %v1721
    %v2010 = vunpack.c.l.b16 %v1722
    %v2011 = vunpack.c.l.b16 %v1723
    %v2012 = vunpack.c.l.b16 %v1724
    %v2013 = vunpack.c.l.b16 %v1725
    %v2014 = vunpack.c.l.b16 %v1726
    %v2015 = vunpack.c.l.b16 %v1727
    %v2016 = vunpack.c.l.b16 %v1728
    %v2017 = vunpack.c.l.b16 %v1729
    %v2018 = vunpack.c.l.b16 %v1730
    %v2019 = vunpack.c.l.b16 %v1731
    %v2020 = vunpack.c.l.b16 %v1732
    %v2021 = vunpack.c.l.b16 %v1733
    %v2022 = vunpack.c.l.b16 %v1734
    %v2023 = vunpack.c.l.b16 %v1735
    %v2024 = vunpack.c.l.b16 %v1736
    %v2025 = vunpack.c.l.b16 %v1737
    %v2026 = vunpack.c.l.b16 %v1738
    %v2027 = vunpack.c.l.b16 %v1739
    %v2028 = vunpack.c.l.b16 %v1740
    %v2029 = vunpack.c.l.b16 %v1741
    %v2030 = vunpack.c.l.b16 %v1742
    %v2031 = vunpack.c.l.b16 %v1743
    %v2032 = vunpack.c.l.b16 %v1744
    %v2033 = vunpack.c.l.b16 %v1745
    %v2034 = vunpack.c.l.b16 %v1746
    %v2035 = vunpack.c.l.b16 %v1747
    %v2036 = vunpack.c.l.b16 %v1748
    %v2037 = vunpack.c.l.b16 %v1749
    %v2038 = vunpack.c.l.b16 %v1750
    %v2039 = vunpack.c.l.b16 %v1751
    %v2040 = vunpack.c.l.b16 %v1752
    %v2041 = vunpack.c.l.b16 %v1753
    %v2042 = vunpack.c.l.b16 %v1754
    %v2043 = vunpack.c.l.b16 %v1755
    %v2044 = vunpack.c.l.b16 %v1756
    %v2045 = vpack.c.b16 %v1902, %v1901
    %v2046 = vpack.c.b16 %v1904, %v1903
    %v2047 = vpack.c.b16 %v1906, %v1905
    %v2048 = vpack.c.b16 %v1908, %v1907
    %v2049 = vpack.c.b16 %v1910, %v1909
    %v2050 = vpack.c.b16 %v1912, %v1911
    %v2051 = vpack.c.b16 %v1914, %v1913
    %v2052 = vpack.c.b16 %v1916, %v1915
    %v2053 = vpack.c.b16 %v1918, %v1917
    %v2054 = vpack.c.b16 %v1920, %v1919
    %v2055 = vpack.c.b16 %v1922, %v1921
    %v2056 = vpack.c.b16 %v1924, %v1923
    %v2057 = vpack.c.b16 %v1926, %v1925
    %v2058 = vpack.c.b16 %v1928, %v1927
    %v2059 = vpack.c.b16 %v1930, %v1929
    %v2060 = vpack.c.b16 %v1932, %v1931
    %v2061 = vpack.c.b16 %v1934, %v1933
    %v2062 = vpack.c.b16 %v1936, %v1935
    %v2063 = vpack.c.b16 %v1938, %v1937
    %v2064 = vpack.c.b16 %v1940, %v1939
    %v2065 = vpack.c.b16 %v1942, %v1941
    %v2066 = vpack.c.b16 %v1944, %v1943
    %v2067 = vpack.c.b16 %v1946, %v1945
    %v2068 = vpack.c.b16 %v1948, %v1947
    %v2069 = vpack.c.b16 %v1950, %v1949
    %v2070 = vpack.c.b16 %v1952, %v1951
    %v2071 = vpack.c.b16 %v1954, %v1953
    %v2072 = vpack.c.b16 %v1956, %v1955
    %v2073 = vpack.c.b16 %v1958, %v1957
    %v2074 = vpack.c.b16 %v1960, %v1959
    %v2075 = vpack.c.b16 %v1962, %v1961
    %v2076 = vpack.c.b16 %v1964, %v1963
    %v2077 = vpack.c.b16 %v1966, %v1965
    %v2078 = vpack.c.b16 %v1968, %v1967
    %v2079 = vpack.c.b16 %v1970, %v1969
    %v2080 = vpack.c.b16 %v1972, %v1971
    %v2081 = vpack.c.b16 %v1974, %v1973
    %v2082 = vpack.c.b16 %v1976, %v1975
    %v2083 = vpack.c.b16 %v1978, %v1977
    %v2084 = vpack.c.b16 %v1980, %v1979
    %v2085 = vpack.c.b16 %v1982, %v1981
    %v2086 = vpack.c.b16 %v1984, %v1983
    %v2087 = vpack.c.b16 %v1986, %v1985
    %v2088 = vpack.c.b16 %v1988, %v1987
    %v2089 = vpack.c.b16 %v1990, %v1989
    %v2090 = vpack.c.b16 %v1992, %v1991
    %v2091 = vpack.c.b16 %v1994, %v1993
    %v2092 = vpack.c.b16 %v1996, %v1995
    %v2093 = vpack.c.b16 %v1998, %v1997
    %v2094 = vpack.c.b16 %v2000, %v1999
    %v2095 = vpack.c.b16 %v2002, %v2001
    %v2096 = vpack.c.b16 %v2004, %v2003
    %v2097 = vpack.c.b16 %v2006, %v2005
    %v2098 = vpack.c.b16 %v2008, %v2007
    %v2099 = vpack.c.b16 %v2010, %v2009
    %v2100 = vpack.c.b16 %v2012, %v2011
    %v2101 = vpack.c.b16 %v2014, %v2013
    %v2102 = vpack.c.b16 %v2016, %v2015
    %v2103 = vpack.c.b16 %v2018, %v2017
    %v2104 = vpack.c.b16 %v2020, %v2019
    %v2105 = vpack.c.b16 %v2022, %v2021
    %v2106 = vpack.c.b16 %v2024, %v2023
    %v2107 = vpack.c.b16 %v2026, %v2025
    %v2108 = vpack.c.b16 %v2028, %v2027
    %v2109 = vpack.c.b16 %v2030, %v2029
    %v2110 = vpack.c.b16 %v2032, %v2031
    %v2111 = vpack.c.b16 %v2034, %v2033
    %v2112 = vpack.c.b16 %v2036, %v2035
    %v2113 = vpack.c.b16 %v2038, %v2037
    %v2114 = vpack.c.b16 %v2040, %v2039
    %v2115 = vpack.c.b16 %v2042, %v2041
    %v2116 = vpack.c.b16 %v2044, %v2043
    %2189 = vmatpush.bf16.msra.mxu0 %v2052
    %2190 = vmatpush.bf16.msra.mxu0 %v2051
    %2191 = vmatpush.bf16.msra.mxu0 %v2050
    %2192 = vmatpush.bf16.msra.mxu0 %v2049
    %2193 = vmatpush.bf16.msra.mxu0 %v2048
    %2194 = vmatpush.bf16.msra.mxu0 %v2047
    %2195 = vmatpush.bf16.msra.mxu0 %v2046
    %2196 = vmatpush.bf16.msra.mxu0 %v2045
    %2197 = vmatmul.bf16.gmra.mxu0 %v1093
    %v2198 = vpop.f32.mrf.mxu0
    %v2199 = vadd.f32 0.0, %v2198
    %v2200 = vpop.f32.mrf.mxu0
    %v2201 = vadd.f32 0.0, %v2200
    %2202 = vmatmul.bf16.gmra.mxu0 %v1094
    %v2203 = vpop.f32.mrf.mxu0
    %v2204 = vadd.f32 0.0, %v2203
    %v2205 = vpop.f32.mrf.mxu0
    %v2206 = vadd.f32 0.0, %v2205
    %2207 = vmatmul.bf16.gmra.mxu0 %v1095
    %v2208 = vpop.f32.mrf.mxu0
    %v2209 = vadd.f32 0.0, %v2208
    %v2210 = vpop.f32.mrf.mxu0
    %v2211 = vadd.f32 0.0, %v2210
    %2212 = vmatmul.bf16.gmra.mxu0 %v1096
    %v2213 = vpop.f32.mrf.mxu0
    %v2214 = vadd.f32 0.0, %v2213
    %v2215 = vpop.f32.mrf.mxu0
    %v2216 = vadd.f32 0.0, %v2215
    %2217 = vmatmul.bf16.gmra.mxu0 %v1097
    %v2218 = vpop.f32.mrf.mxu0
    %v2219 = vadd.f32 0.0, %v2218
    %v2220 = vpop.f32.mrf.mxu0
    %v2221 = vadd.f32 0.0, %v2220
    %2222 = vmatmul.bf16.gmra.mxu0 %v1098
    %v2223 = vpop.f32.mrf.mxu0
    %v2224 = vadd.f32 0.0, %v2223
    %v2225 = vpop.f32.mrf.mxu0
    %v2226 = vadd.f32 0.0, %v2225
    %2227 = vmatmul.bf16.gmra.mxu0 %v1099
    %v2228 = vpop.f32.mrf.mxu0
    %v2229 = vadd.f32 0.0, %v2228
    %v2230 = vpop.f32.mrf.mxu0
    %v2231 = vadd.f32 0.0, %v2230
    %2232 = vmatmul.bf16.gmra.mxu0 %v1100
    %v2233 = vpop.f32.mrf.mxu0
    %v2234 = vadd.f32 0.0, %v2233
    %v2235 = vpop.f32.mrf.mxu0
    %v2236 = vadd.f32 0.0, %v2235
    %2237 = vmatmul.bf16.gmra.mxu0 %v1101
    %v2238 = vpop.f32.mrf.mxu0
    %v2239 = vadd.f32 0.0, %v2238
    %v2240 = vpop.f32.mrf.mxu0
    %v2241 = vadd.f32 0.0, %v2240
    %2242 = vmatmul.bf16.gmra.mxu0 %v1102
    %v2243 = vpop.f32.mrf.mxu0
    %v2244 = vadd.f32 0.0, %v2243
    %v2245 = vpop.f32.mrf.mxu0
    %v2246 = vadd.f32 0.0, %v2245
    %2247 = vmatmul.bf16.gmra.mxu0 %v1103
    %v2248 = vpop.f32.mrf.mxu0
    %v2249 = vadd.f32 0.0, %v2248
    %v2250 = vpop.f32.mrf.mxu0
    %v2251 = vadd.f32 0.0, %v2250
    %2252 = vmatmul.bf16.gmra.mxu0 %v1104
    %v2253 = vpop.f32.mrf.mxu0
    %v2254 = vadd.f32 0.0, %v2253
    %v2255 = vpop.f32.mrf.mxu0
    %v2256 = vadd.f32 0.0, %v2255
    %2257 = vmatmul.bf16.gmra.mxu0 %v1105
    %v2258 = vpop.f32.mrf.mxu0
    %v2259 = vadd.f32 0.0, %v2258
    %v2260 = vpop.f32.mrf.mxu0
    %v2261 = vadd.f32 0.0, %v2260
    %2262 = vmatmul.bf16.gmra.mxu0 %v1106
    %v2263 = vpop.f32.mrf.mxu0
    %v2264 = vadd.f32 0.0, %v2263
    %v2265 = vpop.f32.mrf.mxu0
    %v2266 = vadd.f32 0.0, %v2265
    %2267 = vmatmul.bf16.gmra.mxu0 %v1107
    %v2268 = vpop.f32.mrf.mxu0
    %v2269 = vadd.f32 0.0, %v2268
    %v2270 = vpop.f32.mrf.mxu0
    %v2271 = vadd.f32 0.0, %v2270
    %2272 = vmatmul.bf16.gmra.mxu0 %v1108
    %v2273 = vpop.f32.mrf.mxu0
    %v2274 = vadd.f32 0.0, %v2273
    %v2275 = vpop.f32.mrf.mxu0
    %v2276 = vadd.f32 0.0, %v2275
    %2277 = vmatmul.bf16.gmra.mxu0 %v1109
    %v2278 = vpop.f32.mrf.mxu0
    %v2279 = vadd.f32 0.0, %v2278
    %v2280 = vpop.f32.mrf.mxu0
    %v2281 = vadd.f32 0.0, %v2280
    %2282 = vmatmul.bf16.gmra.mxu0 %v1110
    %v2283 = vpop.f32.mrf.mxu0
    %v2284 = vadd.f32 0.0, %v2283
    %v2285 = vpop.f32.mrf.mxu0
    %v2286 = vadd.f32 0.0, %v2285
    %2287 = vmatmul.bf16.gmra.mxu0 %v1111
    %v2288 = vpop.f32.mrf.mxu0
    %v2289 = vadd.f32 0.0, %v2288
    %v2290 = vpop.f32.mrf.mxu0
    %v2291 = vadd.f32 0.0, %v2290
    %2292 = vmatmul.bf16.gmra.mxu0 %v1112
    %v2293 = vpop.f32.mrf.mxu0
    %v2294 = vadd.f32 0.0, %v2293
    %v2295 = vpop.f32.mrf.mxu0
    %v2296 = vadd.f32 0.0, %v2295
    %2297 = vmatmul.bf16.gmra.mxu0 %v1113
    %v2298 = vpop.f32.mrf.mxu0
    %v2299 = vadd.f32 0.0, %v2298
    %v2300 = vpop.f32.mrf.mxu0
    %v2301 = vadd.f32 0.0, %v2300
    %2302 = vmatmul.bf16.gmra.mxu0 %v1114
    %v2303 = vpop.f32.mrf.mxu0
    %v2304 = vadd.f32 0.0, %v2303
    %v2305 = vpop.f32.mrf.mxu0
    %v2306 = vadd.f32 0.0, %v2305
    %2307 = vmatmul.bf16.gmra.mxu0 %v1115
    %v2308 = vpop.f32.mrf.mxu0
    %v2309 = vadd.f32 0.0, %v2308
    %v2310 = vpop.f32.mrf.mxu0
    %v2311 = vadd.f32 0.0, %v2310
    %2312 = vmatmul.bf16.gmra.mxu0 %v1116
    %v2313 = vpop.f32.mrf.mxu0
    %v2314 = vadd.f32 0.0, %v2313
    %v2315 = vpop.f32.mrf.mxu0
    %v2316 = vadd.f32 0.0, %v2315
    %2317 = vmatmul.bf16.gmra.mxu0 %v1117
    %v2318 = vpop.f32.mrf.mxu0
    %v2319 = vadd.f32 0.0, %v2318
    %v2320 = vpop.f32.mrf.mxu0
    %v2321 = vadd.f32 0.0, %v2320
    %2322 = vmatmul.bf16.gmra.mxu0 %v1118
    %v2323 = vpop.f32.mrf.mxu0
    %v2324 = vadd.f32 0.0, %v2323
    %v2325 = vpop.f32.mrf.mxu0
    %v2326 = vadd.f32 0.0, %v2325
    %2327 = vmatmul.bf16.gmra.mxu0 %v1119
    %v2328 = vpop.f32.mrf.mxu0
    %v2329 = vadd.f32 0.0, %v2328
    %v2330 = vpop.f32.mrf.mxu0
    %v2331 = vadd.f32 0.0, %v2330
    %2332 = vmatmul.bf16.gmra.mxu0 %v1120
    %v2333 = vpop.f32.mrf.mxu0
    %v2334 = vadd.f32 0.0, %v2333
    %v2335 = vpop.f32.mrf.mxu0
    %v2336 = vadd.f32 0.0, %v2335
    %2337 = vmatmul.bf16.gmra.mxu0 %v1121
    %v2338 = vpop.f32.mrf.mxu0
    %v2339 = vadd.f32 0.0, %v2338
    %v2340 = vpop.f32.mrf.mxu0
    %v2341 = vadd.f32 0.0, %v2340
    %2342 = vmatmul.bf16.gmra.mxu0 %v1122
    %v2343 = vpop.f32.mrf.mxu0
    %v2344 = vadd.f32 0.0, %v2343
    %v2345 = vpop.f32.mrf.mxu0
    %v2346 = vadd.f32 0.0, %v2345
    %2347 = vmatmul.bf16.gmra.mxu0 %v1123
    %v2348 = vpop.f32.mrf.mxu0
    %v2349 = vadd.f32 0.0, %v2348
    %v2350 = vpop.f32.mrf.mxu0
    %v2351 = vadd.f32 0.0, %v2350
    %2352 = vmatmul.bf16.gmra.mxu0 %v1124
    %v2353 = vpop.f32.mrf.mxu0
    %v2354 = vadd.f32 0.0, %v2353
    %v2355 = vpop.f32.mrf.mxu0
    %v2356 = vadd.f32 0.0, %v2355
    %2357 = vdwg.mxu0
    %2358 = vmatpush.bf16.msra.mxu0 %v2060
    %2359 = vmatpush.bf16.msra.mxu0 %v2059
    %2360 = vmatpush.bf16.msra.mxu0 %v2058
    %2361 = vmatpush.bf16.msra.mxu0 %v2057
    %2362 = vmatpush.bf16.msra.mxu0 %v2056
    %2363 = vmatpush.bf16.msra.mxu0 %v2055
    %2364 = vmatpush.bf16.msra.mxu0 %v2054
    %2365 = vmatpush.bf16.msra.mxu0 %v2053
    %2366 = vmatmul.bf16.gmra.mxu0 %v1285
    %v2367 = vpop.f32.mrf.mxu0
    %v2368 = vadd.f32 %v2199, %v2367
    %v2369 = vpop.f32.mrf.mxu0
    %v2370 = vadd.f32 %v2201, %v2369
    %2371 = vmatmul.bf16.gmra.mxu0 %v1286
    %v2372 = vpop.f32.mrf.mxu0
    %v2373 = vadd.f32 %v2204, %v2372
    %v2374 = vpop.f32.mrf.mxu0
    %v2375 = vadd.f32 %v2206, %v2374
    %2376 = vmatmul.bf16.gmra.mxu0 %v1287
    %v2377 = vpop.f32.mrf.mxu0
    %v2378 = vadd.f32 %v2209, %v2377
    %v2379 = vpop.f32.mrf.mxu0
    %v2380 = vadd.f32 %v2211, %v2379
    %2381 = vmatmul.bf16.gmra.mxu0 %v1288
    %v2382 = vpop.f32.mrf.mxu0
    %v2383 = vadd.f32 %v2214, %v2382
    %v2384 = vpop.f32.mrf.mxu0
    %v2385 = vadd.f32 %v2216, %v2384
    %2386 = vmatmul.bf16.gmra.mxu0 %v1289
    %v2387 = vpop.f32.mrf.mxu0
    %v2388 = vadd.f32 %v2219, %v2387
    %v2389 = vpop.f32.mrf.mxu0
    %v2390 = vadd.f32 %v2221, %v2389
    %2391 = vmatmul.bf16.gmra.mxu0 %v1290
    %v2392 = vpop.f32.mrf.mxu0
    %v2393 = vadd.f32 %v2224, %v2392
    %v2394 = vpop.f32.mrf.mxu0
    %v2395 = vadd.f32 %v2226, %v2394
    %2396 = vmatmul.bf16.gmra.mxu0 %v1291
    %v2397 = vpop.f32.mrf.mxu0
    %v2398 = vadd.f32 %v2229, %v2397
    %v2399 = vpop.f32.mrf.mxu0
    %v2400 = vadd.f32 %v2231, %v2399
    %2401 = vmatmul.bf16.gmra.mxu0 %v1292
    %v2402 = vpop.f32.mrf.mxu0
    %v2403 = vadd.f32 %v2234, %v2402
    %v2404 = vpop.f32.mrf.mxu0
    %v2405 = vadd.f32 %v2236, %v2404
    %2406 = vmatmul.bf16.gmra.mxu0 %v1293
    %v2407 = vpop.f32.mrf.mxu0
    %v2408 = vadd.f32 %v2239, %v2407
    %v2409 = vpop.f32.mrf.mxu0
    %v2410 = vadd.f32 %v2241, %v2409
    %2411 = vmatmul.bf16.gmra.mxu0 %v1294
    %v2412 = vpop.f32.mrf.mxu0
    %v2413 = vadd.f32 %v2244, %v2412
    %v2414 = vpop.f32.mrf.mxu0
    %v2415 = vadd.f32 %v2246, %v2414
    %2416 = vmatmul.bf16.gmra.mxu0 %v1295
    %v2417 = vpop.f32.mrf.mxu0
    %v2418 = vadd.f32 %v2249, %v2417
    %v2419 = vpop.f32.mrf.mxu0
    %v2420 = vadd.f32 %v2251, %v2419
    %2421 = vmatmul.bf16.gmra.mxu0 %v1296
    %v2422 = vpop.f32.mrf.mxu0
    %v2423 = vadd.f32 %v2254, %v2422
    %v2424 = vpop.f32.mrf.mxu0
    %v2425 = vadd.f32 %v2256, %v2424
    %2426 = vmatmul.bf16.gmra.mxu0 %v1297
    %v2427 = vpop.f32.mrf.mxu0
    %v2428 = vadd.f32 %v2259, %v2427
    %v2429 = vpop.f32.mrf.mxu0
    %v2430 = vadd.f32 %v2261, %v2429
    %2431 = vmatmul.bf16.gmra.mxu0 %v1298
    %v2432 = vpop.f32.mrf.mxu0
    %v2433 = vadd.f32 %v2264, %v2432
    %v2434 = vpop.f32.mrf.mxu0
    %v2435 = vadd.f32 %v2266, %v2434
    %2436 = vmatmul.bf16.gmra.mxu0 %v1299
    %v2437 = vpop.f32.mrf.mxu0
    %v2438 = vadd.f32 %v2269, %v2437
    %v2439 = vpop.f32.mrf.mxu0
    %v2440 = vadd.f32 %v2271, %v2439
    %2441 = vmatmul.bf16.gmra.mxu0 %v1300
    %v2442 = vpop.f32.mrf.mxu0
    %v2443 = vadd.f32 %v2274, %v2442
    %v2444 = vpop.f32.mrf.mxu0
    %v2445 = vadd.f32 %v2276, %v2444
    %2446 = vmatmul.bf16.gmra.mxu0 %v1301
    %v2447 = vpop.f32.mrf.mxu0
    %v2448 = vadd.f32 %v2279, %v2447
    %v2449 = vpop.f32.mrf.mxu0
    %v2450 = vadd.f32 %v2281, %v2449
    %2451 = vmatmul.bf16.gmra.mxu0 %v1302
    %v2452 = vpop.f32.mrf.mxu0
    %v2453 = vadd.f32 %v2284, %v2452
    %v2454 = vpop.f32.mrf.mxu0
    %v2455 = vadd.f32 %v2286, %v2454
    %2456 = vmatmul.bf16.gmra.mxu0 %v1303
    %v2457 = vpop.f32.mrf.mxu0
    %v2458 = vadd.f32 %v2289, %v2457
    %v2459 = vpop.f32.mrf.mxu0
    %v2460 = vadd.f32 %v2291, %v2459
    %2461 = vmatmul.bf16.gmra.mxu0 %v1304
    %v2462 = vpop.f32.mrf.mxu0
    %v2463 = vadd.f32 %v2294, %v2462
    %v2464 = vpop.f32.mrf.mxu0
    %v2465 = vadd.f32 %v2296, %v2464
    %2466 = vmatmul.bf16.gmra.mxu0 %v1305
    %v2467 = vpop.f32.mrf.mxu0
    %v2468 = vadd.f32 %v2299, %v2467
    %v2469 = vpop.f32.mrf.mxu0
    %v2470 = vadd.f32 %v2301, %v2469
    %2471 = vmatmul.bf16.gmra.mxu0 %v1306
    %v2472 = vpop.f32.mrf.mxu0
    %v2473 = vadd.f32 %v2304, %v2472
    %v2474 = vpop.f32.mrf.mxu0
    %v2475 = vadd.f32 %v2306, %v2474
    %2476 = vmatmul.bf16.gmra.mxu0 %v1307
    %v2477 = vpop.f32.mrf.mxu0
    %v2478 = vadd.f32 %v2309, %v2477
    %v2479 = vpop.f32.mrf.mxu0
    %v2480 = vadd.f32 %v2311, %v2479
    %2481 = vmatmul.bf16.gmra.mxu0 %v1308
    %v2482 = vpop.f32.mrf.mxu0
    %v2483 = vadd.f32 %v2314, %v2482
    %v2484 = vpop.f32.mrf.mxu0
    %v2485 = vadd.f32 %v2316, %v2484
    %2486 = vmatmul.bf16.gmra.mxu0 %v1309
    %v2487 = vpop.f32.mrf.mxu0
    %v2488 = vadd.f32 %v2319, %v2487
    %v2489 = vpop.f32.mrf.mxu0
    %v2490 = vadd.f32 %v2321, %v2489
    %2491 = vmatmul.bf16.gmra.mxu0 %v1310
    %v2492 = vpop.f32.mrf.mxu0
    %v2493 = vadd.f32 %v2324, %v2492
    %v2494 = vpop.f32.mrf.mxu0
    %v2495 = vadd.f32 %v2326, %v2494
    %2496 = vmatmul.bf16.gmra.mxu0 %v1311
    %v2497 = vpop.f32.mrf.mxu0
    %v2498 = vadd.f32 %v2329, %v2497
    %v2499 = vpop.f32.mrf.mxu0
    %v2500 = vadd.f32 %v2331, %v2499
    %2501 = vmatmul.bf16.gmra.mxu0 %v1312
    %v2502 = vpop.f32.mrf.mxu0
    %v2503 = vadd.f32 %v2334, %v2502
    %v2504 = vpop.f32.mrf.mxu0
    %v2505 = vadd.f32 %v2336, %v2504
    %2506 = vmatmul.bf16.gmra.mxu0 %v1313
    %v2507 = vpop.f32.mrf.mxu0
    %v2508 = vadd.f32 %v2339, %v2507
    %v2509 = vpop.f32.mrf.mxu0
    %v2510 = vadd.f32 %v2341, %v2509
    %2511 = vmatmul.bf16.gmra.mxu0 %v1314
    %v2512 = vpop.f32.mrf.mxu0
    %v2513 = vadd.f32 %v2344, %v2512
    %v2514 = vpop.f32.mrf.mxu0
    %v2515 = vadd.f32 %v2346, %v2514
    %2516 = vmatmul.bf16.gmra.mxu0 %v1315
    %v2517 = vpop.f32.mrf.mxu0
    %v2518 = vadd.f32 %v2349, %v2517
    %v2519 = vpop.f32.mrf.mxu0
    %v2520 = vadd.f32 %v2351, %v2519
    %2521 = vmatmul.bf16.gmra.mxu0 %v1316
    %v2522 = vpop.f32.mrf.mxu0
    %v2523 = vadd.f32 %v2354, %v2522
    %v2524 = vpop.f32.mrf.mxu0
    %v2525 = vadd.f32 %v2356, %v2524
    %2526 = vdwg.mxu0
    %2527 = vmatpush.bf16.msra.mxu0 %v2068
    %2528 = vmatpush.bf16.msra.mxu0 %v2067
    %2529 = vmatpush.bf16.msra.mxu0 %v2066
    %2530 = vmatpush.bf16.msra.mxu0 %v2065
    %2531 = vmatpush.bf16.msra.mxu0 %v2064
    %2532 = vmatpush.bf16.msra.mxu0 %v2063
    %2533 = vmatpush.bf16.msra.mxu0 %v2062
    %2534 = vmatpush.bf16.msra.mxu0 %v2061
    %2535 = vmatmul.bf16.gmra.mxu0 %v1477
    %v2536 = vpop.f32.mrf.mxu0
    %v2537 = vadd.f32 %v2368, %v2536
    %v2538 = vpop.f32.mrf.mxu0
    %v2539 = vadd.f32 %v2370, %v2538
    %2540 = vmatmul.bf16.gmra.mxu0 %v1478
    %v2541 = vpop.f32.mrf.mxu0
    %v2542 = vadd.f32 %v2373, %v2541
    %v2543 = vpop.f32.mrf.mxu0
    %v2544 = vadd.f32 %v2375, %v2543
    %2545 = vmatmul.bf16.gmra.mxu0 %v1479
    %v2546 = vpop.f32.mrf.mxu0
    %v2547 = vadd.f32 %v2378, %v2546
    %v2548 = vpop.f32.mrf.mxu0
    %v2549 = vadd.f32 %v2380, %v2548
    %2550 = vmatmul.bf16.gmra.mxu0 %v1480
    %v2551 = vpop.f32.mrf.mxu0
    %v2552 = vadd.f32 %v2383, %v2551
    %v2553 = vpop.f32.mrf.mxu0
    %v2554 = vadd.f32 %v2385, %v2553
    %2555 = vmatmul.bf16.gmra.mxu0 %v1481
    %v2556 = vpop.f32.mrf.mxu0
    %v2557 = vadd.f32 %v2388, %v2556
    %v2558 = vpop.f32.mrf.mxu0
    %v2559 = vadd.f32 %v2390, %v2558
    %2560 = vmatmul.bf16.gmra.mxu0 %v1482
    %v2561 = vpop.f32.mrf.mxu0
    %v2562 = vadd.f32 %v2393, %v2561
    %v2563 = vpop.f32.mrf.mxu0
    %v2564 = vadd.f32 %v2395, %v2563
    %2565 = vmatmul.bf16.gmra.mxu0 %v1483
    %v2566 = vpop.f32.mrf.mxu0
    %v2567 = vadd.f32 %v2398, %v2566
    %v2568 = vpop.f32.mrf.mxu0
    %v2569 = vadd.f32 %v2400, %v2568
    %2570 = vmatmul.bf16.gmra.mxu0 %v1484
    %v2571 = vpop.f32.mrf.mxu0
    %v2572 = vadd.f32 %v2403, %v2571
    %v2573 = vpop.f32.mrf.mxu0
    %v2574 = vadd.f32 %v2405, %v2573
    %2575 = vmatmul.bf16.gmra.mxu0 %v1485
    %v2576 = vpop.f32.mrf.mxu0
    %v2577 = vadd.f32 %v2408, %v2576
    %v2578 = vpop.f32.mrf.mxu0
    %v2579 = vadd.f32 %v2410, %v2578
    %2580 = vmatmul.bf16.gmra.mxu0 %v1486
    %v2581 = vpop.f32.mrf.mxu0
    %v2582 = vadd.f32 %v2413, %v2581
    %v2583 = vpop.f32.mrf.mxu0
    %v2584 = vadd.f32 %v2415, %v2583
    %2585 = vmatmul.bf16.gmra.mxu0 %v1487
    %v2586 = vpop.f32.mrf.mxu0
    %v2587 = vadd.f32 %v2418, %v2586
    %v2588 = vpop.f32.mrf.mxu0
    %v2589 = vadd.f32 %v2420, %v2588
    %2590 = vmatmul.bf16.gmra.mxu0 %v1488
    %v2591 = vpop.f32.mrf.mxu0
    %v2592 = vadd.f32 %v2423, %v2591
    %v2593 = vpop.f32.mrf.mxu0
    %v2594 = vadd.f32 %v2425, %v2593
    %2595 = vmatmul.bf16.gmra.mxu0 %v1489
    %v2596 = vpop.f32.mrf.mxu0
    %v2597 = vadd.f32 %v2428, %v2596
    %v2598 = vpop.f32.mrf.mxu0
    %v2599 = vadd.f32 %v2430, %v2598
    %2600 = vmatmul.bf16.gmra.mxu0 %v1490
    %v2601 = vpop.f32.mrf.mxu0
    %v2602 = vadd.f32 %v2433, %v2601
    %v2603 = vpop.f32.mrf.mxu0
    %v2604 = vadd.f32 %v2435, %v2603
    %2605 = vmatmul.bf16.gmra.mxu0 %v1491
    %v2606 = vpop.f32.mrf.mxu0
    %v2607 = vadd.f32 %v2438, %v2606
    %v2608 = vpop.f32.mrf.mxu0
    %v2609 = vadd.f32 %v2440, %v2608
    %2610 = vmatmul.bf16.gmra.mxu0 %v1492
    %v2611 = vpop.f32.mrf.mxu0
    %v2612 = vadd.f32 %v2443, %v2611
    %v2613 = vpop.f32.mrf.mxu0
    %v2614 = vadd.f32 %v2445, %v2613
    %2615 = vmatmul.bf16.gmra.mxu0 %v1493
    %v2616 = vpop.f32.mrf.mxu0
    %v2617 = vadd.f32 %v2448, %v2616
    %v2618 = vpop.f32.mrf.mxu0
    %v2619 = vadd.f32 %v2450, %v2618
    %2620 = vmatmul.bf16.gmra.mxu0 %v1494
    %v2621 = vpop.f32.mrf.mxu0
    %v2622 = vadd.f32 %v2453, %v2621
    %v2623 = vpop.f32.mrf.mxu0
    %v2624 = vadd.f32 %v2455, %v2623
    %2625 = vmatmul.bf16.gmra.mxu0 %v1495
    %v2626 = vpop.f32.mrf.mxu0
    %v2627 = vadd.f32 %v2458, %v2626
    %v2628 = vpop.f32.mrf.mxu0
    %v2629 = vadd.f32 %v2460, %v2628
    %2630 = vmatmul.bf16.gmra.mxu0 %v1496
    %v2631 = vpop.f32.mrf.mxu0
    %v2632 = vadd.f32 %v2463, %v2631
    %v2633 = vpop.f32.mrf.mxu0
    %v2634 = vadd.f32 %v2465, %v2633
    %2635 = vmatmul.bf16.gmra.mxu0 %v1497
    %v2636 = vpop.f32.mrf.mxu0
    %v2637 = vadd.f32 %v2468, %v2636
    %v2638 = vpop.f32.mrf.mxu0
    %v2639 = vadd.f32 %v2470, %v2638
    %2640 = vmatmul.bf16.gmra.mxu0 %v1498
    %v2641 = vpop.f32.mrf.mxu0
    %v2642 = vadd.f32 %v2473, %v2641
    %v2643 = vpop.f32.mrf.mxu0
    %v2644 = vadd.f32 %v2475, %v2643
    %2645 = vmatmul.bf16.gmra.mxu0 %v1499
    %v2646 = vpop.f32.mrf.mxu0
    %v2647 = vadd.f32 %v2478, %v2646
    %v2648 = vpop.f32.mrf.mxu0
    %v2649 = vadd.f32 %v2480, %v2648
    %2650 = vmatmul.bf16.gmra.mxu0 %v1500
    %v2651 = vpop.f32.mrf.mxu0
    %v2652 = vadd.f32 %v2483, %v2651
    %v2653 = vpop.f32.mrf.mxu0
    %v2654 = vadd.f32 %v2485, %v2653
    %2655 = vmatmul.bf16.gmra.mxu0 %v1501
    %v2656 = vpop.f32.mrf.mxu0
    %v2657 = vadd.f32 %v2488, %v2656
    %v2658 = vpop.f32.mrf.mxu0
    %v2659 = vadd.f32 %v2490, %v2658
    %2660 = vmatmul.bf16.gmra.mxu0 %v1502
    %v2661 = vpop.f32.mrf.mxu0
    %v2662 = vadd.f32 %v2493, %v2661
    %v2663 = vpop.f32.mrf.mxu0
    %v2664 = vadd.f32 %v2495, %v2663
    %2665 = vmatmul.bf16.gmra.mxu0 %v1503
    %v2666 = vpop.f32.mrf.mxu0
    %v2667 = vadd.f32 %v2498, %v2666
    %v2668 = vpop.f32.mrf.mxu0
    %v2669 = vadd.f32 %v2500, %v2668
    %2670 = vmatmul.bf16.gmra.mxu0 %v1504
    %v2671 = vpop.f32.mrf.mxu0
    %v2672 = vadd.f32 %v2503, %v2671
    %v2673 = vpop.f32.mrf.mxu0
    %v2674 = vadd.f32 %v2505, %v2673
    %2675 = vmatmul.bf16.gmra.mxu0 %v1505
    %v2676 = vpop.f32.mrf.mxu0
    %v2677 = vadd.f32 %v2508, %v2676
    %v2678 = vpop.f32.mrf.mxu0
    %v2679 = vadd.f32 %v2510, %v2678
    %2680 = vmatmul.bf16.gmra.mxu0 %v1506
    %v2681 = vpop.f32.mrf.mxu0
    %v2682 = vadd.f32 %v2513, %v2681
    %v2683 = vpop.f32.mrf.mxu0
    %v2684 = vadd.f32 %v2515, %v2683
    %2685 = vmatmul.bf16.gmra.mxu0 %v1507
    %v2686 = vpop.f32.mrf.mxu0
    %v2687 = vadd.f32 %v2518, %v2686
    %v2688 = vpop.f32.mrf.mxu0
    %v2689 = vadd.f32 %v2520, %v2688
    %2690 = vmatmul.bf16.gmra.mxu0 %v1508
    %v2691 = vpop.f32.mrf.mxu0
    %v2692 = vadd.f32 %v2523, %v2691
    %v2693 = vpop.f32.mrf.mxu0
    %v2694 = vadd.f32 %v2525, %v2693
    %2695 = vdwg.mxu0
    %2696 = vmatpush.bf16.msra.mxu0 %v2076
    %2697 = vmatpush.bf16.msra.mxu0 %v2075
    %2698 = vmatpush.bf16.msra.mxu0 %v2074
    %2699 = vmatpush.bf16.msra.mxu0 %v2073
    %2700 = vmatpush.bf16.msra.mxu0 %v2072
    %2701 = vmatpush.bf16.msra.mxu0 %v2071
    %2702 = vmatpush.bf16.msra.mxu0 %v2070
    %2703 = vmatpush.bf16.msra.mxu0 %v2069
    %2704 = vmatmul.bf16.gmra.mxu0 %v1094
    %v2705 = vpop.f32.mrf.mxu0
    %v2706 = vadd.f32 %v2537, %v2705
    %v2707 = vpop.f32.mrf.mxu0
    %v2708 = vadd.f32 %v2539, %v2707
    %2709 = vmatmul.bf16.gmra.mxu0 %v1095
    %v2710 = vpop.f32.mrf.mxu0
    %v2711 = vadd.f32 %v2542, %v2710
    %v2712 = vpop.f32.mrf.mxu0
    %v2713 = vadd.f32 %v2544, %v2712
    %2714 = vmatmul.bf16.gmra.mxu0 %v1096
    %v2715 = vpop.f32.mrf.mxu0
    %v2716 = vadd.f32 %v2547, %v2715
    %v2717 = vpop.f32.mrf.mxu0
    %v2718 = vadd.f32 %v2549, %v2717
    %2719 = vmatmul.bf16.gmra.mxu0 %v1097
    %v2720 = vpop.f32.mrf.mxu0
    %v2721 = vadd.f32 %v2552, %v2720
    %v2722 = vpop.f32.mrf.mxu0
    %v2723 = vadd.f32 %v2554, %v2722
    %2724 = vmatmul.bf16.gmra.mxu0 %v1098
    %v2725 = vpop.f32.mrf.mxu0
    %v2726 = vadd.f32 %v2557, %v2725
    %v2727 = vpop.f32.mrf.mxu0
    %v2728 = vadd.f32 %v2559, %v2727
    %2729 = vmatmul.bf16.gmra.mxu0 %v1099
    %v2730 = vpop.f32.mrf.mxu0
    %v2731 = vadd.f32 %v2562, %v2730
    %v2732 = vpop.f32.mrf.mxu0
    %v2733 = vadd.f32 %v2564, %v2732
    %2734 = vmatmul.bf16.gmra.mxu0 %v1100
    %v2735 = vpop.f32.mrf.mxu0
    %v2736 = vadd.f32 %v2567, %v2735
    %v2737 = vpop.f32.mrf.mxu0
    %v2738 = vadd.f32 %v2569, %v2737
    %2739 = vmatmul.bf16.gmra.mxu0 %v1101
    %v2740 = vpop.f32.mrf.mxu0
    %v2741 = vadd.f32 %v2572, %v2740
    %v2742 = vpop.f32.mrf.mxu0
    %v2743 = vadd.f32 %v2574, %v2742
    %2744 = vmatmul.bf16.gmra.mxu0 %v1102
    %v2745 = vpop.f32.mrf.mxu0
    %v2746 = vadd.f32 %v2577, %v2745
    %v2747 = vpop.f32.mrf.mxu0
    %v2748 = vadd.f32 %v2579, %v2747
    %2749 = vmatmul.bf16.gmra.mxu0 %v1103
    %v2750 = vpop.f32.mrf.mxu0
    %v2751 = vadd.f32 %v2582, %v2750
    %v2752 = vpop.f32.mrf.mxu0
    %v2753 = vadd.f32 %v2584, %v2752
    %2754 = vmatmul.bf16.gmra.mxu0 %v1104
    %v2755 = vpop.f32.mrf.mxu0
    %v2756 = vadd.f32 %v2587, %v2755
    %v2757 = vpop.f32.mrf.mxu0
    %v2758 = vadd.f32 %v2589, %v2757
    %2759 = vmatmul.bf16.gmra.mxu0 %v1105
    %v2760 = vpop.f32.mrf.mxu0
    %v2761 = vadd.f32 %v2592, %v2760
    %v2762 = vpop.f32.mrf.mxu0
    %v2763 = vadd.f32 %v2594, %v2762
    %2764 = vmatmul.bf16.gmra.mxu0 %v1106
    %v2765 = vpop.f32.mrf.mxu0
    %v2766 = vadd.f32 %v2597, %v2765
    %v2767 = vpop.f32.mrf.mxu0
    %v2768 = vadd.f32 %v2599, %v2767
    %2769 = vmatmul.bf16.gmra.mxu0 %v1107
    %v2770 = vpop.f32.mrf.mxu0
    %v2771 = vadd.f32 %v2602, %v2770
    %v2772 = vpop.f32.mrf.mxu0
    %v2773 = vadd.f32 %v2604, %v2772
    %2774 = vmatmul.bf16.gmra.mxu0 %v1108
    %v2775 = vpop.f32.mrf.mxu0
    %v2776 = vadd.f32 %v2607, %v2775
    %v2777 = vpop.f32.mrf.mxu0
    %v2778 = vadd.f32 %v2609, %v2777
    %2779 = vmatmul.bf16.gmra.mxu0 %v1549
    %v2780 = vpop.f32.mrf.mxu0
    %v2781 = vadd.f32 %v2612, %v2780
    %v2782 = vpop.f32.mrf.mxu0
    %v2783 = vadd.f32 %v2614, %v2782
    %2784 = vmatmul.bf16.gmra.mxu0 %v1110
    %v2785 = vpop.f32.mrf.mxu0
    %v2786 = vadd.f32 %v2617, %v2785
    %v2787 = vpop.f32.mrf.mxu0
    %v2788 = vadd.f32 %v2619, %v2787
    %2789 = vmatmul.bf16.gmra.mxu0 %v1111
    %v2790 = vpop.f32.mrf.mxu0
    %v2791 = vadd.f32 %v2622, %v2790
    %v2792 = vpop.f32.mrf.mxu0
    %v2793 = vadd.f32 %v2624, %v2792
    %2794 = vmatmul.bf16.gmra.mxu0 %v1112
    %v2795 = vpop.f32.mrf.mxu0
    %v2796 = vadd.f32 %v2627, %v2795
    %v2797 = vpop.f32.mrf.mxu0
    %v2798 = vadd.f32 %v2629, %v2797
    %2799 = vmatmul.bf16.gmra.mxu0 %v1113
    %v2800 = vpop.f32.mrf.mxu0
    %v2801 = vadd.f32 %v2632, %v2800
    %v2802 = vpop.f32.mrf.mxu0
    %v2803 = vadd.f32 %v2634, %v2802
    %2804 = vmatmul.bf16.gmra.mxu0 %v1114
    %v2805 = vpop.f32.mrf.mxu0
    %v2806 = vadd.f32 %v2637, %v2805
    %v2807 = vpop.f32.mrf.mxu0
    %v2808 = vadd.f32 %v2639, %v2807
    %2809 = vmatmul.bf16.gmra.mxu0 %v1115
    %v2810 = vpop.f32.mrf.mxu0
    %v2811 = vadd.f32 %v2642, %v2810
    %v2812 = vpop.f32.mrf.mxu0
    %v2813 = vadd.f32 %v2644, %v2812
    %2814 = vmatmul.bf16.gmra.mxu0 %v1116
    %v2815 = vpop.f32.mrf.mxu0
    %v2816 = vadd.f32 %v2647, %v2815
    %v2817 = vpop.f32.mrf.mxu0
    %v2818 = vadd.f32 %v2649, %v2817
    %2819 = vmatmul.bf16.gmra.mxu0 %v1117
    %v2820 = vpop.f32.mrf.mxu0
    %v2821 = vadd.f32 %v2652, %v2820
    %v2822 = vpop.f32.mrf.mxu0
    %v2823 = vadd.f32 %v2654, %v2822
    %2824 = vmatmul.bf16.gmra.mxu0 %v1118
    %v2825 = vpop.f32.mrf.mxu0
    %v2826 = vadd.f32 %v2657, %v2825
    %v2827 = vpop.f32.mrf.mxu0
    %v2828 = vadd.f32 %v2659, %v2827
    %2829 = vmatmul.bf16.gmra.mxu0 %v1119
    %v2830 = vpop.f32.mrf.mxu0
    %v2831 = vadd.f32 %v2662, %v2830
    %v2832 = vpop.f32.mrf.mxu0
    %v2833 = vadd.f32 %v2664, %v2832
    %2834 = vmatmul.bf16.gmra.mxu0 %v1120
    %v2835 = vpop.f32.mrf.mxu0
    %v2836 = vadd.f32 %v2667, %v2835
    %v2837 = vpop.f32.mrf.mxu0
    %v2838 = vadd.f32 %v2669, %v2837
    %2839 = vmatmul.bf16.gmra.mxu0 %v1121
    %v2840 = vpop.f32.mrf.mxu0
    %v2841 = vadd.f32 %v2672, %v2840
    %v2842 = vpop.f32.mrf.mxu0
    %v2843 = vadd.f32 %v2674, %v2842
    %2844 = vmatmul.bf16.gmra.mxu0 %v1122
    %v2845 = vpop.f32.mrf.mxu0
    %v2846 = vadd.f32 %v2677, %v2845
    %v2847 = vpop.f32.mrf.mxu0
    %v2848 = vadd.f32 %v2679, %v2847
    %2849 = vmatmul.bf16.gmra.mxu0 %v1123
    %v2850 = vpop.f32.mrf.mxu0
    %v2851 = vadd.f32 %v2682, %v2850
    %v2852 = vpop.f32.mrf.mxu0
    %v2853 = vadd.f32 %v2684, %v2852
    %2854 = vmatmul.bf16.gmra.mxu0 %v1124
    %v2855 = vpop.f32.mrf.mxu0
    %v2856 = vadd.f32 %v2687, %v2855
    %v2857 = vpop.f32.mrf.mxu0
    %v2858 = vadd.f32 %v2689, %v2857
    %2859 = vmatmul.bf16.gmra.mxu0 %v1550
    %v2860 = vpop.f32.mrf.mxu0
    %v2861 = vadd.f32 %v2692, %v2860
    %v2862 = vpop.f32.mrf.mxu0
    %v2863 = vadd.f32 %v2694, %v2862
    %2864 = vdwg.mxu0
    %2865 = vmatpush.bf16.msra.mxu0 %v2084
    %2866 = vmatpush.bf16.msra.mxu0 %v2083
    %2867 = vmatpush.bf16.msra.mxu0 %v2082
    %2868 = vmatpush.bf16.msra.mxu0 %v2081
    %2869 = vmatpush.bf16.msra.mxu0 %v2080
    %2870 = vmatpush.bf16.msra.mxu0 %v2079
    %2871 = vmatpush.bf16.msra.mxu0 %v2078
    %2872 = vmatpush.bf16.msra.mxu0 %v2077
    %2873 = vmatmul.bf16.gmra.mxu0 %v1286
    %v2874 = vpop.f32.mrf.mxu0
    %v2875 = vadd.f32 %v2706, %v2874
    %v2876 = vpop.f32.mrf.mxu0
    %v2877 = vadd.f32 %v2708, %v2876
    %2878 = vmatmul.bf16.gmra.mxu0 %v1287
    %v2879 = vpop.f32.mrf.mxu0
    %v2880 = vadd.f32 %v2711, %v2879
    %v2881 = vpop.f32.mrf.mxu0
    %v2882 = vadd.f32 %v2713, %v2881
    %2883 = vmatmul.bf16.gmra.mxu0 %v1288
    %v2884 = vpop.f32.mrf.mxu0
    %v2885 = vadd.f32 %v2716, %v2884
    %v2886 = vpop.f32.mrf.mxu0
    %v2887 = vadd.f32 %v2718, %v2886
    %2888 = vmatmul.bf16.gmra.mxu0 %v1289
    %v2889 = vpop.f32.mrf.mxu0
    %v2890 = vadd.f32 %v2721, %v2889
    %v2891 = vpop.f32.mrf.mxu0
    %v2892 = vadd.f32 %v2723, %v2891
    %2893 = vmatmul.bf16.gmra.mxu0 %v1290
    %v2894 = vpop.f32.mrf.mxu0
    %v2895 = vadd.f32 %v2726, %v2894
    %v2896 = vpop.f32.mrf.mxu0
    %v2897 = vadd.f32 %v2728, %v2896
    %2898 = vmatmul.bf16.gmra.mxu0 %v1291
    %v2899 = vpop.f32.mrf.mxu0
    %v2900 = vadd.f32 %v2731, %v2899
    %v2901 = vpop.f32.mrf.mxu0
    %v2902 = vadd.f32 %v2733, %v2901
    %2903 = vmatmul.bf16.gmra.mxu0 %v1292
    %v2904 = vpop.f32.mrf.mxu0
    %v2905 = vadd.f32 %v2736, %v2904
    %v2906 = vpop.f32.mrf.mxu0
    %v2907 = vadd.f32 %v2738, %v2906
    %2908 = vmatmul.bf16.gmra.mxu0 %v1293
    %v2909 = vpop.f32.mrf.mxu0
    %v2910 = vadd.f32 %v2741, %v2909
    %v2911 = vpop.f32.mrf.mxu0
    %v2912 = vadd.f32 %v2743, %v2911
    %2913 = vmatmul.bf16.gmra.mxu0 %v1294
    %v2914 = vpop.f32.mrf.mxu0
    %v2915 = vadd.f32 %v2746, %v2914
    %v2916 = vpop.f32.mrf.mxu0
    %v2917 = vadd.f32 %v2748, %v2916
    %2918 = vmatmul.bf16.gmra.mxu0 %v1295
    %v2919 = vpop.f32.mrf.mxu0
    %v2920 = vadd.f32 %v2751, %v2919
    %v2921 = vpop.f32.mrf.mxu0
    %v2922 = vadd.f32 %v2753, %v2921
    %2923 = vmatmul.bf16.gmra.mxu0 %v1296
    %v2924 = vpop.f32.mrf.mxu0
    %v2925 = vadd.f32 %v2756, %v2924
    %v2926 = vpop.f32.mrf.mxu0
    %v2927 = vadd.f32 %v2758, %v2926
    %2928 = vmatmul.bf16.gmra.mxu0 %v1297
    %v2929 = vpop.f32.mrf.mxu0
    %v2930 = vadd.f32 %v2761, %v2929
    %v2931 = vpop.f32.mrf.mxu0
    %v2932 = vadd.f32 %v2763, %v2931
    %2933 = vmatmul.bf16.gmra.mxu0 %v1298
    %v2934 = vpop.f32.mrf.mxu0
    %v2935 = vadd.f32 %v2766, %v2934
    %v2936 = vpop.f32.mrf.mxu0
    %v2937 = vadd.f32 %v2768, %v2936
    %2938 = vmatmul.bf16.gmra.mxu0 %v1299
    %v2939 = vpop.f32.mrf.mxu0
    %v2940 = vadd.f32 %v2771, %v2939
    %v2941 = vpop.f32.mrf.mxu0
    %v2942 = vadd.f32 %v2773, %v2941
    %2943 = vmatmul.bf16.gmra.mxu0 %v1300
    %v2944 = vpop.f32.mrf.mxu0
    %v2945 = vadd.f32 %v2776, %v2944
    %v2946 = vpop.f32.mrf.mxu0
    %v2947 = vadd.f32 %v2778, %v2946
    %2948 = vmatmul.bf16.gmra.mxu0 %v1561
    %v2949 = vpop.f32.mrf.mxu0
    %v2950 = vadd.f32 %v2781, %v2949
    %v2951 = vpop.f32.mrf.mxu0
    %v2952 = vadd.f32 %v2783, %v2951
    %2953 = vmatmul.bf16.gmra.mxu0 %v1302
    %v2954 = vpop.f32.mrf.mxu0
    %v2955 = vadd.f32 %v2786, %v2954
    %v2956 = vpop.f32.mrf.mxu0
    %v2957 = vadd.f32 %v2788, %v2956
    %2958 = vmatmul.bf16.gmra.mxu0 %v1303
    %v2959 = vpop.f32.mrf.mxu0
    %v2960 = vadd.f32 %v2791, %v2959
    %v2961 = vpop.f32.mrf.mxu0
    %v2962 = vadd.f32 %v2793, %v2961
    %2963 = vmatmul.bf16.gmra.mxu0 %v1304
    %v2964 = vpop.f32.mrf.mxu0
    %v2965 = vadd.f32 %v2796, %v2964
    %v2966 = vpop.f32.mrf.mxu0
    %v2967 = vadd.f32 %v2798, %v2966
    %2968 = vmatmul.bf16.gmra.mxu0 %v1305
    %v2969 = vpop.f32.mrf.mxu0
    %v2970 = vadd.f32 %v2801, %v2969
    %v2971 = vpop.f32.mrf.mxu0
    %v2972 = vadd.f32 %v2803, %v2971
    %2973 = vmatmul.bf16.gmra.mxu0 %v1306
    %v2974 = vpop.f32.mrf.mxu0
    %v2975 = vadd.f32 %v2806, %v2974
    %v2976 = vpop.f32.mrf.mxu0
    %v2977 = vadd.f32 %v2808, %v2976
    %2978 = vmatmul.bf16.gmra.mxu0 %v1307
    %v2979 = vpop.f32.mrf.mxu0
    %v2980 = vadd.f32 %v2811, %v2979
    %v2981 = vpop.f32.mrf.mxu0
    %v2982 = vadd.f32 %v2813, %v2981
    %2983 = vmatmul.bf16.gmra.mxu0 %v1308
    %v2984 = vpop.f32.mrf.mxu0
    %v2985 = vadd.f32 %v2816, %v2984
    %v2986 = vpop.f32.mrf.mxu0
    %v2987 = vadd.f32 %v2818, %v2986
    %2988 = vmatmul.bf16.gmra.mxu0 %v1309
    %v2989 = vpop.f32.mrf.mxu0
    %v2990 = vadd.f32 %v2821, %v2989
    %v2991 = vpop.f32.mrf.mxu0
    %v2992 = vadd.f32 %v2823, %v2991
    %2993 = vmatmul.bf16.gmra.mxu0 %v1310
    %v2994 = vpop.f32.mrf.mxu0
    %v2995 = vadd.f32 %v2826, %v2994
    %v2996 = vpop.f32.mrf.mxu0
    %v2997 = vadd.f32 %v2828, %v2996
    %2998 = vmatmul.bf16.gmra.mxu0 %v1311
    %v2999 = vpop.f32.mrf.mxu0
    %v3000 = vadd.f32 %v2831, %v2999
    %v3001 = vpop.f32.mrf.mxu0
    %v3002 = vadd.f32 %v2833, %v3001
    %3003 = vmatmul.bf16.gmra.mxu0 %v1312
    %v3004 = vpop.f32.mrf.mxu0
    %v3005 = vadd.f32 %v2836, %v3004
    %v3006 = vpop.f32.mrf.mxu0
    %v3007 = vadd.f32 %v2838, %v3006
    %3008 = vmatmul.bf16.gmra.mxu0 %v1313
    %v3009 = vpop.f32.mrf.mxu0
    %v3010 = vadd.f32 %v2841, %v3009
    %v3011 = vpop.f32.mrf.mxu0
    %v3012 = vadd.f32 %v2843, %v3011
    %3013 = vmatmul.bf16.gmra.mxu0 %v1314
    %v3014 = vpop.f32.mrf.mxu0
    %v3015 = vadd.f32 %v2846, %v3014
    %v3016 = vpop.f32.mrf.mxu0
    %v3017 = vadd.f32 %v2848, %v3016
    %3018 = vmatmul.bf16.gmra.mxu0 %v1315
    %v3019 = vpop.f32.mrf.mxu0
    %v3020 = vadd.f32 %v2851, %v3019
    %v3021 = vpop.f32.mrf.mxu0
    %v3022 = vadd.f32 %v2853, %v3021
    %3023 = vmatmul.bf16.gmra.mxu0 %v1316
    %v3024 = vpop.f32.mrf.mxu0
    %v3025 = vadd.f32 %v2856, %v3024
    %v3026 = vpop.f32.mrf.mxu0
    %v3027 = vadd.f32 %v2858, %v3026
    %3028 = vmatmul.bf16.gmra.mxu0 %v1562
    %v3029 = vpop.f32.mrf.mxu0
    %v3030 = vadd.f32 %v2861, %v3029
    %v3031 = vpop.f32.mrf.mxu0
    %v3032 = vadd.f32 %v2863, %v3031
    %3033 = vdwg.mxu0
    %3034 = vmatpush.bf16.msra.mxu0 %v2092
    %3035 = vmatpush.bf16.msra.mxu0 %v2091
    %3036 = vmatpush.bf16.msra.mxu0 %v2090
    %3037 = vmatpush.bf16.msra.mxu0 %v2089
    %3038 = vmatpush.bf16.msra.mxu0 %v2088
    %3039 = vmatpush.bf16.msra.mxu0 %v2087
    %3040 = vmatpush.bf16.msra.mxu0 %v2086
    %3041 = vmatpush.bf16.msra.mxu0 %v2085
    %3042 = vmatmul.bf16.gmra.mxu0 %v1478
    %v3043 = vpop.f32.mrf.mxu0
    %v3044 = vadd.f32 %v2875, %v3043
    %v3045 = vpop.f32.mrf.mxu0
    %v3046 = vadd.f32 %v2877, %v3045
    %3047 = vmatmul.bf16.gmra.mxu0 %v1479
    %v3048 = vpop.f32.mrf.mxu0
    %v3049 = vadd.f32 %v2880, %v3048
    %v3050 = vpop.f32.mrf.mxu0
    %v3051 = vadd.f32 %v2882, %v3050
    %3052 = vmatmul.bf16.gmra.mxu0 %v1480
    %v3053 = vpop.f32.mrf.mxu0
    %v3054 = vadd.f32 %v2885, %v3053
    %v3055 = vpop.f32.mrf.mxu0
    %v3056 = vadd.f32 %v2887, %v3055
    %3057 = vmatmul.bf16.gmra.mxu0 %v1481
    %v3058 = vpop.f32.mrf.mxu0
    %v3059 = vadd.f32 %v2890, %v3058
    %v3060 = vpop.f32.mrf.mxu0
    %v3061 = vadd.f32 %v2892, %v3060
    %3062 = vmatmul.bf16.gmra.mxu0 %v1482
    %v3063 = vpop.f32.mrf.mxu0
    %v3064 = vadd.f32 %v2895, %v3063
    %v3065 = vpop.f32.mrf.mxu0
    %v3066 = vadd.f32 %v2897, %v3065
    %3067 = vmatmul.bf16.gmra.mxu0 %v1483
    %v3068 = vpop.f32.mrf.mxu0
    %v3069 = vadd.f32 %v2900, %v3068
    %v3070 = vpop.f32.mrf.mxu0
    %v3071 = vadd.f32 %v2902, %v3070
    %3072 = vmatmul.bf16.gmra.mxu0 %v1484
    %v3073 = vpop.f32.mrf.mxu0
    %v3074 = vadd.f32 %v2905, %v3073
    %v3075 = vpop.f32.mrf.mxu0
    %v3076 = vadd.f32 %v2907, %v3075
    %3077 = vmatmul.bf16.gmra.mxu0 %v1485
    %v3078 = vpop.f32.mrf.mxu0
    %v3079 = vadd.f32 %v2910, %v3078
    %v3080 = vpop.f32.mrf.mxu0
    %v3081 = vadd.f32 %v2912, %v3080
    %3082 = vmatmul.bf16.gmra.mxu0 %v1486
    %v3083 = vpop.f32.mrf.mxu0
    %v3084 = vadd.f32 %v2915, %v3083
    %v3085 = vpop.f32.mrf.mxu0
    %v3086 = vadd.f32 %v2917, %v3085
    %3087 = vmatmul.bf16.gmra.mxu0 %v1487
    %v3088 = vpop.f32.mrf.mxu0
    %v3089 = vadd.f32 %v2920, %v3088
    %v3090 = vpop.f32.mrf.mxu0
    %v3091 = vadd.f32 %v2922, %v3090
    %3092 = vmatmul.bf16.gmra.mxu0 %v1488
    %v3093 = vpop.f32.mrf.mxu0
    %v3094 = vadd.f32 %v2925, %v3093
    %v3095 = vpop.f32.mrf.mxu0
    %v3096 = vadd.f32 %v2927, %v3095
    %3097 = vmatmul.bf16.gmra.mxu0 %v1489
    %v3098 = vpop.f32.mrf.mxu0
    %v3099 = vadd.f32 %v2930, %v3098
    %v3100 = vpop.f32.mrf.mxu0
    %v3101 = vadd.f32 %v2932, %v3100
    %3102 = vmatmul.bf16.gmra.mxu0 %v1490
    %v3103 = vpop.f32.mrf.mxu0
    %v3104 = vadd.f32 %v2935, %v3103
    %v3105 = vpop.f32.mrf.mxu0
    %v3106 = vadd.f32 %v2937, %v3105
    %3107 = vmatmul.bf16.gmra.mxu0 %v1491
    %v3108 = vpop.f32.mrf.mxu0
    %v3109 = vadd.f32 %v2940, %v3108
    %v3110 = vpop.f32.mrf.mxu0
    %v3111 = vadd.f32 %v2942, %v3110
    %3112 = vmatmul.bf16.gmra.mxu0 %v1492
    %v3113 = vpop.f32.mrf.mxu0
    %v3114 = vadd.f32 %v2945, %v3113
    %v3115 = vpop.f32.mrf.mxu0
    %v3116 = vadd.f32 %v2947, %v3115
    %3117 = vmatmul.bf16.gmra.mxu0 %v1573
    %v3118 = vpop.f32.mrf.mxu0
    %v3119 = vadd.f32 %v2950, %v3118
    %v3120 = vpop.f32.mrf.mxu0
    %v3121 = vadd.f32 %v2952, %v3120
    %3122 = vmatmul.bf16.gmra.mxu0 %v1494
    %v3123 = vpop.f32.mrf.mxu0
    %v3124 = vadd.f32 %v2955, %v3123
    %v3125 = vpop.f32.mrf.mxu0
    %v3126 = vadd.f32 %v2957, %v3125
    %3127 = vmatmul.bf16.gmra.mxu0 %v1495
    %v3128 = vpop.f32.mrf.mxu0
    %v3129 = vadd.f32 %v2960, %v3128
    %v3130 = vpop.f32.mrf.mxu0
    %v3131 = vadd.f32 %v2962, %v3130
    %3132 = vmatmul.bf16.gmra.mxu0 %v1496
    %v3133 = vpop.f32.mrf.mxu0
    %v3134 = vadd.f32 %v2965, %v3133
    %v3135 = vpop.f32.mrf.mxu0
    %v3136 = vadd.f32 %v2967, %v3135
    %3137 = vmatmul.bf16.gmra.mxu0 %v1497
    %v3138 = vpop.f32.mrf.mxu0
    %v3139 = vadd.f32 %v2970, %v3138
    %v3140 = vpop.f32.mrf.mxu0
    %v3141 = vadd.f32 %v2972, %v3140
    %3142 = vmatmul.bf16.gmra.mxu0 %v1498
    %v3143 = vpop.f32.mrf.mxu0
    %v3144 = vadd.f32 %v2975, %v3143
    %v3145 = vpop.f32.mrf.mxu0
    %v3146 = vadd.f32 %v2977, %v3145
    %3147 = vmatmul.bf16.gmra.mxu0 %v1499
    %v3148 = vpop.f32.mrf.mxu0
    %v3149 = vadd.f32 %v2980, %v3148
    %v3150 = vpop.f32.mrf.mxu0
    %v3151 = vadd.f32 %v2982, %v3150
    %3152 = vmatmul.bf16.gmra.mxu0 %v1500
    %v3153 = vpop.f32.mrf.mxu0
    %v3154 = vadd.f32 %v2985, %v3153
    %v3155 = vpop.f32.mrf.mxu0
    %v3156 = vadd.f32 %v2987, %v3155
    %3157 = vmatmul.bf16.gmra.mxu0 %v1501
    %v3158 = vpop.f32.mrf.mxu0
    %v3159 = vadd.f32 %v2990, %v3158
    %v3160 = vpop.f32.mrf.mxu0
    %v3161 = vadd.f32 %v2992, %v3160
    %3162 = vmatmul.bf16.gmra.mxu0 %v1502
    %v3163 = vpop.f32.mrf.mxu0
    %v3164 = vadd.f32 %v2995, %v3163
    %v3165 = vpop.f32.mrf.mxu0
    %v3166 = vadd.f32 %v2997, %v3165
    %3167 = vmatmul.bf16.gmra.mxu0 %v1503
    %v3168 = vpop.f32.mrf.mxu0
    %v3169 = vadd.f32 %v3000, %v3168
    %v3170 = vpop.f32.mrf.mxu0
    %v3171 = vadd.f32 %v3002, %v3170
    %3172 = vmatmul.bf16.gmra.mxu0 %v1504
    %v3173 = vpop.f32.mrf.mxu0
    %v3174 = vadd.f32 %v3005, %v3173
    %v3175 = vpop.f32.mrf.mxu0
    %v3176 = vadd.f32 %v3007, %v3175
    %3177 = vmatmul.bf16.gmra.mxu0 %v1505
    %v3178 = vpop.f32.mrf.mxu0
    %v3179 = vadd.f32 %v3010, %v3178
    %v3180 = vpop.f32.mrf.mxu0
    %v3181 = vadd.f32 %v3012, %v3180
    %3182 = vmatmul.bf16.gmra.mxu0 %v1506
    %v3183 = vpop.f32.mrf.mxu0
    %v3184 = vadd.f32 %v3015, %v3183
    %v3185 = vpop.f32.mrf.mxu0
    %v3186 = vadd.f32 %v3017, %v3185
    %3187 = vmatmul.bf16.gmra.mxu0 %v1507
    %v3188 = vpop.f32.mrf.mxu0
    %v3189 = vadd.f32 %v3020, %v3188
    %v3190 = vpop.f32.mrf.mxu0
    %v3191 = vadd.f32 %v3022, %v3190
    %3192 = vmatmul.bf16.gmra.mxu0 %v1508
    %v3193 = vpop.f32.mrf.mxu0
    %v3194 = vadd.f32 %v3025, %v3193
    %v3195 = vpop.f32.mrf.mxu0
    %v3196 = vadd.f32 %v3027, %v3195
    %3197 = vmatmul.bf16.gmra.mxu0 %v1574
    %v3198 = vpop.f32.mrf.mxu0
    %v3199 = vadd.f32 %v3030, %v3198
    %v3200 = vpop.f32.mrf.mxu0
    %v3201 = vadd.f32 %v3032, %v3200
    %3202 = vdwg.mxu0
    %3203 = vmatpush.bf16.msra.mxu0 %v2100
    %3204 = vmatpush.bf16.msra.mxu0 %v2099
    %3205 = vmatpush.bf16.msra.mxu0 %v2098
    %3206 = vmatpush.bf16.msra.mxu0 %v2097
    %3207 = vmatpush.bf16.msra.mxu0 %v2096
    %3208 = vmatpush.bf16.msra.mxu0 %v2095
    %3209 = vmatpush.bf16.msra.mxu0 %v2094
    %3210 = vmatpush.bf16.msra.mxu0 %v2093
    %3211 = vmatmul.bf16.gmra.mxu0 %v1095
    %v3212 = vpop.f32.mrf.mxu0
    %v3213 = vadd.f32 %v3044, %v3212
    %v3214 = vpop.f32.mrf.mxu0
    %v3215 = vadd.f32 %v3046, %v3214
    %3216 = vmatmul.bf16.gmra.mxu0 %v1096
    %v3217 = vpop.f32.mrf.mxu0
    %v3218 = vadd.f32 %v3049, %v3217
    %v3219 = vpop.f32.mrf.mxu0
    %v3220 = vadd.f32 %v3051, %v3219
    %3221 = vmatmul.bf16.gmra.mxu0 %v1097
    %v3222 = vpop.f32.mrf.mxu0
    %v3223 = vadd.f32 %v3054, %v3222
    %v3224 = vpop.f32.mrf.mxu0
    %v3225 = vadd.f32 %v3056, %v3224
    %3226 = vmatmul.bf16.gmra.mxu0 %v1098
    %v3227 = vpop.f32.mrf.mxu0
    %v3228 = vadd.f32 %v3059, %v3227
    %v3229 = vpop.f32.mrf.mxu0
    %v3230 = vadd.f32 %v3061, %v3229
    %3231 = vmatmul.bf16.gmra.mxu0 %v1099
    %v3232 = vpop.f32.mrf.mxu0
    %v3233 = vadd.f32 %v3064, %v3232
    %v3234 = vpop.f32.mrf.mxu0
    %v3235 = vadd.f32 %v3066, %v3234
    %3236 = vmatmul.bf16.gmra.mxu0 %v1100
    %v3237 = vpop.f32.mrf.mxu0
    %v3238 = vadd.f32 %v3069, %v3237
    %v3239 = vpop.f32.mrf.mxu0
    %v3240 = vadd.f32 %v3071, %v3239
    %3241 = vmatmul.bf16.gmra.mxu0 %v1101
    %v3242 = vpop.f32.mrf.mxu0
    %v3243 = vadd.f32 %v3074, %v3242
    %v3244 = vpop.f32.mrf.mxu0
    %v3245 = vadd.f32 %v3076, %v3244
    %3246 = vmatmul.bf16.gmra.mxu0 %v1102
    %v3247 = vpop.f32.mrf.mxu0
    %v3248 = vadd.f32 %v3079, %v3247
    %v3249 = vpop.f32.mrf.mxu0
    %v3250 = vadd.f32 %v3081, %v3249
    %3251 = vmatmul.bf16.gmra.mxu0 %v1103
    %v3252 = vpop.f32.mrf.mxu0
    %v3253 = vadd.f32 %v3084, %v3252
    %v3254 = vpop.f32.mrf.mxu0
    %v3255 = vadd.f32 %v3086, %v3254
    %3256 = vmatmul.bf16.gmra.mxu0 %v1104
    %v3257 = vpop.f32.mrf.mxu0
    %v3258 = vadd.f32 %v3089, %v3257
    %v3259 = vpop.f32.mrf.mxu0
    %v3260 = vadd.f32 %v3091, %v3259
    %3261 = vmatmul.bf16.gmra.mxu0 %v1105
    %v3262 = vpop.f32.mrf.mxu0
    %v3263 = vadd.f32 %v3094, %v3262
    %v3264 = vpop.f32.mrf.mxu0
    %v3265 = vadd.f32 %v3096, %v3264
    %3266 = vmatmul.bf16.gmra.mxu0 %v1106
    %v3267 = vpop.f32.mrf.mxu0
    %v3268 = vadd.f32 %v3099, %v3267
    %v3269 = vpop.f32.mrf.mxu0
    %v3270 = vadd.f32 %v3101, %v3269
    %3271 = vmatmul.bf16.gmra.mxu0 %v1107
    %v3272 = vpop.f32.mrf.mxu0
    %v3273 = vadd.f32 %v3104, %v3272
    %v3274 = vpop.f32.mrf.mxu0
    %v3275 = vadd.f32 %v3106, %v3274
    %3276 = vmatmul.bf16.gmra.mxu0 %v1108
    %v3277 = vpop.f32.mrf.mxu0
    %v3278 = vadd.f32 %v3109, %v3277
    %v3279 = vpop.f32.mrf.mxu0
    %v3280 = vadd.f32 %v3111, %v3279
    %3281 = vmatmul.bf16.gmra.mxu0 %v1549
    %v3282 = vpop.f32.mrf.mxu0
    %v3283 = vadd.f32 %v3114, %v3282
    %v3284 = vpop.f32.mrf.mxu0
    %v3285 = vadd.f32 %v3116, %v3284
    %3286 = vmatmul.bf16.gmra.mxu0 %v1585
    %v3287 = vpop.f32.mrf.mxu0
    %v3288 = vadd.f32 %v3119, %v3287
    %v3289 = vpop.f32.mrf.mxu0
    %v3290 = vadd.f32 %v3121, %v3289
    %3291 = vmatmul.bf16.gmra.mxu0 %v1111
    %v3292 = vpop.f32.mrf.mxu0
    %v3293 = vadd.f32 %v3124, %v3292
    %v3294 = vpop.f32.mrf.mxu0
    %v3295 = vadd.f32 %v3126, %v3294
    %3296 = vmatmul.bf16.gmra.mxu0 %v1112
    %v3297 = vpop.f32.mrf.mxu0
    %v3298 = vadd.f32 %v3129, %v3297
    %v3299 = vpop.f32.mrf.mxu0
    %v3300 = vadd.f32 %v3131, %v3299
    %3301 = vmatmul.bf16.gmra.mxu0 %v1113
    %v3302 = vpop.f32.mrf.mxu0
    %v3303 = vadd.f32 %v3134, %v3302
    %v3304 = vpop.f32.mrf.mxu0
    %v3305 = vadd.f32 %v3136, %v3304
    %3306 = vmatmul.bf16.gmra.mxu0 %v1114
    %v3307 = vpop.f32.mrf.mxu0
    %v3308 = vadd.f32 %v3139, %v3307
    %v3309 = vpop.f32.mrf.mxu0
    %v3310 = vadd.f32 %v3141, %v3309
    %3311 = vmatmul.bf16.gmra.mxu0 %v1115
    %v3312 = vpop.f32.mrf.mxu0
    %v3313 = vadd.f32 %v3144, %v3312
    %v3314 = vpop.f32.mrf.mxu0
    %v3315 = vadd.f32 %v3146, %v3314
    %3316 = vmatmul.bf16.gmra.mxu0 %v1116
    %v3317 = vpop.f32.mrf.mxu0
    %v3318 = vadd.f32 %v3149, %v3317
    %v3319 = vpop.f32.mrf.mxu0
    %v3320 = vadd.f32 %v3151, %v3319
    %3321 = vmatmul.bf16.gmra.mxu0 %v1117
    %v3322 = vpop.f32.mrf.mxu0
    %v3323 = vadd.f32 %v3154, %v3322
    %v3324 = vpop.f32.mrf.mxu0
    %v3325 = vadd.f32 %v3156, %v3324
    %3326 = vmatmul.bf16.gmra.mxu0 %v1118
    %v3327 = vpop.f32.mrf.mxu0
    %v3328 = vadd.f32 %v3159, %v3327
    %v3329 = vpop.f32.mrf.mxu0
    %v3330 = vadd.f32 %v3161, %v3329
    %3331 = vmatmul.bf16.gmra.mxu0 %v1119
    %v3332 = vpop.f32.mrf.mxu0
    %v3333 = vadd.f32 %v3164, %v3332
    %v3334 = vpop.f32.mrf.mxu0
    %v3335 = vadd.f32 %v3166, %v3334
    %3336 = vmatmul.bf16.gmra.mxu0 %v1120
    %v3337 = vpop.f32.mrf.mxu0
    %v3338 = vadd.f32 %v3169, %v3337
    %v3339 = vpop.f32.mrf.mxu0
    %v3340 = vadd.f32 %v3171, %v3339
    %3341 = vmatmul.bf16.gmra.mxu0 %v1121
    %v3342 = vpop.f32.mrf.mxu0
    %v3343 = vadd.f32 %v3174, %v3342
    %v3344 = vpop.f32.mrf.mxu0
    %v3345 = vadd.f32 %v3176, %v3344
    %3346 = vmatmul.bf16.gmra.mxu0 %v1122
    %v3347 = vpop.f32.mrf.mxu0
    %v3348 = vadd.f32 %v3179, %v3347
    %v3349 = vpop.f32.mrf.mxu0
    %v3350 = vadd.f32 %v3181, %v3349
    %3351 = vmatmul.bf16.gmra.mxu0 %v1123
    %v3352 = vpop.f32.mrf.mxu0
    %v3353 = vadd.f32 %v3184, %v3352
    %v3354 = vpop.f32.mrf.mxu0
    %v3355 = vadd.f32 %v3186, %v3354
    %3356 = vmatmul.bf16.gmra.mxu0 %v1124
    %v3357 = vpop.f32.mrf.mxu0
    %v3358 = vadd.f32 %v3189, %v3357
    %v3359 = vpop.f32.mrf.mxu0
    %v3360 = vadd.f32 %v3191, %v3359
    %3361 = vmatmul.bf16.gmra.mxu0 %v1550
    %v3362 = vpop.f32.mrf.mxu0
    %v3363 = vadd.f32 %v3194, %v3362
    %v3364 = vpop.f32.mrf.mxu0
    %v3365 = vadd.f32 %v3196, %v3364
    %3366 = vmatmul.bf16.gmra.mxu0 %v1586
    %v3367 = vpop.f32.mrf.mxu0
    %v3368 = vadd.f32 %v3199, %v3367
    %v3369 = vpop.f32.mrf.mxu0
    %v3370 = vadd.f32 %v3201, %v3369
    %3371 = vdwg.mxu0
    %3372 = vmatpush.bf16.msra.mxu0 %v2108
    %3373 = vmatpush.bf16.msra.mxu0 %v2107
    %3374 = vmatpush.bf16.msra.mxu0 %v2106
    %3375 = vmatpush.bf16.msra.mxu0 %v2105
    %3376 = vmatpush.bf16.msra.mxu0 %v2104
    %3377 = vmatpush.bf16.msra.mxu0 %v2103
    %3378 = vmatpush.bf16.msra.mxu0 %v2102
    %3379 = vmatpush.bf16.msra.mxu0 %v2101
    %3380 = vmatmul.bf16.gmra.mxu0 %v1287
    %v3381 = vpop.f32.mrf.mxu0
    %v3382 = vadd.f32 %v3213, %v3381
    %v3383 = vpop.f32.mrf.mxu0
    %v3384 = vadd.f32 %v3215, %v3383
    %3385 = vmatmul.bf16.gmra.mxu0 %v1288
    %v3386 = vpop.f32.mrf.mxu0
    %v3387 = vadd.f32 %v3218, %v3386
    %v3388 = vpop.f32.mrf.mxu0
    %v3389 = vadd.f32 %v3220, %v3388
    %3390 = vmatmul.bf16.gmra.mxu0 %v1289
    %v3391 = vpop.f32.mrf.mxu0
    %v3392 = vadd.f32 %v3223, %v3391
    %v3393 = vpop.f32.mrf.mxu0
    %v3394 = vadd.f32 %v3225, %v3393
    %3395 = vmatmul.bf16.gmra.mxu0 %v1290
    %v3396 = vpop.f32.mrf.mxu0
    %v3397 = vadd.f32 %v3228, %v3396
    %v3398 = vpop.f32.mrf.mxu0
    %v3399 = vadd.f32 %v3230, %v3398
    %3400 = vmatmul.bf16.gmra.mxu0 %v1291
    %v3401 = vpop.f32.mrf.mxu0
    %v3402 = vadd.f32 %v3233, %v3401
    %v3403 = vpop.f32.mrf.mxu0
    %v3404 = vadd.f32 %v3235, %v3403
    %3405 = vmatmul.bf16.gmra.mxu0 %v1292
    %v3406 = vpop.f32.mrf.mxu0
    %v3407 = vadd.f32 %v3238, %v3406
    %v3408 = vpop.f32.mrf.mxu0
    %v3409 = vadd.f32 %v3240, %v3408
    %3410 = vmatmul.bf16.gmra.mxu0 %v1293
    %v3411 = vpop.f32.mrf.mxu0
    %v3412 = vadd.f32 %v3243, %v3411
    %v3413 = vpop.f32.mrf.mxu0
    %v3414 = vadd.f32 %v3245, %v3413
    %3415 = vmatmul.bf16.gmra.mxu0 %v1294
    %v3416 = vpop.f32.mrf.mxu0
    %v3417 = vadd.f32 %v3248, %v3416
    %v3418 = vpop.f32.mrf.mxu0
    %v3419 = vadd.f32 %v3250, %v3418
    %3420 = vmatmul.bf16.gmra.mxu0 %v1295
    %v3421 = vpop.f32.mrf.mxu0
    %v3422 = vadd.f32 %v3253, %v3421
    %v3423 = vpop.f32.mrf.mxu0
    %v3424 = vadd.f32 %v3255, %v3423
    %3425 = vmatmul.bf16.gmra.mxu0 %v1296
    %v3426 = vpop.f32.mrf.mxu0
    %v3427 = vadd.f32 %v3258, %v3426
    %v3428 = vpop.f32.mrf.mxu0
    %v3429 = vadd.f32 %v3260, %v3428
    %3430 = vmatmul.bf16.gmra.mxu0 %v1297
    %v3431 = vpop.f32.mrf.mxu0
    %v3432 = vadd.f32 %v3263, %v3431
    %v3433 = vpop.f32.mrf.mxu0
    %v3434 = vadd.f32 %v3265, %v3433
    %3435 = vmatmul.bf16.gmra.mxu0 %v1298
    %v3436 = vpop.f32.mrf.mxu0
    %v3437 = vadd.f32 %v3268, %v3436
    %v3438 = vpop.f32.mrf.mxu0
    %v3439 = vadd.f32 %v3270, %v3438
    %3440 = vmatmul.bf16.gmra.mxu0 %v1299
    %v3441 = vpop.f32.mrf.mxu0
    %v3442 = vadd.f32 %v3273, %v3441
    %v3443 = vpop.f32.mrf.mxu0
    %v3444 = vadd.f32 %v3275, %v3443
    %3445 = vmatmul.bf16.gmra.mxu0 %v1300
    %v3446 = vpop.f32.mrf.mxu0
    %v3447 = vadd.f32 %v3278, %v3446
    %v3448 = vpop.f32.mrf.mxu0
    %v3449 = vadd.f32 %v3280, %v3448
    %3450 = vmatmul.bf16.gmra.mxu0 %v1561
    %v3451 = vpop.f32.mrf.mxu0
    %v3452 = vadd.f32 %v3283, %v3451
    %v3453 = vpop.f32.mrf.mxu0
    %v3454 = vadd.f32 %v3285, %v3453
    %3455 = vmatmul.bf16.gmra.mxu0 %v1597
    %v3456 = vpop.f32.mrf.mxu0
    %v3457 = vadd.f32 %v3288, %v3456
    %v3458 = vpop.f32.mrf.mxu0
    %v3459 = vadd.f32 %v3290, %v3458
    %3460 = vmatmul.bf16.gmra.mxu0 %v1303
    %v3461 = vpop.f32.mrf.mxu0
    %v3462 = vadd.f32 %v3293, %v3461
    %v3463 = vpop.f32.mrf.mxu0
    %v3464 = vadd.f32 %v3295, %v3463
    %3465 = vmatmul.bf16.gmra.mxu0 %v1304
    %v3466 = vpop.f32.mrf.mxu0
    %v3467 = vadd.f32 %v3298, %v3466
    %v3468 = vpop.f32.mrf.mxu0
    %v3469 = vadd.f32 %v3300, %v3468
    %3470 = vmatmul.bf16.gmra.mxu0 %v1305
    %v3471 = vpop.f32.mrf.mxu0
    %v3472 = vadd.f32 %v3303, %v3471
    %v3473 = vpop.f32.mrf.mxu0
    %v3474 = vadd.f32 %v3305, %v3473
    %3475 = vmatmul.bf16.gmra.mxu0 %v1306
    %v3476 = vpop.f32.mrf.mxu0
    %v3477 = vadd.f32 %v3308, %v3476
    %v3478 = vpop.f32.mrf.mxu0
    %v3479 = vadd.f32 %v3310, %v3478
    %3480 = vmatmul.bf16.gmra.mxu0 %v1307
    %v3481 = vpop.f32.mrf.mxu0
    %v3482 = vadd.f32 %v3313, %v3481
    %v3483 = vpop.f32.mrf.mxu0
    %v3484 = vadd.f32 %v3315, %v3483
    %3485 = vmatmul.bf16.gmra.mxu0 %v1308
    %v3486 = vpop.f32.mrf.mxu0
    %v3487 = vadd.f32 %v3318, %v3486
    %v3488 = vpop.f32.mrf.mxu0
    %v3489 = vadd.f32 %v3320, %v3488
    %3490 = vmatmul.bf16.gmra.mxu0 %v1309
    %v3491 = vpop.f32.mrf.mxu0
    %v3492 = vadd.f32 %v3323, %v3491
    %v3493 = vpop.f32.mrf.mxu0
    %v3494 = vadd.f32 %v3325, %v3493
    %3495 = vmatmul.bf16.gmra.mxu0 %v1310
    %v3496 = vpop.f32.mrf.mxu0
    %v3497 = vadd.f32 %v3328, %v3496
    %v3498 = vpop.f32.mrf.mxu0
    %v3499 = vadd.f32 %v3330, %v3498
    %3500 = vmatmul.bf16.gmra.mxu0 %v1311
    %v3501 = vpop.f32.mrf.mxu0
    %v3502 = vadd.f32 %v3333, %v3501
    %v3503 = vpop.f32.mrf.mxu0
    %v3504 = vadd.f32 %v3335, %v3503
    %3505 = vmatmul.bf16.gmra.mxu0 %v1312
    %v3506 = vpop.f32.mrf.mxu0
    %v3507 = vadd.f32 %v3338, %v3506
    %v3508 = vpop.f32.mrf.mxu0
    %v3509 = vadd.f32 %v3340, %v3508
    %3510 = vmatmul.bf16.gmra.mxu0 %v1313
    %v3511 = vpop.f32.mrf.mxu0
    %v3512 = vadd.f32 %v3343, %v3511
    %v3513 = vpop.f32.mrf.mxu0
    %v3514 = vadd.f32 %v3345, %v3513
    %3515 = vmatmul.bf16.gmra.mxu0 %v1314
    %v3516 = vpop.f32.mrf.mxu0
    %v3517 = vadd.f32 %v3348, %v3516
    %v3518 = vpop.f32.mrf.mxu0
    %v3519 = vadd.f32 %v3350, %v3518
    %3520 = vmatmul.bf16.gmra.mxu0 %v1315
    %v3521 = vpop.f32.mrf.mxu0
    %v3522 = vadd.f32 %v3353, %v3521
    %v3523 = vpop.f32.mrf.mxu0
    %v3524 = vadd.f32 %v3355, %v3523
    %3525 = vmatmul.bf16.gmra.mxu0 %v1316
    %v3526 = vpop.f32.mrf.mxu0
    %v3527 = vadd.f32 %v3358, %v3526
    %v3528 = vpop.f32.mrf.mxu0
    %v3529 = vadd.f32 %v3360, %v3528
    %3530 = vmatmul.bf16.gmra.mxu0 %v1562
    %v3531 = vpop.f32.mrf.mxu0
    %v3532 = vadd.f32 %v3363, %v3531
    %v3533 = vpop.f32.mrf.mxu0
    %v3534 = vadd.f32 %v3365, %v3533
    %3535 = vmatmul.bf16.gmra.mxu0 %v1598
    %v3536 = vpop.f32.mrf.mxu0
    %v3537 = vadd.f32 %v3368, %v3536
    %v3538 = vpop.f32.mrf.mxu0
    %v3539 = vadd.f32 %v3370, %v3538
    %3540 = vdwg.mxu0
    %3541 = vmatpush.bf16.msra.mxu0 %v2116
    %3542 = vmatpush.bf16.msra.mxu0 %v2115
    %3543 = vmatpush.bf16.msra.mxu0 %v2114
    %3544 = vmatpush.bf16.msra.mxu0 %v2113
    %3545 = vmatpush.bf16.msra.mxu0 %v2112
    %3546 = vmatpush.bf16.msra.mxu0 %v2111
    %3547 = vmatpush.bf16.msra.mxu0 %v2110
    %3548 = vmatpush.bf16.msra.mxu0 %v2109
    %3549 = vmatmul.bf16.gmra.mxu0 %v1479
    %v3550 = vpop.f32.mrf.mxu0
    %v3551 = vadd.f32 %v3382, %v3550
    %v3552 = vpop.f32.mrf.mxu0
    %v3553 = vadd.f32 %v3384, %v3552
    %3554 = vmatmul.bf16.gmra.mxu0 %v1480
    %v3555 = vpop.f32.mrf.mxu0
    %v3556 = vadd.f32 %v3387, %v3555
    %v3557 = vpop.f32.mrf.mxu0
    %v3558 = vadd.f32 %v3389, %v3557
    %3559 = vmatmul.bf16.gmra.mxu0 %v1481
    %v3560 = vpop.f32.mrf.mxu0
    %v3561 = vadd.f32 %v3392, %v3560
    %v3562 = vpop.f32.mrf.mxu0
    %v3563 = vadd.f32 %v3394, %v3562
    %3564 = vmatmul.bf16.gmra.mxu0 %v1482
    %v3565 = vpop.f32.mrf.mxu0
    %v3566 = vadd.f32 %v3397, %v3565
    %v3567 = vpop.f32.mrf.mxu0
    %v3568 = vadd.f32 %v3399, %v3567
    %3569 = vmatmul.bf16.gmra.mxu0 %v1483
    %v3570 = vpop.f32.mrf.mxu0
    %v3571 = vadd.f32 %v3402, %v3570
    %v3572 = vpop.f32.mrf.mxu0
    %v3573 = vadd.f32 %v3404, %v3572
    %3574 = vmatmul.bf16.gmra.mxu0 %v1484
    %v3575 = vpop.f32.mrf.mxu0
    %v3576 = vadd.f32 %v3407, %v3575
    %v3577 = vpop.f32.mrf.mxu0
    %v3578 = vadd.f32 %v3409, %v3577
    %3579 = vmatmul.bf16.gmra.mxu0 %v1485
    %v3580 = vpop.f32.mrf.mxu0
    %v3581 = vadd.f32 %v3412, %v3580
    %v3582 = vpop.f32.mrf.mxu0
    %v3583 = vadd.f32 %v3414, %v3582
    %3584 = vmatmul.bf16.gmra.mxu0 %v1486
    %v3585 = vpop.f32.mrf.mxu0
    %v3586 = vadd.f32 %v3417, %v3585
    %v3587 = vpop.f32.mrf.mxu0
    %v3588 = vadd.f32 %v3419, %v3587
    %3589 = vmatmul.bf16.gmra.mxu0 %v1487
    %v3590 = vpop.f32.mrf.mxu0
    %v3591 = vadd.f32 %v3422, %v3590
    %v3592 = vpop.f32.mrf.mxu0
    %v3593 = vadd.f32 %v3424, %v3592
    %3594 = vmatmul.bf16.gmra.mxu0 %v1488
    %v3595 = vpop.f32.mrf.mxu0
    %v3596 = vadd.f32 %v3427, %v3595
    %v3597 = vpop.f32.mrf.mxu0
    %v3598 = vadd.f32 %v3429, %v3597
    %3599 = vmatmul.bf16.gmra.mxu0 %v1489
    %v3600 = vpop.f32.mrf.mxu0
    %v3601 = vadd.f32 %v3432, %v3600
    %v3602 = vpop.f32.mrf.mxu0
    %v3603 = vadd.f32 %v3434, %v3602
    %3604 = vmatmul.bf16.gmra.mxu0 %v1490
    %v3605 = vpop.f32.mrf.mxu0
    %v3606 = vadd.f32 %v3437, %v3605
    %v3607 = vpop.f32.mrf.mxu0
    %v3608 = vadd.f32 %v3439, %v3607
    %3609 = vmatmul.bf16.gmra.mxu0 %v1491
    %v3610 = vpop.f32.mrf.mxu0
    %v3611 = vadd.f32 %v3442, %v3610
    %v3612 = vpop.f32.mrf.mxu0
    %v3613 = vadd.f32 %v3444, %v3612
    %3614 = vmatmul.bf16.gmra.mxu0 %v1492
    %v3615 = vpop.f32.mrf.mxu0
    %v3616 = vadd.f32 %v3447, %v3615
    %v3617 = vpop.f32.mrf.mxu0
    %v3618 = vadd.f32 %v3449, %v3617
    %3619 = vmatmul.bf16.gmra.mxu0 %v1573
    %v3620 = vpop.f32.mrf.mxu0
    %v3621 = vadd.f32 %v3452, %v3620
    %v3622 = vpop.f32.mrf.mxu0
    %v3623 = vadd.f32 %v3454, %v3622
    %3624 = vmatmul.bf16.gmra.mxu0 %v1609
    %v3625 = vpop.f32.mrf.mxu0
    %v3626 = vadd.f32 %v3457, %v3625
    %v3627 = vpop.f32.mrf.mxu0
    %v3628 = vadd.f32 %v3459, %v3627
    %3629 = vmatmul.bf16.gmra.mxu0 %v1495
    %v3630 = vpop.f32.mrf.mxu0
    %v3631 = vadd.f32 %v3462, %v3630
    %v3632 = vpop.f32.mrf.mxu0
    %v3633 = vadd.f32 %v3464, %v3632
    %3634 = vmatmul.bf16.gmra.mxu0 %v1496
    %v3635 = vpop.f32.mrf.mxu0
    %v3636 = vadd.f32 %v3467, %v3635
    %v3637 = vpop.f32.mrf.mxu0
    %v3638 = vadd.f32 %v3469, %v3637
    %3639 = vmatmul.bf16.gmra.mxu0 %v1497
    %v3640 = vpop.f32.mrf.mxu0
    %v3641 = vadd.f32 %v3472, %v3640
    %v3642 = vpop.f32.mrf.mxu0
    %v3643 = vadd.f32 %v3474, %v3642
    %3644 = vmatmul.bf16.gmra.mxu0 %v1498
    %v3645 = vpop.f32.mrf.mxu0
    %v3646 = vadd.f32 %v3477, %v3645
    %v3647 = vpop.f32.mrf.mxu0
    %v3648 = vadd.f32 %v3479, %v3647
    %3649 = vmatmul.bf16.gmra.mxu0 %v1499
    %v3650 = vpop.f32.mrf.mxu0
    %v3651 = vadd.f32 %v3482, %v3650
    %v3652 = vpop.f32.mrf.mxu0
    %v3653 = vadd.f32 %v3484, %v3652
    %3654 = vmatmul.bf16.gmra.mxu0 %v1500
    %v3655 = vpop.f32.mrf.mxu0
    %v3656 = vadd.f32 %v3487, %v3655
    %v3657 = vpop.f32.mrf.mxu0
    %v3658 = vadd.f32 %v3489, %v3657
    %3659 = vmatmul.bf16.gmra.mxu0 %v1501
    %v3660 = vpop.f32.mrf.mxu0
    %v3661 = vadd.f32 %v3492, %v3660
    %v3662 = vpop.f32.mrf.mxu0
    %v3663 = vadd.f32 %v3494, %v3662
    %3664 = vmatmul.bf16.gmra.mxu0 %v1502
    %v3665 = vpop.f32.mrf.mxu0
    %v3666 = vadd.f32 %v3497, %v3665
    %v3667 = vpop.f32.mrf.mxu0
    %v3668 = vadd.f32 %v3499, %v3667
    %3669 = vmatmul.bf16.gmra.mxu0 %v1503
    %v3670 = vpop.f32.mrf.mxu0
    %v3671 = vadd.f32 %v3502, %v3670
    %v3672 = vpop.f32.mrf.mxu0
    %v3673 = vadd.f32 %v3504, %v3672
    %3674 = vmatmul.bf16.gmra.mxu0 %v1504
    %v3675 = vpop.f32.mrf.mxu0
    %v3676 = vadd.f32 %v3507, %v3675
    %v3677 = vpop.f32.mrf.mxu0
    %v3678 = vadd.f32 %v3509, %v3677
    %3679 = vmatmul.bf16.gmra.mxu0 %v1505
    %v3680 = vpop.f32.mrf.mxu0
    %v3681 = vadd.f32 %v3512, %v3680
    %v3682 = vpop.f32.mrf.mxu0
    %v3683 = vadd.f32 %v3514, %v3682
    %3684 = vmatmul.bf16.gmra.mxu0 %v1506
    %v3685 = vpop.f32.mrf.mxu0
    %v3686 = vadd.f32 %v3517, %v3685
    %v3687 = vpop.f32.mrf.mxu0
    %v3688 = vadd.f32 %v3519, %v3687
    %3689 = vmatmul.bf16.gmra.mxu0 %v1507
    %v3690 = vpop.f32.mrf.mxu0
    %v3691 = vadd.f32 %v3522, %v3690
    %v3692 = vpop.f32.mrf.mxu0
    %v3693 = vadd.f32 %v3524, %v3692
    %3694 = vmatmul.bf16.gmra.mxu0 %v1508
    %v3695 = vpop.f32.mrf.mxu0
    %v3696 = vadd.f32 %v3527, %v3695
    %v3697 = vpop.f32.mrf.mxu0
    %v3698 = vadd.f32 %v3529, %v3697
    %3699 = vmatmul.bf16.gmra.mxu0 %v1574
    %v3700 = vpop.f32.mrf.mxu0
    %v3701 = vadd.f32 %v3532, %v3700
    %v3702 = vpop.f32.mrf.mxu0
    %v3703 = vadd.f32 %v3534, %v3702
    %3704 = vmatmul.bf16.gmra.mxu0 %v1610
    %v3705 = vpop.f32.mrf.mxu0
    %v3706 = vadd.f32 %v3537, %v3705
    %v3707 = vpop.f32.mrf.mxu0
    %v3708 = vadd.f32 %v3539, %v3707
    %3709 = vdwg.mxu0
    %v3710 = vld [vmem:[%s2] sm:$0x1]
    %v3711 = vld [vmem:[%s3] sm:$0x1]
    %v3712 = vadd.f32 %v3551, %v3553
    %v3713 = vadd.f32 %v3712, %v3556
    %v3714 = vadd.f32 %v3713, %v3558
    %v3715 = vadd.f32 %v3714, %v3561
    %v3716 = vadd.f32 %v3715, %v3563
    %v3717 = vadd.f32 %v3716, %v3566
    %v3718 = vadd.f32 %v3717, %v3568
    %v3719 = vadd.f32 %v3718, %v3571
    %v3720 = vadd.f32 %v3719, %v3573
    %v3721 = vadd.f32 %v3720, %v3576
    %v3722 = vadd.f32 %v3721, %v3578
    %v3723 = vadd.f32 %v3722, %v3581
    %v3724 = vadd.f32 %v3723, %v3583
    %v3725 = vadd.f32 %v3724, %v3586
    %v3726 = vadd.f32 %v3725, %v3588
    %v3727 = vadd.f32 %v3726, %v3591
    %v3728 = vadd.f32 %v3727, %v3593
    %v3729 = vadd.f32 %v3728, %v3596
    %v3730 = vadd.f32 %v3729, %v3598
    %v3731 = vadd.f32 %v3730, %v3601
    %v3732 = vadd.f32 %v3731, %v3603
    %v3733 = vadd.f32 %v3732, %v3606
    %v3734 = vadd.f32 %v3733, %v3608
    %v3735 = vadd.f32 %v3734, %v3611
    %v3736 = vadd.f32 %v3735, %v3613
    %v3737 = vadd.f32 %v3736, %v3616
    %v3738 = vadd.f32 %v3737, %v3618
    %v3739 = vadd.f32 %v3738, %v3621
    %v3740 = vadd.f32 %v3739, %v3623
    %v3741 = vadd.f32 %v3740, %v3626
    %v3742 = vadd.f32 %v3741, %v3628
    %v3743 = vadd.f32 %v3742, %v3631
    %v3744 = vadd.f32 %v3743, %v3633
    %v3745 = vadd.f32 %v3744, %v3636
    %v3746 = vadd.f32 %v3745, %v3638
    %v3747 = vadd.f32 %v3746, %v3641
    %v3748 = vadd.f32 %v3747, %v3643
    %v3749 = vadd.f32 %v3748, %v3646
    %v3750 = vadd.f32 %v3749, %v3648
    %v3751 = vadd.f32 %v3750, %v3651
    %v3752 = vadd.f32 %v3751, %v3653
    %v3753 = vadd.f32 %v3752, %v3656
    %v3754 = vadd.f32 %v3753, %v3658
    %v3755 = vadd.f32 %v3754, %v3661
    %v3756 = vadd.f32 %v3755, %v3663
    %v3757 = vadd.f32 %v3756, %v3666
    %v3758 = vadd.f32 %v3757, %v3668
    %v3759 = vadd.f32 %v3758, %v3671
    %v3760 = vadd.f32 %v3759, %v3673
    %v3761 = vadd.f32 %v3760, %v3676
    %v3762 = vadd.f32 %v3761, %v3678
    %v3763 = vadd.f32 %v3762, %v3681
    %v3764 = vadd.f32 %v3763, %v3683
    %v3765 = vadd.f32 %v3764, %v3686
    %v3766 = vadd.f32 %v3765, %v3688
    %v3767 = vadd.f32 %v3766, %v3691
    %v3768 = vadd.f32 %v3767, %v3693
    %v3769 = vadd.f32 %v3768, %v3696
    %v3770 = vadd.f32 %v3769, %v3698
    %v3771 = vadd.f32 %v3770, %v3701
    %v3772 = vadd.f32 %v3771, %v3703
    %v3773 = vadd.f32 %v3772, %v3706
    %v3774 = vadd.f32 %v3773, %v3708
    %v3775 = vrot.slane %v3774, 4
    %v3776 = vadd.f32 %v3774, %v3775
    %v3777 = vrot.slane %v3776, 2
    %v3778 = vadd.f32 %v3776, %v3777
    %v3779 = vrot.slane %v3778, 1
    %v3780 = vadd.f32 %v3778, %v3779
    %v3781 = vmul.f32 %v3551, %v3551
    %v3782 = vmul.f32 %v3553, %v3553
    %v3783 = vmul.f32 %v3556, %v3556
    %v3784 = vmul.f32 %v3558, %v3558
    %v3785 = vmul.f32 %v3561, %v3561
    %v3786 = vmul.f32 %v3563, %v3563
    %v3787 = vmul.f32 %v3566, %v3566
    %v3788 = vmul.f32 %v3568, %v3568
    %v3789 = vmul.f32 %v3571, %v3571
    %v3790 = vmul.f32 %v3573, %v3573
    %v3791 = vmul.f32 %v3576, %v3576
    %v3792 = vmul.f32 %v3578, %v3578
    %v3793 = vmul.f32 %v3581, %v3581
    %v3794 = vmul.f32 %v3583, %v3583
    %v3795 = vmul.f32 %v3586, %v3586
    %v3796 = vmul.f32 %v3588, %v3588
    %v3797 = vmul.f32 %v3591, %v3591
    %v3798 = vmul.f32 %v3593, %v3593
    %v3799 = vmul.f32 %v3596, %v3596
    %v3800 = vmul.f32 %v3598, %v3598
    %v3801 = vmul.f32 %v3601, %v3601
    %v3802 = vmul.f32 %v3603, %v3603
    %v3803 = vmul.f32 %v3606, %v3606
    %v3804 = vmul.f32 %v3608, %v3608
    %v3805 = vmul.f32 %v3611, %v3611
    %v3806 = vmul.f32 %v3613, %v3613
    %v3807 = vmul.f32 %v3616, %v3616
    %v3808 = vmul.f32 %v3618, %v3618
    %v3809 = vmul.f32 %v3621, %v3621
    %v3810 = vmul.f32 %v3623, %v3623
    %v3811 = vmul.f32 %v3626, %v3626
    %v3812 = vmul.f32 %v3628, %v3628
    %v3813 = vmul.f32 %v3631, %v3631
    %v3814 = vmul.f32 %v3633, %v3633
    %v3815 = vmul.f32 %v3636, %v3636
    %v3816 = vmul.f32 %v3638, %v3638
    %v3817 = vmul.f32 %v3641, %v3641
    %v3818 = vmul.f32 %v3643, %v3643
    %v3819 = vmul.f32 %v3646, %v3646
    %v3820 = vmul.f32 %v3648, %v3648
    %v3821 = vmul.f32 %v3651, %v3651
    %v3822 = vmul.f32 %v3653, %v3653
    %v3823 = vmul.f32 %v3656, %v3656
    %v3824 = vmul.f32 %v3658, %v3658
    %v3825 = vmul.f32 %v3661, %v3661
    %v3826 = vmul.f32 %v3663, %v3663
    %v3827 = vmul.f32 %v3666, %v3666
    %v3828 = vmul.f32 %v3668, %v3668
    %v3829 = vmul.f32 %v3671, %v3671
    %v3830 = vmul.f32 %v3673, %v3673
    %v3831 = vmul.f32 %v3676, %v3676
    %v3832 = vmul.f32 %v3678, %v3678
    %v3833 = vmul.f32 %v3681, %v3681
    %v3834 = vmul.f32 %v3683, %v3683
    %v3835 = vmul.f32 %v3686, %v3686
    %v3836 = vmul.f32 %v3688, %v3688
    %v3837 = vmul.f32 %v3691, %v3691
    %v3838 = vmul.f32 %v3693, %v3693
    %v3839 = vmul.f32 %v3696, %v3696
    %v3840 = vmul.f32 %v3698, %v3698
    %v3841 = vmul.f32 %v3701, %v3701
    %v3842 = vmul.f32 %v3703, %v3703
    %v3843 = vmul.f32 %v3706, %v3706
    %v3844 = vmul.f32 %v3708, %v3708
    %v3845 = vadd.f32 %v3781, %v3782
    %v3846 = vadd.f32 %v3845, %v3783
    %v3847 = vadd.f32 %v3846, %v3784
    %v3848 = vadd.f32 %v3847, %v3785
    %v3849 = vadd.f32 %v3848, %v3786
    %v3850 = vadd.f32 %v3849, %v3787
    %v3851 = vadd.f32 %v3850, %v3788
    %v3852 = vadd.f32 %v3851, %v3789
    %v3853 = vadd.f32 %v3852, %v3790
    %v3854 = vadd.f32 %v3853, %v3791
    %v3855 = vadd.f32 %v3854, %v3792
    %v3856 = vadd.f32 %v3855, %v3793
    %v3857 = vadd.f32 %v3856, %v3794
    %v3858 = vadd.f32 %v3857, %v3795
    %v3859 = vadd.f32 %v3858, %v3796
    %v3860 = vadd.f32 %v3859, %v3797
    %v3861 = vadd.f32 %v3860, %v3798
    %v3862 = vadd.f32 %v3861, %v3799
    %v3863 = vadd.f32 %v3862, %v3800
    %v3864 = vadd.f32 %v3863, %v3801
    %v3865 = vadd.f32 %v3864, %v3802
    %v3866 = vadd.f32 %v3865, %v3803
    %v3867 = vadd.f32 %v3866, %v3804
    %v3868 = vadd.f32 %v3867, %v3805
    %v3869 = vadd.f32 %v3868, %v3806
    %v3870 = vadd.f32 %v3869, %v3807
    %v3871 = vadd.f32 %v3870, %v3808
    %v3872 = vadd.f32 %v3871, %v3809
    %v3873 = vadd.f32 %v3872, %v3810
    %v3874 = vadd.f32 %v3873, %v3811
    %v3875 = vadd.f32 %v3874, %v3812
    %v3876 = vadd.f32 %v3875, %v3813
    %v3877 = vadd.f32 %v3876, %v3814
    %v3878 = vadd.f32 %v3877, %v3815
    %v3879 = vadd.f32 %v3878, %v3816
    %v3880 = vadd.f32 %v3879, %v3817
    %v3881 = vadd.f32 %v3880, %v3818
    %v3882 = vadd.f32 %v3881, %v3819
    %v3883 = vadd.f32 %v3882, %v3820
    %v3884 = vadd.f32 %v3883, %v3821
    %v3885 = vadd.f32 %v3884, %v3822
    %v3886 = vadd.f32 %v3885, %v3823
    %v3887 = vadd.f32 %v3886, %v3824
    %v3888 = vadd.f32 %v3887, %v3825
    %v3889 = vadd.f32 %v3888, %v3826
    %v3890 = vadd.f32 %v3889, %v3827
    %v3891 = vadd.f32 %v3890, %v3828
    %v3892 = vadd.f32 %v3891, %v3829
    %v3893 = vadd.f32 %v3892, %v3830
    %v3894 = vadd.f32 %v3893, %v3831
    %v3895 = vadd.f32 %v3894, %v3832
    %v3896 = vadd.f32 %v3895, %v3833
    %v3897 = vadd.f32 %v3896, %v3834
    %v3898 = vadd.f32 %v3897, %v3835
    %v3899 = vadd.f32 %v3898, %v3836
    %v3900 = vadd.f32 %v3899, %v3837
    %v3901 = vadd.f32 %v3900, %v3838
    %v3902 = vadd.f32 %v3901, %v3839
    %v3903 = vadd.f32 %v3902, %v3840
    %v3904 = vadd.f32 %v3903, %v3841
    %v3905 = vadd.f32 %v3904, %v3842
    %v3906 = vadd.f32 %v3905, %v3843
    %v3907 = vadd.f32 %v3906, %v3844
    %v3908 = vrot.slane %v3907, 4
    %v3909 = vadd.f32 %v3907, %v3908
    %v3910 = vrot.slane %v3909, 2
    %v3911 = vadd.f32 %v3909, %v3910
    %v3912 = vrot.slane %v3911, 1
    %v3913 = vadd.f32 %v3911, %v3912
    %v3914 = vmul.f32 %v3780, 0.001953125
    %v3915 = vmul.f32 %v3913, 0.001953125
    %v3916 = vmul.f32 %v3914, %v3914
    %v3917 = vsub.f32 %v3915, %v3916
    %v3918 = vadd.f32 %v3917, 1e-05
    %v3919 = vrsqrt.pop %v3918
    %v3920 = vmul.f32 %v3919, %v3918
    %v3921 = vmul.f32 %v3920, %v3919
    %v3922 = vmul.f32 0.5, %v3921
    %v3923 = vsub.f32 1.5, %v3922
    %v3924 = vmul.f32 %v3919, %v3923
    %vm3925 = vweird.f32 %v3918
    %vm3926 = vweird.f32 %v3919
    %vm3927 = vmor %vm3925, %vm3926
    %v3928 = vsel %vm3927, %v3919, %v3924
    %v3929 = vmul.f32 %v3710, %v3928
    %v3930 = vmul.f32 %v3914, %v3929
    %v3931 = vsub.f32 %v3711, %v3930
    %v3933 = vperm.slane %v3929, 0
    %v3935 = vmul.f32 %v3551, %v3933
    %v3936 = vmul.f32 %v3553, %v3933
    %v3937 = vmul.f32 %v3556, %v3933
    %v3938 = vmul.f32 %v3558, %v3933
    %v3939 = vmul.f32 %v3561, %v3933
    %v3940 = vmul.f32 %v3563, %v3933
    %v3941 = vmul.f32 %v3566, %v3933
    %v3942 = vmul.f32 %v3568, %v3933
    %v3943 = vmul.f32 %v3571, %v3933
    %v3944 = vmul.f32 %v3573, %v3933
    %v3945 = vmul.f32 %v3576, %v3933
    %v3946 = vmul.f32 %v3578, %v3933
    %v3947 = vmul.f32 %v3581, %v3933
    %v3948 = vmul.f32 %v3583, %v3933
    %v3949 = vmul.f32 %v3586, %v3933
    %v3950 = vmul.f32 %v3588, %v3933
    %v3951 = vmul.f32 %v3591, %v3933
    %v3952 = vmul.f32 %v3593, %v3933
    %v3953 = vmul.f32 %v3596, %v3933
    %v3954 = vmul.f32 %v3598, %v3933
    %v3955 = vmul.f32 %v3601, %v3933
    %v3956 = vmul.f32 %v3603, %v3933
    %v3957 = vmul.f32 %v3606, %v3933
    %v3958 = vmul.f32 %v3608, %v3933
    %v3959 = vmul.f32 %v3611, %v3933
    %v3960 = vmul.f32 %v3613, %v3933
    %v3961 = vmul.f32 %v3616, %v3933
    %v3962 = vmul.f32 %v3618, %v3933
    %v3963 = vmul.f32 %v3621, %v3933
    %v3964 = vmul.f32 %v3623, %v3933
    %v3965 = vmul.f32 %v3626, %v3933
    %v3966 = vmul.f32 %v3628, %v3933
    %v3967 = vmul.f32 %v3631, %v3933
    %v3968 = vmul.f32 %v3633, %v3933
    %v3969 = vmul.f32 %v3636, %v3933
    %v3970 = vmul.f32 %v3638, %v3933
    %v3971 = vmul.f32 %v3641, %v3933
    %v3972 = vmul.f32 %v3643, %v3933
    %v3973 = vmul.f32 %v3646, %v3933
    %v3974 = vmul.f32 %v3648, %v3933
    %v3975 = vmul.f32 %v3651, %v3933
    %v3976 = vmul.f32 %v3653, %v3933
    %v3977 = vmul.f32 %v3656, %v3933
    %v3978 = vmul.f32 %v3658, %v3933
    %v3979 = vmul.f32 %v3661, %v3933
    %v3980 = vmul.f32 %v3663, %v3933
    %v3981 = vmul.f32 %v3666, %v3933
    %v3982 = vmul.f32 %v3668, %v3933
    %v3983 = vmul.f32 %v3671, %v3933
    %v3984 = vmul.f32 %v3673, %v3933
    %v3985 = vmul.f32 %v3676, %v3933
    %v3986 = vmul.f32 %v3678, %v3933
    %v3987 = vmul.f32 %v3681, %v3933
    %v3988 = vmul.f32 %v3683, %v3933
    %v3989 = vmul.f32 %v3686, %v3933
    %v3990 = vmul.f32 %v3688, %v3933
    %v3991 = vmul.f32 %v3691, %v3933
    %v3992 = vmul.f32 %v3693, %v3933
    %v3993 = vmul.f32 %v3696, %v3933
    %v3994 = vmul.f32 %v3698, %v3933
    %v3995 = vmul.f32 %v3701, %v3933
    %v3996 = vmul.f32 %v3703, %v3933
    %v3997 = vmul.f32 %v3706, %v3933
    %v3998 = vmul.f32 %v3708, %v3933
    %v4000 = vperm.slane %v3931, 0
    %v4002 = vadd.f32 %v3935, %v4000
    %v4003 = vadd.f32 %v3936, %v4000
    %v4004 = vadd.f32 %v3937, %v4000
    %v4005 = vadd.f32 %v3938, %v4000
    %v4006 = vadd.f32 %v3939, %v4000
    %v4007 = vadd.f32 %v3940, %v4000
    %v4008 = vadd.f32 %v3941, %v4000
    %v4009 = vadd.f32 %v3942, %v4000
    %v4010 = vadd.f32 %v3943, %v4000
    %v4011 = vadd.f32 %v3944, %v4000
    %v4012 = vadd.f32 %v3945, %v4000
    %v4013 = vadd.f32 %v3946, %v4000
    %v4014 = vadd.f32 %v3947, %v4000
    %v4015 = vadd.f32 %v3948, %v4000
    %v4016 = vadd.f32 %v3949, %v4000
    %v4017 = vadd.f32 %v3950, %v4000
    %v4018 = vadd.f32 %v3951, %v4000
    %v4019 = vadd.f32 %v3952, %v4000
    %v4020 = vadd.f32 %v3953, %v4000
    %v4021 = vadd.f32 %v3954, %v4000
    %v4022 = vadd.f32 %v3955, %v4000
    %v4023 = vadd.f32 %v3956, %v4000
    %v4024 = vadd.f32 %v3957, %v4000
    %v4025 = vadd.f32 %v3958, %v4000
    %v4026 = vadd.f32 %v3959, %v4000
    %v4027 = vadd.f32 %v3960, %v4000
    %v4028 = vadd.f32 %v3961, %v4000
    %v4029 = vadd.f32 %v3962, %v4000
    %v4030 = vadd.f32 %v3963, %v4000
    %v4031 = vadd.f32 %v3964, %v4000
    %v4032 = vadd.f32 %v3965, %v4000
    %v4033 = vadd.f32 %v3966, %v4000
    %v4034 = vadd.f32 %v3967, %v4000
    %v4035 = vadd.f32 %v3968, %v4000
    %v4036 = vadd.f32 %v3969, %v4000
    %v4037 = vadd.f32 %v3970, %v4000
    %v4038 = vadd.f32 %v3971, %v4000
    %v4039 = vadd.f32 %v3972, %v4000
    %v4040 = vadd.f32 %v3973, %v4000
    %v4041 = vadd.f32 %v3974, %v4000
    %v4042 = vadd.f32 %v3975, %v4000
    %v4043 = vadd.f32 %v3976, %v4000
    %v4044 = vadd.f32 %v3977, %v4000
    %v4045 = vadd.f32 %v3978, %v4000
    %v4046 = vadd.f32 %v3979, %v4000
    %v4047 = vadd.f32 %v3980, %v4000
    %v4048 = vadd.f32 %v3981, %v4000
    %v4049 = vadd.f32 %v3982, %v4000
    %v4050 = vadd.f32 %v3983, %v4000
    %v4051 = vadd.f32 %v3984, %v4000
    %v4052 = vadd.f32 %v3985, %v4000
    %v4053 = vadd.f32 %v3986, %v4000
    %v4054 = vadd.f32 %v3987, %v4000
    %v4055 = vadd.f32 %v3988, %v4000
    %v4056 = vadd.f32 %v3989, %v4000
    %v4057 = vadd.f32 %v3990, %v4000
    %v4058 = vadd.f32 %v3991, %v4000
    %v4059 = vadd.f32 %v3992, %v4000
    %v4060 = vadd.f32 %v3993, %v4000
    %v4061 = vadd.f32 %v3994, %v4000
    %v4062 = vadd.f32 %v3995, %v4000
    %v4063 = vadd.f32 %v3996, %v4000
    %v4064 = vadd.f32 %v3997, %v4000
    %v4065 = vadd.f32 %v3998, %v4000
    %v4066 = vmax.f32 %v4002, 0.0
    %v4067 = vmax.f32 %v4003, 0.0
    %v4068 = vmax.f32 %v4004, 0.0
    %v4069 = vmax.f32 %v4005, 0.0
    %v4070 = vmax.f32 %v4006, 0.0
    %v4071 = vmax.f32 %v4007, 0.0
    %v4072 = vmax.f32 %v4008, 0.0
    %v4073 = vmax.f32 %v4009, 0.0
    %v4074 = vmax.f32 %v4010, 0.0
    %v4075 = vmax.f32 %v4011, 0.0
    %v4076 = vmax.f32 %v4012, 0.0
    %v4077 = vmax.f32 %v4013, 0.0
    %v4078 = vmax.f32 %v4014, 0.0
    %v4079 = vmax.f32 %v4015, 0.0
    %v4080 = vmax.f32 %v4016, 0.0
    %v4081 = vmax.f32 %v4017, 0.0
    %v4082 = vmax.f32 %v4018, 0.0
    %v4083 = vmax.f32 %v4019, 0.0
    %v4084 = vmax.f32 %v4020, 0.0
    %v4085 = vmax.f32 %v4021, 0.0
    %v4086 = vmax.f32 %v4022, 0.0
    %v4087 = vmax.f32 %v4023, 0.0
    %v4088 = vmax.f32 %v4024, 0.0
    %v4089 = vmax.f32 %v4025, 0.0
    %v4090 = vmax.f32 %v4026, 0.0
    %v4091 = vmax.f32 %v4027, 0.0
    %v4092 = vmax.f32 %v4028, 0.0
    %v4093 = vmax.f32 %v4029, 0.0
    %v4094 = vmax.f32 %v4030, 0.0
    %v4095 = vmax.f32 %v4031, 0.0
    %v4096 = vmax.f32 %v4032, 0.0
    %v4097 = vmax.f32 %v4033, 0.0
    %v4098 = vmax.f32 %v4034, 0.0
    %v4099 = vmax.f32 %v4035, 0.0
    %v4100 = vmax.f32 %v4036, 0.0
    %v4101 = vmax.f32 %v4037, 0.0
    %v4102 = vmax.f32 %v4038, 0.0
    %v4103 = vmax.f32 %v4039, 0.0
    %v4104 = vmax.f32 %v4040, 0.0
    %v4105 = vmax.f32 %v4041, 0.0
    %v4106 = vmax.f32 %v4042, 0.0
    %v4107 = vmax.f32 %v4043, 0.0
    %v4108 = vmax.f32 %v4044, 0.0
    %v4109 = vmax.f32 %v4045, 0.0
    %v4110 = vmax.f32 %v4046, 0.0
    %v4111 = vmax.f32 %v4047, 0.0
    %v4112 = vmax.f32 %v4048, 0.0
    %v4113 = vmax.f32 %v4049, 0.0
    %v4114 = vmax.f32 %v4050, 0.0
    %v4115 = vmax.f32 %v4051, 0.0
    %v4116 = vmax.f32 %v4052, 0.0
    %v4117 = vmax.f32 %v4053, 0.0
    %v4118 = vmax.f32 %v4054, 0.0
    %v4119 = vmax.f32 %v4055, 0.0
    %v4120 = vmax.f32 %v4056, 0.0
    %v4121 = vmax.f32 %v4057, 0.0
    %v4122 = vmax.f32 %v4058, 0.0
    %v4123 = vmax.f32 %v4059, 0.0
    %v4124 = vmax.f32 %v4060, 0.0
    %v4125 = vmax.f32 %v4061, 0.0
    %v4126 = vmax.f32 %v4062, 0.0
    %v4127 = vmax.f32 %v4063, 0.0
    %v4128 = vmax.f32 %v4064, 0.0
    %v4129 = vmax.f32 %v4065, 0.0
    %4130 = vst [vmem:[#allocation2] sm:$0xff] 0.0
    %4131 = vst [vmem:[#allocation2 + $0x8] sm:$0xff] 0.0
    %4132 = vst [vmem:[#allocation2 + $0x10] sm:$0x3] 0.0
    %4133 = vst [vmem:[#allocation2 + $0x1b0] sm:$0xff] 0.0
    %4134 = vst [vmem:[#allocation2 + $0x1b8] sm:$0xff] 0.0
    %4135 = vst [vmem:[#allocation2 + $0x1c0] sm:$0x3] 0.0
    %s4136 = scalar_lea.vmem [#allocation2], 408
    %4137 = vst [vmem:[%s4136] sm:$0xff] 0.0
    %4138 = vst [vmem:[%s4136 + $0x8] sm:$0xff] 0.0
    %4139 = vst [vmem:[%s4136 + $0x10] sm:$0x3] 0.0
    %4140 = vst [vmem:[%s4136 + $0x1b0] sm:$0xff] 0.0
    %4141 = vst [vmem:[%s4136 + $0x1b8] sm:$0xff] 0.0
    %4142 = vst [vmem:[%s4136 + $0x1c0] sm:$0x3] 0.0
    %4143 = vst [vmem:[#allocation2] sm:$0x1] 0.0
    %4144 = vst [vmem:[#allocation2 + $0x18] sm:$0x1] 0.0
    %4145 = vst [vmem:[#allocation2 + $0x30] sm:$0x1] 0.0
    %4146 = vst [vmem:[#allocation2 + $0x48] sm:$0x1] 0.0
    %4147 = vst [vmem:[#allocation2 + $0x60] sm:$0x1] 0.0
    %4148 = vst [vmem:[#allocation2 + $0x78] sm:$0x1] 0.0
    %4149 = vst [vmem:[#allocation2 + $0x90] sm:$0x1] 0.0
    %4150 = vst [vmem:[#allocation2 + $0xa8] sm:$0x1] 0.0
    %4151 = vst [vmem:[#allocation2 + $0xc0] sm:$0x1] 0.0
    %4152 = vst [vmem:[#allocation2 + $0xd8] sm:$0x1] 0.0
    %4153 = vst [vmem:[#allocation2 + $0xf0] sm:$0x1] 0.0
    %4154 = vst [vmem:[#allocation2 + $0x108] sm:$0x1] 0.0
    %4155 = vst [vmem:[#allocation2 + $0x120] sm:$0x1] 0.0
    %4156 = vst [vmem:[#allocation2 + $0x138] sm:$0x1] 0.0
    %4157 = vst [vmem:[#allocation2 + $0x150] sm:$0x1] 0.0
    %4158 = vst [vmem:[#allocation2 + $0x168] sm:$0x1] 0.0
    %4159 = vst [vmem:[#allocation2 + $0x180] sm:$0x1] 0.0
    %4160 = vst [vmem:[#allocation2 + $0x198] sm:$0x1] 0.0
    %4161 = vst [vmem:[#allocation2 + $0x1b0] sm:$0x1] 0.0
    %4162 = vst [vmem:[#allocation2 + $0x1c8] sm:$0x1] 0.0
    %4163 = vst [vmem:[#allocation2 + $0x1e0] sm:$0x1] 0.0
    %4164 = vst [vmem:[#allocation2 + $0x1f8] sm:$0x1] 0.0
    %4165 = vst [vmem:[#allocation2 + $0x210] sm:$0x1] 0.0
    %4166 = vst [vmem:[#allocation2 + $0x228] sm:$0x1] 0.0
    %4167 = vst [vmem:[#allocation2 + $0x240] sm:$0x1] 0.0
    %4168 = vst [vmem:[#allocation2 + $0x258] sm:$0x1] 0.0
    %4169 = vst [vmem:[#allocation2 + $0x270] sm:$0x1] 0.0
    %4170 = vst [vmem:[#allocation2 + $0x288] sm:$0x1] 0.0
    %4171 = vst [vmem:[#allocation2 + $0x2a0] sm:$0x1] 0.0
    %4172 = vst [vmem:[#allocation2 + $0x2b8] sm:$0x1] 0.0
    %4173 = vst [vmem:[#allocation2 + $0x2d0] sm:$0x1] 0.0
    %4174 = vst [vmem:[#allocation2 + $0x2e8] sm:$0x1] 0.0
    %4175 = vst [vmem:[#allocation2 + $0x300] sm:$0x1] 0.0
    %4176 = vst [vmem:[#allocation2 + $0x318] sm:$0x1] 0.0
    %4177 = vst [vmem:[#allocation2 + $0x330] sm:$0x1] 0.0
    %4178 = vst [vmem:[#allocation2 + $0x348] sm:$0x1] 0.0
    %4179 = vst [vmem:[#allocation2 + $0x11] sm:$0x1] 0.0
    %4180 = vst [vmem:[#allocation2 + $0x29] sm:$0x1] 0.0
    %4181 = vst [vmem:[#allocation2 + $0x41] sm:$0x1] 0.0
    %4182 = vst [vmem:[#allocation2 + $0x59] sm:$0x1] 0.0
    %4183 = vst [vmem:[#allocation2 + $0x71] sm:$0x1] 0.0
    %4184 = vst [vmem:[#allocation2 + $0x89] sm:$0x1] 0.0
    %4185 = vst [vmem:[#allocation2 + $0xa1] sm:$0x1] 0.0
    %4186 = vst [vmem:[#allocation2 + $0xb9] sm:$0x1] 0.0
    %4187 = vst [vmem:[#allocation2 + $0xd1] sm:$0x1] 0.0
    %4188 = vst [vmem:[#allocation2 + $0xe9] sm:$0x1] 0.0
    %4189 = vst [vmem:[#allocation2 + $0x101] sm:$0x1] 0.0
    %4190 = vst [vmem:[#allocation2 + $0x119] sm:$0x1] 0.0
    %4191 = vst [vmem:[#allocation2 + $0x131] sm:$0x1] 0.0
    %4192 = vst [vmem:[#allocation2 + $0x149] sm:$0x1] 0.0
    %4193 = vst [vmem:[#allocation2 + $0x161] sm:$0x1] 0.0
    %4194 = vst [vmem:[#allocation2 + $0x179] sm:$0x1] 0.0
    %4195 = vst [vmem:[#allocation2 + $0x191] sm:$0x1] 0.0
    %4196 = vst [vmem:[#allocation2 + $0x1a9] sm:$0x1] 0.0
    %4197 = vst [vmem:[#allocation2 + $0x1c1] sm:$0x1] 0.0
    %4198 = vst [vmem:[#allocation2 + $0x1d9] sm:$0x1] 0.0
    %4199 = vst [vmem:[#allocation2 + $0x1f1] sm:$0x1] 0.0
    %4200 = vst [vmem:[#allocation2 + $0x209] sm:$0x1] 0.0
    %4201 = vst [vmem:[#allocation2 + $0x221] sm:$0x1] 0.0
    %4202 = vst [vmem:[#allocation2 + $0x239] sm:$0x1] 0.0
    %4203 = vst [vmem:[#allocation2 + $0x251] sm:$0x1] 0.0
    %4204 = vst [vmem:[#allocation2 + $0x269] sm:$0x1] 0.0
    %4205 = vst [vmem:[#allocation2 + $0x281] sm:$0x1] 0.0
    %4206 = vst [vmem:[#allocation2 + $0x299] sm:$0x1] 0.0
    %4207 = vst [vmem:[#allocation2 + $0x2b1] sm:$0x1] 0.0
    %4208 = vst [vmem:[#allocation2 + $0x2c9] sm:$0x1] 0.0
    %4209 = vst [vmem:[#allocation2 + $0x2e1] sm:$0x1] 0.0
    %4210 = vst [vmem:[#allocation2 + $0x2f9] sm:$0x1] 0.0
    %4211 = vst [vmem:[#allocation2 + $0x311] sm:$0x1] 0.0
    %4212 = vst [vmem:[#allocation2 + $0x329] sm:$0x1] 0.0
    %4213 = vst [vmem:[#allocation2 + $0x341] sm:$0x1] 0.0
    %4214 = vst [vmem:[#allocation2 + $0x359] sm:$0x1] 0.0
    %s4215 = scalar_lea.vmem [#allocation2], 24
    %4216 = vst [vmem:[%s4215 + $0x1] sm:$0xff] %v4066
    %4217 = vst [vmem:[%s4215 + $0x9] sm:$0xff] %v4067
    %4218 = vst [vmem:[%s4215 + $0x19] sm:$0xff] %v4068
    %4219 = vst [vmem:[%s4215 + $0x21] sm:$0xff] %v4069
    %4220 = vst [vmem:[%s4215 + $0x31] sm:$0xff] %v4070
    %4221 = vst [vmem:[%s4215 + $0x39] sm:$0xff] %v4071
    %4222 = vst [vmem:[%s4215 + $0x49] sm:$0xff] %v4072
    %4223 = vst [vmem:[%s4215 + $0x51] sm:$0xff] %v4073
    %4224 = vst [vmem:[%s4215 + $0x61] sm:$0xff] %v4074
    %4225 = vst [vmem:[%s4215 + $0x69] sm:$0xff] %v4075
    %4226 = vst [vmem:[%s4215 + $0x79] sm:$0xff] %v4076
    %4227 = vst [vmem:[%s4215 + $0x81] sm:$0xff] %v4077
    %4228 = vst [vmem:[%s4215 + $0x91] sm:$0xff] %v4078
    %4229 = vst [vmem:[%s4215 + $0x99] sm:$0xff] %v4079
    %4230 = vst [vmem:[%s4215 + $0xa9] sm:$0xff] %v4080
    %4231 = vst [vmem:[%s4215 + $0xb1] sm:$0xff] %v4081
    %4232 = vst [vmem:[%s4215 + $0xc1] sm:$0xff] %v4082
    %4233 = vst [vmem:[%s4215 + $0xc9] sm:$0xff] %v4083
    %4234 = vst [vmem:[%s4215 + $0xd9] sm:$0xff] %v4084
    %4235 = vst [vmem:[%s4215 + $0xe1] sm:$0xff] %v4085
    %4236 = vst [vmem:[%s4215 + $0xf1] sm:$0xff] %v4086
    %4237 = vst [vmem:[%s4215 + $0xf9] sm:$0xff] %v4087
    %4238 = vst [vmem:[%s4215 + $0x109] sm:$0xff] %v4088
    %4239 = vst [vmem:[%s4215 + $0x111] sm:$0xff] %v4089
    %4240 = vst [vmem:[%s4215 + $0x121] sm:$0xff] %v4090
    %4241 = vst [vmem:[%s4215 + $0x129] sm:$0xff] %v4091
    %4242 = vst [vmem:[%s4215 + $0x139] sm:$0xff] %v4092
    %4243 = vst [vmem:[%s4215 + $0x141] sm:$0xff] %v4093
    %4244 = vst [vmem:[%s4215 + $0x151] sm:$0xff] %v4094
    %4245 = vst [vmem:[%s4215 + $0x159] sm:$0xff] %v4095
    %4246 = vst [vmem:[%s4215 + $0x169] sm:$0xff] %v4096
    %4247 = vst [vmem:[%s4215 + $0x171] sm:$0xff] %v4097
    %4248 = vst [vmem:[%s4215 + $0x1b1] sm:$0xff] %v4098
    %4249 = vst [vmem:[%s4215 + $0x1b9] sm:$0xff] %v4099
    %4250 = vst [vmem:[%s4215 + $0x1c9] sm:$0xff] %v4100
    %4251 = vst [vmem:[%s4215 + $0x1d1] sm:$0xff] %v4101
    %4252 = vst [vmem:[%s4215 + $0x1e1] sm:$0xff] %v4102
    %4253 = vst [vmem:[%s4215 + $0x1e9] sm:$0xff] %v4103
    %4254 = vst [vmem:[%s4215 + $0x1f9] sm:$0xff] %v4104
    %4255 = vst [vmem:[%s4215 + $0x201] sm:$0xff] %v4105
    %4256 = vst [vmem:[%s4215 + $0x211] sm:$0xff] %v4106
    %4257 = vst [vmem:[%s4215 + $0x219] sm:$0xff] %v4107
    %4258 = vst [vmem:[%s4215 + $0x229] sm:$0xff] %v4108
    %4259 = vst [vmem:[%s4215 + $0x231] sm:$0xff] %v4109
    %4260 = vst [vmem:[%s4215 + $0x241] sm:$0xff] %v4110
    %4261 = vst [vmem:[%s4215 + $0x249] sm:$0xff] %v4111
    %4262 = vst [vmem:[%s4215 + $0x259] sm:$0xff] %v4112
    %4263 = vst [vmem:[%s4215 + $0x261] sm:$0xff] %v4113
    %4264 = vst [vmem:[%s4215 + $0x271] sm:$0xff] %v4114
    %4265 = vst [vmem:[%s4215 + $0x279] sm:$0xff] %v4115
    %4266 = vst [vmem:[%s4215 + $0x289] sm:$0xff] %v4116
    %4267 = vst [vmem:[%s4215 + $0x291] sm:$0xff] %v4117
    %4268 = vst [vmem:[%s4215 + $0x2a1] sm:$0xff] %v4118
    %4269 = vst [vmem:[%s4215 + $0x2a9] sm:$0xff] %v4119
    %4270 = vst [vmem:[%s4215 + $0x2b9] sm:$0xff] %v4120
    %4271 = vst [vmem:[%s4215 + $0x2c1] sm:$0xff] %v4121
    %4272 = vst [vmem:[%s4215 + $0x2d1] sm:$0xff] %v4122
    %4273 = vst [vmem:[%s4215 + $0x2d9] sm:$0xff] %v4123
    %4274 = vst [vmem:[%s4215 + $0x2e9] sm:$0xff] %v4124
    %4275 = vst [vmem:[%s4215 + $0x2f1] sm:$0xff] %v4125
    %4276 = vst [vmem:[%s4215 + $0x301] sm:$0xff] %v4126
    %4277 = vst [vmem:[%s4215 + $0x309] sm:$0xff] %v4127
    %4278 = vst [vmem:[%s4215 + $0x319] sm:$0xff] %v4128
    %4279 = vst [vmem:[%s4215 + $0x321] sm:$0xff] %v4129
    %v4280 = vld [vmem:[#allocation2] sm:$0xff]
    %v4281 = vld [vmem:[#allocation2 + $0x8] sm:$0xff]
    %v4282 = vld [vmem:[#allocation2 + $0x10] sm:$0x3]
    %v4283 = vld [vmem:[#allocation2 + $0x18] sm:$0xff]
    %v4284 = vld [vmem:[#allocation2 + $0x20] sm:$0xff]
    %v4285 = vld [vmem:[#allocation2 + $0x28] sm:$0x3]
    %v4286 = vld [vmem:[#allocation2 + $0x30] sm:$0xff]
    %v4287 = vld [vmem:[#allocation2 + $0x38] sm:$0xff]
    %v4288 = vld [vmem:[#allocation2 + $0x40] sm:$0x3]
    %v4289 = vld [vmem:[#allocation2 + $0x48] sm:$0xff]
    %v4290 = vld [vmem:[#allocation2 + $0x50] sm:$0xff]
    %v4291 = vld [vmem:[#allocation2 + $0x58] sm:$0x3]
    %v4292 = vld [vmem:[#allocation2 + $0x60] sm:$0xff]
    %v4293 = vld [vmem:[#allocation2 + $0x68] sm:$0xff]
    %v4294 = vld [vmem:[#allocation2 + $0x70] sm:$0x3]
    %v4295 = vld [vmem:[#allocation2 + $0x78] sm:$0xff]
    %v4296 = vld [vmem:[#allocation2 + $0x80] sm:$0xff]
    %v4297 = vld [vmem:[#allocation2 + $0x88] sm:$0x3]
    %v4298 = vld [vmem:[#allocation2 + $0x90] sm:$0xff]
    %v4299 = vld [vmem:[#allocation2 + $0x98] sm:$0xff]
    %v4300 = vld [vmem:[#allocation2 + $0xa0] sm:$0x3]
    %v4301 = vld [vmem:[#allocation2 + $0xa8] sm:$0xff]
    %v4302 = vld [vmem:[#allocation2 + $0xb0] sm:$0xff]
    %v4303 = vld [vmem:[#allocation2 + $0xb8] sm:$0x3]
    %v4304 = vld [vmem:[#allocation2 + $0xc0] sm:$0xff]
    %v4305 = vld [vmem:[#allocation2 + $0xc8] sm:$0xff]
    %v4306 = vld [vmem:[#allocation2 + $0xd0] sm:$0x3]
    %v4307 = vld [vmem:[#allocation2 + $0xd8] sm:$0xff]
    %v4308 = vld [vmem:[#allocation2 + $0xe0] sm:$0xff]
    %v4309 = vld [vmem:[#allocation2 + $0xe8] sm:$0x3]
    %v4310 = vld [vmem:[#allocation2 + $0xf0] sm:$0xff]
    %v4311 = vld [vmem:[#allocation2 + $0xf8] sm:$0xff]
    %v4312 = vld [vmem:[#allocation2 + $0x100] sm:$0x3]
    %v4313 = vld [vmem:[#allocation2 + $0x108] sm:$0xff]
    %v4314 = vld [vmem:[#allocation2 + $0x110] sm:$0xff]
    %v4315 = vld [vmem:[#allocation2 + $0x118] sm:$0x3]
    %v4316 = vld [vmem:[#allocation2 + $0x120] sm:$0xff]
    %v4317 = vld [vmem:[#allocation2 + $0x128] sm:$0xff]
    %v4318 = vld [vmem:[#allocation2 + $0x130] sm:$0x3]
    %v4319 = vld [vmem:[#allocation2 + $0x138] sm:$0xff]
    %v4320 = vld [vmem:[#allocation2 + $0x140] sm:$0xff]
    %v4321 = vld [vmem:[#allocation2 + $0x148] sm:$0x3]
    %v4322 = vld [vmem:[#allocation2 + $0x150] sm:$0xff]
    %v4323 = vld [vmem:[#allocation2 + $0x158] sm:$0xff]
    %v4324 = vld [vmem:[#allocation2 + $0x160] sm:$0x3]
    %v4325 = vld [vmem:[#allocation2 + $0x168] sm:$0xff]
    %v4326 = vld [vmem:[#allocation2 + $0x170] sm:$0xff]
    %v4327 = vld [vmem:[#allocation2 + $0x178] sm:$0x3]
    %v4328 = vld [vmem:[#allocation2 + $0x180] sm:$0xff]
    %v4329 = vld [vmem:[#allocation2 + $0x188] sm:$0xff]
    %v4330 = vld [vmem:[#allocation2 + $0x190] sm:$0x3]
    %v4331 = vld [vmem:[#allocation2 + $0x198] sm:$0xff]
    %v4332 = vld [vmem:[#allocation2 + $0x1a0] sm:$0xff]
    %v4333 = vld [vmem:[#allocation2 + $0x1a8] sm:$0x3]
    %v4334 = vld [vmem:[#allocation2 + $0x1b0] sm:$0xff]
    %v4335 = vld [vmem:[#allocation2 + $0x1b8] sm:$0xff]
    %v4336 = vld [vmem:[#allocation2 + $0x1c0] sm:$0x3]
    %v4337 = vld [vmem:[#allocation2 + $0x1c8] sm:$0xff]
    %v4338 = vld [vmem:[#allocation2 + $0x1d0] sm:$0xff]
    %v4339 = vld [vmem:[#allocation2 + $0x1d8] sm:$0x3]
    %v4340 = vld [vmem:[#allocation2 + $0x1e0] sm:$0xff]
    %v4341 = vld [vmem:[#allocation2 + $0x1e8] sm:$0xff]
    %v4342 = vld [vmem:[#allocation2 + $0x1f0] sm:$0x3]
    %v4343 = vld [vmem:[#allocation2 + $0x1f8] sm:$0xff]
    %v4344 = vld [vmem:[#allocation2 + $0x200] sm:$0xff]
    %v4345 = vld [vmem:[#allocation2 + $0x208] sm:$0x3]
    %v4346 = vld [vmem:[#allocation2 + $0x210] sm:$0xff]
    %v4347 = vld [vmem:[#allocation2 + $0x218] sm:$0xff]
    %v4348 = vld [vmem:[#allocation2 + $0x220] sm:$0x3]
    %v4349 = vld [vmem:[#allocation2 + $0x228] sm:$0xff]
    %v4350 = vld [vmem:[#allocation2 + $0x230] sm:$0xff]
    %v4351 = vld [vmem:[#allocation2 + $0x238] sm:$0x3]
    %v4352 = vld [vmem:[#allocation2 + $0x240] sm:$0xff]
    %v4353 = vld [vmem:[#allocation2 + $0x248] sm:$0xff]
    %v4354 = vld [vmem:[#allocation2 + $0x250] sm:$0x3]
    %v4355 = vld [vmem:[#allocation2 + $0x258] sm:$0xff]
    %v4356 = vld [vmem:[#allocation2 + $0x260] sm:$0xff]
    %v4357 = vld [vmem:[#allocation2 + $0x268] sm:$0x3]
    %v4358 = vld [vmem:[#allocation2 + $0x270] sm:$0xff]
    %v4359 = vld [vmem:[#allocation2 + $0x278] sm:$0xff]
    %v4360 = vld [vmem:[#allocation2 + $0x280] sm:$0x3]
    %v4361 = vld [vmem:[#allocation2 + $0x288] sm:$0xff]
    %v4362 = vld [vmem:[#allocation2 + $0x290] sm:$0xff]
    %v4363 = vld [vmem:[#allocation2 + $0x298] sm:$0x3]
    %v4364 = vld [vmem:[#allocation2 + $0x2a0] sm:$0xff]
    %v4365 = vld [vmem:[#allocation2 + $0x2a8] sm:$0xff]
    %v4366 = vld [vmem:[#allocation2 + $0x2b0] sm:$0x3]
    %v4367 = vld [vmem:[#allocation2 + $0x2b8] sm:$0xff]
    %v4368 = vld [vmem:[#allocation2 + $0x2c0] sm:$0xff]
    %v4369 = vld [vmem:[#allocation2 + $0x2c8] sm:$0x3]
    %v4370 = vld [vmem:[#allocation2 + $0x2d0] sm:$0xff]
    %v4371 = vld [vmem:[#allocation2 + $0x2d8] sm:$0xff]
    %v4372 = vld [vmem:[#allocation2 + $0x2e0] sm:$0x3]
    %v4373 = vld [vmem:[#allocation2 + $0x2e8] sm:$0xff]
    %v4374 = vld [vmem:[#allocation2 + $0x2f0] sm:$0xff]
    %v4375 = vld [vmem:[#allocation2 + $0x2f8] sm:$0x3]
    %v4376 = vld [vmem:[#allocation2 + $0x300] sm:$0xff]
    %v4377 = vld [vmem:[#allocation2 + $0x308] sm:$0xff]
    %v4378 = vld [vmem:[#allocation2 + $0x310] sm:$0x3]
    %v4379 = vld [vmem:[#allocation2 + $0x318] sm:$0xff]
    %v4380 = vld [vmem:[#allocation2 + $0x320] sm:$0xff]
    %v4381 = vld [vmem:[#allocation2 + $0x328] sm:$0x3]
    %v4382 = vld [vmem:[#allocation2 + $0x330] sm:$0xff]
    %v4383 = vld [vmem:[#allocation2 + $0x338] sm:$0xff]
    %v4384 = vld [vmem:[#allocation2 + $0x340] sm:$0x3]
    %v4385 = vld [vmem:[#allocation2 + $0x348] sm:$0xff]
    %v4386 = vld [vmem:[#allocation2 + $0x350] sm:$0xff]
    %v4387 = vld [vmem:[#allocation2 + $0x358] sm:$0x3]
    %v4484 = vrot.slane %v4280, 1
    %v4485 = vrot.slane %v4281, 1
    %v4486 = vsel %vm231, %v4484, %v4485
    %v4487 = vrot.slane %v4282, 1
    %v4488 = vsel %vm231, %v4485, %v4487
    %v4489 = vrot.slane %v4283, 1
    %v4490 = vrot.slane %v4284, 1
    %v4491 = vsel %vm231, %v4489, %v4490
    %v4492 = vrot.slane %v4285, 1
    %v4493 = vsel %vm231, %v4490, %v4492
    %v4494 = vrot.slane %v4286, 1
    %v4495 = vrot.slane %v4287, 1
    %v4496 = vsel %vm231, %v4494, %v4495
    %v4497 = vrot.slane %v4288, 1
    %v4498 = vsel %vm231, %v4495, %v4497
    %v4499 = vrot.slane %v4289, 1
    %v4500 = vrot.slane %v4290, 1
    %v4501 = vsel %vm231, %v4499, %v4500
    %v4502 = vrot.slane %v4291, 1
    %v4503 = vsel %vm231, %v4500, %v4502
    %v4504 = vrot.slane %v4292, 1
    %v4505 = vrot.slane %v4293, 1
    %v4506 = vsel %vm231, %v4504, %v4505
    %v4507 = vrot.slane %v4294, 1
    %v4508 = vsel %vm231, %v4505, %v4507
    %v4509 = vrot.slane %v4295, 1
    %v4510 = vrot.slane %v4296, 1
    %v4511 = vsel %vm231, %v4509, %v4510
    %v4512 = vrot.slane %v4297, 1
    %v4513 = vsel %vm231, %v4510, %v4512
    %v4514 = vrot.slane %v4298, 1
    %v4515 = vrot.slane %v4299, 1
    %v4516 = vsel %vm231, %v4514, %v4515
    %v4517 = vrot.slane %v4300, 1
    %v4518 = vsel %vm231, %v4515, %v4517
    %v4519 = vrot.slane %v4301, 1
    %v4520 = vrot.slane %v4302, 1
    %v4521 = vsel %vm231, %v4519, %v4520
    %v4522 = vrot.slane %v4303, 1
    %v4523 = vsel %vm231, %v4520, %v4522
    %v4524 = vrot.slane %v4304, 1
    %v4525 = vrot.slane %v4305, 1
    %v4526 = vsel %vm231, %v4524, %v4525
    %v4527 = vrot.slane %v4306, 1
    %v4528 = vsel %vm231, %v4525, %v4527
    %v4529 = vrot.slane %v4307, 1
    %v4530 = vrot.slane %v4308, 1
    %v4531 = vsel %vm231, %v4529, %v4530
    %v4532 = vrot.slane %v4309, 1
    %v4533 = vsel %vm231, %v4530, %v4532
    %v4534 = vrot.slane %v4310, 1
    %v4535 = vrot.slane %v4311, 1
    %v4536 = vsel %vm231, %v4534, %v4535
    %v4537 = vrot.slane %v4312, 1
    %v4538 = vsel %vm231, %v4535, %v4537
    %v4539 = vrot.slane %v4313, 1
    %v4540 = vrot.slane %v4314, 1
    %v4541 = vsel %vm231, %v4539, %v4540
    %v4542 = vrot.slane %v4315, 1
    %v4543 = vsel %vm231, %v4540, %v4542
    %v4544 = vrot.slane %v4316, 1
    %v4545 = vrot.slane %v4317, 1
    %v4546 = vsel %vm231, %v4544, %v4545
    %v4547 = vrot.slane %v4318, 1
    %v4548 = vsel %vm231, %v4545, %v4547
    %v4549 = vrot.slane %v4319, 1
    %v4550 = vrot.slane %v4320, 1
    %v4551 = vsel %vm231, %v4549, %v4550
    %v4552 = vrot.slane %v4321, 1
    %v4553 = vsel %vm231, %v4550, %v4552
    %v4554 = vrot.slane %v4322, 1
    %v4555 = vrot.slane %v4323, 1
    %v4556 = vsel %vm231, %v4554, %v4555
    %v4557 = vrot.slane %v4324, 1
    %v4558 = vsel %vm231, %v4555, %v4557
    %v4559 = vrot.slane %v4325, 1
    %v4560 = vrot.slane %v4326, 1
    %v4561 = vsel %vm231, %v4559, %v4560
    %v4562 = vrot.slane %v4327, 1
    %v4563 = vsel %vm231, %v4560, %v4562
    %v4564 = vrot.slane %v4334, 1
    %v4565 = vrot.slane %v4335, 1
    %v4566 = vsel %vm231, %v4564, %v4565
    %v4567 = vrot.slane %v4336, 1
    %v4568 = vsel %vm231, %v4565, %v4567
    %v4569 = vrot.slane %v4337, 1
    %v4570 = vrot.slane %v4338, 1
    %v4571 = vsel %vm231, %v4569, %v4570
    %v4572 = vrot.slane %v4339, 1
    %v4573 = vsel %vm231, %v4570, %v4572
    %v4574 = vrot.slane %v4340, 1
    %v4575 = vrot.slane %v4341, 1
    %v4576 = vsel %vm231, %v4574, %v4575
    %v4577 = vrot.slane %v4342, 1
    %v4578 = vsel %vm231, %v4575, %v4577
    %v4579 = vrot.slane %v4343, 1
    %v4580 = vrot.slane %v4344, 1
    %v4581 = vsel %vm231, %v4579, %v4580
    %v4582 = vrot.slane %v4345, 1
    %v4583 = vsel %vm231, %v4580, %v4582
    %v4584 = vrot.slane %v4346, 1
    %v4585 = vrot.slane %v4347, 1
    %v4586 = vsel %vm231, %v4584, %v4585
    %v4587 = vrot.slane %v4348, 1
    %v4588 = vsel %vm231, %v4585, %v4587
    %v4589 = vrot.slane %v4349, 1
    %v4590 = vrot.slane %v4350, 1
    %v4591 = vsel %vm231, %v4589, %v4590
    %v4592 = vrot.slane %v4351, 1
    %v4593 = vsel %vm231, %v4590, %v4592
    %v4594 = vrot.slane %v4352, 1
    %v4595 = vrot.slane %v4353, 1
    %v4596 = vsel %vm231, %v4594, %v4595
    %v4597 = vrot.slane %v4354, 1
    %v4598 = vsel %vm231, %v4595, %v4597
    %v4599 = vrot.slane %v4355, 1
    %v4600 = vrot.slane %v4356, 1
    %v4601 = vsel %vm231, %v4599, %v4600
    %v4602 = vrot.slane %v4357, 1
    %v4603 = vsel %vm231, %v4600, %v4602
    %v4604 = vrot.slane %v4358, 1
    %v4605 = vrot.slane %v4359, 1
    %v4606 = vsel %vm231, %v4604, %v4605
    %v4607 = vrot.slane %v4360, 1
    %v4608 = vsel %vm231, %v4605, %v4607
    %v4609 = vrot.slane %v4361, 1
    %v4610 = vrot.slane %v4362, 1
    %v4611 = vsel %vm231, %v4609, %v4610
    %v4612 = vrot.slane %v4363, 1
    %v4613 = vsel %vm231, %v4610, %v4612
    %v4614 = vrot.slane %v4364, 1
    %v4615 = vrot.slane %v4365, 1
    %v4616 = vsel %vm231, %v4614, %v4615
    %v4617 = vrot.slane %v4366, 1
    %v4618 = vsel %vm231, %v4615, %v4617
    %v4619 = vrot.slane %v4367, 1
    %v4620 = vrot.slane %v4368, 1
    %v4621 = vsel %vm231, %v4619, %v4620
    %v4622 = vrot.slane %v4369, 1
    %v4623 = vsel %vm231, %v4620, %v4622
    %v4624 = vrot.slane %v4370, 1
    %v4625 = vrot.slane %v4371, 1
    %v4626 = vsel %vm231, %v4624, %v4625
    %v4627 = vrot.slane %v4372, 1
    %v4628 = vsel %vm231, %v4625, %v4627
    %v4629 = vrot.slane %v4373, 1
    %v4630 = vrot.slane %v4374, 1
    %v4631 = vsel %vm231, %v4629, %v4630
    %v4632 = vrot.slane %v4375, 1
    %v4633 = vsel %vm231, %v4630, %v4632
    %v4634 = vrot.slane %v4376, 1
    %v4635 = vrot.slane %v4377, 1
    %v4636 = vsel %vm231, %v4634, %v4635
    %v4637 = vrot.slane %v4378, 1
    %v4638 = vsel %vm231, %v4635, %v4637
    %v4639 = vrot.slane %v4379, 1
    %v4640 = vrot.slane %v4380, 1
    %v4641 = vsel %vm231, %v4639, %v4640
    %v4642 = vrot.slane %v4381, 1
    %v4643 = vsel %vm231, %v4640, %v4642
    %v4708 = vrot.slane %v4280, 2
    %v4709 = vrot.slane %v4281, 2
    %v4710 = vsel %vm456, %v4708, %v4709
    %v4711 = vrot.slane %v4282, 2
    %v4712 = vsel %vm456, %v4709, %v4711
    %v4713 = vrot.slane %v4283, 2
    %v4714 = vrot.slane %v4284, 2
    %v4715 = vsel %vm456, %v4713, %v4714
    %v4716 = vrot.slane %v4285, 2
    %v4717 = vsel %vm456, %v4714, %v4716
    %v4718 = vrot.slane %v4286, 2
    %v4719 = vrot.slane %v4287, 2
    %v4720 = vsel %vm456, %v4718, %v4719
    %v4721 = vrot.slane %v4288, 2
    %v4722 = vsel %vm456, %v4719, %v4721
    %v4723 = vrot.slane %v4289, 2
    %v4724 = vrot.slane %v4290, 2
    %v4725 = vsel %vm456, %v4723, %v4724
    %v4726 = vrot.slane %v4291, 2
    %v4727 = vsel %vm456, %v4724, %v4726
    %v4728 = vrot.slane %v4292, 2
    %v4729 = vrot.slane %v4293, 2
    %v4730 = vsel %vm456, %v4728, %v4729
    %v4731 = vrot.slane %v4294, 2
    %v4732 = vsel %vm456, %v4729, %v4731
    %v4733 = vrot.slane %v4295, 2
    %v4734 = vrot.slane %v4296, 2
    %v4735 = vsel %vm456, %v4733, %v4734
    %v4736 = vrot.slane %v4297, 2
    %v4737 = vsel %vm456, %v4734, %v4736
    %v4738 = vrot.slane %v4298, 2
    %v4739 = vrot.slane %v4299, 2
    %v4740 = vsel %vm456, %v4738, %v4739
    %v4741 = vrot.slane %v4300, 2
    %v4742 = vsel %vm456, %v4739, %v4741
    %v4743 = vrot.slane %v4301, 2
    %v4744 = vrot.slane %v4302, 2
    %v4745 = vsel %vm456, %v4743, %v4744
    %v4746 = vrot.slane %v4303, 2
    %v4747 = vsel %vm456, %v4744, %v4746
    %v4748 = vrot.slane %v4304, 2
    %v4749 = vrot.slane %v4305, 2
    %v4750 = vsel %vm456, %v4748, %v4749
    %v4751 = vrot.slane %v4306, 2
    %v4752 = vsel %vm456, %v4749, %v4751
    %v4753 = vrot.slane %v4307, 2
    %v4754 = vrot.slane %v4308, 2
    %v4755 = vsel %vm456, %v4753, %v4754
    %v4756 = vrot.slane %v4309, 2
    %v4757 = vsel %vm456, %v4754, %v4756
    %v4758 = vrot.slane %v4310, 2
    %v4759 = vrot.slane %v4311, 2
    %v4760 = vsel %vm456, %v4758, %v4759
    %v4761 = vrot.slane %v4312, 2
    %v4762 = vsel %vm456, %v4759, %v4761
    %v4763 = vrot.slane %v4313, 2
    %v4764 = vrot.slane %v4314, 2
    %v4765 = vsel %vm456, %v4763, %v4764
    %v4766 = vrot.slane %v4315, 2
    %v4767 = vsel %vm456, %v4764, %v4766
    %v4768 = vrot.slane %v4316, 2
    %v4769 = vrot.slane %v4317, 2
    %v4770 = vsel %vm456, %v4768, %v4769
    %v4771 = vrot.slane %v4318, 2
    %v4772 = vsel %vm456, %v4769, %v4771
    %v4773 = vrot.slane %v4319, 2
    %v4774 = vrot.slane %v4320, 2
    %v4775 = vsel %vm456, %v4773, %v4774
    %v4776 = vrot.slane %v4321, 2
    %v4777 = vsel %vm456, %v4774, %v4776
    %v4778 = vrot.slane %v4322, 2
    %v4779 = vrot.slane %v4323, 2
    %v4780 = vsel %vm456, %v4778, %v4779
    %v4781 = vrot.slane %v4324, 2
    %v4782 = vsel %vm456, %v4779, %v4781
    %v4783 = vrot.slane %v4325, 2
    %v4784 = vrot.slane %v4326, 2
    %v4785 = vsel %vm456, %v4783, %v4784
    %v4786 = vrot.slane %v4327, 2
    %v4787 = vsel %vm456, %v4784, %v4786
    %v4788 = vrot.slane %v4334, 2
    %v4789 = vrot.slane %v4335, 2
    %v4790 = vsel %vm456, %v4788, %v4789
    %v4791 = vrot.slane %v4336, 2
    %v4792 = vsel %vm456, %v4789, %v4791
    %v4793 = vrot.slane %v4337, 2
    %v4794 = vrot.slane %v4338, 2
    %v4795 = vsel %vm456, %v4793, %v4794
    %v4796 = vrot.slane %v4339, 2
    %v4797 = vsel %vm456, %v4794, %v4796
    %v4798 = vrot.slane %v4340, 2
    %v4799 = vrot.slane %v4341, 2
    %v4800 = vsel %vm456, %v4798, %v4799
    %v4801 = vrot.slane %v4342, 2
    %v4802 = vsel %vm456, %v4799, %v4801
    %v4803 = vrot.slane %v4343, 2
    %v4804 = vrot.slane %v4344, 2
    %v4805 = vsel %vm456, %v4803, %v4804
    %v4806 = vrot.slane %v4345, 2
    %v4807 = vsel %vm456, %v4804, %v4806
    %v4808 = vrot.slane %v4346, 2
    %v4809 = vrot.slane %v4347, 2
    %v4810 = vsel %vm456, %v4808, %v4809
    %v4811 = vrot.slane %v4348, 2
    %v4812 = vsel %vm456, %v4809, %v4811
    %v4813 = vrot.slane %v4349, 2
    %v4814 = vrot.slane %v4350, 2
    %v4815 = vsel %vm456, %v4813, %v4814
    %v4816 = vrot.slane %v4351, 2
    %v4817 = vsel %vm456, %v4814, %v4816
    %v4818 = vrot.slane %v4352, 2
    %v4819 = vrot.slane %v4353, 2
    %v4820 = vsel %vm456, %v4818, %v4819
    %v4821 = vrot.slane %v4354, 2
    %v4822 = vsel %vm456, %v4819, %v4821
    %v4823 = vrot.slane %v4355, 2
    %v4824 = vrot.slane %v4356, 2
    %v4825 = vsel %vm456, %v4823, %v4824
    %v4826 = vrot.slane %v4357, 2
    %v4827 = vsel %vm456, %v4824, %v4826
    %v4828 = vrot.slane %v4358, 2
    %v4829 = vrot.slane %v4359, 2
    %v4830 = vsel %vm456, %v4828, %v4829
    %v4831 = vrot.slane %v4360, 2
    %v4832 = vsel %vm456, %v4829, %v4831
    %v4833 = vrot.slane %v4361, 2
    %v4834 = vrot.slane %v4362, 2
    %v4835 = vsel %vm456, %v4833, %v4834
    %v4836 = vrot.slane %v4363, 2
    %v4837 = vsel %vm456, %v4834, %v4836
    %v4838 = vrot.slane %v4364, 2
    %v4839 = vrot.slane %v4365, 2
    %v4840 = vsel %vm456, %v4838, %v4839
    %v4841 = vrot.slane %v4366, 2
    %v4842 = vsel %vm456, %v4839, %v4841
    %v4843 = vrot.slane %v4367, 2
    %v4844 = vrot.slane %v4368, 2
    %v4845 = vsel %vm456, %v4843, %v4844
    %v4846 = vrot.slane %v4369, 2
    %v4847 = vsel %vm456, %v4844, %v4846
    %v4848 = vrot.slane %v4370, 2
    %v4849 = vrot.slane %v4371, 2
    %v4850 = vsel %vm456, %v4848, %v4849
    %v4851 = vrot.slane %v4372, 2
    %v4852 = vsel %vm456, %v4849, %v4851
    %v4853 = vrot.slane %v4373, 2
    %v4854 = vrot.slane %v4374, 2
    %v4855 = vsel %vm456, %v4853, %v4854
    %v4856 = vrot.slane %v4375, 2
    %v4857 = vsel %vm456, %v4854, %v4856
    %v4858 = vrot.slane %v4376, 2
    %v4859 = vrot.slane %v4377, 2
    %v4860 = vsel %vm456, %v4858, %v4859
    %v4861 = vrot.slane %v4378, 2
    %v4862 = vsel %vm456, %v4859, %v4861
    %v4863 = vrot.slane %v4379, 2
    %v4864 = vrot.slane %v4380, 2
    %v4865 = vsel %vm456, %v4863, %v4864
    %v4866 = vrot.slane %v4381, 2
    %v4867 = vsel %vm456, %v4864, %v4866
    %v4938 = vrot.slane %v4328, 1
    %v4939 = vrot.slane %v4329, 1
    %v4940 = vsel %vm231, %v4938, %v4939
    %v4941 = vrot.slane %v4330, 1
    %v4942 = vsel %vm231, %v4939, %v4941
    %v4943 = vrot.slane %v4382, 1
    %v4944 = vrot.slane %v4383, 1
    %v4945 = vsel %vm231, %v4943, %v4944
    %v4946 = vrot.slane %v4384, 1
    %v4947 = vsel %vm231, %v4944, %v4946
    %v4952 = vrot.slane %v4328, 2
    %v4953 = vrot.slane %v4329, 2
    %v4954 = vsel %vm456, %v4952, %v4953
    %v4955 = vrot.slane %v4330, 2
    %v4956 = vsel %vm456, %v4953, %v4955
    %v4957 = vrot.slane %v4382, 2
    %v4958 = vrot.slane %v4383, 2
    %v4959 = vsel %vm456, %v4957, %v4958
    %v4960 = vrot.slane %v4384, 2
    %v4961 = vsel %vm456, %v4958, %v4960
    %v4972 = vrot.slane %v4331, 1
    %v4973 = vrot.slane %v4332, 1
    %v4974 = vsel %vm231, %v4972, %v4973
    %v4975 = vrot.slane %v4333, 1
    %v4976 = vsel %vm231, %v4973, %v4975
    %v4977 = vrot.slane %v4385, 1
    %v4978 = vrot.slane %v4386, 1
    %v4979 = vsel %vm231, %v4977, %v4978
    %v4980 = vrot.slane %v4387, 1
    %v4981 = vsel %vm231, %v4978, %v4980
    %v4986 = vrot.slane %v4331, 2
    %v4987 = vrot.slane %v4332, 2
    %v4988 = vsel %vm456, %v4986, %v4987
    %v4989 = vrot.slane %v4333, 2
    %v4990 = vsel %vm456, %v4987, %v4989
    %v4991 = vrot.slane %v4385, 2
    %v4992 = vrot.slane %v4386, 2
    %v4993 = vsel %vm456, %v4991, %v4992
    %v4994 = vrot.slane %v4387, 2
    %v4995 = vsel %vm456, %v4992, %v4994
    %v5000 = vpack.c.bf16 %v4280, %v4280
    %v5001 = vpack.c.bf16 %v4281, %v4281
    %v5002 = vpack.c.bf16 %v4283, %v4283
    %v5003 = vpack.c.bf16 %v4284, %v4284
    %v5004 = vpack.c.bf16 %v4286, %v4286
    %v5005 = vpack.c.bf16 %v4287, %v4287
    %v5006 = vpack.c.bf16 %v4289, %v4289
    %v5007 = vpack.c.bf16 %v4290, %v4290
    %v5008 = vpack.c.bf16 %v4292, %v4292
    %v5009 = vpack.c.bf16 %v4293, %v4293
    %v5010 = vpack.c.bf16 %v4295, %v4295
    %v5011 = vpack.c.bf16 %v4296, %v4296
    %v5012 = vpack.c.bf16 %v4298, %v4298
    %v5013 = vpack.c.bf16 %v4299, %v4299
    %v5014 = vpack.c.bf16 %v4301, %v4301
    %v5015 = vpack.c.bf16 %v4302, %v4302
    %v5016 = vpack.c.bf16 %v4304, %v4304
    %v5017 = vpack.c.bf16 %v4305, %v4305
    %v5018 = vpack.c.bf16 %v4307, %v4307
    %v5019 = vpack.c.bf16 %v4308, %v4308
    %v5020 = vpack.c.bf16 %v4310, %v4310
    %v5021 = vpack.c.bf16 %v4311, %v4311
    %v5022 = vpack.c.bf16 %v4313, %v4313
    %v5023 = vpack.c.bf16 %v4314, %v4314
    %v5024 = vpack.c.bf16 %v4316, %v4316
    %v5025 = vpack.c.bf16 %v4317, %v4317
    %v5026 = vpack.c.bf16 %v4319, %v4319
    %v5027 = vpack.c.bf16 %v4320, %v4320
    %v5028 = vpack.c.bf16 %v4322, %v4322
    %v5029 = vpack.c.bf16 %v4323, %v4323
    %v5030 = vpack.c.bf16 %v4325, %v4325
    %v5031 = vpack.c.bf16 %v4326, %v4326
    %v5032 = vpack.c.bf16 %v4334, %v4334
    %v5033 = vpack.c.bf16 %v4335, %v4335
    %v5034 = vpack.c.bf16 %v4337, %v4337
    %v5035 = vpack.c.bf16 %v4338, %v4338
    %v5036 = vpack.c.bf16 %v4340, %v4340
    %v5037 = vpack.c.bf16 %v4341, %v4341
    %v5038 = vpack.c.bf16 %v4343, %v4343
    %v5039 = vpack.c.bf16 %v4344, %v4344
    %v5040 = vpack.c.bf16 %v4346, %v4346
    %v5041 = vpack.c.bf16 %v4347, %v4347
    %v5042 = vpack.c.bf16 %v4349, %v4349
    %v5043 = vpack.c.bf16 %v4350, %v4350
    %v5044 = vpack.c.bf16 %v4352, %v4352
    %v5045 = vpack.c.bf16 %v4353, %v4353
    %v5046 = vpack.c.bf16 %v4355, %v4355
    %v5047 = vpack.c.bf16 %v4356, %v4356
    %v5048 = vpack.c.bf16 %v4358, %v4358
    %v5049 = vpack.c.bf16 %v4359, %v4359
    %v5050 = vpack.c.bf16 %v4361, %v4361
    %v5051 = vpack.c.bf16 %v4362, %v4362
    %v5052 = vpack.c.bf16 %v4364, %v4364
    %v5053 = vpack.c.bf16 %v4365, %v4365
    %v5054 = vpack.c.bf16 %v4367, %v4367
    %v5055 = vpack.c.bf16 %v4368, %v4368
    %v5056 = vpack.c.bf16 %v4370, %v4370
    %v5057 = vpack.c.bf16 %v4371, %v4371
    %v5058 = vpack.c.bf16 %v4373, %v4373
    %v5059 = vpack.c.bf16 %v4374, %v4374
    %v5060 = vpack.c.bf16 %v4376, %v4376
    %v5061 = vpack.c.bf16 %v4377, %v4377
    %v5062 = vpack.c.bf16 %v4379, %v4379
    %v5063 = vpack.c.bf16 %v4380, %v4380
    %v5064 = vpack.c.bf16 %v4486, %v4486
    %v5065 = vpack.c.bf16 %v4488, %v4488
    %v5066 = vpack.c.bf16 %v4491, %v4491
    %v5067 = vpack.c.bf16 %v4493, %v4493
    %v5068 = vpack.c.bf16 %v4496, %v4496
    %v5069 = vpack.c.bf16 %v4498, %v4498
    %v5070 = vpack.c.bf16 %v4501, %v4501
    %v5071 = vpack.c.bf16 %v4503, %v4503
    %v5072 = vpack.c.bf16 %v4506, %v4506
    %v5073 = vpack.c.bf16 %v4508, %v4508
    %v5074 = vpack.c.bf16 %v4511, %v4511
    %v5075 = vpack.c.bf16 %v4513, %v4513
    %v5076 = vpack.c.bf16 %v4516, %v4516
    %v5077 = vpack.c.bf16 %v4518, %v4518
    %v5078 = vpack.c.bf16 %v4521, %v4521
    %v5079 = vpack.c.bf16 %v4523, %v4523
    %v5080 = vpack.c.bf16 %v4526, %v4526
    %v5081 = vpack.c.bf16 %v4528, %v4528
    %v5082 = vpack.c.bf16 %v4531, %v4531
    %v5083 = vpack.c.bf16 %v4533, %v4533
    %v5084 = vpack.c.bf16 %v4536, %v4536
    %v5085 = vpack.c.bf16 %v4538, %v4538
    %v5086 = vpack.c.bf16 %v4541, %v4541
    %v5087 = vpack.c.bf16 %v4543, %v4543
    %v5088 = vpack.c.bf16 %v4546, %v4546
    %v5089 = vpack.c.bf16 %v4548, %v4548
    %v5090 = vpack.c.bf16 %v4551, %v4551
    %v5091 = vpack.c.bf16 %v4553, %v4553
    %v5092 = vpack.c.bf16 %v4556, %v4556
    %v5093 = vpack.c.bf16 %v4558, %v4558
    %v5094 = vpack.c.bf16 %v4561, %v4561
    %v5095 = vpack.c.bf16 %v4563, %v4563
    %v5096 = vpack.c.bf16 %v4566, %v4566
    %v5097 = vpack.c.bf16 %v4568, %v4568
    %v5098 = vpack.c.bf16 %v4571, %v4571
    %v5099 = vpack.c.bf16 %v4573, %v4573
    %v5100 = vpack.c.bf16 %v4576, %v4576
    %v5101 = vpack.c.bf16 %v4578, %v4578
    %v5102 = vpack.c.bf16 %v4581, %v4581
    %v5103 = vpack.c.bf16 %v4583, %v4583
    %v5104 = vpack.c.bf16 %v4586, %v4586
    %v5105 = vpack.c.bf16 %v4588, %v4588
    %v5106 = vpack.c.bf16 %v4591, %v4591
    %v5107 = vpack.c.bf16 %v4593, %v4593
    %v5108 = vpack.c.bf16 %v4596, %v4596
    %v5109 = vpack.c.bf16 %v4598, %v4598
    %v5110 = vpack.c.bf16 %v4601, %v4601
    %v5111 = vpack.c.bf16 %v4603, %v4603
    %v5112 = vpack.c.bf16 %v4606, %v4606
    %v5113 = vpack.c.bf16 %v4608, %v4608
    %v5114 = vpack.c.bf16 %v4611, %v4611
    %v5115 = vpack.c.bf16 %v4613, %v4613
    %v5116 = vpack.c.bf16 %v4616, %v4616
    %v5117 = vpack.c.bf16 %v4618, %v4618
    %v5118 = vpack.c.bf16 %v4621, %v4621
    %v5119 = vpack.c.bf16 %v4623, %v4623
    %v5120 = vpack.c.bf16 %v4626, %v4626
    %v5121 = vpack.c.bf16 %v4628, %v4628
    %v5122 = vpack.c.bf16 %v4631, %v4631
    %v5123 = vpack.c.bf16 %v4633, %v4633
    %v5124 = vpack.c.bf16 %v4636, %v4636
    %v5125 = vpack.c.bf16 %v4638, %v4638
    %v5126 = vpack.c.bf16 %v4641, %v4641
    %v5127 = vpack.c.bf16 %v4643, %v4643
    %v5128 = vpack.c.bf16 %v4710, %v4710
    %v5129 = vpack.c.bf16 %v4712, %v4712
    %v5130 = vpack.c.bf16 %v4715, %v4715
    %v5131 = vpack.c.bf16 %v4717, %v4717
    %v5132 = vpack.c.bf16 %v4720, %v4720
    %v5133 = vpack.c.bf16 %v4722, %v4722
    %v5134 = vpack.c.bf16 %v4725, %v4725
    %v5135 = vpack.c.bf16 %v4727, %v4727
    %v5136 = vpack.c.bf16 %v4730, %v4730
    %v5137 = vpack.c.bf16 %v4732, %v4732
    %v5138 = vpack.c.bf16 %v4735, %v4735
    %v5139 = vpack.c.bf16 %v4737, %v4737
    %v5140 = vpack.c.bf16 %v4740, %v4740
    %v5141 = vpack.c.bf16 %v4742, %v4742
    %v5142 = vpack.c.bf16 %v4745, %v4745
    %v5143 = vpack.c.bf16 %v4747, %v4747
    %v5144 = vpack.c.bf16 %v4750, %v4750
    %v5145 = vpack.c.bf16 %v4752, %v4752
    %v5146 = vpack.c.bf16 %v4755, %v4755
    %v5147 = vpack.c.bf16 %v4757, %v4757
    %v5148 = vpack.c.bf16 %v4760, %v4760
    %v5149 = vpack.c.bf16 %v4762, %v4762
    %v5150 = vpack.c.bf16 %v4765, %v4765
    %v5151 = vpack.c.bf16 %v4767, %v4767
    %v5152 = vpack.c.bf16 %v4770, %v4770
    %v5153 = vpack.c.bf16 %v4772, %v4772
    %v5154 = vpack.c.bf16 %v4775, %v4775
    %v5155 = vpack.c.bf16 %v4777, %v4777
    %v5156 = vpack.c.bf16 %v4780, %v4780
    %v5157 = vpack.c.bf16 %v4782, %v4782
    %v5158 = vpack.c.bf16 %v4785, %v4785
    %v5159 = vpack.c.bf16 %v4787, %v4787
    %v5160 = vpack.c.bf16 %v4790, %v4790
    %v5161 = vpack.c.bf16 %v4792, %v4792
    %v5162 = vpack.c.bf16 %v4795, %v4795
    %v5163 = vpack.c.bf16 %v4797, %v4797
    %v5164 = vpack.c.bf16 %v4800, %v4800
    %v5165 = vpack.c.bf16 %v4802, %v4802
    %v5166 = vpack.c.bf16 %v4805, %v4805
    %v5167 = vpack.c.bf16 %v4807, %v4807
    %v5168 = vpack.c.bf16 %v4810, %v4810
    %v5169 = vpack.c.bf16 %v4812, %v4812
    %v5170 = vpack.c.bf16 %v4815, %v4815
    %v5171 = vpack.c.bf16 %v4817, %v4817
    %v5172 = vpack.c.bf16 %v4820, %v4820
    %v5173 = vpack.c.bf16 %v4822, %v4822
    %v5174 = vpack.c.bf16 %v4825, %v4825
    %v5175 = vpack.c.bf16 %v4827, %v4827
    %v5176 = vpack.c.bf16 %v4830, %v4830
    %v5177 = vpack.c.bf16 %v4832, %v4832
    %v5178 = vpack.c.bf16 %v4835, %v4835
    %v5179 = vpack.c.bf16 %v4837, %v4837
    %v5180 = vpack.c.bf16 %v4840, %v4840
    %v5181 = vpack.c.bf16 %v4842, %v4842
    %v5182 = vpack.c.bf16 %v4845, %v4845
    %v5183 = vpack.c.bf16 %v4847, %v4847
    %v5184 = vpack.c.bf16 %v4850, %v4850
    %v5185 = vpack.c.bf16 %v4852, %v4852
    %v5186 = vpack.c.bf16 %v4855, %v4855
    %v5187 = vpack.c.bf16 %v4857, %v4857
    %v5188 = vpack.c.bf16 %v4860, %v4860
    %v5189 = vpack.c.bf16 %v4862, %v4862
    %v5190 = vpack.c.bf16 %v4865, %v4865
    %v5191 = vpack.c.bf16 %v4867, %v4867
    %v5192 = vpack.c.bf16 %v4328, %v4328
    %v5193 = vpack.c.bf16 %v4329, %v4329
    %v5194 = vpack.c.bf16 %v4382, %v4382
    %v5195 = vpack.c.bf16 %v4383, %v4383
    %v5196 = vpack.c.bf16 %v4940, %v4940
    %v5197 = vpack.c.bf16 %v4942, %v4942
    %v5198 = vpack.c.bf16 %v4945, %v4945
    %v5199 = vpack.c.bf16 %v4947, %v4947
    %v5200 = vpack.c.bf16 %v4954, %v4954
    %v5201 = vpack.c.bf16 %v4956, %v4956
    %v5202 = vpack.c.bf16 %v4959, %v4959
    %v5203 = vpack.c.bf16 %v4961, %v4961
    %v5204 = vpack.c.bf16 %v4331, %v4331
    %v5205 = vpack.c.bf16 %v4332, %v4332
    %v5206 = vpack.c.bf16 %v4385, %v4385
    %v5207 = vpack.c.bf16 %v4386, %v4386
    %v5208 = vpack.c.bf16 %v4974, %v4974
    %v5209 = vpack.c.bf16 %v4976, %v4976
    %v5210 = vpack.c.bf16 %v4979, %v4979
    %v5211 = vpack.c.bf16 %v4981, %v4981
    %v5212 = vpack.c.bf16 %v4988, %v4988
    %v5213 = vpack.c.bf16 %v4990, %v4990
    %v5214 = vpack.c.bf16 %v4993, %v4993
    %v5215 = vpack.c.bf16 %v4995, %v4995
    %v5280 = vunpack.c.l.b16 %v5000
    %v5281 = vunpack.c.l.b16 %v5001
    %v5282 = vunpack.c.l.b16 %v5002
    %v5283 = vunpack.c.l.b16 %v5003
    %v5284 = vunpack.c.l.b16 %v5004
    %v5285 = vunpack.c.l.b16 %v5005
    %v5286 = vunpack.c.l.b16 %v5006
    %v5287 = vunpack.c.l.b16 %v5007
    %v5288 = vunpack.c.l.b16 %v5008
    %v5289 = vunpack.c.l.b16 %v5009
    %v5290 = vunpack.c.l.b16 %v5010
    %v5291 = vunpack.c.l.b16 %v5011
    %v5292 = vunpack.c.l.b16 %v5012
    %v5293 = vunpack.c.l.b16 %v5013
    %v5294 = vunpack.c.l.b16 %v5014
    %v5295 = vunpack.c.l.b16 %v5015
    %v5296 = vunpack.c.l.b16 %v5016
    %v5297 = vunpack.c.l.b16 %v5017
    %v5298 = vunpack.c.l.b16 %v5018
    %v5299 = vunpack.c.l.b16 %v5019
    %v5300 = vunpack.c.l.b16 %v5020
    %v5301 = vunpack.c.l.b16 %v5021
    %v5302 = vunpack.c.l.b16 %v5022
    %v5303 = vunpack.c.l.b16 %v5023
    %v5304 = vunpack.c.l.b16 %v5024
    %v5305 = vunpack.c.l.b16 %v5025
    %v5306 = vunpack.c.l.b16 %v5026
    %v5307 = vunpack.c.l.b16 %v5027
    %v5308 = vunpack.c.l.b16 %v5028
    %v5309 = vunpack.c.l.b16 %v5029
    %v5310 = vunpack.c.l.b16 %v5030
    %v5311 = vunpack.c.l.b16 %v5031
    %v5312 = vunpack.c.l.b16 %v5032
    %v5313 = vunpack.c.l.b16 %v5033
    %v5314 = vunpack.c.l.b16 %v5034
    %v5315 = vunpack.c.l.b16 %v5035
    %v5316 = vunpack.c.l.b16 %v5036
    %v5317 = vunpack.c.l.b16 %v5037
    %v5318 = vunpack.c.l.b16 %v5038
    %v5319 = vunpack.c.l.b16 %v5039
    %v5320 = vunpack.c.l.b16 %v5040
    %v5321 = vunpack.c.l.b16 %v5041
    %v5322 = vunpack.c.l.b16 %v5042
    %v5323 = vunpack.c.l.b16 %v5043
    %v5324 = vunpack.c.l.b16 %v5044
    %v5325 = vunpack.c.l.b16 %v5045
    %v5326 = vunpack.c.l.b16 %v5046
    %v5327 = vunpack.c.l.b16 %v5047
    %v5328 = vunpack.c.l.b16 %v5048
    %v5329 = vunpack.c.l.b16 %v5049
    %v5330 = vunpack.c.l.b16 %v5050
    %v5331 = vunpack.c.l.b16 %v5051
    %v5332 = vunpack.c.l.b16 %v5052
    %v5333 = vunpack.c.l.b16 %v5053
    %v5334 = vunpack.c.l.b16 %v5054
    %v5335 = vunpack.c.l.b16 %v5055
    %v5336 = vunpack.c.l.b16 %v5056
    %v5337 = vunpack.c.l.b16 %v5057
    %v5338 = vunpack.c.l.b16 %v5058
    %v5339 = vunpack.c.l.b16 %v5059
    %v5340 = vunpack.c.l.b16 %v5060
    %v5341 = vunpack.c.l.b16 %v5061
    %v5342 = vunpack.c.l.b16 %v5062
    %v5343 = vunpack.c.l.b16 %v5063
    %v5344 = vpack.c.b16 %v5281, %v5280
    %v5345 = vpack.c.b16 %v5283, %v5282
    %v5346 = vpack.c.b16 %v5285, %v5284
    %v5347 = vpack.c.b16 %v5287, %v5286
    %v5348 = vpack.c.b16 %v5289, %v5288
    %v5349 = vpack.c.b16 %v5291, %v5290
    %v5350 = vpack.c.b16 %v5293, %v5292
    %v5351 = vpack.c.b16 %v5295, %v5294
    %v5352 = vpack.c.b16 %v5297, %v5296
    %v5353 = vpack.c.b16 %v5299, %v5298
    %v5354 = vpack.c.b16 %v5301, %v5300
    %v5355 = vpack.c.b16 %v5303, %v5302
    %v5356 = vpack.c.b16 %v5305, %v5304
    %v5357 = vpack.c.b16 %v5307, %v5306
    %v5358 = vpack.c.b16 %v5309, %v5308
    %v5359 = vpack.c.b16 %v5311, %v5310
    %v5360 = vpack.c.b16 %v5313, %v5312
    %v5361 = vpack.c.b16 %v5315, %v5314
    %v5362 = vpack.c.b16 %v5317, %v5316
    %v5363 = vpack.c.b16 %v5319, %v5318
    %v5364 = vpack.c.b16 %v5321, %v5320
    %v5365 = vpack.c.b16 %v5323, %v5322
    %v5366 = vpack.c.b16 %v5325, %v5324
    %v5367 = vpack.c.b16 %v5327, %v5326
    %v5368 = vpack.c.b16 %v5329, %v5328
    %v5369 = vpack.c.b16 %v5331, %v5330
    %v5370 = vpack.c.b16 %v5333, %v5332
    %v5371 = vpack.c.b16 %v5335, %v5334
    %v5372 = vpack.c.b16 %v5337, %v5336
    %v5373 = vpack.c.b16 %v5339, %v5338
    %v5374 = vpack.c.b16 %v5341, %v5340
    %v5375 = vpack.c.b16 %v5343, %v5342
    %v5472 = vunpack.c.l.b16 %v5064
    %v5473 = vunpack.c.l.b16 %v5065
    %v5474 = vunpack.c.l.b16 %v5066
    %v5475 = vunpack.c.l.b16 %v5067
    %v5476 = vunpack.c.l.b16 %v5068
    %v5477 = vunpack.c.l.b16 %v5069
    %v5478 = vunpack.c.l.b16 %v5070
    %v5479 = vunpack.c.l.b16 %v5071
    %v5480 = vunpack.c.l.b16 %v5072
    %v5481 = vunpack.c.l.b16 %v5073
    %v5482 = vunpack.c.l.b16 %v5074
    %v5483 = vunpack.c.l.b16 %v5075
    %v5484 = vunpack.c.l.b16 %v5076
    %v5485 = vunpack.c.l.b16 %v5077
    %v5486 = vunpack.c.l.b16 %v5078
    %v5487 = vunpack.c.l.b16 %v5079
    %v5488 = vunpack.c.l.b16 %v5080
    %v5489 = vunpack.c.l.b16 %v5081
    %v5490 = vunpack.c.l.b16 %v5082
    %v5491 = vunpack.c.l.b16 %v5083
    %v5492 = vunpack.c.l.b16 %v5084
    %v5493 = vunpack.c.l.b16 %v5085
    %v5494 = vunpack.c.l.b16 %v5086
    %v5495 = vunpack.c.l.b16 %v5087
    %v5496 = vunpack.c.l.b16 %v5088
    %v5497 = vunpack.c.l.b16 %v5089
    %v5498 = vunpack.c.l.b16 %v5090
    %v5499 = vunpack.c.l.b16 %v5091
    %v5500 = vunpack.c.l.b16 %v5092
    %v5501 = vunpack.c.l.b16 %v5093
    %v5502 = vunpack.c.l.b16 %v5094
    %v5503 = vunpack.c.l.b16 %v5095
    %v5504 = vunpack.c.l.b16 %v5096
    %v5505 = vunpack.c.l.b16 %v5097
    %v5506 = vunpack.c.l.b16 %v5098
    %v5507 = vunpack.c.l.b16 %v5099
    %v5508 = vunpack.c.l.b16 %v5100
    %v5509 = vunpack.c.l.b16 %v5101
    %v5510 = vunpack.c.l.b16 %v5102
    %v5511 = vunpack.c.l.b16 %v5103
    %v5512 = vunpack.c.l.b16 %v5104
    %v5513 = vunpack.c.l.b16 %v5105
    %v5514 = vunpack.c.l.b16 %v5106
    %v5515 = vunpack.c.l.b16 %v5107
    %v5516 = vunpack.c.l.b16 %v5108
    %v5517 = vunpack.c.l.b16 %v5109
    %v5518 = vunpack.c.l.b16 %v5110
    %v5519 = vunpack.c.l.b16 %v5111
    %v5520 = vunpack.c.l.b16 %v5112
    %v5521 = vunpack.c.l.b16 %v5113
    %v5522 = vunpack.c.l.b16 %v5114
    %v5523 = vunpack.c.l.b16 %v5115
    %v5524 = vunpack.c.l.b16 %v5116
    %v5525 = vunpack.c.l.b16 %v5117
    %v5526 = vunpack.c.l.b16 %v5118
    %v5527 = vunpack.c.l.b16 %v5119
    %v5528 = vunpack.c.l.b16 %v5120
    %v5529 = vunpack.c.l.b16 %v5121
    %v5530 = vunpack.c.l.b16 %v5122
    %v5531 = vunpack.c.l.b16 %v5123
    %v5532 = vunpack.c.l.b16 %v5124
    %v5533 = vunpack.c.l.b16 %v5125
    %v5534 = vunpack.c.l.b16 %v5126
    %v5535 = vunpack.c.l.b16 %v5127
    %v5536 = vpack.c.b16 %v5473, %v5472
    %v5537 = vpack.c.b16 %v5475, %v5474
    %v5538 = vpack.c.b16 %v5477, %v5476
    %v5539 = vpack.c.b16 %v5479, %v5478
    %v5540 = vpack.c.b16 %v5481, %v5480
    %v5541 = vpack.c.b16 %v5483, %v5482
    %v5542 = vpack.c.b16 %v5485, %v5484
    %v5543 = vpack.c.b16 %v5487, %v5486
    %v5544 = vpack.c.b16 %v5489, %v5488
    %v5545 = vpack.c.b16 %v5491, %v5490
    %v5546 = vpack.c.b16 %v5493, %v5492
    %v5547 = vpack.c.b16 %v5495, %v5494
    %v5548 = vpack.c.b16 %v5497, %v5496
    %v5549 = vpack.c.b16 %v5499, %v5498
    %v5550 = vpack.c.b16 %v5501, %v5500
    %v5551 = vpack.c.b16 %v5503, %v5502
    %v5552 = vpack.c.b16 %v5505, %v5504
    %v5553 = vpack.c.b16 %v5507, %v5506
    %v5554 = vpack.c.b16 %v5509, %v5508
    %v5555 = vpack.c.b16 %v5511, %v5510
    %v5556 = vpack.c.b16 %v5513, %v5512
    %v5557 = vpack.c.b16 %v5515, %v5514
    %v5558 = vpack.c.b16 %v5517, %v5516
    %v5559 = vpack.c.b16 %v5519, %v5518
    %v5560 = vpack.c.b16 %v5521, %v5520
    %v5561 = vpack.c.b16 %v5523, %v5522
    %v5562 = vpack.c.b16 %v5525, %v5524
    %v5563 = vpack.c.b16 %v5527, %v5526
    %v5564 = vpack.c.b16 %v5529, %v5528
    %v5565 = vpack.c.b16 %v5531, %v5530
    %v5566 = vpack.c.b16 %v5533, %v5532
    %v5567 = vpack.c.b16 %v5535, %v5534
    %v5664 = vunpack.c.l.b16 %v5128
    %v5665 = vunpack.c.l.b16 %v5129
    %v5666 = vunpack.c.l.b16 %v5130
    %v5667 = vunpack.c.l.b16 %v5131
    %v5668 = vunpack.c.l.b16 %v5132
    %v5669 = vunpack.c.l.b16 %v5133
    %v5670 = vunpack.c.l.b16 %v5134
    %v5671 = vunpack.c.l.b16 %v5135
    %v5672 = vunpack.c.l.b16 %v5136
    %v5673 = vunpack.c.l.b16 %v5137
    %v5674 = vunpack.c.l.b16 %v5138
    %v5675 = vunpack.c.l.b16 %v5139
    %v5676 = vunpack.c.l.b16 %v5140
    %v5677 = vunpack.c.l.b16 %v5141
    %v5678 = vunpack.c.l.b16 %v5142
    %v5679 = vunpack.c.l.b16 %v5143
    %v5680 = vunpack.c.l.b16 %v5144
    %v5681 = vunpack.c.l.b16 %v5145
    %v5682 = vunpack.c.l.b16 %v5146
    %v5683 = vunpack.c.l.b16 %v5147
    %v5684 = vunpack.c.l.b16 %v5148
    %v5685 = vunpack.c.l.b16 %v5149
    %v5686 = vunpack.c.l.b16 %v5150
    %v5687 = vunpack.c.l.b16 %v5151
    %v5688 = vunpack.c.l.b16 %v5152
    %v5689 = vunpack.c.l.b16 %v5153
    %v5690 = vunpack.c.l.b16 %v5154
    %v5691 = vunpack.c.l.b16 %v5155
    %v5692 = vunpack.c.l.b16 %v5156
    %v5693 = vunpack.c.l.b16 %v5157
    %v5694 = vunpack.c.l.b16 %v5158
    %v5695 = vunpack.c.l.b16 %v5159
    %v5696 = vunpack.c.l.b16 %v5160
    %v5697 = vunpack.c.l.b16 %v5161
    %v5698 = vunpack.c.l.b16 %v5162
    %v5699 = vunpack.c.l.b16 %v5163
    %v5700 = vunpack.c.l.b16 %v5164
    %v5701 = vunpack.c.l.b16 %v5165
    %v5702 = vunpack.c.l.b16 %v5166
    %v5703 = vunpack.c.l.b16 %v5167
    %v5704 = vunpack.c.l.b16 %v5168
    %v5705 = vunpack.c.l.b16 %v5169
    %v5706 = vunpack.c.l.b16 %v5170
    %v5707 = vunpack.c.l.b16 %v5171
    %v5708 = vunpack.c.l.b16 %v5172
    %v5709 = vunpack.c.l.b16 %v5173
    %v5710 = vunpack.c.l.b16 %v5174
    %v5711 = vunpack.c.l.b16 %v5175
    %v5712 = vunpack.c.l.b16 %v5176
    %v5713 = vunpack.c.l.b16 %v5177
    %v5714 = vunpack.c.l.b16 %v5178
    %v5715 = vunpack.c.l.b16 %v5179
    %v5716 = vunpack.c.l.b16 %v5180
    %v5717 = vunpack.c.l.b16 %v5181
    %v5718 = vunpack.c.l.b16 %v5182
    %v5719 = vunpack.c.l.b16 %v5183
    %v5720 = vunpack.c.l.b16 %v5184
    %v5721 = vunpack.c.l.b16 %v5185
    %v5722 = vunpack.c.l.b16 %v5186
    %v5723 = vunpack.c.l.b16 %v5187
    %v5724 = vunpack.c.l.b16 %v5188
    %v5725 = vunpack.c.l.b16 %v5189
    %v5726 = vunpack.c.l.b16 %v5190
    %v5727 = vunpack.c.l.b16 %v5191
    %v5728 = vpack.c.b16 %v5665, %v5664
    %v5729 = vpack.c.b16 %v5667, %v5666
    %v5730 = vpack.c.b16 %v5669, %v5668
    %v5731 = vpack.c.b16 %v5671, %v5670
    %v5732 = vpack.c.b16 %v5673, %v5672
    %v5733 = vpack.c.b16 %v5675, %v5674
    %v5734 = vpack.c.b16 %v5677, %v5676
    %v5735 = vpack.c.b16 %v5679, %v5678
    %v5736 = vpack.c.b16 %v5681, %v5680
    %v5737 = vpack.c.b16 %v5683, %v5682
    %v5738 = vpack.c.b16 %v5685, %v5684
    %v5739 = vpack.c.b16 %v5687, %v5686
    %v5740 = vpack.c.b16 %v5689, %v5688
    %v5741 = vpack.c.b16 %v5691, %v5690
    %v5742 = vpack.c.b16 %v5693, %v5692
    %v5743 = vpack.c.b16 %v5695, %v5694
    %v5744 = vpack.c.b16 %v5697, %v5696
    %v5745 = vpack.c.b16 %v5699, %v5698
    %v5746 = vpack.c.b16 %v5701, %v5700
    %v5747 = vpack.c.b16 %v5703, %v5702
    %v5748 = vpack.c.b16 %v5705, %v5704
    %v5749 = vpack.c.b16 %v5707, %v5706
    %v5750 = vpack.c.b16 %v5709, %v5708
    %v5751 = vpack.c.b16 %v5711, %v5710
    %v5752 = vpack.c.b16 %v5713, %v5712
    %v5753 = vpack.c.b16 %v5715, %v5714
    %v5754 = vpack.c.b16 %v5717, %v5716
    %v5755 = vpack.c.b16 %v5719, %v5718
    %v5756 = vpack.c.b16 %v5721, %v5720
    %v5757 = vpack.c.b16 %v5723, %v5722
    %v5758 = vpack.c.b16 %v5725, %v5724
    %v5759 = vpack.c.b16 %v5727, %v5726
    %v5796 = vunpack.c.l.b16 %v5192
    %v5797 = vunpack.c.l.b16 %v5193
    %v5798 = vunpack.c.l.b16 %v5194
    %v5799 = vunpack.c.l.b16 %v5195
    %v5800 = vpack.c.b16 %v5797, %v5796
    %v5801 = vpack.c.b16 %v5799, %v5798
    %v5808 = vunpack.c.l.b16 %v5196
    %v5809 = vunpack.c.l.b16 %v5197
    %v5810 = vunpack.c.l.b16 %v5198
    %v5811 = vunpack.c.l.b16 %v5199
    %v5812 = vpack.c.b16 %v5809, %v5808
    %v5813 = vpack.c.b16 %v5811, %v5810
    %v5820 = vunpack.c.l.b16 %v5200
    %v5821 = vunpack.c.l.b16 %v5201
    %v5822 = vunpack.c.l.b16 %v5202
    %v5823 = vunpack.c.l.b16 %v5203
    %v5824 = vpack.c.b16 %v5821, %v5820
    %v5825 = vpack.c.b16 %v5823, %v5822
    %v5832 = vunpack.c.l.b16 %v5204
    %v5833 = vunpack.c.l.b16 %v5205
    %v5834 = vunpack.c.l.b16 %v5206
    %v5835 = vunpack.c.l.b16 %v5207
    %v5836 = vpack.c.b16 %v5833, %v5832
    %v5837 = vpack.c.b16 %v5835, %v5834
    %v5844 = vunpack.c.l.b16 %v5208
    %v5845 = vunpack.c.l.b16 %v5209
    %v5846 = vunpack.c.l.b16 %v5210
    %v5847 = vunpack.c.l.b16 %v5211
    %v5848 = vpack.c.b16 %v5845, %v5844
    %v5849 = vpack.c.b16 %v5847, %v5846
    %v5856 = vunpack.c.l.b16 %v5212
    %v5857 = vunpack.c.l.b16 %v5213
    %v5858 = vunpack.c.l.b16 %v5214
    %v5859 = vunpack.c.l.b16 %v5215
    %v5860 = vpack.c.b16 %v5857, %v5856
    %v5861 = vpack.c.b16 %v5859, %v5858
    %v5864 = vld [vmem:[%s4] sm:$0xf]
    %v5865 = vld [vmem:[%s4 + $0x4] sm:$0xf]
    %v5866 = vld [vmem:[%s4 + $0x8] sm:$0xf]
    %v5867 = vld [vmem:[%s4 + $0xc] sm:$0xf]
    %v5868 = vld [vmem:[%s4 + $0x10] sm:$0xf]
    %v5869 = vld [vmem:[%s4 + $0x14] sm:$0xf]
    %v5870 = vld [vmem:[%s4 + $0x18] sm:$0xf]
    %v5871 = vld [vmem:[%s4 + $0x1c] sm:$0xf]
    %v5872 = vld [vmem:[%s4 + $0x20] sm:$0xf]
    %v5873 = vld [vmem:[%s4 + $0x24] sm:$0xf]
    %v5874 = vld [vmem:[%s4 + $0x28] sm:$0xf]
    %v5875 = vld [vmem:[%s4 + $0x2c] sm:$0xf]
    %v5876 = vld [vmem:[%s4 + $0x30] sm:$0xf]
    %v5877 = vld [vmem:[%s4 + $0x34] sm:$0xf]
    %v5878 = vld [vmem:[%s4 + $0x38] sm:$0xf]
    %v5879 = vld [vmem:[%s4 + $0x3c] sm:$0xf]
    %v5880 = vld [vmem:[%s4 + $0x40] sm:$0xf]
    %v5881 = vld [vmem:[%s4 + $0x44] sm:$0xf]
    %v5882 = vld [vmem:[%s4 + $0x48] sm:$0xf]
    %v5883 = vld [vmem:[%s4 + $0x4c] sm:$0xf]
    %v5884 = vld [vmem:[%s4 + $0x50] sm:$0xf]
    %v5885 = vld [vmem:[%s4 + $0x54] sm:$0xf]
    %v5886 = vld [vmem:[%s4 + $0x58] sm:$0xf]
    %v5887 = vld [vmem:[%s4 + $0x5c] sm:$0xf]
    %v5888 = vld [vmem:[%s4 + $0x60] sm:$0xf]
    %v5889 = vld [vmem:[%s4 + $0x64] sm:$0xf]
    %v5890 = vld [vmem:[%s4 + $0x68] sm:$0xf]
    %v5891 = vld [vmem:[%s4 + $0x6c] sm:$0xf]
    %v5892 = vld [vmem:[%s4 + $0x70] sm:$0xf]
    %v5893 = vld [vmem:[%s4 + $0x74] sm:$0xf]
    %v5894 = vld [vmem:[%s4 + $0x78] sm:$0xf]
    %v5895 = vld [vmem:[%s4 + $0x7c] sm:$0xf]
    %v5896 = vld [vmem:[%s4 + $0x80] sm:$0xf]
    %v5897 = vld [vmem:[%s4 + $0x84] sm:$0xf]
    %v5898 = vld [vmem:[%s4 + $0x88] sm:$0xf]
    %v5899 = vld [vmem:[%s4 + $0x8c] sm:$0xf]
    %v5900 = vld [vmem:[%s4 + $0x90] sm:$0xf]
    %v5901 = vld [vmem:[%s4 + $0x94] sm:$0xf]
    %v5902 = vld [vmem:[%s4 + $0x98] sm:$0xf]
    %v5903 = vld [vmem:[%s4 + $0x9c] sm:$0xf]
    %v5904 = vld [vmem:[%s4 + $0xa0] sm:$0xf]
    %v5905 = vld [vmem:[%s4 + $0xa4] sm:$0xf]
    %v5906 = vld [vmem:[%s4 + $0xa8] sm:$0xf]
    %v5907 = vld [vmem:[%s4 + $0xac] sm:$0xf]
    %v5908 = vld [vmem:[%s4 + $0xb0] sm:$0xf]
    %v5909 = vld [vmem:[%s4 + $0xb4] sm:$0xf]
    %v5910 = vld [vmem:[%s4 + $0xb8] sm:$0xf]
    %v5911 = vld [vmem:[%s4 + $0xbc] sm:$0xf]
    %v5912 = vld [vmem:[%s4 + $0xc0] sm:$0xf]
    %v5913 = vld [vmem:[%s4 + $0xc4] sm:$0xf]
    %v5914 = vld [vmem:[%s4 + $0xc8] sm:$0xf]
    %v5915 = vld [vmem:[%s4 + $0xcc] sm:$0xf]
    %v5916 = vld [vmem:[%s4 + $0xd0] sm:$0xf]
    %v5917 = vld [vmem:[%s4 + $0xd4] sm:$0xf]
    %v5918 = vld [vmem:[%s4 + $0xd8] sm:$0xf]
    %v5919 = vld [vmem:[%s4 + $0xdc] sm:$0xf]
    %v5920 = vld [vmem:[%s4 + $0xe0] sm:$0xf]
    %v5921 = vld [vmem:[%s4 + $0xe4] sm:$0xf]
    %v5922 = vld [vmem:[%s4 + $0xe8] sm:$0xf]
    %v5923 = vld [vmem:[%s4 + $0xec] sm:$0xf]
    %v5924 = vld [vmem:[%s4 + $0xf0] sm:$0xf]
    %v5925 = vld [vmem:[%s4 + $0xf4] sm:$0xf]
    %v5926 = vld [vmem:[%s4 + $0xf8] sm:$0xf]
    %v5927 = vld [vmem:[%s4 + $0xfc] sm:$0xf]
    %v5928 = vld [vmem:[%s4 + $0x100] sm:$0xf]
    %v5929 = vld [vmem:[%s4 + $0x104] sm:$0xf]
    %v5930 = vld [vmem:[%s4 + $0x108] sm:$0xf]
    %v5931 = vld [vmem:[%s4 + $0x10c] sm:$0xf]
    %v5932 = vld [vmem:[%s4 + $0x110] sm:$0xf]
    %v5933 = vld [vmem:[%s4 + $0x114] sm:$0xf]
    %v5934 = vld [vmem:[%s4 + $0x118] sm:$0xf]
    %v5935 = vld [vmem:[%s4 + $0x11c] sm:$0xf]
    %v5936 = vld [vmem:[%s4 + $0x120] sm:$0xf]
    %v5937 = vld [vmem:[%s4 + $0x124] sm:$0xf]
    %v5938 = vld [vmem:[%s4 + $0x128] sm:$0xf]
    %v5939 = vld [vmem:[%s4 + $0x12c] sm:$0xf]
    %v5940 = vld [vmem:[%s4 + $0x130] sm:$0xf]
    %v5941 = vld [vmem:[%s4 + $0x134] sm:$0xf]
    %v5942 = vld [vmem:[%s4 + $0x138] sm:$0xf]
    %v5943 = vld [vmem:[%s4 + $0x13c] sm:$0xf]
    %v5944 = vld [vmem:[%s4 + $0x140] sm:$0xf]
    %v5945 = vld [vmem:[%s4 + $0x144] sm:$0xf]
    %v5946 = vld [vmem:[%s4 + $0x148] sm:$0xf]
    %v5947 = vld [vmem:[%s4 + $0x14c] sm:$0xf]
    %v5948 = vld [vmem:[%s4 + $0x150] sm:$0xf]
    %v5949 = vld [vmem:[%s4 + $0x154] sm:$0xf]
    %v5950 = vld [vmem:[%s4 + $0x158] sm:$0xf]
    %v5951 = vld [vmem:[%s4 + $0x15c] sm:$0xf]
    %v5952 = vld [vmem:[%s4 + $0x160] sm:$0xf]
    %v5953 = vld [vmem:[%s4 + $0x164] sm:$0xf]
    %v5954 = vld [vmem:[%s4 + $0x168] sm:$0xf]
    %v5955 = vld [vmem:[%s4 + $0x16c] sm:$0xf]
    %v5956 = vld [vmem:[%s4 + $0x170] sm:$0xf]
    %v5957 = vld [vmem:[%s4 + $0x174] sm:$0xf]
    %v5958 = vld [vmem:[%s4 + $0x178] sm:$0xf]
    %v5959 = vld [vmem:[%s4 + $0x17c] sm:$0xf]
    %v5960 = vld [vmem:[%s4 + $0x180] sm:$0xf]
    %v5961 = vld [vmem:[%s4 + $0x184] sm:$0xf]
    %v5962 = vld [vmem:[%s4 + $0x188] sm:$0xf]
    %v5963 = vld [vmem:[%s4 + $0x18c] sm:$0xf]
    %v5964 = vld [vmem:[%s4 + $0x190] sm:$0xf]
    %v5965 = vld [vmem:[%s4 + $0x194] sm:$0xf]
    %v5966 = vld [vmem:[%s4 + $0x198] sm:$0xf]
    %v5967 = vld [vmem:[%s4 + $0x19c] sm:$0xf]
    %v5968 = vld [vmem:[%s4 + $0x1a0] sm:$0xf]
    %v5969 = vld [vmem:[%s4 + $0x1a4] sm:$0xf]
    %v5970 = vld [vmem:[%s4 + $0x1a8] sm:$0xf]
    %v5971 = vld [vmem:[%s4 + $0x1ac] sm:$0xf]
    %v5972 = vld [vmem:[%s4 + $0x1b0] sm:$0xf]
    %v5973 = vld [vmem:[%s4 + $0x1b4] sm:$0xf]
    %v5974 = vld [vmem:[%s4 + $0x1b8] sm:$0xf]
    %v5975 = vld [vmem:[%s4 + $0x1bc] sm:$0xf]
    %v5976 = vld [vmem:[%s4 + $0x1c0] sm:$0xf]
    %v5977 = vld [vmem:[%s4 + $0x1c4] sm:$0xf]
    %v5978 = vld [vmem:[%s4 + $0x1c8] sm:$0xf]
    %v5979 = vld [vmem:[%s4 + $0x1cc] sm:$0xf]
    %v5980 = vld [vmem:[%s4 + $0x1d0] sm:$0xf]
    %v5981 = vld [vmem:[%s4 + $0x1d4] sm:$0xf]
    %v5982 = vld [vmem:[%s4 + $0x1d8] sm:$0xf]
    %v5983 = vld [vmem:[%s4 + $0x1dc] sm:$0xf]
    %v5984 = vld [vmem:[%s4 + $0x1e0] sm:$0xf]
    %v5985 = vld [vmem:[%s4 + $0x1e4] sm:$0xf]
    %v5986 = vld [vmem:[%s4 + $0x1e8] sm:$0xf]
    %v5987 = vld [vmem:[%s4 + $0x1ec] sm:$0xf]
    %v5988 = vld [vmem:[%s4 + $0x1f0] sm:$0xf]
    %v5989 = vld [vmem:[%s4 + $0x1f4] sm:$0xf]
    %v5990 = vld [vmem:[%s4 + $0x1f8] sm:$0xf]
    %v5991 = vld [vmem:[%s4 + $0x1fc] sm:$0xf]
    %v5992 = vld [vmem:[%s4 + $0x200] sm:$0xf]
    %v5993 = vld [vmem:[%s4 + $0x204] sm:$0xf]
    %v5994 = vld [vmem:[%s4 + $0x208] sm:$0xf]
    %v5995 = vld [vmem:[%s4 + $0x20c] sm:$0xf]
    %v5996 = vld [vmem:[%s4 + $0x210] sm:$0xf]
    %v5997 = vld [vmem:[%s4 + $0x214] sm:$0xf]
    %v5998 = vld [vmem:[%s4 + $0x218] sm:$0xf]
    %v5999 = vld [vmem:[%s4 + $0x21c] sm:$0xf]
    %v6000 = vld [vmem:[%s4 + $0x220] sm:$0xf]
    %v6001 = vld [vmem:[%s4 + $0x224] sm:$0xf]
    %v6002 = vld [vmem:[%s4 + $0x228] sm:$0xf]
    %v6003 = vld [vmem:[%s4 + $0x22c] sm:$0xf]
    %v6004 = vld [vmem:[%s4 + $0x230] sm:$0xf]
    %v6005 = vld [vmem:[%s4 + $0x234] sm:$0xf]
    %v6006 = vld [vmem:[%s4 + $0x238] sm:$0xf]
    %v6007 = vld [vmem:[%s4 + $0x23c] sm:$0xf]
    %v6152 = vunpack.c.l.b16 %v5864
    %v6153 = vunpack.c.l.b16 %v5865
    %v6154 = vunpack.c.l.b16 %v5866
    %v6155 = vunpack.c.l.b16 %v5867
    %v6156 = vunpack.c.l.b16 %v5868
    %v6157 = vunpack.c.l.b16 %v5869
    %v6158 = vunpack.c.l.b16 %v5870
    %v6159 = vunpack.c.l.b16 %v5871
    %v6160 = vunpack.c.l.b16 %v5872
    %v6161 = vunpack.c.l.b16 %v5873
    %v6162 = vunpack.c.l.b16 %v5874
    %v6163 = vunpack.c.l.b16 %v5875
    %v6164 = vunpack.c.l.b16 %v5876
    %v6165 = vunpack.c.l.b16 %v5877
    %v6166 = vunpack.c.l.b16 %v5878
    %v6167 = vunpack.c.l.b16 %v5879
    %v6168 = vunpack.c.l.b16 %v5880
    %v6169 = vunpack.c.l.b16 %v5881
    %v6170 = vunpack.c.l.b16 %v5882
    %v6171 = vunpack.c.l.b16 %v5883
    %v6172 = vunpack.c.l.b16 %v5884
    %v6173 = vunpack.c.l.b16 %v5885
    %v6174 = vunpack.c.l.b16 %v5886
    %v6175 = vunpack.c.l.b16 %v5887
    %v6176 = vunpack.c.l.b16 %v5888
    %v6177 = vunpack.c.l.b16 %v5889
    %v6178 = vunpack.c.l.b16 %v5890
    %v6179 = vunpack.c.l.b16 %v5891
    %v6180 = vunpack.c.l.b16 %v5892
    %v6181 = vunpack.c.l.b16 %v5893
    %v6182 = vunpack.c.l.b16 %v5894
    %v6183 = vunpack.c.l.b16 %v5895
    %v6184 = vunpack.c.l.b16 %v5896
    %v6185 = vunpack.c.l.b16 %v5897
    %v6186 = vunpack.c.l.b16 %v5898
    %v6187 = vunpack.c.l.b16 %v5899
    %v6188 = vunpack.c.l.b16 %v5900
    %v6189 = vunpack.c.l.b16 %v5901
    %v6190 = vunpack.c.l.b16 %v5902
    %v6191 = vunpack.c.l.b16 %v5903
    %v6192 = vunpack.c.l.b16 %v5904
    %v6193 = vunpack.c.l.b16 %v5905
    %v6194 = vunpack.c.l.b16 %v5906
    %v6195 = vunpack.c.l.b16 %v5907
    %v6196 = vunpack.c.l.b16 %v5908
    %v6197 = vunpack.c.l.b16 %v5909
    %v6198 = vunpack.c.l.b16 %v5910
    %v6199 = vunpack.c.l.b16 %v5911
    %v6200 = vunpack.c.l.b16 %v5912
    %v6201 = vunpack.c.l.b16 %v5913
    %v6202 = vunpack.c.l.b16 %v5914
    %v6203 = vunpack.c.l.b16 %v5915
    %v6204 = vunpack.c.l.b16 %v5916
    %v6205 = vunpack.c.l.b16 %v5917
    %v6206 = vunpack.c.l.b16 %v5918
    %v6207 = vunpack.c.l.b16 %v5919
    %v6208 = vunpack.c.l.b16 %v5920
    %v6209 = vunpack.c.l.b16 %v5921
    %v6210 = vunpack.c.l.b16 %v5922
    %v6211 = vunpack.c.l.b16 %v5923
    %v6212 = vunpack.c.l.b16 %v5924
    %v6213 = vunpack.c.l.b16 %v5925
    %v6214 = vunpack.c.l.b16 %v5926
    %v6215 = vunpack.c.l.b16 %v5927
    %v6216 = vunpack.c.l.b16 %v5928
    %v6217 = vunpack.c.l.b16 %v5929
    %v6218 = vunpack.c.l.b16 %v5930
    %v6219 = vunpack.c.l.b16 %v5931
    %v6220 = vunpack.c.l.b16 %v5932
    %v6221 = vunpack.c.l.b16 %v5933
    %v6222 = vunpack.c.l.b16 %v5934
    %v6223 = vunpack.c.l.b16 %v5935
    %v6224 = vunpack.c.l.b16 %v5936
    %v6225 = vunpack.c.l.b16 %v5937
    %v6226 = vunpack.c.l.b16 %v5938
    %v6227 = vunpack.c.l.b16 %v5939
    %v6228 = vunpack.c.l.b16 %v5940
    %v6229 = vunpack.c.l.b16 %v5941
    %v6230 = vunpack.c.l.b16 %v5942
    %v6231 = vunpack.c.l.b16 %v5943
    %v6232 = vunpack.c.l.b16 %v5944
    %v6233 = vunpack.c.l.b16 %v5945
    %v6234 = vunpack.c.l.b16 %v5946
    %v6235 = vunpack.c.l.b16 %v5947
    %v6236 = vunpack.c.l.b16 %v5948
    %v6237 = vunpack.c.l.b16 %v5949
    %v6238 = vunpack.c.l.b16 %v5950
    %v6239 = vunpack.c.l.b16 %v5951
    %v6240 = vunpack.c.l.b16 %v5952
    %v6241 = vunpack.c.l.b16 %v5953
    %v6242 = vunpack.c.l.b16 %v5954
    %v6243 = vunpack.c.l.b16 %v5955
    %v6244 = vunpack.c.l.b16 %v5956
    %v6245 = vunpack.c.l.b16 %v5957
    %v6246 = vunpack.c.l.b16 %v5958
    %v6247 = vunpack.c.l.b16 %v5959
    %v6248 = vunpack.c.l.b16 %v5960
    %v6249 = vunpack.c.l.b16 %v5961
    %v6250 = vunpack.c.l.b16 %v5962
    %v6251 = vunpack.c.l.b16 %v5963
    %v6252 = vunpack.c.l.b16 %v5964
    %v6253 = vunpack.c.l.b16 %v5965
    %v6254 = vunpack.c.l.b16 %v5966
    %v6255 = vunpack.c.l.b16 %v5967
    %v6256 = vunpack.c.l.b16 %v5968
    %v6257 = vunpack.c.l.b16 %v5969
    %v6258 = vunpack.c.l.b16 %v5970
    %v6259 = vunpack.c.l.b16 %v5971
    %v6260 = vunpack.c.l.b16 %v5972
    %v6261 = vunpack.c.l.b16 %v5973
    %v6262 = vunpack.c.l.b16 %v5974
    %v6263 = vunpack.c.l.b16 %v5975
    %v6264 = vunpack.c.l.b16 %v5976
    %v6265 = vunpack.c.l.b16 %v5977
    %v6266 = vunpack.c.l.b16 %v5978
    %v6267 = vunpack.c.l.b16 %v5979
    %v6268 = vunpack.c.l.b16 %v5980
    %v6269 = vunpack.c.l.b16 %v5981
    %v6270 = vunpack.c.l.b16 %v5982
    %v6271 = vunpack.c.l.b16 %v5983
    %v6272 = vunpack.c.l.b16 %v5984
    %v6273 = vunpack.c.l.b16 %v5985
    %v6274 = vunpack.c.l.b16 %v5986
    %v6275 = vunpack.c.l.b16 %v5987
    %v6276 = vunpack.c.l.b16 %v5988
    %v6277 = vunpack.c.l.b16 %v5989
    %v6278 = vunpack.c.l.b16 %v5990
    %v6279 = vunpack.c.l.b16 %v5991
    %v6280 = vunpack.c.l.b16 %v5992
    %v6281 = vunpack.c.l.b16 %v5993
    %v6282 = vunpack.c.l.b16 %v5994
    %v6283 = vunpack.c.l.b16 %v5995
    %v6284 = vunpack.c.l.b16 %v5996
    %v6285 = vunpack.c.l.b16 %v5997
    %v6286 = vunpack.c.l.b16 %v5998
    %v6287 = vunpack.c.l.b16 %v5999
    %v6288 = vunpack.c.l.b16 %v6000
    %v6289 = vunpack.c.l.b16 %v6001
    %v6290 = vunpack.c.l.b16 %v6002
    %v6291 = vunpack.c.l.b16 %v6003
    %v6292 = vunpack.c.l.b16 %v6004
    %v6293 = vunpack.c.l.b16 %v6005
    %v6294 = vunpack.c.l.b16 %v6006
    %v6295 = vunpack.c.l.b16 %v6007
    %v6296 = vpack.c.b16 %v6153, %v6152
    %v6297 = vpack.c.b16 %v6155, %v6154
    %v6298 = vpack.c.b16 %v6157, %v6156
    %v6299 = vpack.c.b16 %v6159, %v6158
    %v6300 = vpack.c.b16 %v6161, %v6160
    %v6301 = vpack.c.b16 %v6163, %v6162
    %v6302 = vpack.c.b16 %v6165, %v6164
    %v6303 = vpack.c.b16 %v6167, %v6166
    %v6304 = vpack.c.b16 %v6169, %v6168
    %v6305 = vpack.c.b16 %v6171, %v6170
    %v6306 = vpack.c.b16 %v6173, %v6172
    %v6307 = vpack.c.b16 %v6175, %v6174
    %v6308 = vpack.c.b16 %v6177, %v6176
    %v6309 = vpack.c.b16 %v6179, %v6178
    %v6310 = vpack.c.b16 %v6181, %v6180
    %v6311 = vpack.c.b16 %v6183, %v6182
    %v6312 = vpack.c.b16 %v6185, %v6184
    %v6313 = vpack.c.b16 %v6187, %v6186
    %v6314 = vpack.c.b16 %v6189, %v6188
    %v6315 = vpack.c.b16 %v6191, %v6190
    %v6316 = vpack.c.b16 %v6193, %v6192
    %v6317 = vpack.c.b16 %v6195, %v6194
    %v6318 = vpack.c.b16 %v6197, %v6196
    %v6319 = vpack.c.b16 %v6199, %v6198
    %v6320 = vpack.c.b16 %v6201, %v6200
    %v6321 = vpack.c.b16 %v6203, %v6202
    %v6322 = vpack.c.b16 %v6205, %v6204
    %v6323 = vpack.c.b16 %v6207, %v6206
    %v6324 = vpack.c.b16 %v6209, %v6208
    %v6325 = vpack.c.b16 %v6211, %v6210
    %v6326 = vpack.c.b16 %v6213, %v6212
    %v6327 = vpack.c.b16 %v6215, %v6214
    %v6328 = vpack.c.b16 %v6217, %v6216
    %v6329 = vpack.c.b16 %v6219, %v6218
    %v6330 = vpack.c.b16 %v6221, %v6220
    %v6331 = vpack.c.b16 %v6223, %v6222
    %v6332 = vpack.c.b16 %v6225, %v6224
    %v6333 = vpack.c.b16 %v6227, %v6226
    %v6334 = vpack.c.b16 %v6229, %v6228
    %v6335 = vpack.c.b16 %v6231, %v6230
    %v6336 = vpack.c.b16 %v6233, %v6232
    %v6337 = vpack.c.b16 %v6235, %v6234
    %v6338 = vpack.c.b16 %v6237, %v6236
    %v6339 = vpack.c.b16 %v6239, %v6238
    %v6340 = vpack.c.b16 %v6241, %v6240
    %v6341 = vpack.c.b16 %v6243, %v6242
    %v6342 = vpack.c.b16 %v6245, %v6244
    %v6343 = vpack.c.b16 %v6247, %v6246
    %v6344 = vpack.c.b16 %v6249, %v6248
    %v6345 = vpack.c.b16 %v6251, %v6250
    %v6346 = vpack.c.b16 %v6253, %v6252
    %v6347 = vpack.c.b16 %v6255, %v6254
    %v6348 = vpack.c.b16 %v6257, %v6256
    %v6349 = vpack.c.b16 %v6259, %v6258
    %v6350 = vpack.c.b16 %v6261, %v6260
    %v6351 = vpack.c.b16 %v6263, %v6262
    %v6352 = vpack.c.b16 %v6265, %v6264
    %v6353 = vpack.c.b16 %v6267, %v6266
    %v6354 = vpack.c.b16 %v6269, %v6268
    %v6355 = vpack.c.b16 %v6271, %v6270
    %v6356 = vpack.c.b16 %v6273, %v6272
    %v6357 = vpack.c.b16 %v6275, %v6274
    %v6358 = vpack.c.b16 %v6277, %v6276
    %v6359 = vpack.c.b16 %v6279, %v6278
    %v6360 = vpack.c.b16 %v6281, %v6280
    %v6361 = vpack.c.b16 %v6283, %v6282
    %v6362 = vpack.c.b16 %v6285, %v6284
    %v6363 = vpack.c.b16 %v6287, %v6286
    %v6364 = vpack.c.b16 %v6289, %v6288
    %v6365 = vpack.c.b16 %v6291, %v6290
    %v6366 = vpack.c.b16 %v6293, %v6292
    %v6367 = vpack.c.b16 %v6295, %v6294
    %6440 = vmatpush.bf16.msra.mxu0 %v6303
    %6441 = vmatpush.bf16.msra.mxu0 %v6302
    %6442 = vmatpush.bf16.msra.mxu0 %v6301
    %6443 = vmatpush.bf16.msra.mxu0 %v6300
    %6444 = vmatpush.bf16.msra.mxu0 %v6299
    %6445 = vmatpush.bf16.msra.mxu0 %v6298
    %6446 = vmatpush.bf16.msra.mxu0 %v6297
    %6447 = vmatpush.bf16.msra.mxu0 %v6296
    %6448 = vmatmul.bf16.gmra.mxu0 %v5344
    %v6449 = vpop.f32.mrf.mxu0
    %v6450 = vadd.f32 0.0, %v6449
    %v6451 = vpop.f32.mrf.mxu0
    %v6452 = vadd.f32 0.0, %v6451
    %6453 = vmatmul.bf16.gmra.mxu0 %v5345
    %v6454 = vpop.f32.mrf.mxu0
    %v6455 = vadd.f32 0.0, %v6454
    %v6456 = vpop.f32.mrf.mxu0
    %v6457 = vadd.f32 0.0, %v6456
    %6458 = vmatmul.bf16.gmra.mxu0 %v5346
    %v6459 = vpop.f32.mrf.mxu0
    %v6460 = vadd.f32 0.0, %v6459
    %v6461 = vpop.f32.mrf.mxu0
    %v6462 = vadd.f32 0.0, %v6461
    %6463 = vmatmul.bf16.gmra.mxu0 %v5347
    %v6464 = vpop.f32.mrf.mxu0
    %v6465 = vadd.f32 0.0, %v6464
    %v6466 = vpop.f32.mrf.mxu0
    %v6467 = vadd.f32 0.0, %v6466
    %6468 = vmatmul.bf16.gmra.mxu0 %v5348
    %v6469 = vpop.f32.mrf.mxu0
    %v6470 = vadd.f32 0.0, %v6469
    %v6471 = vpop.f32.mrf.mxu0
    %v6472 = vadd.f32 0.0, %v6471
    %6473 = vmatmul.bf16.gmra.mxu0 %v5349
    %v6474 = vpop.f32.mrf.mxu0
    %v6475 = vadd.f32 0.0, %v6474
    %v6476 = vpop.f32.mrf.mxu0
    %v6477 = vadd.f32 0.0, %v6476
    %6478 = vmatmul.bf16.gmra.mxu0 %v5350
    %v6479 = vpop.f32.mrf.mxu0
    %v6480 = vadd.f32 0.0, %v6479
    %v6481 = vpop.f32.mrf.mxu0
    %v6482 = vadd.f32 0.0, %v6481
    %6483 = vmatmul.bf16.gmra.mxu0 %v5351
    %v6484 = vpop.f32.mrf.mxu0
    %v6485 = vadd.f32 0.0, %v6484
    %v6486 = vpop.f32.mrf.mxu0
    %v6487 = vadd.f32 0.0, %v6486
    %6488 = vmatmul.bf16.gmra.mxu0 %v5352
    %v6489 = vpop.f32.mrf.mxu0
    %v6490 = vadd.f32 0.0, %v6489
    %v6491 = vpop.f32.mrf.mxu0
    %v6492 = vadd.f32 0.0, %v6491
    %6493 = vmatmul.bf16.gmra.mxu0 %v5353
    %v6494 = vpop.f32.mrf.mxu0
    %v6495 = vadd.f32 0.0, %v6494
    %v6496 = vpop.f32.mrf.mxu0
    %v6497 = vadd.f32 0.0, %v6496
    %6498 = vmatmul.bf16.gmra.mxu0 %v5354
    %v6499 = vpop.f32.mrf.mxu0
    %v6500 = vadd.f32 0.0, %v6499
    %v6501 = vpop.f32.mrf.mxu0
    %v6502 = vadd.f32 0.0, %v6501
    %6503 = vmatmul.bf16.gmra.mxu0 %v5355
    %v6504 = vpop.f32.mrf.mxu0
    %v6505 = vadd.f32 0.0, %v6504
    %v6506 = vpop.f32.mrf.mxu0
    %v6507 = vadd.f32 0.0, %v6506
    %6508 = vmatmul.bf16.gmra.mxu0 %v5356
    %v6509 = vpop.f32.mrf.mxu0
    %v6510 = vadd.f32 0.0, %v6509
    %v6511 = vpop.f32.mrf.mxu0
    %v6512 = vadd.f32 0.0, %v6511
    %6513 = vmatmul.bf16.gmra.mxu0 %v5357
    %v6514 = vpop.f32.mrf.mxu0
    %v6515 = vadd.f32 0.0, %v6514
    %v6516 = vpop.f32.mrf.mxu0
    %v6517 = vadd.f32 0.0, %v6516
    %6518 = vmatmul.bf16.gmra.mxu0 %v5358
    %v6519 = vpop.f32.mrf.mxu0
    %v6520 = vadd.f32 0.0, %v6519
    %v6521 = vpop.f32.mrf.mxu0
    %v6522 = vadd.f32 0.0, %v6521
    %6523 = vmatmul.bf16.gmra.mxu0 %v5359
    %v6524 = vpop.f32.mrf.mxu0
    %v6525 = vadd.f32 0.0, %v6524
    %v6526 = vpop.f32.mrf.mxu0
    %v6527 = vadd.f32 0.0, %v6526
    %6528 = vmatmul.bf16.gmra.mxu0 %v5360
    %v6529 = vpop.f32.mrf.mxu0
    %v6530 = vadd.f32 0.0, %v6529
    %v6531 = vpop.f32.mrf.mxu0
    %v6532 = vadd.f32 0.0, %v6531
    %6533 = vmatmul.bf16.gmra.mxu0 %v5361
    %v6534 = vpop.f32.mrf.mxu0
    %v6535 = vadd.f32 0.0, %v6534
    %v6536 = vpop.f32.mrf.mxu0
    %v6537 = vadd.f32 0.0, %v6536
    %6538 = vmatmul.bf16.gmra.mxu0 %v5362
    %v6539 = vpop.f32.mrf.mxu0
    %v6540 = vadd.f32 0.0, %v6539
    %v6541 = vpop.f32.mrf.mxu0
    %v6542 = vadd.f32 0.0, %v6541
    %6543 = vmatmul.bf16.gmra.mxu0 %v5363
    %v6544 = vpop.f32.mrf.mxu0
    %v6545 = vadd.f32 0.0, %v6544
    %v6546 = vpop.f32.mrf.mxu0
    %v6547 = vadd.f32 0.0, %v6546
    %6548 = vmatmul.bf16.gmra.mxu0 %v5364
    %v6549 = vpop.f32.mrf.mxu0
    %v6550 = vadd.f32 0.0, %v6549
    %v6551 = vpop.f32.mrf.mxu0
    %v6552 = vadd.f32 0.0, %v6551
    %6553 = vmatmul.bf16.gmra.mxu0 %v5365
    %v6554 = vpop.f32.mrf.mxu0
    %v6555 = vadd.f32 0.0, %v6554
    %v6556 = vpop.f32.mrf.mxu0
    %v6557 = vadd.f32 0.0, %v6556
    %6558 = vmatmul.bf16.gmra.mxu0 %v5366
    %v6559 = vpop.f32.mrf.mxu0
    %v6560 = vadd.f32 0.0, %v6559
    %v6561 = vpop.f32.mrf.mxu0
    %v6562 = vadd.f32 0.0, %v6561
    %6563 = vmatmul.bf16.gmra.mxu0 %v5367
    %v6564 = vpop.f32.mrf.mxu0
    %v6565 = vadd.f32 0.0, %v6564
    %v6566 = vpop.f32.mrf.mxu0
    %v6567 = vadd.f32 0.0, %v6566
    %6568 = vmatmul.bf16.gmra.mxu0 %v5368
    %v6569 = vpop.f32.mrf.mxu0
    %v6570 = vadd.f32 0.0, %v6569
    %v6571 = vpop.f32.mrf.mxu0
    %v6572 = vadd.f32 0.0, %v6571
    %6573 = vmatmul.bf16.gmra.mxu0 %v5369
    %v6574 = vpop.f32.mrf.mxu0
    %v6575 = vadd.f32 0.0, %v6574
    %v6576 = vpop.f32.mrf.mxu0
    %v6577 = vadd.f32 0.0, %v6576
    %6578 = vmatmul.bf16.gmra.mxu0 %v5370
    %v6579 = vpop.f32.mrf.mxu0
    %v6580 = vadd.f32 0.0, %v6579
    %v6581 = vpop.f32.mrf.mxu0
    %v6582 = vadd.f32 0.0, %v6581
    %6583 = vmatmul.bf16.gmra.mxu0 %v5371
    %v6584 = vpop.f32.mrf.mxu0
    %v6585 = vadd.f32 0.0, %v6584
    %v6586 = vpop.f32.mrf.mxu0
    %v6587 = vadd.f32 0.0, %v6586
    %6588 = vmatmul.bf16.gmra.mxu0 %v5372
    %v6589 = vpop.f32.mrf.mxu0
    %v6590 = vadd.f32 0.0, %v6589
    %v6591 = vpop.f32.mrf.mxu0
    %v6592 = vadd.f32 0.0, %v6591
    %6593 = vmatmul.bf16.gmra.mxu0 %v5373
    %v6594 = vpop.f32.mrf.mxu0
    %v6595 = vadd.f32 0.0, %v6594
    %v6596 = vpop.f32.mrf.mxu0
    %v6597 = vadd.f32 0.0, %v6596
    %6598 = vmatmul.bf16.gmra.mxu0 %v5374
    %v6599 = vpop.f32.mrf.mxu0
    %v6600 = vadd.f32 0.0, %v6599
    %v6601 = vpop.f32.mrf.mxu0
    %v6602 = vadd.f32 0.0, %v6601
    %6603 = vmatmul.bf16.gmra.mxu0 %v5375
    %v6604 = vpop.f32.mrf.mxu0
    %v6605 = vadd.f32 0.0, %v6604
    %v6606 = vpop.f32.mrf.mxu0
    %v6607 = vadd.f32 0.0, %v6606
    %6608 = vdwg.mxu0
    %6609 = vmatpush.bf16.msra.mxu0 %v6311
    %6610 = vmatpush.bf16.msra.mxu0 %v6310
    %6611 = vmatpush.bf16.msra.mxu0 %v6309
    %6612 = vmatpush.bf16.msra.mxu0 %v6308
    %6613 = vmatpush.bf16.msra.mxu0 %v6307
    %6614 = vmatpush.bf16.msra.mxu0 %v6306
    %6615 = vmatpush.bf16.msra.mxu0 %v6305
    %6616 = vmatpush.bf16.msra.mxu0 %v6304
    %6617 = vmatmul.bf16.gmra.mxu0 %v5536
    %v6618 = vpop.f32.mrf.mxu0
    %v6619 = vadd.f32 %v6450, %v6618
    %v6620 = vpop.f32.mrf.mxu0
    %v6621 = vadd.f32 %v6452, %v6620
    %6622 = vmatmul.bf16.gmra.mxu0 %v5537
    %v6623 = vpop.f32.mrf.mxu0
    %v6624 = vadd.f32 %v6455, %v6623
    %v6625 = vpop.f32.mrf.mxu0
    %v6626 = vadd.f32 %v6457, %v6625
    %6627 = vmatmul.bf16.gmra.mxu0 %v5538
    %v6628 = vpop.f32.mrf.mxu0
    %v6629 = vadd.f32 %v6460, %v6628
    %v6630 = vpop.f32.mrf.mxu0
    %v6631 = vadd.f32 %v6462, %v6630
    %6632 = vmatmul.bf16.gmra.mxu0 %v5539
    %v6633 = vpop.f32.mrf.mxu0
    %v6634 = vadd.f32 %v6465, %v6633
    %v6635 = vpop.f32.mrf.mxu0
    %v6636 = vadd.f32 %v6467, %v6635
    %6637 = vmatmul.bf16.gmra.mxu0 %v5540
    %v6638 = vpop.f32.mrf.mxu0
    %v6639 = vadd.f32 %v6470, %v6638
    %v6640 = vpop.f32.mrf.mxu0
    %v6641 = vadd.f32 %v6472, %v6640
    %6642 = vmatmul.bf16.gmra.mxu0 %v5541
    %v6643 = vpop.f32.mrf.mxu0
    %v6644 = vadd.f32 %v6475, %v6643
    %v6645 = vpop.f32.mrf.mxu0
    %v6646 = vadd.f32 %v6477, %v6645
    %6647 = vmatmul.bf16.gmra.mxu0 %v5542
    %v6648 = vpop.f32.mrf.mxu0
    %v6649 = vadd.f32 %v6480, %v6648
    %v6650 = vpop.f32.mrf.mxu0
    %v6651 = vadd.f32 %v6482, %v6650
    %6652 = vmatmul.bf16.gmra.mxu0 %v5543
    %v6653 = vpop.f32.mrf.mxu0
    %v6654 = vadd.f32 %v6485, %v6653
    %v6655 = vpop.f32.mrf.mxu0
    %v6656 = vadd.f32 %v6487, %v6655
    %6657 = vmatmul.bf16.gmra.mxu0 %v5544
    %v6658 = vpop.f32.mrf.mxu0
    %v6659 = vadd.f32 %v6490, %v6658
    %v6660 = vpop.f32.mrf.mxu0
    %v6661 = vadd.f32 %v6492, %v6660
    %6662 = vmatmul.bf16.gmra.mxu0 %v5545
    %v6663 = vpop.f32.mrf.mxu0
    %v6664 = vadd.f32 %v6495, %v6663
    %v6665 = vpop.f32.mrf.mxu0
    %v6666 = vadd.f32 %v6497, %v6665
    %6667 = vmatmul.bf16.gmra.mxu0 %v5546
    %v6668 = vpop.f32.mrf.mxu0
    %v6669 = vadd.f32 %v6500, %v6668
    %v6670 = vpop.f32.mrf.mxu0
    %v6671 = vadd.f32 %v6502, %v6670
    %6672 = vmatmul.bf16.gmra.mxu0 %v5547
    %v6673 = vpop.f32.mrf.mxu0
    %v6674 = vadd.f32 %v6505, %v6673
    %v6675 = vpop.f32.mrf.mxu0
    %v6676 = vadd.f32 %v6507, %v6675
    %6677 = vmatmul.bf16.gmra.mxu0 %v5548
    %v6678 = vpop.f32.mrf.mxu0
    %v6679 = vadd.f32 %v6510, %v6678
    %v6680 = vpop.f32.mrf.mxu0
    %v6681 = vadd.f32 %v6512, %v6680
    %6682 = vmatmul.bf16.gmra.mxu0 %v5549
    %v6683 = vpop.f32.mrf.mxu0
    %v6684 = vadd.f32 %v6515, %v6683
    %v6685 = vpop.f32.mrf.mxu0
    %v6686 = vadd.f32 %v6517, %v6685
    %6687 = vmatmul.bf16.gmra.mxu0 %v5550
    %v6688 = vpop.f32.mrf.mxu0
    %v6689 = vadd.f32 %v6520, %v6688
    %v6690 = vpop.f32.mrf.mxu0
    %v6691 = vadd.f32 %v6522, %v6690
    %6692 = vmatmul.bf16.gmra.mxu0 %v5551
    %v6693 = vpop.f32.mrf.mxu0
    %v6694 = vadd.f32 %v6525, %v6693
    %v6695 = vpop.f32.mrf.mxu0
    %v6696 = vadd.f32 %v6527, %v6695
    %6697 = vmatmul.bf16.gmra.mxu0 %v5552
    %v6698 = vpop.f32.mrf.mxu0
    %v6699 = vadd.f32 %v6530, %v6698
    %v6700 = vpop.f32.mrf.mxu0
    %v6701 = vadd.f32 %v6532, %v6700
    %6702 = vmatmul.bf16.gmra.mxu0 %v5553
    %v6703 = vpop.f32.mrf.mxu0
    %v6704 = vadd.f32 %v6535, %v6703
    %v6705 = vpop.f32.mrf.mxu0
    %v6706 = vadd.f32 %v6537, %v6705
    %6707 = vmatmul.bf16.gmra.mxu0 %v5554
    %v6708 = vpop.f32.mrf.mxu0
    %v6709 = vadd.f32 %v6540, %v6708
    %v6710 = vpop.f32.mrf.mxu0
    %v6711 = vadd.f32 %v6542, %v6710
    %6712 = vmatmul.bf16.gmra.mxu0 %v5555
    %v6713 = vpop.f32.mrf.mxu0
    %v6714 = vadd.f32 %v6545, %v6713
    %v6715 = vpop.f32.mrf.mxu0
    %v6716 = vadd.f32 %v6547, %v6715
    %6717 = vmatmul.bf16.gmra.mxu0 %v5556
    %v6718 = vpop.f32.mrf.mxu0
    %v6719 = vadd.f32 %v6550, %v6718
    %v6720 = vpop.f32.mrf.mxu0
    %v6721 = vadd.f32 %v6552, %v6720
    %6722 = vmatmul.bf16.gmra.mxu0 %v5557
    %v6723 = vpop.f32.mrf.mxu0
    %v6724 = vadd.f32 %v6555, %v6723
    %v6725 = vpop.f32.mrf.mxu0
    %v6726 = vadd.f32 %v6557, %v6725
    %6727 = vmatmul.bf16.gmra.mxu0 %v5558
    %v6728 = vpop.f32.mrf.mxu0
    %v6729 = vadd.f32 %v6560, %v6728
    %v6730 = vpop.f32.mrf.mxu0
    %v6731 = vadd.f32 %v6562, %v6730
    %6732 = vmatmul.bf16.gmra.mxu0 %v5559
    %v6733 = vpop.f32.mrf.mxu0
    %v6734 = vadd.f32 %v6565, %v6733
    %v6735 = vpop.f32.mrf.mxu0
    %v6736 = vadd.f32 %v6567, %v6735
    %6737 = vmatmul.bf16.gmra.mxu0 %v5560
    %v6738 = vpop.f32.mrf.mxu0
    %v6739 = vadd.f32 %v6570, %v6738
    %v6740 = vpop.f32.mrf.mxu0
    %v6741 = vadd.f32 %v6572, %v6740
    %6742 = vmatmul.bf16.gmra.mxu0 %v5561
    %v6743 = vpop.f32.mrf.mxu0
    %v6744 = vadd.f32 %v6575, %v6743
    %v6745 = vpop.f32.mrf.mxu0
    %v6746 = vadd.f32 %v6577, %v6745
    %6747 = vmatmul.bf16.gmra.mxu0 %v5562
    %v6748 = vpop.f32.mrf.mxu0
    %v6749 = vadd.f32 %v6580, %v6748
    %v6750 = vpop.f32.mrf.mxu0
    %v6751 = vadd.f32 %v6582, %v6750
    %6752 = vmatmul.bf16.gmra.mxu0 %v5563
    %v6753 = vpop.f32.mrf.mxu0
    %v6754 = vadd.f32 %v6585, %v6753
    %v6755 = vpop.f32.mrf.mxu0
    %v6756 = vadd.f32 %v6587, %v6755
    %6757 = vmatmul.bf16.gmra.mxu0 %v5564
    %v6758 = vpop.f32.mrf.mxu0
    %v6759 = vadd.f32 %v6590, %v6758
    %v6760 = vpop.f32.mrf.mxu0
    %v6761 = vadd.f32 %v6592, %v6760
    %6762 = vmatmul.bf16.gmra.mxu0 %v5565
    %v6763 = vpop.f32.mrf.mxu0
    %v6764 = vadd.f32 %v6595, %v6763
    %v6765 = vpop.f32.mrf.mxu0
    %v6766 = vadd.f32 %v6597, %v6765
    %6767 = vmatmul.bf16.gmra.mxu0 %v5566
    %v6768 = vpop.f32.mrf.mxu0
    %v6769 = vadd.f32 %v6600, %v6768
    %v6770 = vpop.f32.mrf.mxu0
    %v6771 = vadd.f32 %v6602, %v6770
    %6772 = vmatmul.bf16.gmra.mxu0 %v5567
    %v6773 = vpop.f32.mrf.mxu0
    %v6774 = vadd.f32 %v6605, %v6773
    %v6775 = vpop.f32.mrf.mxu0
    %v6776 = vadd.f32 %v6607, %v6775
    %6777 = vdwg.mxu0
    %6778 = vmatpush.bf16.msra.mxu0 %v6319
    %6779 = vmatpush.bf16.msra.mxu0 %v6318
    %6780 = vmatpush.bf16.msra.mxu0 %v6317
    %6781 = vmatpush.bf16.msra.mxu0 %v6316
    %6782 = vmatpush.bf16.msra.mxu0 %v6315
    %6783 = vmatpush.bf16.msra.mxu0 %v6314
    %6784 = vmatpush.bf16.msra.mxu0 %v6313
    %6785 = vmatpush.bf16.msra.mxu0 %v6312
    %6786 = vmatmul.bf16.gmra.mxu0 %v5728
    %v6787 = vpop.f32.mrf.mxu0
    %v6788 = vadd.f32 %v6619, %v6787
    %v6789 = vpop.f32.mrf.mxu0
    %v6790 = vadd.f32 %v6621, %v6789
    %6791 = vmatmul.bf16.gmra.mxu0 %v5729
    %v6792 = vpop.f32.mrf.mxu0
    %v6793 = vadd.f32 %v6624, %v6792
    %v6794 = vpop.f32.mrf.mxu0
    %v6795 = vadd.f32 %v6626, %v6794
    %6796 = vmatmul.bf16.gmra.mxu0 %v5730
    %v6797 = vpop.f32.mrf.mxu0
    %v6798 = vadd.f32 %v6629, %v6797
    %v6799 = vpop.f32.mrf.mxu0
    %v6800 = vadd.f32 %v6631, %v6799
    %6801 = vmatmul.bf16.gmra.mxu0 %v5731
    %v6802 = vpop.f32.mrf.mxu0
    %v6803 = vadd.f32 %v6634, %v6802
    %v6804 = vpop.f32.mrf.mxu0
    %v6805 = vadd.f32 %v6636, %v6804
    %6806 = vmatmul.bf16.gmra.mxu0 %v5732
    %v6807 = vpop.f32.mrf.mxu0
    %v6808 = vadd.f32 %v6639, %v6807
    %v6809 = vpop.f32.mrf.mxu0
    %v6810 = vadd.f32 %v6641, %v6809
    %6811 = vmatmul.bf16.gmra.mxu0 %v5733
    %v6812 = vpop.f32.mrf.mxu0
    %v6813 = vadd.f32 %v6644, %v6812
    %v6814 = vpop.f32.mrf.mxu0
    %v6815 = vadd.f32 %v6646, %v6814
    %6816 = vmatmul.bf16.gmra.mxu0 %v5734
    %v6817 = vpop.f32.mrf.mxu0
    %v6818 = vadd.f32 %v6649, %v6817
    %v6819 = vpop.f32.mrf.mxu0
    %v6820 = vadd.f32 %v6651, %v6819
    %6821 = vmatmul.bf16.gmra.mxu0 %v5735
    %v6822 = vpop.f32.mrf.mxu0
    %v6823 = vadd.f32 %v6654, %v6822
    %v6824 = vpop.f32.mrf.mxu0
    %v6825 = vadd.f32 %v6656, %v6824
    %6826 = vmatmul.bf16.gmra.mxu0 %v5736
    %v6827 = vpop.f32.mrf.mxu0
    %v6828 = vadd.f32 %v6659, %v6827
    %v6829 = vpop.f32.mrf.mxu0
    %v6830 = vadd.f32 %v6661, %v6829
    %6831 = vmatmul.bf16.gmra.mxu0 %v5737
    %v6832 = vpop.f32.mrf.mxu0
    %v6833 = vadd.f32 %v6664, %v6832
    %v6834 = vpop.f32.mrf.mxu0
    %v6835 = vadd.f32 %v6666, %v6834
    %6836 = vmatmul.bf16.gmra.mxu0 %v5738
    %v6837 = vpop.f32.mrf.mxu0
    %v6838 = vadd.f32 %v6669, %v6837
    %v6839 = vpop.f32.mrf.mxu0
    %v6840 = vadd.f32 %v6671, %v6839
    %6841 = vmatmul.bf16.gmra.mxu0 %v5739
    %v6842 = vpop.f32.mrf.mxu0
    %v6843 = vadd.f32 %v6674, %v6842
    %v6844 = vpop.f32.mrf.mxu0
    %v6845 = vadd.f32 %v6676, %v6844
    %6846 = vmatmul.bf16.gmra.mxu0 %v5740
    %v6847 = vpop.f32.mrf.mxu0
    %v6848 = vadd.f32 %v6679, %v6847
    %v6849 = vpop.f32.mrf.mxu0
    %v6850 = vadd.f32 %v6681, %v6849
    %6851 = vmatmul.bf16.gmra.mxu0 %v5741
    %v6852 = vpop.f32.mrf.mxu0
    %v6853 = vadd.f32 %v6684, %v6852
    %v6854 = vpop.f32.mrf.mxu0
    %v6855 = vadd.f32 %v6686, %v6854
    %6856 = vmatmul.bf16.gmra.mxu0 %v5742
    %v6857 = vpop.f32.mrf.mxu0
    %v6858 = vadd.f32 %v6689, %v6857
    %v6859 = vpop.f32.mrf.mxu0
    %v6860 = vadd.f32 %v6691, %v6859
    %6861 = vmatmul.bf16.gmra.mxu0 %v5743
    %v6862 = vpop.f32.mrf.mxu0
    %v6863 = vadd.f32 %v6694, %v6862
    %v6864 = vpop.f32.mrf.mxu0
    %v6865 = vadd.f32 %v6696, %v6864
    %6866 = vmatmul.bf16.gmra.mxu0 %v5744
    %v6867 = vpop.f32.mrf.mxu0
    %v6868 = vadd.f32 %v6699, %v6867
    %v6869 = vpop.f32.mrf.mxu0
    %v6870 = vadd.f32 %v6701, %v6869
    %6871 = vmatmul.bf16.gmra.mxu0 %v5745
    %v6872 = vpop.f32.mrf.mxu0
    %v6873 = vadd.f32 %v6704, %v6872
    %v6874 = vpop.f32.mrf.mxu0
    %v6875 = vadd.f32 %v6706, %v6874
    %6876 = vmatmul.bf16.gmra.mxu0 %v5746
    %v6877 = vpop.f32.mrf.mxu0
    %v6878 = vadd.f32 %v6709, %v6877
    %v6879 = vpop.f32.mrf.mxu0
    %v6880 = vadd.f32 %v6711, %v6879
    %6881 = vmatmul.bf16.gmra.mxu0 %v5747
    %v6882 = vpop.f32.mrf.mxu0
    %v6883 = vadd.f32 %v6714, %v6882
    %v6884 = vpop.f32.mrf.mxu0
    %v6885 = vadd.f32 %v6716, %v6884
    %6886 = vmatmul.bf16.gmra.mxu0 %v5748
    %v6887 = vpop.f32.mrf.mxu0
    %v6888 = vadd.f32 %v6719, %v6887
    %v6889 = vpop.f32.mrf.mxu0
    %v6890 = vadd.f32 %v6721, %v6889
    %6891 = vmatmul.bf16.gmra.mxu0 %v5749
    %v6892 = vpop.f32.mrf.mxu0
    %v6893 = vadd.f32 %v6724, %v6892
    %v6894 = vpop.f32.mrf.mxu0
    %v6895 = vadd.f32 %v6726, %v6894
    %6896 = vmatmul.bf16.gmra.mxu0 %v5750
    %v6897 = vpop.f32.mrf.mxu0
    %v6898 = vadd.f32 %v6729, %v6897
    %v6899 = vpop.f32.mrf.mxu0
    %v6900 = vadd.f32 %v6731, %v6899
    %6901 = vmatmul.bf16.gmra.mxu0 %v5751
    %v6902 = vpop.f32.mrf.mxu0
    %v6903 = vadd.f32 %v6734, %v6902
    %v6904 = vpop.f32.mrf.mxu0
    %v6905 = vadd.f32 %v6736, %v6904
    %6906 = vmatmul.bf16.gmra.mxu0 %v5752
    %v6907 = vpop.f32.mrf.mxu0
    %v6908 = vadd.f32 %v6739, %v6907
    %v6909 = vpop.f32.mrf.mxu0
    %v6910 = vadd.f32 %v6741, %v6909
    %6911 = vmatmul.bf16.gmra.mxu0 %v5753
    %v6912 = vpop.f32.mrf.mxu0
    %v6913 = vadd.f32 %v6744, %v6912
    %v6914 = vpop.f32.mrf.mxu0
    %v6915 = vadd.f32 %v6746, %v6914
    %6916 = vmatmul.bf16.gmra.mxu0 %v5754
    %v6917 = vpop.f32.mrf.mxu0
    %v6918 = vadd.f32 %v6749, %v6917
    %v6919 = vpop.f32.mrf.mxu0
    %v6920 = vadd.f32 %v6751, %v6919
    %6921 = vmatmul.bf16.gmra.mxu0 %v5755
    %v6922 = vpop.f32.mrf.mxu0
    %v6923 = vadd.f32 %v6754, %v6922
    %v6924 = vpop.f32.mrf.mxu0
    %v6925 = vadd.f32 %v6756, %v6924
    %6926 = vmatmul.bf16.gmra.mxu0 %v5756
    %v6927 = vpop.f32.mrf.mxu0
    %v6928 = vadd.f32 %v6759, %v6927
    %v6929 = vpop.f32.mrf.mxu0
    %v6930 = vadd.f32 %v6761, %v6929
    %6931 = vmatmul.bf16.gmra.mxu0 %v5757
    %v6932 = vpop.f32.mrf.mxu0
    %v6933 = vadd.f32 %v6764, %v6932
    %v6934 = vpop.f32.mrf.mxu0
    %v6935 = vadd.f32 %v6766, %v6934
    %6936 = vmatmul.bf16.gmra.mxu0 %v5758
    %v6937 = vpop.f32.mrf.mxu0
    %v6938 = vadd.f32 %v6769, %v6937
    %v6939 = vpop.f32.mrf.mxu0
    %v6940 = vadd.f32 %v6771, %v6939
    %6941 = vmatmul.bf16.gmra.mxu0 %v5759
    %v6942 = vpop.f32.mrf.mxu0
    %v6943 = vadd.f32 %v6774, %v6942
    %v6944 = vpop.f32.mrf.mxu0
    %v6945 = vadd.f32 %v6776, %v6944
    %6946 = vdwg.mxu0
    %6947 = vmatpush.bf16.msra.mxu0 %v6327
    %6948 = vmatpush.bf16.msra.mxu0 %v6326
    %6949 = vmatpush.bf16.msra.mxu0 %v6325
    %6950 = vmatpush.bf16.msra.mxu0 %v6324
    %6951 = vmatpush.bf16.msra.mxu0 %v6323
    %6952 = vmatpush.bf16.msra.mxu0 %v6322
    %6953 = vmatpush.bf16.msra.mxu0 %v6321
    %6954 = vmatpush.bf16.msra.mxu0 %v6320
    %6955 = vmatmul.bf16.gmra.mxu0 %v5345
    %v6956 = vpop.f32.mrf.mxu0
    %v6957 = vadd.f32 %v6788, %v6956
    %v6958 = vpop.f32.mrf.mxu0
    %v6959 = vadd.f32 %v6790, %v6958
    %6960 = vmatmul.bf16.gmra.mxu0 %v5346
    %v6961 = vpop.f32.mrf.mxu0
    %v6962 = vadd.f32 %v6793, %v6961
    %v6963 = vpop.f32.mrf.mxu0
    %v6964 = vadd.f32 %v6795, %v6963
    %6965 = vmatmul.bf16.gmra.mxu0 %v5347
    %v6966 = vpop.f32.mrf.mxu0
    %v6967 = vadd.f32 %v6798, %v6966
    %v6968 = vpop.f32.mrf.mxu0
    %v6969 = vadd.f32 %v6800, %v6968
    %6970 = vmatmul.bf16.gmra.mxu0 %v5348
    %v6971 = vpop.f32.mrf.mxu0
    %v6972 = vadd.f32 %v6803, %v6971
    %v6973 = vpop.f32.mrf.mxu0
    %v6974 = vadd.f32 %v6805, %v6973
    %6975 = vmatmul.bf16.gmra.mxu0 %v5349
    %v6976 = vpop.f32.mrf.mxu0
    %v6977 = vadd.f32 %v6808, %v6976
    %v6978 = vpop.f32.mrf.mxu0
    %v6979 = vadd.f32 %v6810, %v6978
    %6980 = vmatmul.bf16.gmra.mxu0 %v5350
    %v6981 = vpop.f32.mrf.mxu0
    %v6982 = vadd.f32 %v6813, %v6981
    %v6983 = vpop.f32.mrf.mxu0
    %v6984 = vadd.f32 %v6815, %v6983
    %6985 = vmatmul.bf16.gmra.mxu0 %v5351
    %v6986 = vpop.f32.mrf.mxu0
    %v6987 = vadd.f32 %v6818, %v6986
    %v6988 = vpop.f32.mrf.mxu0
    %v6989 = vadd.f32 %v6820, %v6988
    %6990 = vmatmul.bf16.gmra.mxu0 %v5352
    %v6991 = vpop.f32.mrf.mxu0
    %v6992 = vadd.f32 %v6823, %v6991
    %v6993 = vpop.f32.mrf.mxu0
    %v6994 = vadd.f32 %v6825, %v6993
    %6995 = vmatmul.bf16.gmra.mxu0 %v5353
    %v6996 = vpop.f32.mrf.mxu0
    %v6997 = vadd.f32 %v6828, %v6996
    %v6998 = vpop.f32.mrf.mxu0
    %v6999 = vadd.f32 %v6830, %v6998
    %7000 = vmatmul.bf16.gmra.mxu0 %v5354
    %v7001 = vpop.f32.mrf.mxu0
    %v7002 = vadd.f32 %v6833, %v7001
    %v7003 = vpop.f32.mrf.mxu0
    %v7004 = vadd.f32 %v6835, %v7003
    %7005 = vmatmul.bf16.gmra.mxu0 %v5355
    %v7006 = vpop.f32.mrf.mxu0
    %v7007 = vadd.f32 %v6838, %v7006
    %v7008 = vpop.f32.mrf.mxu0
    %v7009 = vadd.f32 %v6840, %v7008
    %7010 = vmatmul.bf16.gmra.mxu0 %v5356
    %v7011 = vpop.f32.mrf.mxu0
    %v7012 = vadd.f32 %v6843, %v7011
    %v7013 = vpop.f32.mrf.mxu0
    %v7014 = vadd.f32 %v6845, %v7013
    %7015 = vmatmul.bf16.gmra.mxu0 %v5357
    %v7016 = vpop.f32.mrf.mxu0
    %v7017 = vadd.f32 %v6848, %v7016
    %v7018 = vpop.f32.mrf.mxu0
    %v7019 = vadd.f32 %v6850, %v7018
    %7020 = vmatmul.bf16.gmra.mxu0 %v5358
    %v7021 = vpop.f32.mrf.mxu0
    %v7022 = vadd.f32 %v6853, %v7021
    %v7023 = vpop.f32.mrf.mxu0
    %v7024 = vadd.f32 %v6855, %v7023
    %7025 = vmatmul.bf16.gmra.mxu0 %v5359
    %v7026 = vpop.f32.mrf.mxu0
    %v7027 = vadd.f32 %v6858, %v7026
    %v7028 = vpop.f32.mrf.mxu0
    %v7029 = vadd.f32 %v6860, %v7028
    %7030 = vmatmul.bf16.gmra.mxu0 %v5800
    %v7031 = vpop.f32.mrf.mxu0
    %v7032 = vadd.f32 %v6863, %v7031
    %v7033 = vpop.f32.mrf.mxu0
    %v7034 = vadd.f32 %v6865, %v7033
    %7035 = vmatmul.bf16.gmra.mxu0 %v5361
    %v7036 = vpop.f32.mrf.mxu0
    %v7037 = vadd.f32 %v6868, %v7036
    %v7038 = vpop.f32.mrf.mxu0
    %v7039 = vadd.f32 %v6870, %v7038
    %7040 = vmatmul.bf16.gmra.mxu0 %v5362
    %v7041 = vpop.f32.mrf.mxu0
    %v7042 = vadd.f32 %v6873, %v7041
    %v7043 = vpop.f32.mrf.mxu0
    %v7044 = vadd.f32 %v6875, %v7043
    %7045 = vmatmul.bf16.gmra.mxu0 %v5363
    %v7046 = vpop.f32.mrf.mxu0
    %v7047 = vadd.f32 %v6878, %v7046
    %v7048 = vpop.f32.mrf.mxu0
    %v7049 = vadd.f32 %v6880, %v7048
    %7050 = vmatmul.bf16.gmra.mxu0 %v5364
    %v7051 = vpop.f32.mrf.mxu0
    %v7052 = vadd.f32 %v6883, %v7051
    %v7053 = vpop.f32.mrf.mxu0
    %v7054 = vadd.f32 %v6885, %v7053
    %7055 = vmatmul.bf16.gmra.mxu0 %v5365
    %v7056 = vpop.f32.mrf.mxu0
    %v7057 = vadd.f32 %v6888, %v7056
    %v7058 = vpop.f32.mrf.mxu0
    %v7059 = vadd.f32 %v6890, %v7058
    %7060 = vmatmul.bf16.gmra.mxu0 %v5366
    %v7061 = vpop.f32.mrf.mxu0
    %v7062 = vadd.f32 %v6893, %v7061
    %v7063 = vpop.f32.mrf.mxu0
    %v7064 = vadd.f32 %v6895, %v7063
    %7065 = vmatmul.bf16.gmra.mxu0 %v5367
    %v7066 = vpop.f32.mrf.mxu0
    %v7067 = vadd.f32 %v6898, %v7066
    %v7068 = vpop.f32.mrf.mxu0
    %v7069 = vadd.f32 %v6900, %v7068
    %7070 = vmatmul.bf16.gmra.mxu0 %v5368
    %v7071 = vpop.f32.mrf.mxu0
    %v7072 = vadd.f32 %v6903, %v7071
    %v7073 = vpop.f32.mrf.mxu0
    %v7074 = vadd.f32 %v6905, %v7073
    %7075 = vmatmul.bf16.gmra.mxu0 %v5369
    %v7076 = vpop.f32.mrf.mxu0
    %v7077 = vadd.f32 %v6908, %v7076
    %v7078 = vpop.f32.mrf.mxu0
    %v7079 = vadd.f32 %v6910, %v7078
    %7080 = vmatmul.bf16.gmra.mxu0 %v5370
    %v7081 = vpop.f32.mrf.mxu0
    %v7082 = vadd.f32 %v6913, %v7081
    %v7083 = vpop.f32.mrf.mxu0
    %v7084 = vadd.f32 %v6915, %v7083
    %7085 = vmatmul.bf16.gmra.mxu0 %v5371
    %v7086 = vpop.f32.mrf.mxu0
    %v7087 = vadd.f32 %v6918, %v7086
    %v7088 = vpop.f32.mrf.mxu0
    %v7089 = vadd.f32 %v6920, %v7088
    %7090 = vmatmul.bf16.gmra.mxu0 %v5372
    %v7091 = vpop.f32.mrf.mxu0
    %v7092 = vadd.f32 %v6923, %v7091
    %v7093 = vpop.f32.mrf.mxu0
    %v7094 = vadd.f32 %v6925, %v7093
    %7095 = vmatmul.bf16.gmra.mxu0 %v5373
    %v7096 = vpop.f32.mrf.mxu0
    %v7097 = vadd.f32 %v6928, %v7096
    %v7098 = vpop.f32.mrf.mxu0
    %v7099 = vadd.f32 %v6930, %v7098
    %7100 = vmatmul.bf16.gmra.mxu0 %v5374
    %v7101 = vpop.f32.mrf.mxu0
    %v7102 = vadd.f32 %v6933, %v7101
    %v7103 = vpop.f32.mrf.mxu0
    %v7104 = vadd.f32 %v6935, %v7103
    %7105 = vmatmul.bf16.gmra.mxu0 %v5375
    %v7106 = vpop.f32.mrf.mxu0
    %v7107 = vadd.f32 %v6938, %v7106
    %v7108 = vpop.f32.mrf.mxu0
    %v7109 = vadd.f32 %v6940, %v7108
    %7110 = vmatmul.bf16.gmra.mxu0 %v5801
    %v7111 = vpop.f32.mrf.mxu0
    %v7112 = vadd.f32 %v6943, %v7111
    %v7113 = vpop.f32.mrf.mxu0
    %v7114 = vadd.f32 %v6945, %v7113
    %7115 = vdwg.mxu0
    %7116 = vmatpush.bf16.msra.mxu0 %v6335
    %7117 = vmatpush.bf16.msra.mxu0 %v6334
    %7118 = vmatpush.bf16.msra.mxu0 %v6333
    %7119 = vmatpush.bf16.msra.mxu0 %v6332
    %7120 = vmatpush.bf16.msra.mxu0 %v6331
    %7121 = vmatpush.bf16.msra.mxu0 %v6330
    %7122 = vmatpush.bf16.msra.mxu0 %v6329
    %7123 = vmatpush.bf16.msra.mxu0 %v6328
    %7124 = vmatmul.bf16.gmra.mxu0 %v5537
    %v7125 = vpop.f32.mrf.mxu0
    %v7126 = vadd.f32 %v6957, %v7125
    %v7127 = vpop.f32.mrf.mxu0
    %v7128 = vadd.f32 %v6959, %v7127
    %7129 = vmatmul.bf16.gmra.mxu0 %v5538
    %v7130 = vpop.f32.mrf.mxu0
    %v7131 = vadd.f32 %v6962, %v7130
    %v7132 = vpop.f32.mrf.mxu0
    %v7133 = vadd.f32 %v6964, %v7132
    %7134 = vmatmul.bf16.gmra.mxu0 %v5539
    %v7135 = vpop.f32.mrf.mxu0
    %v7136 = vadd.f32 %v6967, %v7135
    %v7137 = vpop.f32.mrf.mxu0
    %v7138 = vadd.f32 %v6969, %v7137
    %7139 = vmatmul.bf16.gmra.mxu0 %v5540
    %v7140 = vpop.f32.mrf.mxu0
    %v7141 = vadd.f32 %v6972, %v7140
    %v7142 = vpop.f32.mrf.mxu0
    %v7143 = vadd.f32 %v6974, %v7142
    %7144 = vmatmul.bf16.gmra.mxu0 %v5541
    %v7145 = vpop.f32.mrf.mxu0
    %v7146 = vadd.f32 %v6977, %v7145
    %v7147 = vpop.f32.mrf.mxu0
    %v7148 = vadd.f32 %v6979, %v7147
    %7149 = vmatmul.bf16.gmra.mxu0 %v5542
    %v7150 = vpop.f32.mrf.mxu0
    %v7151 = vadd.f32 %v6982, %v7150
    %v7152 = vpop.f32.mrf.mxu0
    %v7153 = vadd.f32 %v6984, %v7152
    %7154 = vmatmul.bf16.gmra.mxu0 %v5543
    %v7155 = vpop.f32.mrf.mxu0
    %v7156 = vadd.f32 %v6987, %v7155
    %v7157 = vpop.f32.mrf.mxu0
    %v7158 = vadd.f32 %v6989, %v7157
    %7159 = vmatmul.bf16.gmra.mxu0 %v5544
    %v7160 = vpop.f32.mrf.mxu0
    %v7161 = vadd.f32 %v6992, %v7160
    %v7162 = vpop.f32.mrf.mxu0
    %v7163 = vadd.f32 %v6994, %v7162
    %7164 = vmatmul.bf16.gmra.mxu0 %v5545
    %v7165 = vpop.f32.mrf.mxu0
    %v7166 = vadd.f32 %v6997, %v7165
    %v7167 = vpop.f32.mrf.mxu0
    %v7168 = vadd.f32 %v6999, %v7167
    %7169 = vmatmul.bf16.gmra.mxu0 %v5546
    %v7170 = vpop.f32.mrf.mxu0
    %v7171 = vadd.f32 %v7002, %v7170
    %v7172 = vpop.f32.mrf.mxu0
    %v7173 = vadd.f32 %v7004, %v7172
    %7174 = vmatmul.bf16.gmra.mxu0 %v5547
    %v7175 = vpop.f32.mrf.mxu0
    %v7176 = vadd.f32 %v7007, %v7175
    %v7177 = vpop.f32.mrf.mxu0
    %v7178 = vadd.f32 %v7009, %v7177
    %7179 = vmatmul.bf16.gmra.mxu0 %v5548
    %v7180 = vpop.f32.mrf.mxu0
    %v7181 = vadd.f32 %v7012, %v7180
    %v7182 = vpop.f32.mrf.mxu0
    %v7183 = vadd.f32 %v7014, %v7182
    %7184 = vmatmul.bf16.gmra.mxu0 %v5549
    %v7185 = vpop.f32.mrf.mxu0
    %v7186 = vadd.f32 %v7017, %v7185
    %v7187 = vpop.f32.mrf.mxu0
    %v7188 = vadd.f32 %v7019, %v7187
    %7189 = vmatmul.bf16.gmra.mxu0 %v5550
    %v7190 = vpop.f32.mrf.mxu0
    %v7191 = vadd.f32 %v7022, %v7190
    %v7192 = vpop.f32.mrf.mxu0
    %v7193 = vadd.f32 %v7024, %v7192
    %7194 = vmatmul.bf16.gmra.mxu0 %v5551
    %v7195 = vpop.f32.mrf.mxu0
    %v7196 = vadd.f32 %v7027, %v7195
    %v7197 = vpop.f32.mrf.mxu0
    %v7198 = vadd.f32 %v7029, %v7197
    %7199 = vmatmul.bf16.gmra.mxu0 %v5812
    %v7200 = vpop.f32.mrf.mxu0
    %v7201 = vadd.f32 %v7032, %v7200
    %v7202 = vpop.f32.mrf.mxu0
    %v7203 = vadd.f32 %v7034, %v7202
    %7204 = vmatmul.bf16.gmra.mxu0 %v5553
    %v7205 = vpop.f32.mrf.mxu0
    %v7206 = vadd.f32 %v7037, %v7205
    %v7207 = vpop.f32.mrf.mxu0
    %v7208 = vadd.f32 %v7039, %v7207
    %7209 = vmatmul.bf16.gmra.mxu0 %v5554
    %v7210 = vpop.f32.mrf.mxu0
    %v7211 = vadd.f32 %v7042, %v7210
    %v7212 = vpop.f32.mrf.mxu0
    %v7213 = vadd.f32 %v7044, %v7212
    %7214 = vmatmul.bf16.gmra.mxu0 %v5555
    %v7215 = vpop.f32.mrf.mxu0
    %v7216 = vadd.f32 %v7047, %v7215
    %v7217 = vpop.f32.mrf.mxu0
    %v7218 = vadd.f32 %v7049, %v7217
    %7219 = vmatmul.bf16.gmra.mxu0 %v5556
    %v7220 = vpop.f32.mrf.mxu0
    %v7221 = vadd.f32 %v7052, %v7220
    %v7222 = vpop.f32.mrf.mxu0
    %v7223 = vadd.f32 %v7054, %v7222
    %7224 = vmatmul.bf16.gmra.mxu0 %v5557
    %v7225 = vpop.f32.mrf.mxu0
    %v7226 = vadd.f32 %v7057, %v7225
    %v7227 = vpop.f32.mrf.mxu0
    %v7228 = vadd.f32 %v7059, %v7227
    %7229 = vmatmul.bf16.gmra.mxu0 %v5558
    %v7230 = vpop.f32.mrf.mxu0
    %v7231 = vadd.f32 %v7062, %v7230
    %v7232 = vpop.f32.mrf.mxu0
    %v7233 = vadd.f32 %v7064, %v7232
    %7234 = vmatmul.bf16.gmra.mxu0 %v5559
    %v7235 = vpop.f32.mrf.mxu0
    %v7236 = vadd.f32 %v7067, %v7235
    %v7237 = vpop.f32.mrf.mxu0
    %v7238 = vadd.f32 %v7069, %v7237
    %7239 = vmatmul.bf16.gmra.mxu0 %v5560
    %v7240 = vpop.f32.mrf.mxu0
    %v7241 = vadd.f32 %v7072, %v7240
    %v7242 = vpop.f32.mrf.mxu0
    %v7243 = vadd.f32 %v7074, %v7242
    %7244 = vmatmul.bf16.gmra.mxu0 %v5561
    %v7245 = vpop.f32.mrf.mxu0
    %v7246 = vadd.f32 %v7077, %v7245
    %v7247 = vpop.f32.mrf.mxu0
    %v7248 = vadd.f32 %v7079, %v7247
    %7249 = vmatmul.bf16.gmra.mxu0 %v5562
    %v7250 = vpop.f32.mrf.mxu0
    %v7251 = vadd.f32 %v7082, %v7250
    %v7252 = vpop.f32.mrf.mxu0
    %v7253 = vadd.f32 %v7084, %v7252
    %7254 = vmatmul.bf16.gmra.mxu0 %v5563
    %v7255 = vpop.f32.mrf.mxu0
    %v7256 = vadd.f32 %v7087, %v7255
    %v7257 = vpop.f32.mrf.mxu0
    %v7258 = vadd.f32 %v7089, %v7257
    %7259 = vmatmul.bf16.gmra.mxu0 %v5564
    %v7260 = vpop.f32.mrf.mxu0
    %v7261 = vadd.f32 %v7092, %v7260
    %v7262 = vpop.f32.mrf.mxu0
    %v7263 = vadd.f32 %v7094, %v7262
    %7264 = vmatmul.bf16.gmra.mxu0 %v5565
    %v7265 = vpop.f32.mrf.mxu0
    %v7266 = vadd.f32 %v7097, %v7265
    %v7267 = vpop.f32.mrf.mxu0
    %v7268 = vadd.f32 %v7099, %v7267
    %7269 = vmatmul.bf16.gmra.mxu0 %v5566
    %v7270 = vpop.f32.mrf.mxu0
    %v7271 = vadd.f32 %v7102, %v7270
    %v7272 = vpop.f32.mrf.mxu0
    %v7273 = vadd.f32 %v7104, %v7272
    %7274 = vmatmul.bf16.gmra.mxu0 %v5567
    %v7275 = vpop.f32.mrf.mxu0
    %v7276 = vadd.f32 %v7107, %v7275
    %v7277 = vpop.f32.mrf.mxu0
    %v7278 = vadd.f32 %v7109, %v7277
    %7279 = vmatmul.bf16.gmra.mxu0 %v5813
    %v7280 = vpop.f32.mrf.mxu0
    %v7281 = vadd.f32 %v7112, %v7280
    %v7282 = vpop.f32.mrf.mxu0
    %v7283 = vadd.f32 %v7114, %v7282
    %7284 = vdwg.mxu0
    %7285 = vmatpush.bf16.msra.mxu0 %v6343
    %7286 = vmatpush.bf16.msra.mxu0 %v6342
    %7287 = vmatpush.bf16.msra.mxu0 %v6341
    %7288 = vmatpush.bf16.msra.mxu0 %v6340
    %7289 = vmatpush.bf16.msra.mxu0 %v6339
    %7290 = vmatpush.bf16.msra.mxu0 %v6338
    %7291 = vmatpush.bf16.msra.mxu0 %v6337
    %7292 = vmatpush.bf16.msra.mxu0 %v6336
    %7293 = vmatmul.bf16.gmra.mxu0 %v5729
    %v7294 = vpop.f32.mrf.mxu0
    %v7295 = vadd.f32 %v7126, %v7294
    %v7296 = vpop.f32.mrf.mxu0
    %v7297 = vadd.f32 %v7128, %v7296
    %7298 = vmatmul.bf16.gmra.mxu0 %v5730
    %v7299 = vpop.f32.mrf.mxu0
    %v7300 = vadd.f32 %v7131, %v7299
    %v7301 = vpop.f32.mrf.mxu0
    %v7302 = vadd.f32 %v7133, %v7301
    %7303 = vmatmul.bf16.gmra.mxu0 %v5731
    %v7304 = vpop.f32.mrf.mxu0
    %v7305 = vadd.f32 %v7136, %v7304
    %v7306 = vpop.f32.mrf.mxu0
    %v7307 = vadd.f32 %v7138, %v7306
    %7308 = vmatmul.bf16.gmra.mxu0 %v5732
    %v7309 = vpop.f32.mrf.mxu0
    %v7310 = vadd.f32 %v7141, %v7309
    %v7311 = vpop.f32.mrf.mxu0
    %v7312 = vadd.f32 %v7143, %v7311
    %7313 = vmatmul.bf16.gmra.mxu0 %v5733
    %v7314 = vpop.f32.mrf.mxu0
    %v7315 = vadd.f32 %v7146, %v7314
    %v7316 = vpop.f32.mrf.mxu0
    %v7317 = vadd.f32 %v7148, %v7316
    %7318 = vmatmul.bf16.gmra.mxu0 %v5734
    %v7319 = vpop.f32.mrf.mxu0
    %v7320 = vadd.f32 %v7151, %v7319
    %v7321 = vpop.f32.mrf.mxu0
    %v7322 = vadd.f32 %v7153, %v7321
    %7323 = vmatmul.bf16.gmra.mxu0 %v5735
    %v7324 = vpop.f32.mrf.mxu0
    %v7325 = vadd.f32 %v7156, %v7324
    %v7326 = vpop.f32.mrf.mxu0
    %v7327 = vadd.f32 %v7158, %v7326
    %7328 = vmatmul.bf16.gmra.mxu0 %v5736
    %v7329 = vpop.f32.mrf.mxu0
    %v7330 = vadd.f32 %v7161, %v7329
    %v7331 = vpop.f32.mrf.mxu0
    %v7332 = vadd.f32 %v7163, %v7331
    %7333 = vmatmul.bf16.gmra.mxu0 %v5737
    %v7334 = vpop.f32.mrf.mxu0
    %v7335 = vadd.f32 %v7166, %v7334
    %v7336 = vpop.f32.mrf.mxu0
    %v7337 = vadd.f32 %v7168, %v7336
    %7338 = vmatmul.bf16.gmra.mxu0 %v5738
    %v7339 = vpop.f32.mrf.mxu0
    %v7340 = vadd.f32 %v7171, %v7339
    %v7341 = vpop.f32.mrf.mxu0
    %v7342 = vadd.f32 %v7173, %v7341
    %7343 = vmatmul.bf16.gmra.mxu0 %v5739
    %v7344 = vpop.f32.mrf.mxu0
    %v7345 = vadd.f32 %v7176, %v7344
    %v7346 = vpop.f32.mrf.mxu0
    %v7347 = vadd.f32 %v7178, %v7346
    %7348 = vmatmul.bf16.gmra.mxu0 %v5740
    %v7349 = vpop.f32.mrf.mxu0
    %v7350 = vadd.f32 %v7181, %v7349
    %v7351 = vpop.f32.mrf.mxu0
    %v7352 = vadd.f32 %v7183, %v7351
    %7353 = vmatmul.bf16.gmra.mxu0 %v5741
    %v7354 = vpop.f32.mrf.mxu0
    %v7355 = vadd.f32 %v7186, %v7354
    %v7356 = vpop.f32.mrf.mxu0
    %v7357 = vadd.f32 %v7188, %v7356
    %7358 = vmatmul.bf16.gmra.mxu0 %v5742
    %v7359 = vpop.f32.mrf.mxu0
    %v7360 = vadd.f32 %v7191, %v7359
    %v7361 = vpop.f32.mrf.mxu0
    %v7362 = vadd.f32 %v7193, %v7361
    %7363 = vmatmul.bf16.gmra.mxu0 %v5743
    %v7364 = vpop.f32.mrf.mxu0
    %v7365 = vadd.f32 %v7196, %v7364
    %v7366 = vpop.f32.mrf.mxu0
    %v7367 = vadd.f32 %v7198, %v7366
    %7368 = vmatmul.bf16.gmra.mxu0 %v5824
    %v7369 = vpop.f32.mrf.mxu0
    %v7370 = vadd.f32 %v7201, %v7369
    %v7371 = vpop.f32.mrf.mxu0
    %v7372 = vadd.f32 %v7203, %v7371
    %7373 = vmatmul.bf16.gmra.mxu0 %v5745
    %v7374 = vpop.f32.mrf.mxu0
    %v7375 = vadd.f32 %v7206, %v7374
    %v7376 = vpop.f32.mrf.mxu0
    %v7377 = vadd.f32 %v7208, %v7376
    %7378 = vmatmul.bf16.gmra.mxu0 %v5746
    %v7379 = vpop.f32.mrf.mxu0
    %v7380 = vadd.f32 %v7211, %v7379
    %v7381 = vpop.f32.mrf.mxu0
    %v7382 = vadd.f32 %v7213, %v7381
    %7383 = vmatmul.bf16.gmra.mxu0 %v5747
    %v7384 = vpop.f32.mrf.mxu0
    %v7385 = vadd.f32 %v7216, %v7384
    %v7386 = vpop.f32.mrf.mxu0
    %v7387 = vadd.f32 %v7218, %v7386
    %7388 = vmatmul.bf16.gmra.mxu0 %v5748
    %v7389 = vpop.f32.mrf.mxu0
    %v7390 = vadd.f32 %v7221, %v7389
    %v7391 = vpop.f32.mrf.mxu0
    %v7392 = vadd.f32 %v7223, %v7391
    %7393 = vmatmul.bf16.gmra.mxu0 %v5749
    %v7394 = vpop.f32.mrf.mxu0
    %v7395 = vadd.f32 %v7226, %v7394
    %v7396 = vpop.f32.mrf.mxu0
    %v7397 = vadd.f32 %v7228, %v7396
    %7398 = vmatmul.bf16.gmra.mxu0 %v5750
    %v7399 = vpop.f32.mrf.mxu0
    %v7400 = vadd.f32 %v7231, %v7399
    %v7401 = vpop.f32.mrf.mxu0
    %v7402 = vadd.f32 %v7233, %v7401
    %7403 = vmatmul.bf16.gmra.mxu0 %v5751
    %v7404 = vpop.f32.mrf.mxu0
    %v7405 = vadd.f32 %v7236, %v7404
    %v7406 = vpop.f32.mrf.mxu0
    %v7407 = vadd.f32 %v7238, %v7406
    %7408 = vmatmul.bf16.gmra.mxu0 %v5752
    %v7409 = vpop.f32.mrf.mxu0
    %v7410 = vadd.f32 %v7241, %v7409
    %v7411 = vpop.f32.mrf.mxu0
    %v7412 = vadd.f32 %v7243, %v7411
    %7413 = vmatmul.bf16.gmra.mxu0 %v5753
    %v7414 = vpop.f32.mrf.mxu0
    %v7415 = vadd.f32 %v7246, %v7414
    %v7416 = vpop.f32.mrf.mxu0
    %v7417 = vadd.f32 %v7248, %v7416
    %7418 = vmatmul.bf16.gmra.mxu0 %v5754
    %v7419 = vpop.f32.mrf.mxu0
    %v7420 = vadd.f32 %v7251, %v7419
    %v7421 = vpop.f32.mrf.mxu0
    %v7422 = vadd.f32 %v7253, %v7421
    %7423 = vmatmul.bf16.gmra.mxu0 %v5755
    %v7424 = vpop.f32.mrf.mxu0
    %v7425 = vadd.f32 %v7256, %v7424
    %v7426 = vpop.f32.mrf.mxu0
    %v7427 = vadd.f32 %v7258, %v7426
    %7428 = vmatmul.bf16.gmra.mxu0 %v5756
    %v7429 = vpop.f32.mrf.mxu0
    %v7430 = vadd.f32 %v7261, %v7429
    %v7431 = vpop.f32.mrf.mxu0
    %v7432 = vadd.f32 %v7263, %v7431
    %7433 = vmatmul.bf16.gmra.mxu0 %v5757
    %v7434 = vpop.f32.mrf.mxu0
    %v7435 = vadd.f32 %v7266, %v7434
    %v7436 = vpop.f32.mrf.mxu0
    %v7437 = vadd.f32 %v7268, %v7436
    %7438 = vmatmul.bf16.gmra.mxu0 %v5758
    %v7439 = vpop.f32.mrf.mxu0
    %v7440 = vadd.f32 %v7271, %v7439
    %v7441 = vpop.f32.mrf.mxu0
    %v7442 = vadd.f32 %v7273, %v7441
    %7443 = vmatmul.bf16.gmra.mxu0 %v5759
    %v7444 = vpop.f32.mrf.mxu0
    %v7445 = vadd.f32 %v7276, %v7444
    %v7446 = vpop.f32.mrf.mxu0
    %v7447 = vadd.f32 %v7278, %v7446
    %7448 = vmatmul.bf16.gmra.mxu0 %v5825
    %v7449 = vpop.f32.mrf.mxu0
    %v7450 = vadd.f32 %v7281, %v7449
    %v7451 = vpop.f32.mrf.mxu0
    %v7452 = vadd.f32 %v7283, %v7451
    %7453 = vdwg.mxu0
    %7454 = vmatpush.bf16.msra.mxu0 %v6351
    %7455 = vmatpush.bf16.msra.mxu0 %v6350
    %7456 = vmatpush.bf16.msra.mxu0 %v6349
    %7457 = vmatpush.bf16.msra.mxu0 %v6348
    %7458 = vmatpush.bf16.msra.mxu0 %v6347
    %7459 = vmatpush.bf16.msra.mxu0 %v6346
    %7460 = vmatpush.bf16.msra.mxu0 %v6345
    %7461 = vmatpush.bf16.msra.mxu0 %v6344
    %7462 = vmatmul.bf16.gmra.mxu0 %v5346
    %v7463 = vpop.f32.mrf.mxu0
    %v7464 = vadd.f32 %v7295, %v7463
    %v7465 = vpop.f32.mrf.mxu0
    %v7466 = vadd.f32 %v7297, %v7465
    %7467 = vmatmul.bf16.gmra.mxu0 %v5347
    %v7468 = vpop.f32.mrf.mxu0
    %v7469 = vadd.f32 %v7300, %v7468
    %v7470 = vpop.f32.mrf.mxu0
    %v7471 = vadd.f32 %v7302, %v7470
    %7472 = vmatmul.bf16.gmra.mxu0 %v5348
    %v7473 = vpop.f32.mrf.mxu0
    %v7474 = vadd.f32 %v7305, %v7473
    %v7475 = vpop.f32.mrf.mxu0
    %v7476 = vadd.f32 %v7307, %v7475
    %7477 = vmatmul.bf16.gmra.mxu0 %v5349
    %v7478 = vpop.f32.mrf.mxu0
    %v7479 = vadd.f32 %v7310, %v7478
    %v7480 = vpop.f32.mrf.mxu0
    %v7481 = vadd.f32 %v7312, %v7480
    %7482 = vmatmul.bf16.gmra.mxu0 %v5350
    %v7483 = vpop.f32.mrf.mxu0
    %v7484 = vadd.f32 %v7315, %v7483
    %v7485 = vpop.f32.mrf.mxu0
    %v7486 = vadd.f32 %v7317, %v7485
    %7487 = vmatmul.bf16.gmra.mxu0 %v5351
    %v7488 = vpop.f32.mrf.mxu0
    %v7489 = vadd.f32 %v7320, %v7488
    %v7490 = vpop.f32.mrf.mxu0
    %v7491 = vadd.f32 %v7322, %v7490
    %7492 = vmatmul.bf16.gmra.mxu0 %v5352
    %v7493 = vpop.f32.mrf.mxu0
    %v7494 = vadd.f32 %v7325, %v7493
    %v7495 = vpop.f32.mrf.mxu0
    %v7496 = vadd.f32 %v7327, %v7495
    %7497 = vmatmul.bf16.gmra.mxu0 %v5353
    %v7498 = vpop.f32.mrf.mxu0
    %v7499 = vadd.f32 %v7330, %v7498
    %v7500 = vpop.f32.mrf.mxu0
    %v7501 = vadd.f32 %v7332, %v7500
    %7502 = vmatmul.bf16.gmra.mxu0 %v5354
    %v7503 = vpop.f32.mrf.mxu0
    %v7504 = vadd.f32 %v7335, %v7503
    %v7505 = vpop.f32.mrf.mxu0
    %v7506 = vadd.f32 %v7337, %v7505
    %7507 = vmatmul.bf16.gmra.mxu0 %v5355
    %v7508 = vpop.f32.mrf.mxu0
    %v7509 = vadd.f32 %v7340, %v7508
    %v7510 = vpop.f32.mrf.mxu0
    %v7511 = vadd.f32 %v7342, %v7510
    %7512 = vmatmul.bf16.gmra.mxu0 %v5356
    %v7513 = vpop.f32.mrf.mxu0
    %v7514 = vadd.f32 %v7345, %v7513
    %v7515 = vpop.f32.mrf.mxu0
    %v7516 = vadd.f32 %v7347, %v7515
    %7517 = vmatmul.bf16.gmra.mxu0 %v5357
    %v7518 = vpop.f32.mrf.mxu0
    %v7519 = vadd.f32 %v7350, %v7518
    %v7520 = vpop.f32.mrf.mxu0
    %v7521 = vadd.f32 %v7352, %v7520
    %7522 = vmatmul.bf16.gmra.mxu0 %v5358
    %v7523 = vpop.f32.mrf.mxu0
    %v7524 = vadd.f32 %v7355, %v7523
    %v7525 = vpop.f32.mrf.mxu0
    %v7526 = vadd.f32 %v7357, %v7525
    %7527 = vmatmul.bf16.gmra.mxu0 %v5359
    %v7528 = vpop.f32.mrf.mxu0
    %v7529 = vadd.f32 %v7360, %v7528
    %v7530 = vpop.f32.mrf.mxu0
    %v7531 = vadd.f32 %v7362, %v7530
    %7532 = vmatmul.bf16.gmra.mxu0 %v5800
    %v7533 = vpop.f32.mrf.mxu0
    %v7534 = vadd.f32 %v7365, %v7533
    %v7535 = vpop.f32.mrf.mxu0
    %v7536 = vadd.f32 %v7367, %v7535
    %7537 = vmatmul.bf16.gmra.mxu0 %v5836
    %v7538 = vpop.f32.mrf.mxu0
    %v7539 = vadd.f32 %v7370, %v7538
    %v7540 = vpop.f32.mrf.mxu0
    %v7541 = vadd.f32 %v7372, %v7540
    %7542 = vmatmul.bf16.gmra.mxu0 %v5362
    %v7543 = vpop.f32.mrf.mxu0
    %v7544 = vadd.f32 %v7375, %v7543
    %v7545 = vpop.f32.mrf.mxu0
    %v7546 = vadd.f32 %v7377, %v7545
    %7547 = vmatmul.bf16.gmra.mxu0 %v5363
    %v7548 = vpop.f32.mrf.mxu0
    %v7549 = vadd.f32 %v7380, %v7548
    %v7550 = vpop.f32.mrf.mxu0
    %v7551 = vadd.f32 %v7382, %v7550
    %7552 = vmatmul.bf16.gmra.mxu0 %v5364
    %v7553 = vpop.f32.mrf.mxu0
    %v7554 = vadd.f32 %v7385, %v7553
    %v7555 = vpop.f32.mrf.mxu0
    %v7556 = vadd.f32 %v7387, %v7555
    %7557 = vmatmul.bf16.gmra.mxu0 %v5365
    %v7558 = vpop.f32.mrf.mxu0
    %v7559 = vadd.f32 %v7390, %v7558
    %v7560 = vpop.f32.mrf.mxu0
    %v7561 = vadd.f32 %v7392, %v7560
    %7562 = vmatmul.bf16.gmra.mxu0 %v5366
    %v7563 = vpop.f32.mrf.mxu0
    %v7564 = vadd.f32 %v7395, %v7563
    %v7565 = vpop.f32.mrf.mxu0
    %v7566 = vadd.f32 %v7397, %v7565
    %7567 = vmatmul.bf16.gmra.mxu0 %v5367
    %v7568 = vpop.f32.mrf.mxu0
    %v7569 = vadd.f32 %v7400, %v7568
    %v7570 = vpop.f32.mrf.mxu0
    %v7571 = vadd.f32 %v7402, %v7570
    %7572 = vmatmul.bf16.gmra.mxu0 %v5368
    %v7573 = vpop.f32.mrf.mxu0
    %v7574 = vadd.f32 %v7405, %v7573
    %v7575 = vpop.f32.mrf.mxu0
    %v7576 = vadd.f32 %v7407, %v7575
    %7577 = vmatmul.bf16.gmra.mxu0 %v5369
    %v7578 = vpop.f32.mrf.mxu0
    %v7579 = vadd.f32 %v7410, %v7578
    %v7580 = vpop.f32.mrf.mxu0
    %v7581 = vadd.f32 %v7412, %v7580
    %7582 = vmatmul.bf16.gmra.mxu0 %v5370
    %v7583 = vpop.f32.mrf.mxu0
    %v7584 = vadd.f32 %v7415, %v7583
    %v7585 = vpop.f32.mrf.mxu0
    %v7586 = vadd.f32 %v7417, %v7585
    %7587 = vmatmul.bf16.gmra.mxu0 %v5371
    %v7588 = vpop.f32.mrf.mxu0
    %v7589 = vadd.f32 %v7420, %v7588
    %v7590 = vpop.f32.mrf.mxu0
    %v7591 = vadd.f32 %v7422, %v7590
    %7592 = vmatmul.bf16.gmra.mxu0 %v5372
    %v7593 = vpop.f32.mrf.mxu0
    %v7594 = vadd.f32 %v7425, %v7593
    %v7595 = vpop.f32.mrf.mxu0
    %v7596 = vadd.f32 %v7427, %v7595
    %7597 = vmatmul.bf16.gmra.mxu0 %v5373
    %v7598 = vpop.f32.mrf.mxu0
    %v7599 = vadd.f32 %v7430, %v7598
    %v7600 = vpop.f32.mrf.mxu0
    %v7601 = vadd.f32 %v7432, %v7600
    %7602 = vmatmul.bf16.gmra.mxu0 %v5374
    %v7603 = vpop.f32.mrf.mxu0
    %v7604 = vadd.f32 %v7435, %v7603
    %v7605 = vpop.f32.mrf.mxu0
    %v7606 = vadd.f32 %v7437, %v7605
    %7607 = vmatmul.bf16.gmra.mxu0 %v5375
    %v7608 = vpop.f32.mrf.mxu0
    %v7609 = vadd.f32 %v7440, %v7608
    %v7610 = vpop.f32.mrf.mxu0
    %v7611 = vadd.f32 %v7442, %v7610
    %7612 = vmatmul.bf16.gmra.mxu0 %v5801
    %v7613 = vpop.f32.mrf.mxu0
    %v7614 = vadd.f32 %v7445, %v7613
    %v7615 = vpop.f32.mrf.mxu0
    %v7616 = vadd.f32 %v7447, %v7615
    %7617 = vmatmul.bf16.gmra.mxu0 %v5837
    %v7618 = vpop.f32.mrf.mxu0
    %v7619 = vadd.f32 %v7450, %v7618
    %v7620 = vpop.f32.mrf.mxu0
    %v7621 = vadd.f32 %v7452, %v7620
    %7622 = vdwg.mxu0
    %7623 = vmatpush.bf16.msra.mxu0 %v6359
    %7624 = vmatpush.bf16.msra.mxu0 %v6358
    %7625 = vmatpush.bf16.msra.mxu0 %v6357
    %7626 = vmatpush.bf16.msra.mxu0 %v6356
    %7627 = vmatpush.bf16.msra.mxu0 %v6355
    %7628 = vmatpush.bf16.msra.mxu0 %v6354
    %7629 = vmatpush.bf16.msra.mxu0 %v6353
    %7630 = vmatpush.bf16.msra.mxu0 %v6352
    %7631 = vmatmul.bf16.gmra.mxu0 %v5538
    %v7632 = vpop.f32.mrf.mxu0
    %v7633 = vadd.f32 %v7464, %v7632
    %v7634 = vpop.f32.mrf.mxu0
    %v7635 = vadd.f32 %v7466, %v7634
    %7636 = vmatmul.bf16.gmra.mxu0 %v5539
    %v7637 = vpop.f32.mrf.mxu0
    %v7638 = vadd.f32 %v7469, %v7637
    %v7639 = vpop.f32.mrf.mxu0
    %v7640 = vadd.f32 %v7471, %v7639
    %7641 = vmatmul.bf16.gmra.mxu0 %v5540
    %v7642 = vpop.f32.mrf.mxu0
    %v7643 = vadd.f32 %v7474, %v7642
    %v7644 = vpop.f32.mrf.mxu0
    %v7645 = vadd.f32 %v7476, %v7644
    %7646 = vmatmul.bf16.gmra.mxu0 %v5541
    %v7647 = vpop.f32.mrf.mxu0
    %v7648 = vadd.f32 %v7479, %v7647
    %v7649 = vpop.f32.mrf.mxu0
    %v7650 = vadd.f32 %v7481, %v7649
    %7651 = vmatmul.bf16.gmra.mxu0 %v5542
    %v7652 = vpop.f32.mrf.mxu0
    %v7653 = vadd.f32 %v7484, %v7652
    %v7654 = vpop.f32.mrf.mxu0
    %v7655 = vadd.f32 %v7486, %v7654
    %7656 = vmatmul.bf16.gmra.mxu0 %v5543
    %v7657 = vpop.f32.mrf.mxu0
    %v7658 = vadd.f32 %v7489, %v7657
    %v7659 = vpop.f32.mrf.mxu0
    %v7660 = vadd.f32 %v7491, %v7659
    %7661 = vmatmul.bf16.gmra.mxu0 %v5544
    %v7662 = vpop.f32.mrf.mxu0
    %v7663 = vadd.f32 %v7494, %v7662
    %v7664 = vpop.f32.mrf.mxu0
    %v7665 = vadd.f32 %v7496, %v7664
    %7666 = vmatmul.bf16.gmra.mxu0 %v5545
    %v7667 = vpop.f32.mrf.mxu0
    %v7668 = vadd.f32 %v7499, %v7667
    %v7669 = vpop.f32.mrf.mxu0
    %v7670 = vadd.f32 %v7501, %v7669
    %7671 = vmatmul.bf16.gmra.mxu0 %v5546
    %v7672 = vpop.f32.mrf.mxu0
    %v7673 = vadd.f32 %v7504, %v7672
    %v7674 = vpop.f32.mrf.mxu0
    %v7675 = vadd.f32 %v7506, %v7674
    %7676 = vmatmul.bf16.gmra.mxu0 %v5547
    %v7677 = vpop.f32.mrf.mxu0
    %v7678 = vadd.f32 %v7509, %v7677
    %v7679 = vpop.f32.mrf.mxu0
    %v7680 = vadd.f32 %v7511, %v7679
    %7681 = vmatmul.bf16.gmra.mxu0 %v5548
    %v7682 = vpop.f32.mrf.mxu0
    %v7683 = vadd.f32 %v7514, %v7682
    %v7684 = vpop.f32.mrf.mxu0
    %v7685 = vadd.f32 %v7516, %v7684
    %7686 = vmatmul.bf16.gmra.mxu0 %v5549
    %v7687 = vpop.f32.mrf.mxu0
    %v7688 = vadd.f32 %v7519, %v7687
    %v7689 = vpop.f32.mrf.mxu0
    %v7690 = vadd.f32 %v7521, %v7689
    %7691 = vmatmul.bf16.gmra.mxu0 %v5550
    %v7692 = vpop.f32.mrf.mxu0
    %v7693 = vadd.f32 %v7524, %v7692
    %v7694 = vpop.f32.mrf.mxu0
    %v7695 = vadd.f32 %v7526, %v7694
    %7696 = vmatmul.bf16.gmra.mxu0 %v5551
    %v7697 = vpop.f32.mrf.mxu0
    %v7698 = vadd.f32 %v7529, %v7697
    %v7699 = vpop.f32.mrf.mxu0
    %v7700 = vadd.f32 %v7531, %v7699
    %7701 = vmatmul.bf16.gmra.mxu0 %v5812
    %v7702 = vpop.f32.mrf.mxu0
    %v7703 = vadd.f32 %v7534, %v7702
    %v7704 = vpop.f32.mrf.mxu0
    %v7705 = vadd.f32 %v7536, %v7704
    %7706 = vmatmul.bf16.gmra.mxu0 %v5848
    %v7707 = vpop.f32.mrf.mxu0
    %v7708 = vadd.f32 %v7539, %v7707
    %v7709 = vpop.f32.mrf.mxu0
    %v7710 = vadd.f32 %v7541, %v7709
    %7711 = vmatmul.bf16.gmra.mxu0 %v5554
    %v7712 = vpop.f32.mrf.mxu0
    %v7713 = vadd.f32 %v7544, %v7712
    %v7714 = vpop.f32.mrf.mxu0
    %v7715 = vadd.f32 %v7546, %v7714
    %7716 = vmatmul.bf16.gmra.mxu0 %v5555
    %v7717 = vpop.f32.mrf.mxu0
    %v7718 = vadd.f32 %v7549, %v7717
    %v7719 = vpop.f32.mrf.mxu0
    %v7720 = vadd.f32 %v7551, %v7719
    %7721 = vmatmul.bf16.gmra.mxu0 %v5556
    %v7722 = vpop.f32.mrf.mxu0
    %v7723 = vadd.f32 %v7554, %v7722
    %v7724 = vpop.f32.mrf.mxu0
    %v7725 = vadd.f32 %v7556, %v7724
    %7726 = vmatmul.bf16.gmra.mxu0 %v5557
    %v7727 = vpop.f32.mrf.mxu0
    %v7728 = vadd.f32 %v7559, %v7727
    %v7729 = vpop.f32.mrf.mxu0
    %v7730 = vadd.f32 %v7561, %v7729
    %7731 = vmatmul.bf16.gmra.mxu0 %v5558
    %v7732 = vpop.f32.mrf.mxu0
    %v7733 = vadd.f32 %v7564, %v7732
    %v7734 = vpop.f32.mrf.mxu0
    %v7735 = vadd.f32 %v7566, %v7734
    %7736 = vmatmul.bf16.gmra.mxu0 %v5559
    %v7737 = vpop.f32.mrf.mxu0
    %v7738 = vadd.f32 %v7569, %v7737
    %v7739 = vpop.f32.mrf.mxu0
    %v7740 = vadd.f32 %v7571, %v7739
    %7741 = vmatmul.bf16.gmra.mxu0 %v5560
    %v7742 = vpop.f32.mrf.mxu0
    %v7743 = vadd.f32 %v7574, %v7742
    %v7744 = vpop.f32.mrf.mxu0
    %v7745 = vadd.f32 %v7576, %v7744
    %7746 = vmatmul.bf16.gmra.mxu0 %v5561
    %v7747 = vpop.f32.mrf.mxu0
    %v7748 = vadd.f32 %v7579, %v7747
    %v7749 = vpop.f32.mrf.mxu0
    %v7750 = vadd.f32 %v7581, %v7749
    %7751 = vmatmul.bf16.gmra.mxu0 %v5562
    %v7752 = vpop.f32.mrf.mxu0
    %v7753 = vadd.f32 %v7584, %v7752
    %v7754 = vpop.f32.mrf.mxu0
    %v7755 = vadd.f32 %v7586, %v7754
    %7756 = vmatmul.bf16.gmra.mxu0 %v5563
    %v7757 = vpop.f32.mrf.mxu0
    %v7758 = vadd.f32 %v7589, %v7757
    %v7759 = vpop.f32.mrf.mxu0
    %v7760 = vadd.f32 %v7591, %v7759
    %7761 = vmatmul.bf16.gmra.mxu0 %v5564
    %v7762 = vpop.f32.mrf.mxu0
    %v7763 = vadd.f32 %v7594, %v7762
    %v7764 = vpop.f32.mrf.mxu0
    %v7765 = vadd.f32 %v7596, %v7764
    %7766 = vmatmul.bf16.gmra.mxu0 %v5565
    %v7767 = vpop.f32.mrf.mxu0
    %v7768 = vadd.f32 %v7599, %v7767
    %v7769 = vpop.f32.mrf.mxu0
    %v7770 = vadd.f32 %v7601, %v7769
    %7771 = vmatmul.bf16.gmra.mxu0 %v5566
    %v7772 = vpop.f32.mrf.mxu0
    %v7773 = vadd.f32 %v7604, %v7772
    %v7774 = vpop.f32.mrf.mxu0
    %v7775 = vadd.f32 %v7606, %v7774
    %7776 = vmatmul.bf16.gmra.mxu0 %v5567
    %v7777 = vpop.f32.mrf.mxu0
    %v7778 = vadd.f32 %v7609, %v7777
    %v7779 = vpop.f32.mrf.mxu0
    %v7780 = vadd.f32 %v7611, %v7779
    %7781 = vmatmul.bf16.gmra.mxu0 %v5813
    %v7782 = vpop.f32.mrf.mxu0
    %v7783 = vadd.f32 %v7614, %v7782
    %v7784 = vpop.f32.mrf.mxu0
    %v7785 = vadd.f32 %v7616, %v7784
    %7786 = vmatmul.bf16.gmra.mxu0 %v5849
    %v7787 = vpop.f32.mrf.mxu0
    %v7788 = vadd.f32 %v7619, %v7787
    %v7789 = vpop.f32.mrf.mxu0
    %v7790 = vadd.f32 %v7621, %v7789
    %7791 = vdwg.mxu0
    %7792 = vmatpush.bf16.msra.mxu0 %v6367
    %7793 = vmatpush.bf16.msra.mxu0 %v6366
    %7794 = vmatpush.bf16.msra.mxu0 %v6365
    %7795 = vmatpush.bf16.msra.mxu0 %v6364
    %7796 = vmatpush.bf16.msra.mxu0 %v6363
    %7797 = vmatpush.bf16.msra.mxu0 %v6362
    %7798 = vmatpush.bf16.msra.mxu0 %v6361
    %7799 = vmatpush.bf16.msra.mxu0 %v6360
    %7800 = vmatmul.bf16.gmra.mxu0 %v5730
    %v7801 = vpop.f32.mrf.mxu0
    %v7802 = vadd.f32 %v7633, %v7801
    %v7803 = vpop.f32.mrf.mxu0
    %v7804 = vadd.f32 %v7635, %v7803
    %7805 = vmatmul.bf16.gmra.mxu0 %v5731
    %v7806 = vpop.f32.mrf.mxu0
    %v7807 = vadd.f32 %v7638, %v7806
    %v7808 = vpop.f32.mrf.mxu0
    %v7809 = vadd.f32 %v7640, %v7808
    %7810 = vmatmul.bf16.gmra.mxu0 %v5732
    %v7811 = vpop.f32.mrf.mxu0
    %v7812 = vadd.f32 %v7643, %v7811
    %v7813 = vpop.f32.mrf.mxu0
    %v7814 = vadd.f32 %v7645, %v7813
    %7815 = vmatmul.bf16.gmra.mxu0 %v5733
    %v7816 = vpop.f32.mrf.mxu0
    %v7817 = vadd.f32 %v7648, %v7816
    %v7818 = vpop.f32.mrf.mxu0
    %v7819 = vadd.f32 %v7650, %v7818
    %7820 = vmatmul.bf16.gmra.mxu0 %v5734
    %v7821 = vpop.f32.mrf.mxu0
    %v7822 = vadd.f32 %v7653, %v7821
    %v7823 = vpop.f32.mrf.mxu0
    %v7824 = vadd.f32 %v7655, %v7823
    %7825 = vmatmul.bf16.gmra.mxu0 %v5735
    %v7826 = vpop.f32.mrf.mxu0
    %v7827 = vadd.f32 %v7658, %v7826
    %v7828 = vpop.f32.mrf.mxu0
    %v7829 = vadd.f32 %v7660, %v7828
    %7830 = vmatmul.bf16.gmra.mxu0 %v5736
    %v7831 = vpop.f32.mrf.mxu0
    %v7832 = vadd.f32 %v7663, %v7831
    %v7833 = vpop.f32.mrf.mxu0
    %v7834 = vadd.f32 %v7665, %v7833
    %7835 = vmatmul.bf16.gmra.mxu0 %v5737
    %v7836 = vpop.f32.mrf.mxu0
    %v7837 = vadd.f32 %v7668, %v7836
    %v7838 = vpop.f32.mrf.mxu0
    %v7839 = vadd.f32 %v7670, %v7838
    %7840 = vmatmul.bf16.gmra.mxu0 %v5738
    %v7841 = vpop.f32.mrf.mxu0
    %v7842 = vadd.f32 %v7673, %v7841
    %v7843 = vpop.f32.mrf.mxu0
    %v7844 = vadd.f32 %v7675, %v7843
    %7845 = vmatmul.bf16.gmra.mxu0 %v5739
    %v7846 = vpop.f32.mrf.mxu0
    %v7847 = vadd.f32 %v7678, %v7846
    %v7848 = vpop.f32.mrf.mxu0
    %v7849 = vadd.f32 %v7680, %v7848
    %7850 = vmatmul.bf16.gmra.mxu0 %v5740
    %v7851 = vpop.f32.mrf.mxu0
    %v7852 = vadd.f32 %v7683, %v7851
    %v7853 = vpop.f32.mrf.mxu0
    %v7854 = vadd.f32 %v7685, %v7853
    %7855 = vmatmul.bf16.gmra.mxu0 %v5741
    %v7856 = vpop.f32.mrf.mxu0
    %v7857 = vadd.f32 %v7688, %v7856
    %v7858 = vpop.f32.mrf.mxu0
    %v7859 = vadd.f32 %v7690, %v7858
    %7860 = vmatmul.bf16.gmra.mxu0 %v5742
    %v7861 = vpop.f32.mrf.mxu0
    %v7862 = vadd.f32 %v7693, %v7861
    %v7863 = vpop.f32.mrf.mxu0
    %v7864 = vadd.f32 %v7695, %v7863
    %7865 = vmatmul.bf16.gmra.mxu0 %v5743
    %v7866 = vpop.f32.mrf.mxu0
    %v7867 = vadd.f32 %v7698, %v7866
    %v7868 = vpop.f32.mrf.mxu0
    %v7869 = vadd.f32 %v7700, %v7868
    %7870 = vmatmul.bf16.gmra.mxu0 %v5824
    %v7871 = vpop.f32.mrf.mxu0
    %v7872 = vadd.f32 %v7703, %v7871
    %v7873 = vpop.f32.mrf.mxu0
    %v7874 = vadd.f32 %v7705, %v7873
    %7875 = vmatmul.bf16.gmra.mxu0 %v5860
    %v7876 = vpop.f32.mrf.mxu0
    %v7877 = vadd.f32 %v7708, %v7876
    %v7878 = vpop.f32.mrf.mxu0
    %v7879 = vadd.f32 %v7710, %v7878
    %7880 = vmatmul.bf16.gmra.mxu0 %v5746
    %v7881 = vpop.f32.mrf.mxu0
    %v7882 = vadd.f32 %v7713, %v7881
    %v7883 = vpop.f32.mrf.mxu0
    %v7884 = vadd.f32 %v7715, %v7883
    %7885 = vmatmul.bf16.gmra.mxu0 %v5747
    %v7886 = vpop.f32.mrf.mxu0
    %v7887 = vadd.f32 %v7718, %v7886
    %v7888 = vpop.f32.mrf.mxu0
    %v7889 = vadd.f32 %v7720, %v7888
    %7890 = vmatmul.bf16.gmra.mxu0 %v5748
    %v7891 = vpop.f32.mrf.mxu0
    %v7892 = vadd.f32 %v7723, %v7891
    %v7893 = vpop.f32.mrf.mxu0
    %v7894 = vadd.f32 %v7725, %v7893
    %7895 = vmatmul.bf16.gmra.mxu0 %v5749
    %v7896 = vpop.f32.mrf.mxu0
    %v7897 = vadd.f32 %v7728, %v7896
    %v7898 = vpop.f32.mrf.mxu0
    %v7899 = vadd.f32 %v7730, %v7898
    %7900 = vmatmul.bf16.gmra.mxu0 %v5750
    %v7901 = vpop.f32.mrf.mxu0
    %v7902 = vadd.f32 %v7733, %v7901
    %v7903 = vpop.f32.mrf.mxu0
    %v7904 = vadd.f32 %v7735, %v7903
    %7905 = vmatmul.bf16.gmra.mxu0 %v5751
    %v7906 = vpop.f32.mrf.mxu0
    %v7907 = vadd.f32 %v7738, %v7906
    %v7908 = vpop.f32.mrf.mxu0
    %v7909 = vadd.f32 %v7740, %v7908
    %7910 = vmatmul.bf16.gmra.mxu0 %v5752
    %v7911 = vpop.f32.mrf.mxu0
    %v7912 = vadd.f32 %v7743, %v7911
    %v7913 = vpop.f32.mrf.mxu0
    %v7914 = vadd.f32 %v7745, %v7913
    %7915 = vmatmul.bf16.gmra.mxu0 %v5753
    %v7916 = vpop.f32.mrf.mxu0
    %v7917 = vadd.f32 %v7748, %v7916
    %v7918 = vpop.f32.mrf.mxu0
    %v7919 = vadd.f32 %v7750, %v7918
    %7920 = vmatmul.bf16.gmra.mxu0 %v5754
    %v7921 = vpop.f32.mrf.mxu0
    %v7922 = vadd.f32 %v7753, %v7921
    %v7923 = vpop.f32.mrf.mxu0
    %v7924 = vadd.f32 %v7755, %v7923
    %7925 = vmatmul.bf16.gmra.mxu0 %v5755
    %v7926 = vpop.f32.mrf.mxu0
    %v7927 = vadd.f32 %v7758, %v7926
    %v7928 = vpop.f32.mrf.mxu0
    %v7929 = vadd.f32 %v7760, %v7928
    %7930 = vmatmul.bf16.gmra.mxu0 %v5756
    %v7931 = vpop.f32.mrf.mxu0
    %v7932 = vadd.f32 %v7763, %v7931
    %v7933 = vpop.f32.mrf.mxu0
    %v7934 = vadd.f32 %v7765, %v7933
    %7935 = vmatmul.bf16.gmra.mxu0 %v5757
    %v7936 = vpop.f32.mrf.mxu0
    %v7937 = vadd.f32 %v7768, %v7936
    %v7938 = vpop.f32.mrf.mxu0
    %v7939 = vadd.f32 %v7770, %v7938
    %7940 = vmatmul.bf16.gmra.mxu0 %v5758
    %v7941 = vpop.f32.mrf.mxu0
    %v7942 = vadd.f32 %v7773, %v7941
    %v7943 = vpop.f32.mrf.mxu0
    %v7944 = vadd.f32 %v7775, %v7943
    %7945 = vmatmul.bf16.gmra.mxu0 %v5759
    %v7946 = vpop.f32.mrf.mxu0
    %v7947 = vadd.f32 %v7778, %v7946
    %v7948 = vpop.f32.mrf.mxu0
    %v7949 = vadd.f32 %v7780, %v7948
    %7950 = vmatmul.bf16.gmra.mxu0 %v5825
    %v7951 = vpop.f32.mrf.mxu0
    %v7952 = vadd.f32 %v7783, %v7951
    %v7953 = vpop.f32.mrf.mxu0
    %v7954 = vadd.f32 %v7785, %v7953
    %7955 = vmatmul.bf16.gmra.mxu0 %v5861
    %v7956 = vpop.f32.mrf.mxu0
    %v7957 = vadd.f32 %v7788, %v7956
    %v7958 = vpop.f32.mrf.mxu0
    %v7959 = vadd.f32 %v7790, %v7958
    %7960 = vdwg.mxu0
    %v7961 = vld [vmem:[%s5] sm:$0x1]
    %v7962 = vld [vmem:[%s6] sm:$0x1]
    %v7963 = vadd.f32 %v7802, %v7804
    %v7964 = vadd.f32 %v7963, %v7807
    %v7965 = vadd.f32 %v7964, %v7809
    %v7966 = vadd.f32 %v7965, %v7812
    %v7967 = vadd.f32 %v7966, %v7814
    %v7968 = vadd.f32 %v7967, %v7817
    %v7969 = vadd.f32 %v7968, %v7819
    %v7970 = vadd.f32 %v7969, %v7822
    %v7971 = vadd.f32 %v7970, %v7824
    %v7972 = vadd.f32 %v7971, %v7827
    %v7973 = vadd.f32 %v7972, %v7829
    %v7974 = vadd.f32 %v7973, %v7832
    %v7975 = vadd.f32 %v7974, %v7834
    %v7976 = vadd.f32 %v7975, %v7837
    %v7977 = vadd.f32 %v7976, %v7839
    %v7978 = vadd.f32 %v7977, %v7842
    %v7979 = vadd.f32 %v7978, %v7844
    %v7980 = vadd.f32 %v7979, %v7847
    %v7981 = vadd.f32 %v7980, %v7849
    %v7982 = vadd.f32 %v7981, %v7852
    %v7983 = vadd.f32 %v7982, %v7854
    %v7984 = vadd.f32 %v7983, %v7857
    %v7985 = vadd.f32 %v7984, %v7859
    %v7986 = vadd.f32 %v7985, %v7862
    %v7987 = vadd.f32 %v7986, %v7864
    %v7988 = vadd.f32 %v7987, %v7867
    %v7989 = vadd.f32 %v7988, %v7869
    %v7990 = vadd.f32 %v7989, %v7872
    %v7991 = vadd.f32 %v7990, %v7874
    %v7992 = vadd.f32 %v7991, %v7877
    %v7993 = vadd.f32 %v7992, %v7879
    %v7994 = vadd.f32 %v7993, %v7882
    %v7995 = vadd.f32 %v7994, %v7884
    %v7996 = vadd.f32 %v7995, %v7887
    %v7997 = vadd.f32 %v7996, %v7889
    %v7998 = vadd.f32 %v7997, %v7892
    %v7999 = vadd.f32 %v7998, %v7894
    %v8000 = vadd.f32 %v7999, %v7897
    %v8001 = vadd.f32 %v8000, %v7899
    %v8002 = vadd.f32 %v8001, %v7902
    %v8003 = vadd.f32 %v8002, %v7904
    %v8004 = vadd.f32 %v8003, %v7907
    %v8005 = vadd.f32 %v8004, %v7909
    %v8006 = vadd.f32 %v8005, %v7912
    %v8007 = vadd.f32 %v8006, %v7914
    %v8008 = vadd.f32 %v8007, %v7917
    %v8009 = vadd.f32 %v8008, %v7919
    %v8010 = vadd.f32 %v8009, %v7922
    %v8011 = vadd.f32 %v8010, %v7924
    %v8012 = vadd.f32 %v8011, %v7927
    %v8013 = vadd.f32 %v8012, %v7929
    %v8014 = vadd.f32 %v8013, %v7932
    %v8015 = vadd.f32 %v8014, %v7934
    %v8016 = vadd.f32 %v8015, %v7937
    %v8017 = vadd.f32 %v8016, %v7939
    %v8018 = vadd.f32 %v8017, %v7942
    %v8019 = vadd.f32 %v8018, %v7944
    %v8020 = vadd.f32 %v8019, %v7947
    %v8021 = vadd.f32 %v8020, %v7949
    %v8022 = vadd.f32 %v8021, %v7952
    %v8023 = vadd.f32 %v8022, %v7954
    %v8024 = vadd.f32 %v8023, %v7957
    %v8025 = vadd.f32 %v8024, %v7959
    %v8026 = vrot.slane %v8025, 4
    %v8027 = vadd.f32 %v8025, %v8026
    %v8028 = vrot.slane %v8027, 2
    %v8029 = vadd.f32 %v8027, %v8028
    %v8030 = vrot.slane %v8029, 1
    %v8031 = vadd.f32 %v8029, %v8030
    %v8032 = vmul.f32 %v7802, %v7802
    %v8033 = vmul.f32 %v7804, %v7804
    %v8034 = vmul.f32 %v7807, %v7807
    %v8035 = vmul.f32 %v7809, %v7809
    %v8036 = vmul.f32 %v7812, %v7812
    %v8037 = vmul.f32 %v7814, %v7814
    %v8038 = vmul.f32 %v7817, %v7817
    %v8039 = vmul.f32 %v7819, %v7819
    %v8040 = vmul.f32 %v7822, %v7822
    %v8041 = vmul.f32 %v7824, %v7824
    %v8042 = vmul.f32 %v7827, %v7827
    %v8043 = vmul.f32 %v7829, %v7829
    %v8044 = vmul.f32 %v7832, %v7832
    %v8045 = vmul.f32 %v7834, %v7834
    %v8046 = vmul.f32 %v7837, %v7837
    %v8047 = vmul.f32 %v7839, %v7839
    %v8048 = vmul.f32 %v7842, %v7842
    %v8049 = vmul.f32 %v7844, %v7844
    %v8050 = vmul.f32 %v7847, %v7847
    %v8051 = vmul.f32 %v7849, %v7849
    %v8052 = vmul.f32 %v7852, %v7852
    %v8053 = vmul.f32 %v7854, %v7854
    %v8054 = vmul.f32 %v7857, %v7857
    %v8055 = vmul.f32 %v7859, %v7859
    %v8056 = vmul.f32 %v7862, %v7862
    %v8057 = vmul.f32 %v7864, %v7864
    %v8058 = vmul.f32 %v7867, %v7867
    %v8059 = vmul.f32 %v7869, %v7869
    %v8060 = vmul.f32 %v7872, %v7872
    %v8061 = vmul.f32 %v7874, %v7874
    %v8062 = vmul.f32 %v7877, %v7877
    %v8063 = vmul.f32 %v7879, %v7879
    %v8064 = vmul.f32 %v7882, %v7882
    %v8065 = vmul.f32 %v7884, %v7884
    %v8066 = vmul.f32 %v7887, %v7887
    %v8067 = vmul.f32 %v7889, %v7889
    %v8068 = vmul.f32 %v7892, %v7892
    %v8069 = vmul.f32 %v7894, %v7894
    %v8070 = vmul.f32 %v7897, %v7897
    %v8071 = vmul.f32 %v7899, %v7899
    %v8072 = vmul.f32 %v7902, %v7902
    %v8073 = vmul.f32 %v7904, %v7904
    %v8074 = vmul.f32 %v7907, %v7907
    %v8075 = vmul.f32 %v7909, %v7909
    %v8076 = vmul.f32 %v7912, %v7912
    %v8077 = vmul.f32 %v7914, %v7914
    %v8078 = vmul.f32 %v7917, %v7917
    %v8079 = vmul.f32 %v7919, %v7919
    %v8080 = vmul.f32 %v7922, %v7922
    %v8081 = vmul.f32 %v7924, %v7924
    %v8082 = vmul.f32 %v7927, %v7927
    %v8083 = vmul.f32 %v7929, %v7929
    %v8084 = vmul.f32 %v7932, %v7932
    %v8085 = vmul.f32 %v7934, %v7934
    %v8086 = vmul.f32 %v7937, %v7937
    %v8087 = vmul.f32 %v7939, %v7939
    %v8088 = vmul.f32 %v7942, %v7942
    %v8089 = vmul.f32 %v7944, %v7944
    %v8090 = vmul.f32 %v7947, %v7947
    %v8091 = vmul.f32 %v7949, %v7949
    %v8092 = vmul.f32 %v7952, %v7952
    %v8093 = vmul.f32 %v7954, %v7954
    %v8094 = vmul.f32 %v7957, %v7957
    %v8095 = vmul.f32 %v7959, %v7959
    %v8096 = vadd.f32 %v8032, %v8033
    %v8097 = vadd.f32 %v8096, %v8034
    %v8098 = vadd.f32 %v8097, %v8035
    %v8099 = vadd.f32 %v8098, %v8036
    %v8100 = vadd.f32 %v8099, %v8037
    %v8101 = vadd.f32 %v8100, %v8038
    %v8102 = vadd.f32 %v8101, %v8039
    %v8103 = vadd.f32 %v8102, %v8040
    %v8104 = vadd.f32 %v8103, %v8041
    %v8105 = vadd.f32 %v8104, %v8042
    %v8106 = vadd.f32 %v8105, %v8043
    %v8107 = vadd.f32 %v8106, %v8044
    %v8108 = vadd.f32 %v8107, %v8045
    %v8109 = vadd.f32 %v8108, %v8046
    %v8110 = vadd.f32 %v8109, %v8047
    %v8111 = vadd.f32 %v8110, %v8048
    %v8112 = vadd.f32 %v8111, %v8049
    %v8113 = vadd.f32 %v8112, %v8050
    %v8114 = vadd.f32 %v8113, %v8051
    %v8115 = vadd.f32 %v8114, %v8052
    %v8116 = vadd.f32 %v8115, %v8053
    %v8117 = vadd.f32 %v8116, %v8054
    %v8118 = vadd.f32 %v8117, %v8055
    %v8119 = vadd.f32 %v8118, %v8056
    %v8120 = vadd.f32 %v8119, %v8057
    %v8121 = vadd.f32 %v8120, %v8058
    %v8122 = vadd.f32 %v8121, %v8059
    %v8123 = vadd.f32 %v8122, %v8060
    %v8124 = vadd.f32 %v8123, %v8061
    %v8125 = vadd.f32 %v8124, %v8062
    %v8126 = vadd.f32 %v8125, %v8063
    %v8127 = vadd.f32 %v8126, %v8064
    %v8128 = vadd.f32 %v8127, %v8065
    %v8129 = vadd.f32 %v8128, %v8066
    %v8130 = vadd.f32 %v8129, %v8067
    %v8131 = vadd.f32 %v8130, %v8068
    %v8132 = vadd.f32 %v8131, %v8069
    %v8133 = vadd.f32 %v8132, %v8070
    %v8134 = vadd.f32 %v8133, %v8071
    %v8135 = vadd.f32 %v8134, %v8072
    %v8136 = vadd.f32 %v8135, %v8073
    %v8137 = vadd.f32 %v8136, %v8074
    %v8138 = vadd.f32 %v8137, %v8075
    %v8139 = vadd.f32 %v8138, %v8076
    %v8140 = vadd.f32 %v8139, %v8077
    %v8141 = vadd.f32 %v8140, %v8078
    %v8142 = vadd.f32 %v8141, %v8079
    %v8143 = vadd.f32 %v8142, %v8080
    %v8144 = vadd.f32 %v8143, %v8081
    %v8145 = vadd.f32 %v8144, %v8082
    %v8146 = vadd.f32 %v8145, %v8083
    %v8147 = vadd.f32 %v8146, %v8084
    %v8148 = vadd.f32 %v8147, %v8085
    %v8149 = vadd.f32 %v8148, %v8086
    %v8150 = vadd.f32 %v8149, %v8087
    %v8151 = vadd.f32 %v8150, %v8088
    %v8152 = vadd.f32 %v8151, %v8089
    %v8153 = vadd.f32 %v8152, %v8090
    %v8154 = vadd.f32 %v8153, %v8091
    %v8155 = vadd.f32 %v8154, %v8092
    %v8156 = vadd.f32 %v8155, %v8093
    %v8157 = vadd.f32 %v8156, %v8094
    %v8158 = vadd.f32 %v8157, %v8095
    %v8159 = vrot.slane %v8158, 4
    %v8160 = vadd.f32 %v8158, %v8159
    %v8161 = vrot.slane %v8160, 2
    %v8162 = vadd.f32 %v8160, %v8161
    %v8163 = vrot.slane %v8162, 1
    %v8164 = vadd.f32 %v8162, %v8163
    %v8165 = vmul.f32 %v8031, 0.001953125
    %v8166 = vmul.f32 %v8164, 0.001953125
    %v8167 = vmul.f32 %v8165, %v8165
    %v8168 = vsub.f32 %v8166, %v8167
    %v8169 = vadd.f32 %v8168, 1e-05
    %v8170 = vrsqrt.pop %v8169
    %v8171 = vmul.f32 %v8170, %v8169
    %v8172 = vmul.f32 %v8171, %v8170
    %v8173 = vmul.f32 0.5, %v8172
    %v8174 = vsub.f32 1.5, %v8173
    %v8175 = vmul.f32 %v8170, %v8174
    %vm8176 = vweird.f32 %v8169
    %vm8177 = vweird.f32 %v8170
    %vm8178 = vmor %vm8176, %vm8177
    %v8179 = vsel %vm8178, %v8170, %v8175
    %v8180 = vmul.f32 %v7961, %v8179
    %v8181 = vmul.f32 %v8165, %v8180
    %v8182 = vsub.f32 %v7962, %v8181
    %v8184 = vperm.slane %v8180, 0
    %v8186 = vmul.f32 %v7802, %v8184
    %v8187 = vmul.f32 %v7804, %v8184
    %v8188 = vmul.f32 %v7807, %v8184
    %v8189 = vmul.f32 %v7809, %v8184
    %v8190 = vmul.f32 %v7812, %v8184
    %v8191 = vmul.f32 %v7814, %v8184
    %v8192 = vmul.f32 %v7817, %v8184
    %v8193 = vmul.f32 %v7819, %v8184
    %v8194 = vmul.f32 %v7822, %v8184
    %v8195 = vmul.f32 %v7824, %v8184
    %v8196 = vmul.f32 %v7827, %v8184
    %v8197 = vmul.f32 %v7829, %v8184
    %v8198 = vmul.f32 %v7832, %v8184
    %v8199 = vmul.f32 %v7834, %v8184
    %v8200 = vmul.f32 %v7837, %v8184
    %v8201 = vmul.f32 %v7839, %v8184
    %v8202 = vmul.f32 %v7842, %v8184
    %v8203 = vmul.f32 %v7844, %v8184
    %v8204 = vmul.f32 %v7847, %v8184
    %v8205 = vmul.f32 %v7849, %v8184
    %v8206 = vmul.f32 %v7852, %v8184
    %v8207 = vmul.f32 %v7854, %v8184
    %v8208 = vmul.f32 %v7857, %v8184
    %v8209 = vmul.f32 %v7859, %v8184
    %v8210 = vmul.f32 %v7862, %v8184
    %v8211 = vmul.f32 %v7864, %v8184
    %v8212 = vmul.f32 %v7867, %v8184
    %v8213 = vmul.f32 %v7869, %v8184
    %v8214 = vmul.f32 %v7872, %v8184
    %v8215 = vmul.f32 %v7874, %v8184
    %v8216 = vmul.f32 %v7877, %v8184
    %v8217 = vmul.f32 %v7879, %v8184
    %v8218 = vmul.f32 %v7882, %v8184
    %v8219 = vmul.f32 %v7884, %v8184
    %v8220 = vmul.f32 %v7887, %v8184
    %v8221 = vmul.f32 %v7889, %v8184
    %v8222 = vmul.f32 %v7892, %v8184
    %v8223 = vmul.f32 %v7894, %v8184
    %v8224 = vmul.f32 %v7897, %v8184
    %v8225 = vmul.f32 %v7899, %v8184
    %v8226 = vmul.f32 %v7902, %v8184
    %v8227 = vmul.f32 %v7904, %v8184
    %v8228 = vmul.f32 %v7907, %v8184
    %v8229 = vmul.f32 %v7909, %v8184
    %v8230 = vmul.f32 %v7912, %v8184
    %v8231 = vmul.f32 %v7914, %v8184
    %v8232 = vmul.f32 %v7917, %v8184
    %v8233 = vmul.f32 %v7919, %v8184
    %v8234 = vmul.f32 %v7922, %v8184
    %v8235 = vmul.f32 %v7924, %v8184
    %v8236 = vmul.f32 %v7927, %v8184
    %v8237 = vmul.f32 %v7929, %v8184
    %v8238 = vmul.f32 %v7932, %v8184
    %v8239 = vmul.f32 %v7934, %v8184
    %v8240 = vmul.f32 %v7937, %v8184
    %v8241 = vmul.f32 %v7939, %v8184
    %v8242 = vmul.f32 %v7942, %v8184
    %v8243 = vmul.f32 %v7944, %v8184
    %v8244 = vmul.f32 %v7947, %v8184
    %v8245 = vmul.f32 %v7949, %v8184
    %v8246 = vmul.f32 %v7952, %v8184
    %v8247 = vmul.f32 %v7954, %v8184
    %v8248 = vmul.f32 %v7957, %v8184
    %v8249 = vmul.f32 %v7959, %v8184
    %v8251 = vperm.slane %v8182, 0
    %v8253 = vadd.f32 %v8186, %v8251
    %v8254 = vadd.f32 %v8187, %v8251
    %v8255 = vadd.f32 %v8188, %v8251
    %v8256 = vadd.f32 %v8189, %v8251
    %v8257 = vadd.f32 %v8190, %v8251
    %v8258 = vadd.f32 %v8191, %v8251
    %v8259 = vadd.f32 %v8192, %v8251
    %v8260 = vadd.f32 %v8193, %v8251
    %v8261 = vadd.f32 %v8194, %v8251
    %v8262 = vadd.f32 %v8195, %v8251
    %v8263 = vadd.f32 %v8196, %v8251
    %v8264 = vadd.f32 %v8197, %v8251
    %v8265 = vadd.f32 %v8198, %v8251
    %v8266 = vadd.f32 %v8199, %v8251
    %v8267 = vadd.f32 %v8200, %v8251
    %v8268 = vadd.f32 %v8201, %v8251
    %v8269 = vadd.f32 %v8202, %v8251
    %v8270 = vadd.f32 %v8203, %v8251
    %v8271 = vadd.f32 %v8204, %v8251
    %v8272 = vadd.f32 %v8205, %v8251
    %v8273 = vadd.f32 %v8206, %v8251
    %v8274 = vadd.f32 %v8207, %v8251
    %v8275 = vadd.f32 %v8208, %v8251
    %v8276 = vadd.f32 %v8209, %v8251
    %v8277 = vadd.f32 %v8210, %v8251
    %v8278 = vadd.f32 %v8211, %v8251
    %v8279 = vadd.f32 %v8212, %v8251
    %v8280 = vadd.f32 %v8213, %v8251
    %v8281 = vadd.f32 %v8214, %v8251
    %v8282 = vadd.f32 %v8215, %v8251
    %v8283 = vadd.f32 %v8216, %v8251
    %v8284 = vadd.f32 %v8217, %v8251
    %v8285 = vadd.f32 %v8218, %v8251
    %v8286 = vadd.f32 %v8219, %v8251
    %v8287 = vadd.f32 %v8220, %v8251
    %v8288 = vadd.f32 %v8221, %v8251
    %v8289 = vadd.f32 %v8222, %v8251
    %v8290 = vadd.f32 %v8223, %v8251
    %v8291 = vadd.f32 %v8224, %v8251
    %v8292 = vadd.f32 %v8225, %v8251
    %v8293 = vadd.f32 %v8226, %v8251
    %v8294 = vadd.f32 %v8227, %v8251
    %v8295 = vadd.f32 %v8228, %v8251
    %v8296 = vadd.f32 %v8229, %v8251
    %v8297 = vadd.f32 %v8230, %v8251
    %v8298 = vadd.f32 %v8231, %v8251
    %v8299 = vadd.f32 %v8232, %v8251
    %v8300 = vadd.f32 %v8233, %v8251
    %v8301 = vadd.f32 %v8234, %v8251
    %v8302 = vadd.f32 %v8235, %v8251
    %v8303 = vadd.f32 %v8236, %v8251
    %v8304 = vadd.f32 %v8237, %v8251
    %v8305 = vadd.f32 %v8238, %v8251
    %v8306 = vadd.f32 %v8239, %v8251
    %v8307 = vadd.f32 %v8240, %v8251
    %v8308 = vadd.f32 %v8241, %v8251
    %v8309 = vadd.f32 %v8242, %v8251
    %v8310 = vadd.f32 %v8243, %v8251
    %v8311 = vadd.f32 %v8244, %v8251
    %v8312 = vadd.f32 %v8245, %v8251
    %v8313 = vadd.f32 %v8246, %v8251
    %v8314 = vadd.f32 %v8247, %v8251
    %v8315 = vadd.f32 %v8248, %v8251
    %v8316 = vadd.f32 %v8249, %v8251
    %v8317 = vadd.f32 %v8253, %v239
    %v8318 = vadd.f32 %v8254, %v241
    %v8319 = vadd.f32 %v8255, %v244
    %v8320 = vadd.f32 %v8256, %v246
    %v8321 = vadd.f32 %v8257, %v249
    %v8322 = vadd.f32 %v8258, %v251
    %v8323 = vadd.f32 %v8259, %v254
    %v8324 = vadd.f32 %v8260, %v256
    %v8325 = vadd.f32 %v8261, %v259
    %v8326 = vadd.f32 %v8262, %v261
    %v8327 = vadd.f32 %v8263, %v264
    %v8328 = vadd.f32 %v8264, %v266
    %v8329 = vadd.f32 %v8265, %v269
    %v8330 = vadd.f32 %v8266, %v271
    %v8331 = vadd.f32 %v8267, %v274
    %v8332 = vadd.f32 %v8268, %v276
    %v8333 = vadd.f32 %v8269, %v279
    %v8334 = vadd.f32 %v8270, %v281
    %v8335 = vadd.f32 %v8271, %v284
    %v8336 = vadd.f32 %v8272, %v286
    %v8337 = vadd.f32 %v8273, %v289
    %v8338 = vadd.f32 %v8274, %v291
    %v8339 = vadd.f32 %v8275, %v294
    %v8340 = vadd.f32 %v8276, %v296
    %v8341 = vadd.f32 %v8277, %v299
    %v8342 = vadd.f32 %v8278, %v301
    %v8343 = vadd.f32 %v8279, %v304
    %v8344 = vadd.f32 %v8280, %v306
    %v8345 = vadd.f32 %v8281, %v309
    %v8346 = vadd.f32 %v8282, %v311
    %v8347 = vadd.f32 %v8283, %v689
    %v8348 = vadd.f32 %v8284, %v691
    %v8349 = vadd.f32 %v8285, %v319
    %v8350 = vadd.f32 %v8286, %v321
    %v8351 = vadd.f32 %v8287, %v324
    %v8352 = vadd.f32 %v8288, %v326
    %v8353 = vadd.f32 %v8289, %v329
    %v8354 = vadd.f32 %v8290, %v331
    %v8355 = vadd.f32 %v8291, %v334
    %v8356 = vadd.f32 %v8292, %v336
    %v8357 = vadd.f32 %v8293, %v339
    %v8358 = vadd.f32 %v8294, %v341
    %v8359 = vadd.f32 %v8295, %v344
    %v8360 = vadd.f32 %v8296, %v346
    %v8361 = vadd.f32 %v8297, %v349
    %v8362 = vadd.f32 %v8298, %v351
    %v8363 = vadd.f32 %v8299, %v354
    %v8364 = vadd.f32 %v8300, %v356
    %v8365 = vadd.f32 %v8301, %v359
    %v8366 = vadd.f32 %v8302, %v361
    %v8367 = vadd.f32 %v8303, %v364
    %v8368 = vadd.f32 %v8304, %v366
    %v8369 = vadd.f32 %v8305, %v369
    %v8370 = vadd.f32 %v8306, %v371
    %v8371 = vadd.f32 %v8307, %v374
    %v8372 = vadd.f32 %v8308, %v376
    %v8373 = vadd.f32 %v8309, %v379
    %v8374 = vadd.f32 %v8310, %v381
    %v8375 = vadd.f32 %v8311, %v384
    %v8376 = vadd.f32 %v8312, %v386
    %v8377 = vadd.f32 %v8313, %v389
    %v8378 = vadd.f32 %v8314, %v391
    %v8379 = vadd.f32 %v8315, %v694
    %v8380 = vadd.f32 %v8316, %v696
    %v8381 = vmax.f32 %v8317, 0.0
    %v8382 = vmax.f32 %v8318, 0.0
    %v8383 = vmax.f32 %v8319, 0.0
    %v8384 = vmax.f32 %v8320, 0.0
    %v8385 = vmax.f32 %v8321, 0.0
    %v8386 = vmax.f32 %v8322, 0.0
    %v8387 = vmax.f32 %v8323, 0.0
    %v8388 = vmax.f32 %v8324, 0.0
    %v8389 = vmax.f32 %v8325, 0.0
    %v8390 = vmax.f32 %v8326, 0.0
    %v8391 = vmax.f32 %v8327, 0.0
    %v8392 = vmax.f32 %v8328, 0.0
    %v8393 = vmax.f32 %v8329, 0.0
    %v8394 = vmax.f32 %v8330, 0.0
    %v8395 = vmax.f32 %v8331, 0.0
    %v8396 = vmax.f32 %v8332, 0.0
    %v8397 = vmax.f32 %v8333, 0.0
    %v8398 = vmax.f32 %v8334, 0.0
    %v8399 = vmax.f32 %v8335, 0.0
    %v8400 = vmax.f32 %v8336, 0.0
    %v8401 = vmax.f32 %v8337, 0.0
    %v8402 = vmax.f32 %v8338, 0.0
    %v8403 = vmax.f32 %v8339, 0.0
    %v8404 = vmax.f32 %v8340, 0.0
    %v8405 = vmax.f32 %v8341, 0.0
    %v8406 = vmax.f32 %v8342, 0.0
    %v8407 = vmax.f32 %v8343, 0.0
    %v8408 = vmax.f32 %v8344, 0.0
    %v8409 = vmax.f32 %v8345, 0.0
    %v8410 = vmax.f32 %v8346, 0.0
    %v8411 = vmax.f32 %v8347, 0.0
    %v8412 = vmax.f32 %v8348, 0.0
    %v8413 = vmax.f32 %v8349, 0.0
    %v8414 = vmax.f32 %v8350, 0.0
    %v8415 = vmax.f32 %v8351, 0.0
    %v8416 = vmax.f32 %v8352, 0.0
    %v8417 = vmax.f32 %v8353, 0.0
    %v8418 = vmax.f32 %v8354, 0.0
    %v8419 = vmax.f32 %v8355, 0.0
    %v8420 = vmax.f32 %v8356, 0.0
    %v8421 = vmax.f32 %v8357, 0.0
    %v8422 = vmax.f32 %v8358, 0.0
    %v8423 = vmax.f32 %v8359, 0.0
    %v8424 = vmax.f32 %v8360, 0.0
    %v8425 = vmax.f32 %v8361, 0.0
    %v8426 = vmax.f32 %v8362, 0.0
    %v8427 = vmax.f32 %v8363, 0.0
    %v8428 = vmax.f32 %v8364, 0.0
    %v8429 = vmax.f32 %v8365, 0.0
    %v8430 = vmax.f32 %v8366, 0.0
    %v8431 = vmax.f32 %v8367, 0.0
    %v8432 = vmax.f32 %v8368, 0.0
    %v8433 = vmax.f32 %v8369, 0.0
    %v8434 = vmax.f32 %v8370, 0.0
    %v8435 = vmax.f32 %v8371, 0.0
    %v8436 = vmax.f32 %v8372, 0.0
    %v8437 = vmax.f32 %v8373, 0.0
    %v8438 = vmax.f32 %v8374, 0.0
    %v8439 = vmax.f32 %v8375, 0.0
    %v8440 = vmax.f32 %v8376, 0.0
    %v8441 = vmax.f32 %v8377, 0.0
    %v8442 = vmax.f32 %v8378, 0.0
    %v8443 = vmax.f32 %v8379, 0.0
    %v8444 = vmax.f32 %v8380, 0.0
    %8445 = vst [vmem:[#allocation3] sm:$0xff] %v8381
    %8446 = vst [vmem:[#allocation3 + $0x8] sm:$0xff] %v8382
    %8447 = vst [vmem:[#allocation3 + $0x10] sm:$0xff] %v8383
    %8448 = vst [vmem:[#allocation3 + $0x18] sm:$0xff] %v8384
    %8449 = vst [vmem:[#allocation3 + $0x20] sm:$0xff] %v8385
    %8450 = vst [vmem:[#allocation3 + $0x28] sm:$0xff] %v8386
    %8451 = vst [vmem:[#allocation3 + $0x30] sm:$0xff] %v8387
    %8452 = vst [vmem:[#allocation3 + $0x38] sm:$0xff] %v8388
    %8453 = vst [vmem:[#allocation3 + $0x40] sm:$0xff] %v8389
    %8454 = vst [vmem:[#allocation3 + $0x48] sm:$0xff] %v8390
    %8455 = vst [vmem:[#allocation3 + $0x50] sm:$0xff] %v8391
    %8456 = vst [vmem:[#allocation3 + $0x58] sm:$0xff] %v8392
    %8457 = vst [vmem:[#allocation3 + $0x60] sm:$0xff] %v8393
    %8458 = vst [vmem:[#allocation3 + $0x68] sm:$0xff] %v8394
    %8459 = vst [vmem:[#allocation3 + $0x70] sm:$0xff] %v8395
    %8460 = vst [vmem:[#allocation3 + $0x78] sm:$0xff] %v8396
    %8461 = vst [vmem:[#allocation3 + $0x80] sm:$0xff] %v8397
    %8462 = vst [vmem:[#allocation3 + $0x88] sm:$0xff] %v8398
    %8463 = vst [vmem:[#allocation3 + $0x90] sm:$0xff] %v8399
    %8464 = vst [vmem:[#allocation3 + $0x98] sm:$0xff] %v8400
    %8465 = vst [vmem:[#allocation3 + $0xa0] sm:$0xff] %v8401
    %8466 = vst [vmem:[#allocation3 + $0xa8] sm:$0xff] %v8402
    %8467 = vst [vmem:[#allocation3 + $0xb0] sm:$0xff] %v8403
    %8468 = vst [vmem:[#allocation3 + $0xb8] sm:$0xff] %v8404
    %8469 = vst [vmem:[#allocation3 + $0xc0] sm:$0xff] %v8405
    %8470 = vst [vmem:[#allocation3 + $0xc8] sm:$0xff] %v8406
    %8471 = vst [vmem:[#allocation3 + $0xd0] sm:$0xff] %v8407
    %8472 = vst [vmem:[#allocation3 + $0xd8] sm:$0xff] %v8408
    %8473 = vst [vmem:[#allocation3 + $0xe0] sm:$0xff] %v8409
    %8474 = vst [vmem:[#allocation3 + $0xe8] sm:$0xff] %v8410
    %8475 = vst [vmem:[#allocation3 + $0xf0] sm:$0xff] %v8411
    %8476 = vst [vmem:[#allocation3 + $0xf8] sm:$0xff] %v8412
    %8477 = vst [vmem:[#allocation3 + $0x100] sm:$0xff] %v8413
    %8478 = vst [vmem:[#allocation3 + $0x108] sm:$0xff] %v8414
    %8479 = vst [vmem:[#allocation3 + $0x110] sm:$0xff] %v8415
    %8480 = vst [vmem:[#allocation3 + $0x118] sm:$0xff] %v8416
    %8481 = vst [vmem:[#allocation3 + $0x120] sm:$0xff] %v8417
    %8482 = vst [vmem:[#allocation3 + $0x128] sm:$0xff] %v8418
    %8483 = vst [vmem:[#allocation3 + $0x130] sm:$0xff] %v8419
    %8484 = vst [vmem:[#allocation3 + $0x138] sm:$0xff] %v8420
    %8485 = vst [vmem:[#allocation3 + $0x140] sm:$0xff] %v8421
    %8486 = vst [vmem:[#allocation3 + $0x148] sm:$0xff] %v8422
    %8487 = vst [vmem:[#allocation3 + $0x150] sm:$0xff] %v8423
    %8488 = vst [vmem:[#allocation3 + $0x158] sm:$0xff] %v8424
    %8489 = vst [vmem:[#allocation3 + $0x160] sm:$0xff] %v8425
    %8490 = vst [vmem:[#allocation3 + $0x168] sm:$0xff] %v8426
    %8491 = vst [vmem:[#allocation3 + $0x170] sm:$0xff] %v8427
    %8492 = vst [vmem:[#allocation3 + $0x178] sm:$0xff] %v8428
    %8493 = vst [vmem:[#allocation3 + $0x180] sm:$0xff] %v8429
    %8494 = vst [vmem:[#allocation3 + $0x188] sm:$0xff] %v8430
    %8495 = vst [vmem:[#allocation3 + $0x190] sm:$0xff] %v8431
    %8496 = vst [vmem:[#allocation3 + $0x198] sm:$0xff] %v8432
    %8497 = vst [vmem:[#allocation3 + $0x1a0] sm:$0xff] %v8433
    %8498 = vst [vmem:[#allocation3 + $0x1a8] sm:$0xff] %v8434
    %8499 = vst [vmem:[#allocation3 + $0x1b0] sm:$0xff] %v8435
    %8500 = vst [vmem:[#allocation3 + $0x1b8] sm:$0xff] %v8436
    %8501 = vst [vmem:[#allocation3 + $0x1c0] sm:$0xff] %v8437
    %8502 = vst [vmem:[#allocation3 + $0x1c8] sm:$0xff] %v8438
    %8503 = vst [vmem:[#allocation3 + $0x1d0] sm:$0xff] %v8439
    %8504 = vst [vmem:[#allocation3 + $0x1d8] sm:$0xff] %v8440
    %8505 = vst [vmem:[#allocation3 + $0x1e0] sm:$0xff] %v8441
    %8506 = vst [vmem:[#allocation3 + $0x1e8] sm:$0xff] %v8442
    %8507 = vst [vmem:[#allocation3 + $0x1f0] sm:$0xff] %v8443
    %8508 = vst [vmem:[#allocation3 + $0x1f8] sm:$0xff] %v8444
    // Predicated region
    $region30: #{tpu_custom_call.1} parent=1 // pred_check
      _
    $region31: #{tpu_custom_call.1} parent=1 // pred_check_branch
      %8510 = sbr.rel (0) target = $region33
    $region32: #{tpu_custom_call.1} parent=1 // pred_region
      %8512 = vsyncadd [#allocation4], 0
      %s8513 = sshll.u32 [#allocation3], 4
      %s8514 = int_to_ptr.vmem [resolvable:$true] %s8513
      %s8515 = sshll.u32 %s7, 4
      %s8516 = int_to_ptr.hbm [resolvable:$true] %s8515
      %8521 = dma.vmem_to_hbm [thread:$0]  %s8514, 8192, %s8516, [#allocation4], 128, 128, 8
    $region33: #{tpu_custom_call.1} parent=1 // pred_fallthru
      _
    // Predicated region
    $region34: #{tpu_custom_call.1} parent=1 // pred_check
      _
    $region35: #{tpu_custom_call.1} parent=1 // pred_check_branch
      %8523 = sbr.rel (0) target = $region37
    $region36: #{tpu_custom_call.1} parent=1 // pred_region
      %8525 = dma.done [#allocation4], 8192
    $region37: #{tpu_custom_call.1} parent=1 // pred_fallthru
      _
    %8526 = vsyncpa [#allocation4], 1

</llo_original>
